<compile_context>
chip_gen: v5e
topology: v5e:2x2
jax: 0.10.0
libtpu: 0.0.40
codegen_flags: <defaults>
</compile_context>

<pallas_src>
import functools
import math

import jax
import jax.numpy as jnp
from jax import lax
from jax.experimental import pallas as pl
from jax.experimental.pallas import tpu as pltpu


# ---------------------------------------------------------------------------
# Kernel: full LSTM stack + fused FC epilogue
# ---------------------------------------------------------------------------
def lstm_stack_kernel(*refs, num_layers, hidden_p, time_chunk, seq_len,
                      batch_chunk, mm_dtype, unroll):
    Hp, Tc, Bc = hidden_p, time_chunk, batch_chunk

    x_ref = refs[0]                                   # (Tc, Bc, Dp)  mm_dtype
    w_refs = refs[1:1 + 3 * num_layers]               # per layer: w_ih, w_hh, bias
    fc_w_ref = refs[1 + 3 * num_layers]               # (Hp, Op)     mm_dtype
    fc_b_ref = refs[2 + 3 * num_layers]               # (1, Op)      f32
    out_ref = refs[3 + 3 * num_layers]                # (Bc, Op)     f32
    h_sc, c_sc, seq_sc, gates_sc = refs[4 + 3 * num_layers:]

    t_blk = pl.program_id(1)

    # Recurrent state persists across time blocks; reset only at the start of a sweep.
    @pl.when(t_blk == 0)
    def _init_state():
        h_sc[...] = jnp.zeros_like(h_sc)
        c_sc[...] = jnp.zeros_like(c_sc)

    for layer in range(num_layers):
        w_ih = w_refs[3 * layer][...]                 # (D_l, 4*Hp)  mm_dtype
        w_hh = w_refs[3 * layer + 1][...]             # (Hp, 4*Hp)   mm_dtype
        bias = w_refs[3 * layer + 2][...]             # (1, 4*Hp)    f32

        # Layer input is already in mm_dtype (x cast in wrapper; seq_sc stored in mm_dtype).
        inp = x_ref[...] if layer == 0 else seq_sc[...]
        d_in = inp.shape[-1]

        # Chunked input projection: one large MXU matmul per chunk; bias folded in once
        # (hoisted out of the per-step recurrence).
        gx = jnp.dot(inp.reshape(Tc * Bc, d_in), w_ih,
                     preferred_element_type=jnp.float32) + bias
        gates_sc[...] = gx.reshape(Tc, Bc, 4 * Hp)

        last_layer = layer == num_layers - 1

        def _step(t, carry, layer=layer, w_hh=w_hh, last_layer=last_layer):
            # Skip padded tail timesteps entirely (no w_hh matmul, no transcendentals).
            @pl.when((t_blk * Tc + t) < seq_len)
            def _valid_step():
                h_prev = h_sc[layer]
                c_prev = c_sc[layer]
                g = gates_sc[t] + jnp.dot(h_prev.astype(mm_dtype), w_hh,
                                          preferred_element_type=jnp.float32)
                # Gate columns packed [i, f, o, g]: one contiguous sigmoid slab + tanh tail.
                sig = jax.nn.sigmoid(g[:, :3 * Hp])
                i_g = sig[:, 0 * Hp:1 * Hp]
                f_g = sig[:, 1 * Hp:2 * Hp]
                o_g = sig[:, 2 * Hp:3 * Hp]
                g_g = jnp.tanh(g[:, 3 * Hp:4 * Hp])
                c_new = f_g * c_prev + i_g * g_g
                h_new = o_g * jnp.tanh(c_new)
                h_sc[layer] = h_new
                c_sc[layer] = c_new
                if not last_layer:                    # last layer: only h[T-1] is consumed
                    seq_sc[t] = h_new.astype(mm_dtype)
            return carry

        lax.fori_loop(0, Tc, _step, 0, unroll=unroll)

    # Fused FC epilogue on the final hidden state of the top layer.
    @pl.when(t_blk == pl.num_programs(1) - 1)
    def _fc_epilogue():
        h_last = h_sc[num_layers - 1]
        out_ref[...] = (jnp.dot(h_last.astype(mm_dtype), fc_w_ref[...],
                                preferred_element_type=jnp.float32)
                        + fc_b_ref[...]).astype(out_ref.dtype)


# ---------------------------------------------------------------------------
# Wrapper helpers
# ---------------------------------------------------------------------------
def _round_up(x, m):
    return ((x + m - 1) // m) * m


def _detect_tpu():
    """Best-effort (vmem_capacity_bytes, is_v7x_like) detection; safe fallbacks."""
    is_v7x = False
    vmem_cap = None
    try:
        kind = jax.devices()[0].device_kind.lower()
        is_v7x = "v7" in kind
    except Exception:
        pass
    try:
        info = pltpu.get_tpu_info()
        for attr in ("vmem_capacity_bytes", "vmem_bytes", "vmem_size_bytes"):
            v = getattr(info, attr, None)
            if v:
                vmem_cap = int(v)
                break
    except Exception:
        pass
    if vmem_cap is None:
        vmem_cap = (64 << 20) if is_v7x else (128 << 20)
    is_v7x = is_v7x or vmem_cap <= (64 << 20)
    return vmem_cap, is_v7x


_GATE_PERM = (0, 1, 3, 2)   # PyTorch gate order [i, f, g, o] -> kernel [i, f, o, g]


def _prep_layer_weights(w_ih, w_hh, b_ih, b_hh, d_in_p, hidden_p, mm_dtype):
    four_h, d_in = w_ih.shape
    H = four_h // 4
    perm = jnp.array(_GATE_PERM)

    # (4H, d_in) -> (4, H, d_in) -> permute gates -> (d_in, 4, H) -> pad -> (d_in_p, 4*Hp)
    wih = jnp.transpose(w_ih.reshape(4, H, d_in)[perm], (2, 0, 1))
    wih = jnp.pad(wih, ((0, d_in_p - d_in), (0, 0), (0, hidden_p - H)))
    wih = wih.reshape(d_in_p, 4 * hidden_p).astype(mm_dtype)

    whh = jnp.transpose(w_hh.reshape(4, H, H)[perm], (2, 0, 1))
    whh = jnp.pad(whh, ((0, hidden_p - H), (0, 0), (0, hidden_p - H)))
    whh = whh.reshape(hidden_p, 4 * hidden_p).astype(mm_dtype)

    b = jnp.pad((b_ih + b_hh).reshape(4, H)[perm], ((0, 0), (0, hidden_p - H)))
    b = b.reshape(1, 4 * hidden_p).astype(jnp.float32)
    return wih, whh, b


# ---------------------------------------------------------------------------
# Wrapper
# ---------------------------------------------------------------------------
def lstm_forward(x, params, *, time_block=None, batch_block=None,
                 matmul_dtype=jnp.bfloat16):
    """x: (B, T, input_size) -> (B, output_size).  Matches LSTM.forward().

    Note: bf16 matmul operands (the default) re-cast h every timestep; rounding error
    compounds with very long sequences / many layers.  Use matmul_dtype=jnp.float32 for
    bit-tight numerics.
    """
    B, T, D = x.shape
    layers = params["lstm"]
    num_layers = len(layers)
    H = layers[0][1].shape[1]                 # w_hh: (4H, H)
    O = params["fc_w"].shape[0]

    Hp = _round_up(H, 128)                    # lane-align hidden / gates
    Dp = _round_up(D, 128)
    Op = _round_up(O, 128)                    # lane-dense output store
    Bp = _round_up(B, 8)                      # f32 sublane minimum

    vmem_cap, is_v7x = _detect_tpu()
    vmem_budget = max(vmem_cap - (8 << 20), 32 << 20)   # ~56 MiB v7x, ~120 MiB v5e/v6e

    # Batch tiling: split across the two TensorCores on v7x when batch allows; keep the
    # whole batch on the single TC on v5e/v6e (splitting only adds grid-step overhead
    # and shrinks the recurrent matmul's LHS rows there).
    if batch_block is None:
        if is_v7x and Bp >= 16:
            Bc = _round_up(pl.cdiv(Bp, 2), 8)
        else:
            Bc = Bp
    else:
        Bc = _round_up(max(batch_block, 8), 8)
    Bp = _round_up(Bp, Bc)
    n_b = Bp // Bc

    mm_isz = jnp.finfo(matmul_dtype).bits // 8

    # Resident weight bytes (single-buffered).
    w_bytes = sum(((Dp if li == 0 else Hp) * 4 * Hp + Hp * 4 * Hp) * mm_isz
                  + 4 * Hp * 4 for li in range(num_layers))
    w_bytes += Hp * Op * mm_isz + Op * 4

    # Time chunk: bigger on v5e/v6e (feeds the MXU / amortizes grid-step overhead),
    # smaller on v7x (64 MiB VMEM); auto-shrink until everything fits the budget.
    if time_block is None:
        time_block = 8 if is_v7x else 32
    Tc = max(1, min(time_block, T))

    def _est_bytes(tc, single_buf_w):
        scratch = (2 * num_layers * Bc * Hp * 4            # h, c state (f32)
                   + tc * Bc * Hp * mm_isz                 # layer-to-layer buffer
                   + tc * Bc * 4 * Hp * 4)                 # gate preactivations (f32)
        tiles = 2 * tc * Bc * Dp * mm_isz + 2 * Bc * Op * 4
        return (1 if single_buf_w else 2) * w_bytes + tiles + scratch + (4 << 20)

    while Tc > 1 and _est_bytes(Tc, True) > vmem_budget:
        Tc = max(1, Tc // 2)

    n_t = pl.cdiv(T, Tc)
    Tp = n_t * Tc

    # Full unroll for small Tc; partial unroll otherwise to bound vreg pressure.
    unroll = Tc if Tc <= 8 else max(1, math.gcd(Tc, 4))

    # Time-major, zero-padded input in matmul dtype (halves HBM DMA bytes for bf16).
    xt = jnp.swapaxes(x, 0, 1)                                          # (T, B, D)
    xt = jnp.pad(xt, ((0, Tp - T), (0, Bp - B), (0, Dp - D))).astype(matmul_dtype)

    weight_args = []
    for li, (w_ih, w_hh, b_ih, b_hh) in enumerate(layers):
        d_in_p = Dp if li == 0 else Hp
        weight_args += list(_prep_layer_weights(w_ih, w_hh, b_ih, b_hh,
                                                d_in_p, Hp, matmul_dtype))
    fc_w = jnp.pad(jnp.transpose(params["fc_w"]),
                   ((0, Hp - H), (0, Op - O))).astype(matmul_dtype)
    fc_b = jnp.pad(params["fc_b"], (0, Op - O)).reshape(1, Op).astype(jnp.float32)
    args = [xt] + weight_args + [fc_w, fc_b]

    # Advisory cost estimate so XLA schedules surrounding ops around the fused kernel.
    flops = 2 * B * H * O
    for li in range(num_layers):
        d_in = D if li == 0 else H
        flops += 2 * T * B * (d_in * 4 * H + H * 4 * H)
    transcendentals = num_layers * T * B * 5 * H
    bytes_accessed = B * T * D * mm_isz + w_bytes + B * O * 4
    cost = pl.CostEstimate(flops=int(flops), transcendentals=int(transcendentals),
                           bytes_accessed=int(bytes_accessed))

    kernel = functools.partial(
        lstm_stack_kernel, num_layers=num_layers, hidden_p=Hp, time_chunk=Tc,
        seq_len=T, batch_chunk=Bc, mm_dtype=matmul_dtype, unroll=unroll)

    scratch_shapes = [
        pltpu.VMEM((num_layers, Bc, Hp), jnp.float32),    # h state per layer
        pltpu.VMEM((num_layers, Bc, Hp), jnp.float32),    # c state per layer
        pltpu.VMEM((Tc, Bc, Hp), matmul_dtype),           # layer-to-layer chunk buffer
        pltpu.VMEM((Tc, Bc, 4 * Hp), jnp.float32),        # per-chunk gate preactivations
    ]

    def _run(single_buffer_weights):
        # Grid-invariant weights need no double buffering; Buffered(1) frees ~w_bytes VMEM.
        w_mode = ({"pipeline_mode": pl.Buffered(1)} if single_buffer_weights else {})
        in_specs = [pl.BlockSpec((Tc, Bc, Dp), lambda b, t: (t, b, 0))]
        for li in range(num_layers):
            d_in_p = Dp if li == 0 else Hp
            in_specs += [pl.BlockSpec((d_in_p, 4 * Hp), lambda b, t: (0, 0), **w_mode),
                         pl.BlockSpec((Hp, 4 * Hp), lambda b, t: (0, 0), **w_mode),
                         pl.BlockSpec((1, 4 * Hp), lambda b, t: (0, 0), **w_mode)]
        in_specs += [pl.BlockSpec((Hp, Op), lambda b, t: (0, 0), **w_mode),
                     pl.BlockSpec((1, Op), lambda b, t: (0, 0), **w_mode)]

        vmem_limit = int(min(max(_est_bytes(Tc, single_buffer_weights), 32 << 20),
                             vmem_budget))
        return pl.pallas_call(
            kernel,
            out_shape=jax.ShapeDtypeStruct((Bp, Op), jnp.float32),
            grid=(n_b, n_t),
            in_specs=in_specs,
            out_specs=pl.BlockSpec((Bc, Op), lambda b, t: (b, 0)),
            scratch_shapes=scratch_shapes,
            compiler_params=pltpu.CompilerParams(
                dimension_semantics=("parallel", "arbitrary"),
                vmem_limit_bytes=vmem_limit),
            cost_estimate=cost,
        )(*args)

    try:
        out = _run(True)
    except Exception:
        # Fallback: installed JAX rejects pipeline_mode on this path -> default buffering.
        out = _run(False)
    return out[:B, :O]


# ---------------------------------------------------------------------------
# Deterministic parameter init (matches nn.LSTM / nn.Linear shapes)
# ---------------------------------------------------------------------------
def init_params(key, input_size, hidden_size, num_layers, output_size):
    params = {"lstm": []}
    stdv = 1.0 / jnp.sqrt(hidden_size)
    for layer in range(num_layers):
        d_in = input_size if layer == 0 else hidden_size
        key, k1, k2, k3, k4 = jax.random.split(key, 5)
        w_ih = jax.random.uniform(k1, (4 * hidden_size, d_in), jnp.float32, -stdv, stdv)
        w_hh = jax.random.uniform(k2, (4 * hidden_size, hidden_size), jnp.float32, -stdv, stdv)
        b_ih = jax.random.uniform(k3, (4 * hidden_size,), jnp.float32, -stdv, stdv)
        b_hh = jax.random.uniform(k4, (4 * hidden_size,), jnp.float32, -stdv, stdv)
        params["lstm"].append((w_ih, w_hh, b_ih, b_hh))
    key, k1, k2 = jax.random.split(key, 3)
    params["fc_w"] = jax.random.uniform(k1, (output_size, hidden_size), jnp.float32, -stdv, stdv)
    params["fc_b"] = jax.random.uniform(k2, (output_size,), jnp.float32, -stdv, stdv)
    return params


# ---------------------------------------------------------------------------
# Pure-JAX reference (same semantics as torch.nn.LSTM forward + Linear)
# ---------------------------------------------------------------------------
def reference_forward(x_btd, params):
    def one_layer(x, w_ih, w_hh, b_ih, b_hh):
        B = x.shape[0]
        H = w_hh.shape[1]

        def step(carry, x_t):
            h, c = carry
            gates = x_t @ w_ih.T + h @ w_hh.T + b_ih + b_hh
            i, f, g, o = jnp.split(gates, 4, axis=-1)
            c = jax.nn.sigmoid(f) * c + jax.nn.sigmoid(i) * jnp.tanh(g)
            h = jax.nn.sigmoid(o) * jnp.tanh(c)
            return (h, c), h

        init = (jnp.zeros((B, H), jnp.float32), jnp.zeros((B, H), jnp.float32))
        _, hs = lax.scan(step, init, jnp.swapaxes(x, 0, 1))
        return jnp.swapaxes(hs, 0, 1)

    h = x_btd
    for layer in params["lstm"]:
        h = one_layer(h, *layer)
    return h[:, -1, :] @ params["fc_w"].T + params["fc_b"]


# ---------------------------------------------------------------------------
if __name__ == "__main__":
    input_size, hidden_size, num_layers, output_size = 16, 32, 2, 4
    B, T = 2, 8

    key = jax.random.PRNGKey(0)
    key, kx = jax.random.split(key)
    x = jax.random.normal(kx, (B, T, input_size), jnp.float32)
    params = init_params(key, input_size, hidden_size, num_layers, output_size)

    ref = reference_forward(x, params)

    # f32 MXU-operand path, even time chunking (2 time blocks -> cross-block state carry).
    out_f32 = jax.block_until_ready(
        lstm_forward(x, params, time_block=4, matmul_dtype=jnp.float32))
    assert out_f32.shape == (B, output_size), out_f32.shape
    assert jnp.allclose(out_f32, ref, atol=1e-4, rtol=1e-4), (
        f"max abs diff {jnp.max(jnp.abs(out_f32 - ref))}")

    # Ragged time chunking (T=8, Tc=3 -> padded tail timesteps skipped in-kernel).
    out_ragged = jax.block_until_ready(
        lstm_forward(x, params, time_block=3, matmul_dtype=jnp.float32))
    assert jnp.allclose(out_ragged, ref, atol=1e-4, rtol=1e-4), (
        f"max abs diff {jnp.max(jnp.abs(out_ragged - ref))}")

    # Default path: bf16 MXU operands + auto Tc/Bc/VMEM cap (f32 accumulation & gate
    # math) — loose numerical check due to bf16 operand rounding.
    out_def = jax.block_until_ready(lstm_forward(x, params))
    assert out_def.shape == (B, output_size)
    assert bool(jnp.all(jnp.isfinite(out_def)))
    assert float(jnp.max(jnp.abs(out_def - ref))) < 0.25, (
        f"max abs diff {jnp.max(jnp.abs(out_def - ref))}")

    print("KERNEL_OK")
</pallas_src>

<mosaic_0001>
module attributes {stable_mosaic.version = 11 : i64} {
  func.func @lstm_stack_kernel(%arg0: i32, %arg1: i32, %arg2: memref<4x8x128xf32, #tpu.memory_space<vmem>>, %arg3: memref<128x512xf32, #tpu.memory_space<vmem>>, %arg4: memref<128x512xf32, #tpu.memory_space<vmem>>, %arg5: memref<1x512xf32, #tpu.memory_space<vmem>>, %arg6: memref<128x512xf32, #tpu.memory_space<vmem>>, %arg7: memref<128x512xf32, #tpu.memory_space<vmem>>, %arg8: memref<1x512xf32, #tpu.memory_space<vmem>>, %arg9: memref<128x128xf32, #tpu.memory_space<vmem>>, %arg10: memref<1x128xf32, #tpu.memory_space<vmem>>, %arg11: memref<8x128xf32, #tpu.memory_space<vmem>>, %arg12: memref<2x8x128xf32, #tpu.memory_space<vmem>>, %arg13: memref<2x8x128xf32, #tpu.memory_space<vmem>>, %arg14: memref<4x8x128xf32, #tpu.memory_space<vmem>>, %arg15: memref<4x8x512xf32, #tpu.memory_space<vmem>>) attributes {dimension_semantics = [#tpu.dimension_semantics<parallel>, #tpu.dimension_semantics<arbitrary>], iteration_bounds = array<i64: 1, 2>, scalar_prefetch = 0 : i64, scratch_operands = 4 : i64, tpu.core_type = #tpu.core_type<tc>, window_params = [{transform_indices = @transform_0, window_bounds = array<i64: 4, 8, 128>}, {pipeline_mode = #tpu.pipeline_mode<synchronous>, transform_indices = @transform_1, window_bounds = array<i64: 128, 512>}, {pipeline_mode = #tpu.pipeline_mode<synchronous>, transform_indices = @transform_2, window_bounds = array<i64: 128, 512>}, {pipeline_mode = #tpu.pipeline_mode<synchronous>, transform_indices = @transform_3, window_bounds = array<i64: 1, 512>}, {pipeline_mode = #tpu.pipeline_mode<synchronous>, transform_indices = @transform_4, window_bounds = array<i64: 128, 512>}, {pipeline_mode = #tpu.pipeline_mode<synchronous>, transform_indices = @transform_5, window_bounds = array<i64: 128, 512>}, {pipeline_mode = #tpu.pipeline_mode<synchronous>, transform_indices = @transform_6, window_bounds = array<i64: 1, 512>}, {pipeline_mode = #tpu.pipeline_mode<synchronous>, transform_indices = @transform_7, window_bounds = array<i64: 128, 128>}, {pipeline_mode = #tpu.pipeline_mode<synchronous>, transform_indices = @transform_8, window_bounds = array<i64: 1, 128>}, {transform_indices = @transform_9, window_bounds = array<i64: 8, 128>}]} {
    %c0_i32 = arith.constant 0 : i32
    %0 = arith.cmpi eq, %arg1, %c0_i32 : i32
    %1 = arith.extui %0 : i1 to i32
    %c0_i32_0 = arith.constant 0 : i32
    %2 = arith.cmpi ne, %1, %c0_i32_0 : i32
    scf.if %2 {
      %cst_56 = arith.constant 0.000000e+00 : f32
      %66 = vector.broadcast %cst_56 : f32 to vector<2x8x128xf32>
      %c0_57 = arith.constant 0 : index
      %c0_58 = arith.constant 0 : index
      %c0_59 = arith.constant 0 : index
      %67 = vector.load %arg12[%c0_57, %c0_58, %c0_59] : memref<2x8x128xf32, #tpu.memory_space<vmem>>, vector<2x8x128xf32>
      tpu.vector_store %arg12[%c0_57, %c0_58, %c0_59], %66 {strides = array<i32>} : memref<2x8x128xf32, #tpu.memory_space<vmem>>, vector<2x8x128xf32>,
      %cst_60 = arith.constant 0.000000e+00 : f32
      %68 = vector.broadcast %cst_60 : f32 to vector<2x8x128xf32>
      %c0_61 = arith.constant 0 : index
      %c0_62 = arith.constant 0 : index
      %c0_63 = arith.constant 0 : index
      %69 = vector.load %arg13[%c0_61, %c0_62, %c0_63] : memref<2x8x128xf32, #tpu.memory_space<vmem>>, vector<2x8x128xf32>
      tpu.vector_store %arg13[%c0_61, %c0_62, %c0_63], %68 {strides = array<i32>} : memref<2x8x128xf32, #tpu.memory_space<vmem>>, vector<2x8x128xf32>,
    } else {
    }
    %c0 = arith.constant 0 : index
    %c0_1 = arith.constant 0 : index
    %3 = vector.load %arg3[%c0, %c0_1] : memref<128x512xf32, #tpu.memory_space<vmem>>, vector<128x512xf32>
    %c0_2 = arith.constant 0 : index
    %c0_3 = arith.constant 0 : index
    %4 = vector.load %arg4[%c0_2, %c0_3] : memref<128x512xf32, #tpu.memory_space<vmem>>, vector<128x512xf32>
    %c0_4 = arith.constant 0 : index
    %c0_5 = arith.constant 0 : index
    %5 = vector.load %arg5[%c0_4, %c0_5] : memref<1x512xf32, #tpu.memory_space<vmem>>, vector<1x512xf32>
    %c0_6 = arith.constant 0 : index
    %c0_7 = arith.constant 0 : index
    %c0_8 = arith.constant 0 : index
    %6 = vector.load %arg2[%c0_6, %c0_7, %c0_8] : memref<4x8x128xf32, #tpu.memory_space<vmem>>, vector<4x8x128xf32>
    %7 = vector.shape_cast %6 : vector<4x8x128xf32> to vector<32x128xf32>
    %cst = arith.constant dense<0.000000e+00> : vector<32x512xf32>
    %8 = tpu.matmul %7, %3, %cst {dimension_numbers = #tpu.dot_dimension_numbers<[1], [0], [0], [1], [0, 0, 1, 1], [], []>} : vector<32x128xf32>, vector<128x512xf32>, vector<32x512xf32> -> vector<32x512xf32>
    %9 = vector.broadcast %5 : vector<1x512xf32> to vector<32x512xf32>
    %10 = arith.addf %8, %9 : vector<32x512xf32>
    %11 = vector.shape_cast %10 : vector<32x512xf32> to vector<4x8x512xf32>
    %c0_9 = arith.constant 0 : index
    %c0_10 = arith.constant 0 : index
    %c0_11 = arith.constant 0 : index
    %12 = vector.load %arg15[%c0_9, %c0_10, %c0_11] : memref<4x8x512xf32, #tpu.memory_space<vmem>>, vector<4x8x512xf32>
    tpu.vector_store %arg15[%c0_9, %c0_10, %c0_11], %11 {strides = array<i32>} : memref<4x8x512xf32, #tpu.memory_space<vmem>>, vector<4x8x512xf32>,
    %c0_i32_12 = arith.constant 0 : i32
    %c4_i32 = arith.constant 4 : i32
    %13 = arith.muli %arg1, %c4_i32 : i32
    %14 = arith.addi %13, %c0_i32_12 : i32
    %c8_i32 = arith.constant 8 : i32
    %15 = arith.cmpi slt, %14, %c8_i32 : i32
    %16 = arith.extui %15 : i1 to i32
    %c0_i32_13 = arith.constant 0 : i32
    %17 = arith.cmpi ne, %16, %c0_i32_13 : i32
    scf.if %17 {
      %c0_56 = arith.constant 0 : index
      %c0_57 = arith.constant 0 : index
      %c0_58 = arith.constant 0 : index
      %66 = vector.load %arg12[%c0_56, %c0_57, %c0_58] : memref<2x8x128xf32, #tpu.memory_space<vmem>>, vector<1x8x128xf32>
      %67 = vector.shape_cast %66 : vector<1x8x128xf32> to vector<8x128xf32>
      %c0_59 = arith.constant 0 : index
      %c0_60 = arith.constant 0 : index
      %c0_61 = arith.constant 0 : index
      %68 = vector.load %arg13[%c0_59, %c0_60, %c0_61] : memref<2x8x128xf32, #tpu.memory_space<vmem>>, vector<1x8x128xf32>
      %69 = vector.shape_cast %68 : vector<1x8x128xf32> to vector<8x128xf32>
      %70 = arith.index_cast %c0_i32_12 : i32 to index
      %c0_62 = arith.constant 0 : index
      %c0_63 = arith.constant 0 : index
      %71 = vector.load %arg15[%70, %c0_62, %c0_63] : memref<4x8x512xf32, #tpu.memory_space<vmem>>, vector<1x8x512xf32>
      %72 = vector.shape_cast %71 : vector<1x8x512xf32> to vector<8x512xf32>
      %cst_64 = arith.constant dense<0.000000e+00> : vector<8x512xf32>
      %73 = tpu.matmul %67, %4, %cst_64 {dimension_numbers = #tpu.dot_dimension_numbers<[1], [0], [0], [1], [0, 0, 1, 1], [], []>} : vector<8x128xf32>, vector<128x512xf32>, vector<8x512xf32> -> vector<8x512xf32>
      %74 = arith.addf %72, %73 : vector<8x512xf32>
      %75 = vector.extract_strided_slice %74 {offsets = [0, 0], sizes = [8, 384], strides = [1, 1]} : vector<8x512xf32> to vector<8x384xf32>
      %76 = arith.negf %75 : vector<8x384xf32>
      %77 = math.exp %76 : vector<8x384xf32>
      %cst_65 = arith.constant 1.000000e+00 : f32
      %78 = vector.broadcast %cst_65 : f32 to vector<8x384xf32>
      %79 = arith.addf %78, %77 : vector<8x384xf32>
      %80 = arith.divf %78, %79 : vector<8x384xf32>
      %81 = vector.extract_strided_slice %80 {offsets = [0, 0], sizes = [8, 128], strides = [1, 1]} : vector<8x384xf32> to vector<8x128xf32>
      %82 = vector.extract_strided_slice %80 {offsets = [0, 128], sizes = [8, 128], strides = [1, 1]} : vector<8x384xf32> to vector<8x128xf32>
      %83 = vector.extract_strided_slice %80 {offsets = [0, 256], sizes = [8, 128], strides = [1, 1]} : vector<8x384xf32> to vector<8x128xf32>
      %84 = vector.extract_strided_slice %74 {offsets = [0, 384], sizes = [8, 128], strides = [1, 1]} : vector<8x512xf32> to vector<8x128xf32>
      %85 = math.tanh %84 : vector<8x128xf32>
      %86 = arith.mulf %82, %69 : vector<8x128xf32>
      %87 = arith.mulf %81, %85 : vector<8x128xf32>
      %88 = arith.addf %86, %87 : vector<8x128xf32>
      %89 = math.tanh %88 : vector<8x128xf32>
      %90 = arith.mulf %83, %89 : vector<8x128xf32>
      %c0_66 = arith.constant 0 : index
      %c0_67 = arith.constant 0 : index
      %c0_68 = arith.constant 0 : index
      %91 = vector.load %arg12[%c0_66, %c0_67, %c0_68] : memref<2x8x128xf32, #tpu.memory_space<vmem>>, vector<1x8x128xf32>
      %92 = vector.shape_cast %91 : vector<1x8x128xf32> to vector<8x128xf32>
      %93 = vector.shape_cast %90 : vector<8x128xf32> to vector<1x8x128xf32>
      tpu.vector_store %arg12[%c0_66, %c0_67, %c0_68], %93 {strides = array<i32>} : memref<2x8x128xf32, #tpu.memory_space<vmem>>, vector<1x8x128xf32>,
      %c0_69 = arith.constant 0 : index
      %c0_70 = arith.constant 0 : index
      %c0_71 = arith.constant 0 : index
      %94 = vector.load %arg13[%c0_69, %c0_70, %c0_71] : memref<2x8x128xf32, #tpu.memory_space<vmem>>, vector<1x8x128xf32>
      %95 = vector.shape_cast %94 : vector<1x8x128xf32> to vector<8x128xf32>
      %96 = vector.shape_cast %88 : vector<8x128xf32> to vector<1x8x128xf32>
      tpu.vector_store %arg13[%c0_69, %c0_70, %c0_71], %96 {strides = array<i32>} : memref<2x8x128xf32, #tpu.memory_space<vmem>>, vector<1x8x128xf32>,
      %97 = arith.index_cast %c0_i32_12 : i32 to index
      %c0_72 = arith.constant 0 : index
      %c0_73 = arith.constant 0 : index
      %98 = vector.load %arg14[%97, %c0_72, %c0_73] : memref<4x8x128xf32, #tpu.memory_space<vmem>>, vector<1x8x128xf32>
      %99 = vector.shape_cast %98 : vector<1x8x128xf32> to vector<8x128xf32>
      %100 = vector.shape_cast %90 : vector<8x128xf32> to vector<1x8x128xf32>
      tpu.vector_store %arg14[%97, %c0_72, %c0_73], %100 {strides = array<i32>} : memref<4x8x128xf32, #tpu.memory_space<vmem>>, vector<1x8x128xf32>,
    } else {
    }
    %c1_i32 = arith.constant 1 : i32
    %c4_i32_14 = arith.constant 4 : i32
    %18 = arith.muli %arg1, %c4_i32_14 : i32
    %19 = arith.addi %18, %c1_i32 : i32
    %c8_i32_15 = arith.constant 8 : i32
    %20 = arith.cmpi slt, %19, %c8_i32_15 : i32
    %21 = arith.extui %20 : i1 to i32
    %c0_i32_16 = arith.constant 0 : i32
    %22 = arith.cmpi ne, %21, %c0_i32_16 : i32
    scf.if %22 {
      %c0_56 = arith.constant 0 : index
      %c0_57 = arith.constant 0 : index
      %c0_58 = arith.constant 0 : index
      %66 = vector.load %arg12[%c0_56, %c0_57, %c0_58] : memref<2x8x128xf32, #tpu.memory_space<vmem>>, vector<1x8x128xf32>
      %67 = vector.shape_cast %66 : vector<1x8x128xf32> to vector<8x128xf32>
      %c0_59 = arith.constant 0 : index
      %c0_60 = arith.constant 0 : index
      %c0_61 = arith.constant 0 : index
      %68 = vector.load %arg13[%c0_59, %c0_60, %c0_61] : memref<2x8x128xf32, #tpu.memory_space<vmem>>, vector<1x8x128xf32>
      %69 = vector.shape_cast %68 : vector<1x8x128xf32> to vector<8x128xf32>
      %70 = arith.index_cast %c1_i32 : i32 to index
      %c0_62 = arith.constant 0 : index
      %c0_63 = arith.constant 0 : index
      %71 = vector.load %arg15[%70, %c0_62, %c0_63] : memref<4x8x512xf32, #tpu.memory_space<vmem>>, vector<1x8x512xf32>
      %72 = vector.shape_cast %71 : vector<1x8x512xf32> to vector<8x512xf32>
      %cst_64 = arith.constant dense<0.000000e+00> : vector<8x512xf32>
      %73 = tpu.matmul %67, %4, %cst_64 {dimension_numbers = #tpu.dot_dimension_numbers<[1], [0], [0], [1], [0, 0, 1, 1], [], []>} : vector<8x128xf32>, vector<128x512xf32>, vector<8x512xf32> -> vector<8x512xf32>
      %74 = arith.addf %72, %73 : vector<8x512xf32>
      %75 = vector.extract_strided_slice %74 {offsets = [0, 0], sizes = [8, 384], strides = [1, 1]} : vector<8x512xf32> to vector<8x384xf32>
      %76 = arith.negf %75 : vector<8x384xf32>
      %77 = math.exp %76 : vector<8x384xf32>
      %cst_65 = arith.constant 1.000000e+00 : f32
      %78 = vector.broadcast %cst_65 : f32 to vector<8x384xf32>
      %79 = arith.addf %78, %77 : vector<8x384xf32>
      %80 = arith.divf %78, %79 : vector<8x384xf32>
      %81 = vector.extract_strided_slice %80 {offsets = [0, 0], sizes = [8, 128], strides = [1, 1]} : vector<8x384xf32> to vector<8x128xf32>
      %82 = vector.extract_strided_slice %80 {offsets = [0, 128], sizes = [8, 128], strides = [1, 1]} : vector<8x384xf32> to vector<8x128xf32>
      %83 = vector.extract_strided_slice %80 {offsets = [0, 256], sizes = [8, 128], strides = [1, 1]} : vector<8x384xf32> to vector<8x128xf32>
      %84 = vector.extract_strided_slice %74 {offsets = [0, 384], sizes = [8, 128], strides = [1, 1]} : vector<8x512xf32> to vector<8x128xf32>
      %85 = math.tanh %84 : vector<8x128xf32>
      %86 = arith.mulf %82, %69 : vector<8x128xf32>
      %87 = arith.mulf %81, %85 : vector<8x128xf32>
      %88 = arith.addf %86, %87 : vector<8x128xf32>
      %89 = math.tanh %88 : vector<8x128xf32>
      %90 = arith.mulf %83, %89 : vector<8x128xf32>
      %c0_66 = arith.constant 0 : index
      %c0_67 = arith.constant 0 : index
      %c0_68 = arith.constant 0 : index
      %91 = vector.load %arg12[%c0_66, %c0_67, %c0_68] : memref<2x8x128xf32, #tpu.memory_space<vmem>>, vector<1x8x128xf32>
      %92 = vector.shape_cast %91 : vector<1x8x128xf32> to vector<8x128xf32>
      %93 = vector.shape_cast %90 : vector<8x128xf32> to vector<1x8x128xf32>
      tpu.vector_store %arg12[%c0_66, %c0_67, %c0_68], %93 {strides = array<i32>} : memref<2x8x128xf32, #tpu.memory_space<vmem>>, vector<1x8x128xf32>,
      %c0_69 = arith.constant 0 : index
      %c0_70 = arith.constant 0 : index
      %c0_71 = arith.constant 0 : index
      %94 = vector.load %arg13[%c0_69, %c0_70, %c0_71] : memref<2x8x128xf32, #tpu.memory_space<vmem>>, vector<1x8x128xf32>
      %95 = vector.shape_cast %94 : vector<1x8x128xf32> to vector<8x128xf32>
      %96 = vector.shape_cast %88 : vector<8x128xf32> to vector<1x8x128xf32>
      tpu.vector_store %arg13[%c0_69, %c0_70, %c0_71], %96 {strides = array<i32>} : memref<2x8x128xf32, #tpu.memory_space<vmem>>, vector<1x8x128xf32>,
      %97 = arith.index_cast %c1_i32 : i32 to index
      %c0_72 = arith.constant 0 : index
      %c0_73 = arith.constant 0 : index
      %98 = vector.load %arg14[%97, %c0_72, %c0_73] : memref<4x8x128xf32, #tpu.memory_space<vmem>>, vector<1x8x128xf32>
      %99 = vector.shape_cast %98 : vector<1x8x128xf32> to vector<8x128xf32>
      %100 = vector.shape_cast %90 : vector<8x128xf32> to vector<1x8x128xf32>
      tpu.vector_store %arg14[%97, %c0_72, %c0_73], %100 {strides = array<i32>} : memref<4x8x128xf32, #tpu.memory_space<vmem>>, vector<1x8x128xf32>,
    } else {
    }
    %c2_i32 = arith.constant 2 : i32
    %c4_i32_17 = arith.constant 4 : i32
    %23 = arith.muli %arg1, %c4_i32_17 : i32
    %24 = arith.addi %23, %c2_i32 : i32
    %c8_i32_18 = arith.constant 8 : i32
    %25 = arith.cmpi slt, %24, %c8_i32_18 : i32
    %26 = arith.extui %25 : i1 to i32
    %c0_i32_19 = arith.constant 0 : i32
    %27 = arith.cmpi ne, %26, %c0_i32_19 : i32
    scf.if %27 {
      %c0_56 = arith.constant 0 : index
      %c0_57 = arith.constant 0 : index
      %c0_58 = arith.constant 0 : index
      %66 = vector.load %arg12[%c0_56, %c0_57, %c0_58] : memref<2x8x128xf32, #tpu.memory_space<vmem>>, vector<1x8x128xf32>
      %67 = vector.shape_cast %66 : vector<1x8x128xf32> to vector<8x128xf32>
      %c0_59 = arith.constant 0 : index
      %c0_60 = arith.constant 0 : index
      %c0_61 = arith.constant 0 : index
      %68 = vector.load %arg13[%c0_59, %c0_60, %c0_61] : memref<2x8x128xf32, #tpu.memory_space<vmem>>, vector<1x8x128xf32>
      %69 = vector.shape_cast %68 : vector<1x8x128xf32> to vector<8x128xf32>
      %70 = arith.index_cast %c2_i32 : i32 to index
      %c0_62 = arith.constant 0 : index
      %c0_63 = arith.constant 0 : index
      %71 = vector.load %arg15[%70, %c0_62, %c0_63] : memref<4x8x512xf32, #tpu.memory_space<vmem>>, vector<1x8x512xf32>
      %72 = vector.shape_cast %71 : vector<1x8x512xf32> to vector<8x512xf32>
      %cst_64 = arith.constant dense<0.000000e+00> : vector<8x512xf32>
      %73 = tpu.matmul %67, %4, %cst_64 {dimension_numbers = #tpu.dot_dimension_numbers<[1], [0], [0], [1], [0, 0, 1, 1], [], []>} : vector<8x128xf32>, vector<128x512xf32>, vector<8x512xf32> -> vector<8x512xf32>
      %74 = arith.addf %72, %73 : vector<8x512xf32>
      %75 = vector.extract_strided_slice %74 {offsets = [0, 0], sizes = [8, 384], strides = [1, 1]} : vector<8x512xf32> to vector<8x384xf32>
      %76 = arith.negf %75 : vector<8x384xf32>
      %77 = math.exp %76 : vector<8x384xf32>
      %cst_65 = arith.constant 1.000000e+00 : f32
      %78 = vector.broadcast %cst_65 : f32 to vector<8x384xf32>
      %79 = arith.addf %78, %77 : vector<8x384xf32>
      %80 = arith.divf %78, %79 : vector<8x384xf32>
      %81 = vector.extract_strided_slice %80 {offsets = [0, 0], sizes = [8, 128], strides = [1, 1]} : vector<8x384xf32> to vector<8x128xf32>
      %82 = vector.extract_strided_slice %80 {offsets = [0, 128], sizes = [8, 128], strides = [1, 1]} : vector<8x384xf32> to vector<8x128xf32>
      %83 = vector.extract_strided_slice %80 {offsets = [0, 256], sizes = [8, 128], strides = [1, 1]} : vector<8x384xf32> to vector<8x128xf32>
      %84 = vector.extract_strided_slice %74 {offsets = [0, 384], sizes = [8, 128], strides = [1, 1]} : vector<8x512xf32> to vector<8x128xf32>
      %85 = math.tanh %84 : vector<8x128xf32>
      %86 = arith.mulf %82, %69 : vector<8x128xf32>
      %87 = arith.mulf %81, %85 : vector<8x128xf32>
      %88 = arith.addf %86, %87 : vector<8x128xf32>
      %89 = math.tanh %88 : vector<8x128xf32>
      %90 = arith.mulf %83, %89 : vector<8x128xf32>
      %c0_66 = arith.constant 0 : index
      %c0_67 = arith.constant 0 : index
      %c0_68 = arith.constant 0 : index
      %91 = vector.load %arg12[%c0_66, %c0_67, %c0_68] : memref<2x8x128xf32, #tpu.memory_space<vmem>>, vector<1x8x128xf32>
      %92 = vector.shape_cast %91 : vector<1x8x128xf32> to vector<8x128xf32>
      %93 = vector.shape_cast %90 : vector<8x128xf32> to vector<1x8x128xf32>
      tpu.vector_store %arg12[%c0_66, %c0_67, %c0_68], %93 {strides = array<i32>} : memref<2x8x128xf32, #tpu.memory_space<vmem>>, vector<1x8x128xf32>,
      %c0_69 = arith.constant 0 : index
      %c0_70 = arith.constant 0 : index
      %c0_71 = arith.constant 0 : index
      %94 = vector.load %arg13[%c0_69, %c0_70, %c0_71] : memref<2x8x128xf32, #tpu.memory_space<vmem>>, vector<1x8x128xf32>
      %95 = vector.shape_cast %94 : vector<1x8x128xf32> to vector<8x128xf32>
      %96 = vector.shape_cast %88 : vector<8x128xf32> to vector<1x8x128xf32>
      tpu.vector_store %arg13[%c0_69, %c0_70, %c0_71], %96 {strides = array<i32>} : memref<2x8x128xf32, #tpu.memory_space<vmem>>, vector<1x8x128xf32>,
      %97 = arith.index_cast %c2_i32 : i32 to index
      %c0_72 = arith.constant 0 : index
      %c0_73 = arith.constant 0 : index
      %98 = vector.load %arg14[%97, %c0_72, %c0_73] : memref<4x8x128xf32, #tpu.memory_space<vmem>>, vector<1x8x128xf32>
      %99 = vector.shape_cast %98 : vector<1x8x128xf32> to vector<8x128xf32>
      %100 = vector.shape_cast %90 : vector<8x128xf32> to vector<1x8x128xf32>
      tpu.vector_store %arg14[%97, %c0_72, %c0_73], %100 {strides = array<i32>} : memref<4x8x128xf32, #tpu.memory_space<vmem>>, vector<1x8x128xf32>,
    } else {
    }
    %c3_i32 = arith.constant 3 : i32
    %c4_i32_20 = arith.constant 4 : i32
    %28 = arith.muli %arg1, %c4_i32_20 : i32
    %29 = arith.addi %28, %c3_i32 : i32
    %c8_i32_21 = arith.constant 8 : i32
    %30 = arith.cmpi slt, %29, %c8_i32_21 : i32
    %31 = arith.extui %30 : i1 to i32
    %c0_i32_22 = arith.constant 0 : i32
    %32 = arith.cmpi ne, %31, %c0_i32_22 : i32
    scf.if %32 {
      %c0_56 = arith.constant 0 : index
      %c0_57 = arith.constant 0 : index
      %c0_58 = arith.constant 0 : index
      %66 = vector.load %arg12[%c0_56, %c0_57, %c0_58] : memref<2x8x128xf32, #tpu.memory_space<vmem>>, vector<1x8x128xf32>
      %67 = vector.shape_cast %66 : vector<1x8x128xf32> to vector<8x128xf32>
      %c0_59 = arith.constant 0 : index
      %c0_60 = arith.constant 0 : index
      %c0_61 = arith.constant 0 : index
      %68 = vector.load %arg13[%c0_59, %c0_60, %c0_61] : memref<2x8x128xf32, #tpu.memory_space<vmem>>, vector<1x8x128xf32>
      %69 = vector.shape_cast %68 : vector<1x8x128xf32> to vector<8x128xf32>
      %70 = arith.index_cast %c3_i32 : i32 to index
      %c0_62 = arith.constant 0 : index
      %c0_63 = arith.constant 0 : index
      %71 = vector.load %arg15[%70, %c0_62, %c0_63] : memref<4x8x512xf32, #tpu.memory_space<vmem>>, vector<1x8x512xf32>
      %72 = vector.shape_cast %71 : vector<1x8x512xf32> to vector<8x512xf32>
      %cst_64 = arith.constant dense<0.000000e+00> : vector<8x512xf32>
      %73 = tpu.matmul %67, %4, %cst_64 {dimension_numbers = #tpu.dot_dimension_numbers<[1], [0], [0], [1], [0, 0, 1, 1], [], []>} : vector<8x128xf32>, vector<128x512xf32>, vector<8x512xf32> -> vector<8x512xf32>
      %74 = arith.addf %72, %73 : vector<8x512xf32>
      %75 = vector.extract_strided_slice %74 {offsets = [0, 0], sizes = [8, 384], strides = [1, 1]} : vector<8x512xf32> to vector<8x384xf32>
      %76 = arith.negf %75 : vector<8x384xf32>
      %77 = math.exp %76 : vector<8x384xf32>
      %cst_65 = arith.constant 1.000000e+00 : f32
      %78 = vector.broadcast %cst_65 : f32 to vector<8x384xf32>
      %79 = arith.addf %78, %77 : vector<8x384xf32>
      %80 = arith.divf %78, %79 : vector<8x384xf32>
      %81 = vector.extract_strided_slice %80 {offsets = [0, 0], sizes = [8, 128], strides = [1, 1]} : vector<8x384xf32> to vector<8x128xf32>
      %82 = vector.extract_strided_slice %80 {offsets = [0, 128], sizes = [8, 128], strides = [1, 1]} : vector<8x384xf32> to vector<8x128xf32>
      %83 = vector.extract_strided_slice %80 {offsets = [0, 256], sizes = [8, 128], strides = [1, 1]} : vector<8x384xf32> to vector<8x128xf32>
      %84 = vector.extract_strided_slice %74 {offsets = [0, 384], sizes = [8, 128], strides = [1, 1]} : vector<8x512xf32> to vector<8x128xf32>
      %85 = math.tanh %84 : vector<8x128xf32>
      %86 = arith.mulf %82, %69 : vector<8x128xf32>
      %87 = arith.mulf %81, %85 : vector<8x128xf32>
      %88 = arith.addf %86, %87 : vector<8x128xf32>
      %89 = math.tanh %88 : vector<8x128xf32>
      %90 = arith.mulf %83, %89 : vector<8x128xf32>
      %c0_66 = arith.constant 0 : index
      %c0_67 = arith.constant 0 : index
      %c0_68 = arith.constant 0 : index
      %91 = vector.load %arg12[%c0_66, %c0_67, %c0_68] : memref<2x8x128xf32, #tpu.memory_space<vmem>>, vector<1x8x128xf32>
      %92 = vector.shape_cast %91 : vector<1x8x128xf32> to vector<8x128xf32>
      %93 = vector.shape_cast %90 : vector<8x128xf32> to vector<1x8x128xf32>
      tpu.vector_store %arg12[%c0_66, %c0_67, %c0_68], %93 {strides = array<i32>} : memref<2x8x128xf32, #tpu.memory_space<vmem>>, vector<1x8x128xf32>,
      %c0_69 = arith.constant 0 : index
      %c0_70 = arith.constant 0 : index
      %c0_71 = arith.constant 0 : index
      %94 = vector.load %arg13[%c0_69, %c0_70, %c0_71] : memref<2x8x128xf32, #tpu.memory_space<vmem>>, vector<1x8x128xf32>
      %95 = vector.shape_cast %94 : vector<1x8x128xf32> to vector<8x128xf32>
      %96 = vector.shape_cast %88 : vector<8x128xf32> to vector<1x8x128xf32>
      tpu.vector_store %arg13[%c0_69, %c0_70, %c0_71], %96 {strides = array<i32>} : memref<2x8x128xf32, #tpu.memory_space<vmem>>, vector<1x8x128xf32>,
      %97 = arith.index_cast %c3_i32 : i32 to index
      %c0_72 = arith.constant 0 : index
      %c0_73 = arith.constant 0 : index
      %98 = vector.load %arg14[%97, %c0_72, %c0_73] : memref<4x8x128xf32, #tpu.memory_space<vmem>>, vector<1x8x128xf32>
      %99 = vector.shape_cast %98 : vector<1x8x128xf32> to vector<8x128xf32>
      %100 = vector.shape_cast %90 : vector<8x128xf32> to vector<1x8x128xf32>
      tpu.vector_store %arg14[%97, %c0_72, %c0_73], %100 {strides = array<i32>} : memref<4x8x128xf32, #tpu.memory_space<vmem>>, vector<1x8x128xf32>,
    } else {
    }
    %c4_i32_23 = arith.constant 4 : i32
    %c0_24 = arith.constant 0 : index
    %c0_25 = arith.constant 0 : index
    %33 = vector.load %arg6[%c0_24, %c0_25] : memref<128x512xf32, #tpu.memory_space<vmem>>, vector<128x512xf32>
    %c0_26 = arith.constant 0 : index
    %c0_27 = arith.constant 0 : index
    %34 = vector.load %arg7[%c0_26, %c0_27] : memref<128x512xf32, #tpu.memory_space<vmem>>, vector<128x512xf32>
    %c0_28 = arith.constant 0 : index
    %c0_29 = arith.constant 0 : index
    %35 = vector.load %arg8[%c0_28, %c0_29] : memref<1x512xf32, #tpu.memory_space<vmem>>, vector<1x512xf32>
    %c0_30 = arith.constant 0 : index
    %c0_31 = arith.constant 0 : index
    %c0_32 = arith.constant 0 : index
    %36 = vector.load %arg14[%c0_30, %c0_31, %c0_32] : memref<4x8x128xf32, #tpu.memory_space<vmem>>, vector<4x8x128xf32>
    %37 = vector.shape_cast %36 : vector<4x8x128xf32> to vector<32x128xf32>
    %cst_33 = arith.constant dense<0.000000e+00> : vector<32x512xf32>
    %38 = tpu.matmul %37, %33, %cst_33 {dimension_numbers = #tpu.dot_dimension_numbers<[1], [0], [0], [1], [0, 0, 1, 1], [], []>} : vector<32x128xf32>, vector<128x512xf32>, vector<32x512xf32> -> vector<32x512xf32>
    %39 = vector.broadcast %35 : vector<1x512xf32> to vector<32x512xf32>
    %40 = arith.addf %38, %39 : vector<32x512xf32>
    %41 = vector.shape_cast %40 : vector<32x512xf32> to vector<4x8x512xf32>
    %c0_34 = arith.constant 0 : index
    %c0_35 = arith.constant 0 : index
    %c0_36 = arith.constant 0 : index
    %42 = vector.load %arg15[%c0_34, %c0_35, %c0_36] : memref<4x8x512xf32, #tpu.memory_space<vmem>>, vector<4x8x512xf32>
    tpu.vector_store %arg15[%c0_34, %c0_35, %c0_36], %41 {strides = array<i32>} : memref<4x8x512xf32, #tpu.memory_space<vmem>>, vector<4x8x512xf32>,
    %c0_i32_37 = arith.constant 0 : i32
    %c4_i32_38 = arith.constant 4 : i32
    %43 = arith.muli %arg1, %c4_i32_38 : i32
    %44 = arith.addi %43, %c0_i32_37 : i32
    %c8_i32_39 = arith.constant 8 : i32
    %45 = arith.cmpi slt, %44, %c8_i32_39 : i32
    %46 = arith.extui %45 : i1 to i32
    %c0_i32_40 = arith.constant 0 : i32
    %47 = arith.cmpi ne, %46, %c0_i32_40 : i32
    scf.if %47 {
      %c1 = arith.constant 1 : index
      %c0_56 = arith.constant 0 : index
      %c0_57 = arith.constant 0 : index
      %66 = vector.load %arg12[%c1, %c0_56, %c0_57] : memref<2x8x128xf32, #tpu.memory_space<vmem>>, vector<1x8x128xf32>
      %67 = vector.shape_cast %66 : vector<1x8x128xf32> to vector<8x128xf32>
      %c1_58 = arith.constant 1 : index
      %c0_59 = arith.constant 0 : index
      %c0_60 = arith.constant 0 : index
      %68 = vector.load %arg13[%c1_58, %c0_59, %c0_60] : memref<2x8x128xf32, #tpu.memory_space<vmem>>, vector<1x8x128xf32>
      %69 = vector.shape_cast %68 : vector<1x8x128xf32> to vector<8x128xf32>
      %70 = arith.index_cast %c0_i32_37 : i32 to index
      %c0_61 = arith.constant 0 : index
      %c0_62 = arith.constant 0 : index
      %71 = vector.load %arg15[%70, %c0_61, %c0_62] : memref<4x8x512xf32, #tpu.memory_space<vmem>>, vector<1x8x512xf32>
      %72 = vector.shape_cast %71 : vector<1x8x512xf32> to vector<8x512xf32>
      %cst_63 = arith.constant dense<0.000000e+00> : vector<8x512xf32>
      %73 = tpu.matmul %67, %34, %cst_63 {dimension_numbers = #tpu.dot_dimension_numbers<[1], [0], [0], [1], [0, 0, 1, 1], [], []>} : vector<8x128xf32>, vector<128x512xf32>, vector<8x512xf32> -> vector<8x512xf32>
      %74 = arith.addf %72, %73 : vector<8x512xf32>
      %75 = vector.extract_strided_slice %74 {offsets = [0, 0], sizes = [8, 384], strides = [1, 1]} : vector<8x512xf32> to vector<8x384xf32>
      %76 = arith.negf %75 : vector<8x384xf32>
      %77 = math.exp %76 : vector<8x384xf32>
      %cst_64 = arith.constant 1.000000e+00 : f32
      %78 = vector.broadcast %cst_64 : f32 to vector<8x384xf32>
      %79 = arith.addf %78, %77 : vector<8x384xf32>
      %80 = arith.divf %78, %79 : vector<8x384xf32>
      %81 = vector.extract_strided_slice %80 {offsets = [0, 0], sizes = [8, 128], strides = [1, 1]} : vector<8x384xf32> to vector<8x128xf32>
      %82 = vector.extract_strided_slice %80 {offsets = [0, 128], sizes = [8, 128], strides = [1, 1]} : vector<8x384xf32> to vector<8x128xf32>
      %83 = vector.extract_strided_slice %80 {offsets = [0, 256], sizes = [8, 128], strides = [1, 1]} : vector<8x384xf32> to vector<8x128xf32>
      %84 = vector.extract_strided_slice %74 {offsets = [0, 384], sizes = [8, 128], strides = [1, 1]} : vector<8x512xf32> to vector<8x128xf32>
      %85 = math.tanh %84 : vector<8x128xf32>
      %86 = arith.mulf %82, %69 : vector<8x128xf32>
      %87 = arith.mulf %81, %85 : vector<8x128xf32>
      %88 = arith.addf %86, %87 : vector<8x128xf32>
      %89 = math.tanh %88 : vector<8x128xf32>
      %90 = arith.mulf %83, %89 : vector<8x128xf32>
      %c1_65 = arith.constant 1 : index
      %c0_66 = arith.constant 0 : index
      %c0_67 = arith.constant 0 : index
      %91 = vector.load %arg12[%c1_65, %c0_66, %c0_67] : memref<2x8x128xf32, #tpu.memory_space<vmem>>, vector<1x8x128xf32>
      %92 = vector.shape_cast %91 : vector<1x8x128xf32> to vector<8x128xf32>
      %93 = vector.shape_cast %90 : vector<8x128xf32> to vector<1x8x128xf32>
      tpu.vector_store %arg12[%c1_65, %c0_66, %c0_67], %93 {strides = array<i32>} : memref<2x8x128xf32, #tpu.memory_space<vmem>>, vector<1x8x128xf32>,
      %c1_68 = arith.constant 1 : index
      %c0_69 = arith.constant 0 : index
      %c0_70 = arith.constant 0 : index
      %94 = vector.load %arg13[%c1_68, %c0_69, %c0_70] : memref<2x8x128xf32, #tpu.memory_space<vmem>>, vector<1x8x128xf32>
      %95 = vector.shape_cast %94 : vector<1x8x128xf32> to vector<8x128xf32>
      %96 = vector.shape_cast %88 : vector<8x128xf32> to vector<1x8x128xf32>
      tpu.vector_store %arg13[%c1_68, %c0_69, %c0_70], %96 {strides = array<i32>} : memref<2x8x128xf32, #tpu.memory_space<vmem>>, vector<1x8x128xf32>,
    } else {
    }
    %c1_i32_41 = arith.constant 1 : i32
    %c4_i32_42 = arith.constant 4 : i32
    %48 = arith.muli %arg1, %c4_i32_42 : i32
    %49 = arith.addi %48, %c1_i32_41 : i32
    %c8_i32_43 = arith.constant 8 : i32
    %50 = arith.cmpi slt, %49, %c8_i32_43 : i32
    %51 = arith.extui %50 : i1 to i32
    %c0_i32_44 = arith.constant 0 : i32
    %52 = arith.cmpi ne, %51, %c0_i32_44 : i32
    scf.if %52 {
      %c1 = arith.constant 1 : index
      %c0_56 = arith.constant 0 : index
      %c0_57 = arith.constant 0 : index
      %66 = vector.load %arg12[%c1, %c0_56, %c0_57] : memref<2x8x128xf32, #tpu.memory_space<vmem>>, vector<1x8x128xf32>
      %67 = vector.shape_cast %66 : vector<1x8x128xf32> to vector<8x128xf32>
      %c1_58 = arith.constant 1 : index
      %c0_59 = arith.constant 0 : index
      %c0_60 = arith.constant 0 : index
      %68 = vector.load %arg13[%c1_58, %c0_59, %c0_60] : memref<2x8x128xf32, #tpu.memory_space<vmem>>, vector<1x8x128xf32>
      %69 = vector.shape_cast %68 : vector<1x8x128xf32> to vector<8x128xf32>
      %70 = arith.index_cast %c1_i32_41 : i32 to index
      %c0_61 = arith.constant 0 : index
      %c0_62 = arith.constant 0 : index
      %71 = vector.load %arg15[%70, %c0_61, %c0_62] : memref<4x8x512xf32, #tpu.memory_space<vmem>>, vector<1x8x512xf32>
      %72 = vector.shape_cast %71 : vector<1x8x512xf32> to vector<8x512xf32>
      %cst_63 = arith.constant dense<0.000000e+00> : vector<8x512xf32>
      %73 = tpu.matmul %67, %34, %cst_63 {dimension_numbers = #tpu.dot_dimension_numbers<[1], [0], [0], [1], [0, 0, 1, 1], [], []>} : vector<8x128xf32>, vector<128x512xf32>, vector<8x512xf32> -> vector<8x512xf32>
      %74 = arith.addf %72, %73 : vector<8x512xf32>
      %75 = vector.extract_strided_slice %74 {offsets = [0, 0], sizes = [8, 384], strides = [1, 1]} : vector<8x512xf32> to vector<8x384xf32>
      %76 = arith.negf %75 : vector<8x384xf32>
      %77 = math.exp %76 : vector<8x384xf32>
      %cst_64 = arith.constant 1.000000e+00 : f32
      %78 = vector.broadcast %cst_64 : f32 to vector<8x384xf32>
      %79 = arith.addf %78, %77 : vector<8x384xf32>
      %80 = arith.divf %78, %79 : vector<8x384xf32>
      %81 = vector.extract_strided_slice %80 {offsets = [0, 0], sizes = [8, 128], strides = [1, 1]} : vector<8x384xf32> to vector<8x128xf32>
      %82 = vector.extract_strided_slice %80 {offsets = [0, 128], sizes = [8, 128], strides = [1, 1]} : vector<8x384xf32> to vector<8x128xf32>
      %83 = vector.extract_strided_slice %80 {offsets = [0, 256], sizes = [8, 128], strides = [1, 1]} : vector<8x384xf32> to vector<8x128xf32>
      %84 = vector.extract_strided_slice %74 {offsets = [0, 384], sizes = [8, 128], strides = [1, 1]} : vector<8x512xf32> to vector<8x128xf32>
      %85 = math.tanh %84 : vector<8x128xf32>
      %86 = arith.mulf %82, %69 : vector<8x128xf32>
      %87 = arith.mulf %81, %85 : vector<8x128xf32>
      %88 = arith.addf %86, %87 : vector<8x128xf32>
      %89 = math.tanh %88 : vector<8x128xf32>
      %90 = arith.mulf %83, %89 : vector<8x128xf32>
      %c1_65 = arith.constant 1 : index
      %c0_66 = arith.constant 0 : index
      %c0_67 = arith.constant 0 : index
      %91 = vector.load %arg12[%c1_65, %c0_66, %c0_67] : memref<2x8x128xf32, #tpu.memory_space<vmem>>, vector<1x8x128xf32>
      %92 = vector.shape_cast %91 : vector<1x8x128xf32> to vector<8x128xf32>
      %93 = vector.shape_cast %90 : vector<8x128xf32> to vector<1x8x128xf32>
      tpu.vector_store %arg12[%c1_65, %c0_66, %c0_67], %93 {strides = array<i32>} : memref<2x8x128xf32, #tpu.memory_space<vmem>>, vector<1x8x128xf32>,
      %c1_68 = arith.constant 1 : index
      %c0_69 = arith.constant 0 : index
      %c0_70 = arith.constant 0 : index
      %94 = vector.load %arg13[%c1_68, %c0_69, %c0_70] : memref<2x8x128xf32, #tpu.memory_space<vmem>>, vector<1x8x128xf32>
      %95 = vector.shape_cast %94 : vector<1x8x128xf32> to vector<8x128xf32>
      %96 = vector.shape_cast %88 : vector<8x128xf32> to vector<1x8x128xf32>
      tpu.vector_store %arg13[%c1_68, %c0_69, %c0_70], %96 {strides = array<i32>} : memref<2x8x128xf32, #tpu.memory_space<vmem>>, vector<1x8x128xf32>,
    } else {
    }
    %c2_i32_45 = arith.constant 2 : i32
    %c4_i32_46 = arith.constant 4 : i32
    %53 = arith.muli %arg1, %c4_i32_46 : i32
    %54 = arith.addi %53, %c2_i32_45 : i32
    %c8_i32_47 = arith.constant 8 : i32
    %55 = arith.cmpi slt, %54, %c8_i32_47 : i32
    %56 = arith.extui %55 : i1 to i32
    %c0_i32_48 = arith.constant 0 : i32
    %57 = arith.cmpi ne, %56, %c0_i32_48 : i32
    scf.if %57 {
      %c1 = arith.constant 1 : index
      %c0_56 = arith.constant 0 : index
      %c0_57 = arith.constant 0 : index
      %66 = vector.load %arg12[%c1, %c0_56, %c0_57] : memref<2x8x128xf32, #tpu.memory_space<vmem>>, vector<1x8x128xf32>
      %67 = vector.shape_cast %66 : vector<1x8x128xf32> to vector<8x128xf32>
      %c1_58 = arith.constant 1 : index
      %c0_59 = arith.constant 0 : index
      %c0_60 = arith.constant 0 : index
      %68 = vector.load %arg13[%c1_58, %c0_59, %c0_60] : memref<2x8x128xf32, #tpu.memory_space<vmem>>, vector<1x8x128xf32>
      %69 = vector.shape_cast %68 : vector<1x8x128xf32> to vector<8x128xf32>
      %70 = arith.index_cast %c2_i32_45 : i32 to index
      %c0_61 = arith.constant 0 : index
      %c0_62 = arith.constant 0 : index
      %71 = vector.load %arg15[%70, %c0_61, %c0_62] : memref<4x8x512xf32, #tpu.memory_space<vmem>>, vector<1x8x512xf32>
      %72 = vector.shape_cast %71 : vector<1x8x512xf32> to vector<8x512xf32>
      %cst_63 = arith.constant dense<0.000000e+00> : vector<8x512xf32>
      %73 = tpu.matmul %67, %34, %cst_63 {dimension_numbers = #tpu.dot_dimension_numbers<[1], [0], [0], [1], [0, 0, 1, 1], [], []>} : vector<8x128xf32>, vector<128x512xf32>, vector<8x512xf32> -> vector<8x512xf32>
      %74 = arith.addf %72, %73 : vector<8x512xf32>
      %75 = vector.extract_strided_slice %74 {offsets = [0, 0], sizes = [8, 384], strides = [1, 1]} : vector<8x512xf32> to vector<8x384xf32>
      %76 = arith.negf %75 : vector<8x384xf32>
      %77 = math.exp %76 : vector<8x384xf32>
      %cst_64 = arith.constant 1.000000e+00 : f32
      %78 = vector.broadcast %cst_64 : f32 to vector<8x384xf32>
      %79 = arith.addf %78, %77 : vector<8x384xf32>
      %80 = arith.divf %78, %79 : vector<8x384xf32>
      %81 = vector.extract_strided_slice %80 {offsets = [0, 0], sizes = [8, 128], strides = [1, 1]} : vector<8x384xf32> to vector<8x128xf32>
      %82 = vector.extract_strided_slice %80 {offsets = [0, 128], sizes = [8, 128], strides = [1, 1]} : vector<8x384xf32> to vector<8x128xf32>
      %83 = vector.extract_strided_slice %80 {offsets = [0, 256], sizes = [8, 128], strides = [1, 1]} : vector<8x384xf32> to vector<8x128xf32>
      %84 = vector.extract_strided_slice %74 {offsets = [0, 384], sizes = [8, 128], strides = [1, 1]} : vector<8x512xf32> to vector<8x128xf32>
      %85 = math.tanh %84 : vector<8x128xf32>
      %86 = arith.mulf %82, %69 : vector<8x128xf32>
      %87 = arith.mulf %81, %85 : vector<8x128xf32>
      %88 = arith.addf %86, %87 : vector<8x128xf32>
      %89 = math.tanh %88 : vector<8x128xf32>
      %90 = arith.mulf %83, %89 : vector<8x128xf32>
      %c1_65 = arith.constant 1 : index
      %c0_66 = arith.constant 0 : index
      %c0_67 = arith.constant 0 : index
      %91 = vector.load %arg12[%c1_65, %c0_66, %c0_67] : memref<2x8x128xf32, #tpu.memory_space<vmem>>, vector<1x8x128xf32>
      %92 = vector.shape_cast %91 : vector<1x8x128xf32> to vector<8x128xf32>
      %93 = vector.shape_cast %90 : vector<8x128xf32> to vector<1x8x128xf32>
      tpu.vector_store %arg12[%c1_65, %c0_66, %c0_67], %93 {strides = array<i32>} : memref<2x8x128xf32, #tpu.memory_space<vmem>>, vector<1x8x128xf32>,
      %c1_68 = arith.constant 1 : index
      %c0_69 = arith.constant 0 : index
      %c0_70 = arith.constant 0 : index
      %94 = vector.load %arg13[%c1_68, %c0_69, %c0_70] : memref<2x8x128xf32, #tpu.memory_space<vmem>>, vector<1x8x128xf32>
      %95 = vector.shape_cast %94 : vector<1x8x128xf32> to vector<8x128xf32>
      %96 = vector.shape_cast %88 : vector<8x128xf32> to vector<1x8x128xf32>
      tpu.vector_store %arg13[%c1_68, %c0_69, %c0_70], %96 {strides = array<i32>} : memref<2x8x128xf32, #tpu.memory_space<vmem>>, vector<1x8x128xf32>,
    } else {
    }
    %c3_i32_49 = arith.constant 3 : i32
    %c4_i32_50 = arith.constant 4 : i32
    %58 = arith.muli %arg1, %c4_i32_50 : i32
    %59 = arith.addi %58, %c3_i32_49 : i32
    %c8_i32_51 = arith.constant 8 : i32
    %60 = arith.cmpi slt, %59, %c8_i32_51 : i32
    %61 = arith.extui %60 : i1 to i32
    %c0_i32_52 = arith.constant 0 : i32
    %62 = arith.cmpi ne, %61, %c0_i32_52 : i32
    scf.if %62 {
      %c1 = arith.constant 1 : index
      %c0_56 = arith.constant 0 : index
      %c0_57 = arith.constant 0 : index
      %66 = vector.load %arg12[%c1, %c0_56, %c0_57] : memref<2x8x128xf32, #tpu.memory_space<vmem>>, vector<1x8x128xf32>
      %67 = vector.shape_cast %66 : vector<1x8x128xf32> to vector<8x128xf32>
      %c1_58 = arith.constant 1 : index
      %c0_59 = arith.constant 0 : index
      %c0_60 = arith.constant 0 : index
      %68 = vector.load %arg13[%c1_58, %c0_59, %c0_60] : memref<2x8x128xf32, #tpu.memory_space<vmem>>, vector<1x8x128xf32>
      %69 = vector.shape_cast %68 : vector<1x8x128xf32> to vector<8x128xf32>
      %70 = arith.index_cast %c3_i32_49 : i32 to index
      %c0_61 = arith.constant 0 : index
      %c0_62 = arith.constant 0 : index
      %71 = vector.load %arg15[%70, %c0_61, %c0_62] : memref<4x8x512xf32, #tpu.memory_space<vmem>>, vector<1x8x512xf32>
      %72 = vector.shape_cast %71 : vector<1x8x512xf32> to vector<8x512xf32>
      %cst_63 = arith.constant dense<0.000000e+00> : vector<8x512xf32>
      %73 = tpu.matmul %67, %34, %cst_63 {dimension_numbers = #tpu.dot_dimension_numbers<[1], [0], [0], [1], [0, 0, 1, 1], [], []>} : vector<8x128xf32>, vector<128x512xf32>, vector<8x512xf32> -> vector<8x512xf32>
      %74 = arith.addf %72, %73 : vector<8x512xf32>
      %75 = vector.extract_strided_slice %74 {offsets = [0, 0], sizes = [8, 384], strides = [1, 1]} : vector<8x512xf32> to vector<8x384xf32>
      %76 = arith.negf %75 : vector<8x384xf32>
      %77 = math.exp %76 : vector<8x384xf32>
      %cst_64 = arith.constant 1.000000e+00 : f32
      %78 = vector.broadcast %cst_64 : f32 to vector<8x384xf32>
      %79 = arith.addf %78, %77 : vector<8x384xf32>
      %80 = arith.divf %78, %79 : vector<8x384xf32>
      %81 = vector.extract_strided_slice %80 {offsets = [0, 0], sizes = [8, 128], strides = [1, 1]} : vector<8x384xf32> to vector<8x128xf32>
      %82 = vector.extract_strided_slice %80 {offsets = [0, 128], sizes = [8, 128], strides = [1, 1]} : vector<8x384xf32> to vector<8x128xf32>
      %83 = vector.extract_strided_slice %80 {offsets = [0, 256], sizes = [8, 128], strides = [1, 1]} : vector<8x384xf32> to vector<8x128xf32>
      %84 = vector.extract_strided_slice %74 {offsets = [0, 384], sizes = [8, 128], strides = [1, 1]} : vector<8x512xf32> to vector<8x128xf32>
      %85 = math.tanh %84 : vector<8x128xf32>
      %86 = arith.mulf %82, %69 : vector<8x128xf32>
      %87 = arith.mulf %81, %85 : vector<8x128xf32>
      %88 = arith.addf %86, %87 : vector<8x128xf32>
      %89 = math.tanh %88 : vector<8x128xf32>
      %90 = arith.mulf %83, %89 : vector<8x128xf32>
      %c1_65 = arith.constant 1 : index
      %c0_66 = arith.constant 0 : index
      %c0_67 = arith.constant 0 : index
      %91 = vector.load %arg12[%c1_65, %c0_66, %c0_67] : memref<2x8x128xf32, #tpu.memory_space<vmem>>, vector<1x8x128xf32>
      %92 = vector.shape_cast %91 : vector<1x8x128xf32> to vector<8x128xf32>
      %93 = vector.shape_cast %90 : vector<8x128xf32> to vector<1x8x128xf32>
      tpu.vector_store %arg12[%c1_65, %c0_66, %c0_67], %93 {strides = array<i32>} : memref<2x8x128xf32, #tpu.memory_space<vmem>>, vector<1x8x128xf32>,
      %c1_68 = arith.constant 1 : index
      %c0_69 = arith.constant 0 : index
      %c0_70 = arith.constant 0 : index
      %94 = vector.load %arg13[%c1_68, %c0_69, %c0_70] : memref<2x8x128xf32, #tpu.memory_space<vmem>>, vector<1x8x128xf32>
      %95 = vector.shape_cast %94 : vector<1x8x128xf32> to vector<8x128xf32>
      %96 = vector.shape_cast %88 : vector<8x128xf32> to vector<1x8x128xf32>
      tpu.vector_store %arg13[%c1_68, %c0_69, %c0_70], %96 {strides = array<i32>} : memref<2x8x128xf32, #tpu.memory_space<vmem>>, vector<1x8x128xf32>,
    } else {
    }
    %c4_i32_53 = arith.constant 4 : i32
    %c1_i32_54 = arith.constant 1 : i32
    %63 = arith.cmpi eq, %arg1, %c1_i32_54 : i32
    %64 = arith.extui %63 : i1 to i32
    %c0_i32_55 = arith.constant 0 : i32
    %65 = arith.cmpi ne, %64, %c0_i32_55 : i32
    scf.if %65 {
      %c1 = arith.constant 1 : index
      %c0_56 = arith.constant 0 : index
      %c0_57 = arith.constant 0 : index
      %66 = vector.load %arg12[%c1, %c0_56, %c0_57] : memref<2x8x128xf32, #tpu.memory_space<vmem>>, vector<1x8x128xf32>
      %67 = vector.shape_cast %66 : vector<1x8x128xf32> to vector<8x128xf32>
      %c0_58 = arith.constant 0 : index
      %c0_59 = arith.constant 0 : index
      %68 = vector.load %arg9[%c0_58, %c0_59] : memref<128x128xf32, #tpu.memory_space<vmem>>, vector<128x128xf32>
      %cst_60 = arith.constant dense<0.000000e+00> : vector<8x128xf32>
      %69 = tpu.matmul %67, %68, %cst_60 {dimension_numbers = #tpu.dot_dimension_numbers<[1], [0], [0], [1], [0, 0, 1, 1], [], []>} : vector<8x128xf32>, vector<128x128xf32>, vector<8x128xf32> -> vector<8x128xf32>
      %c0_61 = arith.constant 0 : index
      %c0_62 = arith.constant 0 : index
      %70 = vector.load %arg10[%c0_61, %c0_62] : memref<1x128xf32, #tpu.memory_space<vmem>>, vector<1x128xf32>
      %71 = vector.broadcast %70 : vector<1x128xf32> to vector<8x128xf32>
      %72 = arith.addf %69, %71 : vector<8x128xf32>
      %c0_63 = arith.constant 0 : index
      %c0_64 = arith.constant 0 : index
      %73 = vector.load %arg11[%c0_63, %c0_64] : memref<8x128xf32, #tpu.memory_space<vmem>>, vector<8x128xf32>
      tpu.vector_store %arg11[%c0_63, %c0_64], %72 {strides = array<i32>} : memref<8x128xf32, #tpu.memory_space<vmem>>, vector<8x128xf32>,
    } else {
    }
    return
  }
  func.func @transform_0(%arg0: i32, %arg1: i32) -> (i32, i32, i32) {
    %c0_i32 = arith.constant 0 : i32
    %c0_i32_0 = arith.constant 0 : i32
    return %arg1, %arg0, %c0_i32 : i32, i32, i32
  }
  func.func @transform_1(%arg0: i32, %arg1: i32) -> (i32, i32) {
    %c0_i32 = arith.constant 0 : i32
    %c0_i32_0 = arith.constant 0 : i32
    %c0_i32_1 = arith.constant 0 : i32
    return %c0_i32, %c0_i32_0 : i32, i32
  }
  func.func @transform_2(%arg0: i32, %arg1: i32) -> (i32, i32) {
    %c0_i32 = arith.constant 0 : i32
    %c0_i32_0 = arith.constant 0 : i32
    %c0_i32_1 = arith.constant 0 : i32
    return %c0_i32, %c0_i32_0 : i32, i32
  }
  func.func @transform_3(%arg0: i32, %arg1: i32) -> (i32, i32) {
    %c0_i32 = arith.constant 0 : i32
    %c0_i32_0 = arith.constant 0 : i32
    %c0_i32_1 = arith.constant 0 : i32
    return %c0_i32, %c0_i32_0 : i32, i32
  }
  func.func @transform_4(%arg0: i32, %arg1: i32) -> (i32, i32) {
    %c0_i32 = arith.constant 0 : i32
    %c0_i32_0 = arith.constant 0 : i32
    %c0_i32_1 = arith.constant 0 : i32
    return %c0_i32, %c0_i32_0 : i32, i32
  }
  func.func @transform_5(%arg0: i32, %arg1: i32) -> (i32, i32) {
    %c0_i32 = arith.constant 0 : i32
    %c0_i32_0 = arith.constant 0 : i32
    %c0_i32_1 = arith.constant 0 : i32
    return %c0_i32, %c0_i32_0 : i32, i32
  }
  func.func @transform_6(%arg0: i32, %arg1: i32) -> (i32, i32) {
    %c0_i32 = arith.constant 0 : i32
    %c0_i32_0 = arith.constant 0 : i32
    %c0_i32_1 = arith.constant 0 : i32
    return %c0_i32, %c0_i32_0 : i32, i32
  }
  func.func @transform_7(%arg0: i32, %arg1: i32) -> (i32, i32) {
    %c0_i32 = arith.constant 0 : i32
    %c0_i32_0 = arith.constant 0 : i32
    %c0_i32_1 = arith.constant 0 : i32
    return %c0_i32, %c0_i32_0 : i32, i32
  }
  func.func @transform_8(%arg0: i32, %arg1: i32) -> (i32, i32) {
    %c0_i32 = arith.constant 0 : i32
    %c0_i32_0 = arith.constant 0 : i32
    %c0_i32_1 = arith.constant 0 : i32
    return %c0_i32, %c0_i32_0 : i32, i32
  }
  func.func @transform_9(%arg0: i32, %arg1: i32) -> (i32, i32) {
    %c0_i32 = arith.constant 0 : i32
    %c0_i32_0 = arith.constant 0 : i32
    return %arg0, %c0_i32 : i32, i32
  }
}

module attributes {stable_mosaic.version = 11 : i64} {
  func.func @lstm_stack_kernel(%arg0: i32, %arg1: i32, %arg2: memref<4x8x128xf32, #tpu.memory_space<vmem>>, %arg3: memref<128x512xf32, #tpu.memory_space<vmem>>, %arg4: memref<128x512xf32, #tpu.memory_space<vmem>>, %arg5: memref<1x512xf32, #tpu.memory_space<vmem>>, %arg6: memref<128x512xf32, #tpu.memory_space<vmem>>, %arg7: memref<128x512xf32, #tpu.memory_space<vmem>>, %arg8: memref<1x512xf32, #tpu.memory_space<vmem>>, %arg9: memref<128x128xf32, #tpu.memory_space<vmem>>, %arg10: memref<1x128xf32, #tpu.memory_space<vmem>>, %arg11: memref<8x128xf32, #tpu.memory_space<vmem>>, %arg12: memref<2x8x128xf32, #tpu.memory_space<vmem>>, %arg13: memref<2x8x128xf32, #tpu.memory_space<vmem>>, %arg14: memref<4x8x128xf32, #tpu.memory_space<vmem>>, %arg15: memref<4x8x512xf32, #tpu.memory_space<vmem>>) attributes {dimension_semantics = [#tpu.dimension_semantics<parallel>, #tpu.dimension_semantics<arbitrary>], iteration_bounds = array<i64: 1, 2>, scalar_prefetch = 0 : i64, scratch_operands = 4 : i64, tpu.core_type = #tpu.core_type<tc>, window_params = [{transform_indices = @transform_0, window_bounds = array<i64: 4, 8, 128>}, {pipeline_mode = #tpu.pipeline_mode<synchronous>, transform_indices = @transform_1, window_bounds = array<i64: 128, 512>}, {pipeline_mode = #tpu.pipeline_mode<synchronous>, transform_indices = @transform_2, window_bounds = array<i64: 128, 512>}, {pipeline_mode = #tpu.pipeline_mode<synchronous>, transform_indices = @transform_3, window_bounds = array<i64: 1, 512>}, {pipeline_mode = #tpu.pipeline_mode<synchronous>, transform_indices = @transform_4, window_bounds = array<i64: 128, 512>}, {pipeline_mode = #tpu.pipeline_mode<synchronous>, transform_indices = @transform_5, window_bounds = array<i64: 128, 512>}, {pipeline_mode = #tpu.pipeline_mode<synchronous>, transform_indices = @transform_6, window_bounds = array<i64: 1, 512>}, {pipeline_mode = #tpu.pipeline_mode<synchronous>, transform_indices = @transform_7, window_bounds = array<i64: 128, 128>}, {pipeline_mode = #tpu.pipeline_mode<synchronous>, transform_indices = @transform_8, window_bounds = array<i64: 1, 128>}, {transform_indices = @transform_9, window_bounds = array<i64: 8, 128>}]} {
    %c0_i32 = arith.constant 0 : i32
    %0 = arith.cmpi eq, %arg1, %c0_i32 : i32
    %1 = arith.extui %0 : i1 to i32
    %c0_i32_0 = arith.constant 0 : i32
    %2 = arith.cmpi ne, %1, %c0_i32_0 : i32
    scf.if %2 {
      %cst_56 = arith.constant 0.000000e+00 : f32
      %66 = vector.broadcast %cst_56 : f32 to vector<2x8x128xf32>
      %c0_57 = arith.constant 0 : index
      %c0_58 = arith.constant 0 : index
      %c0_59 = arith.constant 0 : index
      %67 = vector.load %arg12[%c0_57, %c0_58, %c0_59] : memref<2x8x128xf32, #tpu.memory_space<vmem>>, vector<2x8x128xf32>
      tpu.vector_store %arg12[%c0_57, %c0_58, %c0_59], %66 {strides = array<i32>} : memref<2x8x128xf32, #tpu.memory_space<vmem>>, vector<2x8x128xf32>,
      %cst_60 = arith.constant 0.000000e+00 : f32
      %68 = vector.broadcast %cst_60 : f32 to vector<2x8x128xf32>
      %c0_61 = arith.constant 0 : index
      %c0_62 = arith.constant 0 : index
      %c0_63 = arith.constant 0 : index
      %69 = vector.load %arg13[%c0_61, %c0_62, %c0_63] : memref<2x8x128xf32, #tpu.memory_space<vmem>>, vector<2x8x128xf32>
      tpu.vector_store %arg13[%c0_61, %c0_62, %c0_63], %68 {strides = array<i32>} : memref<2x8x128xf32, #tpu.memory_space<vmem>>, vector<2x8x128xf32>,
    } else {
    }
    %c0 = arith.constant 0 : index
    %c0_1 = arith.constant 0 : index
    %3 = vector.load %arg3[%c0, %c0_1] : memref<128x512xf32, #tpu.memory_space<vmem>>, vector<128x512xf32>
    %c0_2 = arith.constant 0 : index
    %c0_3 = arith.constant 0 : index
    %4 = vector.load %arg4[%c0_2, %c0_3] : memref<128x512xf32, #tpu.memory_space<vmem>>, vector<128x512xf32>
    %c0_4 = arith.constant 0 : index
    %c0_5 = arith.constant 0 : index
    %5 = vector.load %arg5[%c0_4, %c0_5] : memref<1x512xf32, #tpu.memory_space<vmem>>, vector<1x512xf32>
    %c0_6 = arith.constant 0 : index
    %c0_7 = arith.constant 0 : index
    %c0_8 = arith.constant 0 : index
    %6 = vector.load %arg2[%c0_6, %c0_7, %c0_8] : memref<4x8x128xf32, #tpu.memory_space<vmem>>, vector<4x8x128xf32>
    %7 = vector.shape_cast %6 : vector<4x8x128xf32> to vector<32x128xf32>
    %cst = arith.constant dense<0.000000e+00> : vector<32x512xf32>
    %8 = tpu.matmul %7, %3, %cst {dimension_numbers = #tpu.dot_dimension_numbers<[1], [0], [0], [1], [0, 0, 1, 1], [], []>} : vector<32x128xf32>, vector<128x512xf32>, vector<32x512xf32> -> vector<32x512xf32>
    %9 = vector.broadcast %5 : vector<1x512xf32> to vector<32x512xf32>
    %10 = arith.addf %8, %9 : vector<32x512xf32>
    %11 = vector.shape_cast %10 : vector<32x512xf32> to vector<4x8x512xf32>
    %c0_9 = arith.constant 0 : index
    %c0_10 = arith.constant 0 : index
    %c0_11 = arith.constant 0 : index
    %12 = vector.load %arg15[%c0_9, %c0_10, %c0_11] : memref<4x8x512xf32, #tpu.memory_space<vmem>>, vector<4x8x512xf32>
    tpu.vector_store %arg15[%c0_9, %c0_10, %c0_11], %11 {strides = array<i32>} : memref<4x8x512xf32, #tpu.memory_space<vmem>>, vector<4x8x512xf32>,
    %c0_i32_12 = arith.constant 0 : i32
    %c4_i32 = arith.constant 4 : i32
    %13 = arith.muli %arg1, %c4_i32 : i32
    %14 = arith.addi %13, %c0_i32_12 : i32
    %c8_i32 = arith.constant 8 : i32
    %15 = arith.cmpi slt, %14, %c8_i32 : i32
    %16 = arith.extui %15 : i1 to i32
    %c0_i32_13 = arith.constant 0 : i32
    %17 = arith.cmpi ne, %16, %c0_i32_13 : i32
    scf.if %17 {
      %c0_56 = arith.constant 0 : index
      %c0_57 = arith.constant 0 : index
      %c0_58 = arith.constant 0 : index
      %66 = vector.load %arg12[%c0_56, %c0_57, %c0_58] : memref<2x8x128xf32, #tpu.memory_space<vmem>>, vector<1x8x128xf32>
      %67 = vector.shape_cast %66 : vector<1x8x128xf32> to vector<8x128xf32>
      %c0_59 = arith.constant 0 : index
      %c0_60 = arith.constant 0 : index
      %c0_61 = arith.constant 0 : index
      %68 = vector.load %arg13[%c0_59, %c0_60, %c0_61] : memref<2x8x128xf32, #tpu.memory_space<vmem>>, vector<1x8x128xf32>
      %69 = vector.shape_cast %68 : vector<1x8x128xf32> to vector<8x128xf32>
      %70 = arith.index_cast %c0_i32_12 : i32 to index
      %c0_62 = arith.constant 0 : index
      %c0_63 = arith.constant 0 : index
      %71 = vector.load %arg15[%70, %c0_62, %c0_63] : memref<4x8x512xf32, #tpu.memory_space<vmem>>, vector<1x8x512xf32>
      %72 = vector.shape_cast %71 : vector<1x8x512xf32> to vector<8x512xf32>
      %cst_64 = arith.constant dense<0.000000e+00> : vector<8x512xf32>
      %73 = tpu.matmul %67, %4, %cst_64 {dimension_numbers = #tpu.dot_dimension_numbers<[1], [0], [0], [1], [0, 0, 1, 1], [], []>} : vector<8x128xf32>, vector<128x512xf32>, vector<8x512xf32> -> vector<8x512xf32>
      %74 = arith.addf %72, %73 : vector<8x512xf32>
      %75 = vector.extract_strided_slice %74 {offsets = [0, 0], sizes = [8, 384], strides = [1, 1]} : vector<8x512xf32> to vector<8x384xf32>
      %76 = arith.negf %75 : vector<8x384xf32>
      %77 = math.exp %76 : vector<8x384xf32>
      %cst_65 = arith.constant 1.000000e+00 : f32
      %78 = vector.broadcast %cst_65 : f32 to vector<8x384xf32>
      %79 = arith.addf %78, %77 : vector<8x384xf32>
      %80 = arith.divf %78, %79 : vector<8x384xf32>
      %81 = vector.extract_strided_slice %80 {offsets = [0, 0], sizes = [8, 128], strides = [1, 1]} : vector<8x384xf32> to vector<8x128xf32>
      %82 = vector.extract_strided_slice %80 {offsets = [0, 128], sizes = [8, 128], strides = [1, 1]} : vector<8x384xf32> to vector<8x128xf32>
      %83 = vector.extract_strided_slice %80 {offsets = [0, 256], sizes = [8, 128], strides = [1, 1]} : vector<8x384xf32> to vector<8x128xf32>
      %84 = vector.extract_strided_slice %74 {offsets = [0, 384], sizes = [8, 128], strides = [1, 1]} : vector<8x512xf32> to vector<8x128xf32>
      %85 = math.tanh %84 : vector<8x128xf32>
      %86 = arith.mulf %82, %69 : vector<8x128xf32>
      %87 = arith.mulf %81, %85 : vector<8x128xf32>
      %88 = arith.addf %86, %87 : vector<8x128xf32>
      %89 = math.tanh %88 : vector<8x128xf32>
      %90 = arith.mulf %83, %89 : vector<8x128xf32>
      %c0_66 = arith.constant 0 : index
      %c0_67 = arith.constant 0 : index
      %c0_68 = arith.constant 0 : index
      %91 = vector.load %arg12[%c0_66, %c0_67, %c0_68] : memref<2x8x128xf32, #tpu.memory_space<vmem>>, vector<1x8x128xf32>
      %92 = vector.shape_cast %91 : vector<1x8x128xf32> to vector<8x128xf32>
      %93 = vector.shape_cast %90 : vector<8x128xf32> to vector<1x8x128xf32>
      tpu.vector_store %arg12[%c0_66, %c0_67, %c0_68], %93 {strides = array<i32>} : memref<2x8x128xf32, #tpu.memory_space<vmem>>, vector<1x8x128xf32>,
      %c0_69 = arith.constant 0 : index
      %c0_70 = arith.constant 0 : index
      %c0_71 = arith.constant 0 : index
      %94 = vector.load %arg13[%c0_69, %c0_70, %c0_71] : memref<2x8x128xf32, #tpu.memory_space<vmem>>, vector<1x8x128xf32>
      %95 = vector.shape_cast %94 : vector<1x8x128xf32> to vector<8x128xf32>
      %96 = vector.shape_cast %88 : vector<8x128xf32> to vector<1x8x128xf32>
      tpu.vector_store %arg13[%c0_69, %c0_70, %c0_71], %96 {strides = array<i32>} : memref<2x8x128xf32, #tpu.memory_space<vmem>>, vector<1x8x128xf32>,
      %97 = arith.index_cast %c0_i32_12 : i32 to index
      %c0_72 = arith.constant 0 : index
      %c0_73 = arith.constant 0 : index
      %98 = vector.load %arg14[%97, %c0_72, %c0_73] : memref<4x8x128xf32, #tpu.memory_space<vmem>>, vector<1x8x128xf32>
      %99 = vector.shape_cast %98 : vector<1x8x128xf32> to vector<8x128xf32>
      %100 = vector.shape_cast %90 : vector<8x128xf32> to vector<1x8x128xf32>
      tpu.vector_store %arg14[%97, %c0_72, %c0_73], %100 {strides = array<i32>} : memref<4x8x128xf32, #tpu.memory_space<vmem>>, vector<1x8x128xf32>,
    } else {
    }
    %c1_i32 = arith.constant 1 : i32
    %c4_i32_14 = arith.constant 4 : i32
    %18 = arith.muli %arg1, %c4_i32_14 : i32
    %19 = arith.addi %18, %c1_i32 : i32
    %c8_i32_15 = arith.constant 8 : i32
    %20 = arith.cmpi slt, %19, %c8_i32_15 : i32
    %21 = arith.extui %20 : i1 to i32
    %c0_i32_16 = arith.constant 0 : i32
    %22 = arith.cmpi ne, %21, %c0_i32_16 : i32
    scf.if %22 {
      %c0_56 = arith.constant 0 : index
      %c0_57 = arith.constant 0 : index
      %c0_58 = arith.constant 0 : index
      %66 = vector.load %arg12[%c0_56, %c0_57, %c0_58] : memref<2x8x128xf32, #tpu.memory_space<vmem>>, vector<1x8x128xf32>
      %67 = vector.shape_cast %66 : vector<1x8x128xf32> to vector<8x128xf32>
      %c0_59 = arith.constant 0 : index
      %c0_60 = arith.constant 0 : index
      %c0_61 = arith.constant 0 : index
      %68 = vector.load %arg13[%c0_59, %c0_60, %c0_61] : memref<2x8x128xf32, #tpu.memory_space<vmem>>, vector<1x8x128xf32>
      %69 = vector.shape_cast %68 : vector<1x8x128xf32> to vector<8x128xf32>
      %70 = arith.index_cast %c1_i32 : i32 to index
      %c0_62 = arith.constant 0 : index
      %c0_63 = arith.constant 0 : index
      %71 = vector.load %arg15[%70, %c0_62, %c0_63] : memref<4x8x512xf32, #tpu.memory_space<vmem>>, vector<1x8x512xf32>
      %72 = vector.shape_cast %71 : vector<1x8x512xf32> to vector<8x512xf32>
      %cst_64 = arith.constant dense<0.000000e+00> : vector<8x512xf32>
      %73 = tpu.matmul %67, %4, %cst_64 {dimension_numbers = #tpu.dot_dimension_numbers<[1], [0], [0], [1], [0, 0, 1, 1], [], []>} : vector<8x128xf32>, vector<128x512xf32>, vector<8x512xf32> -> vector<8x512xf32>
      %74 = arith.addf %72, %73 : vector<8x512xf32>
      %75 = vector.extract_strided_slice %74 {offsets = [0, 0], sizes = [8, 384], strides = [1, 1]} : vector<8x512xf32> to vector<8x384xf32>
      %76 = arith.negf %75 : vector<8x384xf32>
      %77 = math.exp %76 : vector<8x384xf32>
      %cst_65 = arith.constant 1.000000e+00 : f32
      %78 = vector.broadcast %cst_65 : f32 to vector<8x384xf32>
      %79 = arith.addf %78, %77 : vector<8x384xf32>
      %80 = arith.divf %78, %79 : vector<8x384xf32>
      %81 = vector.extract_strided_slice %80 {offsets = [0, 0], sizes = [8, 128], strides = [1, 1]} : vector<8x384xf32> to vector<8x128xf32>
      %82 = vector.extract_strided_slice %80 {offsets = [0, 128], sizes = [8, 128], strides = [1, 1]} : vector<8x384xf32> to vector<8x128xf32>
      %83 = vector.extract_strided_slice %80 {offsets = [0, 256], sizes = [8, 128], strides = [1, 1]} : vector<8x384xf32> to vector<8x128xf32>
      %84 = vector.extract_strided_slice %74 {offsets = [0, 384], sizes = [8, 128], strides = [1, 1]} : vector<8x512xf32> to vector<8x128xf32>
      %85 = math.tanh %84 : vector<8x128xf32>
      %86 = arith.mulf %82, %69 : vector<8x128xf32>
      %87 = arith.mulf %81, %85 : vector<8x128xf32>
      %88 = arith.addf %86, %87 : vector<8x128xf32>
      %89 = math.tanh %88 : vector<8x128xf32>
      %90 = arith.mulf %83, %89 : vector<8x128xf32>
      %c0_66 = arith.constant 0 : index
      %c0_67 = arith.constant 0 : index
      %c0_68 = arith.constant 0 : index
      %91 = vector.load %arg12[%c0_66, %c0_67, %c0_68] : memref<2x8x128xf32, #tpu.memory_space<vmem>>, vector<1x8x128xf32>
      %92 = vector.shape_cast %91 : vector<1x8x128xf32> to vector<8x128xf32>
      %93 = vector.shape_cast %90 : vector<8x128xf32> to vector<1x8x128xf32>
      tpu.vector_store %arg12[%c0_66, %c0_67, %c0_68], %93 {strides = array<i32>} : memref<2x8x128xf32, #tpu.memory_space<vmem>>, vector<1x8x128xf32>,
      %c0_69 = arith.constant 0 : index
      %c0_70 = arith.constant 0 : index
      %c0_71 = arith.constant 0 : index
      %94 = vector.load %arg13[%c0_69, %c0_70, %c0_71] : memref<2x8x128xf32, #tpu.memory_space<vmem>>, vector<1x8x128xf32>
      %95 = vector.shape_cast %94 : vector<1x8x128xf32> to vector<8x128xf32>
      %96 = vector.shape_cast %88 : vector<8x128xf32> to vector<1x8x128xf32>
      tpu.vector_store %arg13[%c0_69, %c0_70, %c0_71], %96 {strides = array<i32>} : memref<2x8x128xf32, #tpu.memory_space<vmem>>, vector<1x8x128xf32>,
      %97 = arith.index_cast %c1_i32 : i32 to index
      %c0_72 = arith.constant 0 : index
      %c0_73 = arith.constant 0 : index
      %98 = vector.load %arg14[%97, %c0_72, %c0_73] : memref<4x8x128xf32, #tpu.memory_space<vmem>>, vector<1x8x128xf32>
      %99 = vector.shape_cast %98 : vector<1x8x128xf32> to vector<8x128xf32>
      %100 = vector.shape_cast %90 : vector<8x128xf32> to vector<1x8x128xf32>
      tpu.vector_store %arg14[%97, %c0_72, %c0_73], %100 {strides = array<i32>} : memref<4x8x128xf32, #tpu.memory_space<vmem>>, vector<1x8x128xf32>,
    } else {
    }
    %c2_i32 = arith.constant 2 : i32
    %c4_i32_17 = arith.constant 4 : i32
    %23 = arith.muli %arg1, %c4_i32_17 : i32
    %24 = arith.addi %23, %c2_i32 : i32
    %c8_i32_18 = arith.constant 8 : i32
    %25 = arith.cmpi slt, %24, %c8_i32_18 : i32
    %26 = arith.extui %25 : i1 to i32
    %c0_i32_19 = arith.constant 0 : i32
    %27 = arith.cmpi ne, %26, %c0_i32_19 : i32
    scf.if %27 {
      %c0_56 = arith.constant 0 : index
      %c0_57 = arith.constant 0 : index
      %c0_58 = arith.constant 0 : index
      %66 = vector.load %arg12[%c0_56, %c0_57, %c0_58] : memref<2x8x128xf32, #tpu.memory_space<vmem>>, vector<1x8x128xf32>
      %67 = vector.shape_cast %66 : vector<1x8x128xf32> to vector<8x128xf32>
      %c0_59 = arith.constant 0 : index
      %c0_60 = arith.constant 0 : index
      %c0_61 = arith.constant 0 : index
      %68 = vector.load %arg13[%c0_59, %c0_60, %c0_61] : memref<2x8x128xf32, #tpu.memory_space<vmem>>, vector<1x8x128xf32>
      %69 = vector.shape_cast %68 : vector<1x8x128xf32> to vector<8x128xf32>
      %70 = arith.index_cast %c2_i32 : i32 to index
      %c0_62 = arith.constant 0 : index
      %c0_63 = arith.constant 0 : index
      %71 = vector.load %arg15[%70, %c0_62, %c0_63] : memref<4x8x512xf32, #tpu.memory_space<vmem>>, vector<1x8x512xf32>
      %72 = vector.shape_cast %71 : vector<1x8x512xf32> to vector<8x512xf32>
      %cst_64 = arith.constant dense<0.000000e+00> : vector<8x512xf32>
      %73 = tpu.matmul %67, %4, %cst_64 {dimension_numbers = #tpu.dot_dimension_numbers<[1], [0], [0], [1], [0, 0, 1, 1], [], []>} : vector<8x128xf32>, vector<128x512xf32>, vector<8x512xf32> -> vector<8x512xf32>
      %74 = arith.addf %72, %73 : vector<8x512xf32>
      %75 = vector.extract_strided_slice %74 {offsets = [0, 0], sizes = [8, 384], strides = [1, 1]} : vector<8x512xf32> to vector<8x384xf32>
      %76 = arith.negf %75 : vector<8x384xf32>
      %77 = math.exp %76 : vector<8x384xf32>
      %cst_65 = arith.constant 1.000000e+00 : f32
      %78 = vector.broadcast %cst_65 : f32 to vector<8x384xf32>
      %79 = arith.addf %78, %77 : vector<8x384xf32>
      %80 = arith.divf %78, %79 : vector<8x384xf32>
      %81 = vector.extract_strided_slice %80 {offsets = [0, 0], sizes = [8, 128], strides = [1, 1]} : vector<8x384xf32> to vector<8x128xf32>
      %82 = vector.extract_strided_slice %80 {offsets = [0, 128], sizes = [8, 128], strides = [1, 1]} : vector<8x384xf32> to vector<8x128xf32>
      %83 = vector.extract_strided_slice %80 {offsets = [0, 256], sizes = [8, 128], strides = [1, 1]} : vector<8x384xf32> to vector<8x128xf32>
      %84 = vector.extract_strided_slice %74 {offsets = [0, 384], sizes = [8, 128], strides = [1, 1]} : vector<8x512xf32> to vector<8x128xf32>
      %85 = math.tanh %84 : vector<8x128xf32>
      %86 = arith.mulf %82, %69 : vector<8x128xf32>
      %87 = arith.mulf %81, %85 : vector<8x128xf32>
      %88 = arith.addf %86, %87 : vector<8x128xf32>
      %89 = math.tanh %88 : vector<8x128xf32>
      %90 = arith.mulf %83, %89 : vector<8x128xf32>
      %c0_66 = arith.constant 0 : index
      %c0_67 = arith.constant 0 : index
      %c0_68 = arith.constant 0 : index
      %91 = vector.load %arg12[%c0_66, %c0_67, %c0_68] : memref<2x8x128xf32, #tpu.memory_space<vmem>>, vector<1x8x128xf32>
      %92 = vector.shape_cast %91 : vector<1x8x128xf32> to vector<8x128xf32>
      %93 = vector.shape_cast %90 : vector<8x128xf32> to vector<1x8x128xf32>
      tpu.vector_store %arg12[%c0_66, %c0_67, %c0_68], %93 {strides = array<i32>} : memref<2x8x128xf32, #tpu.memory_space<vmem>>, vector<1x8x128xf32>,
      %c0_69 = arith.constant 0 : index
      %c0_70 = arith.constant 0 : index
      %c0_71 = arith.constant 0 : index
      %94 = vector.load %arg13[%c0_69, %c0_70, %c0_71] : memref<2x8x128xf32, #tpu.memory_space<vmem>>, vector<1x8x128xf32>
      %95 = vector.shape_cast %94 : vector<1x8x128xf32> to vector<8x128xf32>
      %96 = vector.shape_cast %88 : vector<8x128xf32> to vector<1x8x128xf32>
      tpu.vector_store %arg13[%c0_69, %c0_70, %c0_71], %96 {strides = array<i32>} : memref<2x8x128xf32, #tpu.memory_space<vmem>>, vector<1x8x128xf32>,
      %97 = arith.index_cast %c2_i32 : i32 to index
      %c0_72 = arith.constant 0 : index
      %c0_73 = arith.constant 0 : index
      %98 = vector.load %arg14[%97, %c0_72, %c0_73] : memref<4x8x128xf32, #tpu.memory_space<vmem>>, vector<1x8x128xf32>
      %99 = vector.shape_cast %98 : vector<1x8x128xf32> to vector<8x128xf32>
      %100 = vector.shape_cast %90 : vector<8x128xf32> to vector<1x8x128xf32>
      tpu.vector_store %arg14[%97, %c0_72, %c0_73], %100 {strides = array<i32>} : memref<4x8x128xf32, #tpu.memory_space<vmem>>, vector<1x8x128xf32>,
    } else {
    }
    %c3_i32 = arith.constant 3 : i32
    %c4_i32_20 = arith.constant 4 : i32
    %28 = arith.muli %arg1, %c4_i32_20 : i32
    %29 = arith.addi %28, %c3_i32 : i32
    %c8_i32_21 = arith.constant 8 : i32
    %30 = arith.cmpi slt, %29, %c8_i32_21 : i32
    %31 = arith.extui %30 : i1 to i32
    %c0_i32_22 = arith.constant 0 : i32
    %32 = arith.cmpi ne, %31, %c0_i32_22 : i32
    scf.if %32 {
      %c0_56 = arith.constant 0 : index
      %c0_57 = arith.constant 0 : index
      %c0_58 = arith.constant 0 : index
      %66 = vector.load %arg12[%c0_56, %c0_57, %c0_58] : memref<2x8x128xf32, #tpu.memory_space<vmem>>, vector<1x8x128xf32>
      %67 = vector.shape_cast %66 : vector<1x8x128xf32> to vector<8x128xf32>
      %c0_59 = arith.constant 0 : index
      %c0_60 = arith.constant 0 : index
      %c0_61 = arith.constant 0 : index
      %68 = vector.load %arg13[%c0_59, %c0_60, %c0_61] : memref<2x8x128xf32, #tpu.memory_space<vmem>>, vector<1x8x128xf32>
      %69 = vector.shape_cast %68 : vector<1x8x128xf32> to vector<8x128xf32>
      %70 = arith.index_cast %c3_i32 : i32 to index
      %c0_62 = arith.constant 0 : index
      %c0_63 = arith.constant 0 : index
      %71 = vector.load %arg15[%70, %c0_62, %c0_63] : memref<4x8x512xf32, #tpu.memory_space<vmem>>, vector<1x8x512xf32>
      %72 = vector.shape_cast %71 : vector<1x8x512xf32> to vector<8x512xf32>
      %cst_64 = arith.constant dense<0.000000e+00> : vector<8x512xf32>
      %73 = tpu.matmul %67, %4, %cst_64 {dimension_numbers = #tpu.dot_dimension_numbers<[1], [0], [0], [1], [0, 0, 1, 1], [], []>} : vector<8x128xf32>, vector<128x512xf32>, vector<8x512xf32> -> vector<8x512xf32>
      %74 = arith.addf %72, %73 : vector<8x512xf32>
      %75 = vector.extract_strided_slice %74 {offsets = [0, 0], sizes = [8, 384], strides = [1, 1]} : vector<8x512xf32> to vector<8x384xf32>
      %76 = arith.negf %75 : vector<8x384xf32>
      %77 = math.exp %76 : vector<8x384xf32>
      %cst_65 = arith.constant 1.000000e+00 : f32
      %78 = vector.broadcast %cst_65 : f32 to vector<8x384xf32>
      %79 = arith.addf %78, %77 : vector<8x384xf32>
      %80 = arith.divf %78, %79 : vector<8x384xf32>
      %81 = vector.extract_strided_slice %80 {offsets = [0, 0], sizes = [8, 128], strides = [1, 1]} : vector<8x384xf32> to vector<8x128xf32>
      %82 = vector.extract_strided_slice %80 {offsets = [0, 128], sizes = [8, 128], strides = [1, 1]} : vector<8x384xf32> to vector<8x128xf32>
      %83 = vector.extract_strided_slice %80 {offsets = [0, 256], sizes = [8, 128], strides = [1, 1]} : vector<8x384xf32> to vector<8x128xf32>
      %84 = vector.extract_strided_slice %74 {offsets = [0, 384], sizes = [8, 128], strides = [1, 1]} : vector<8x512xf32> to vector<8x128xf32>
      %85 = math.tanh %84 : vector<8x128xf32>
      %86 = arith.mulf %82, %69 : vector<8x128xf32>
      %87 = arith.mulf %81, %85 : vector<8x128xf32>
      %88 = arith.addf %86, %87 : vector<8x128xf32>
      %89 = math.tanh %88 : vector<8x128xf32>
      %90 = arith.mulf %83, %89 : vector<8x128xf32>
      %c0_66 = arith.constant 0 : index
      %c0_67 = arith.constant 0 : index
      %c0_68 = arith.constant 0 : index
      %91 = vector.load %arg12[%c0_66, %c0_67, %c0_68] : memref<2x8x128xf32, #tpu.memory_space<vmem>>, vector<1x8x128xf32>
      %92 = vector.shape_cast %91 : vector<1x8x128xf32> to vector<8x128xf32>
      %93 = vector.shape_cast %90 : vector<8x128xf32> to vector<1x8x128xf32>
      tpu.vector_store %arg12[%c0_66, %c0_67, %c0_68], %93 {strides = array<i32>} : memref<2x8x128xf32, #tpu.memory_space<vmem>>, vector<1x8x128xf32>,
      %c0_69 = arith.constant 0 : index
      %c0_70 = arith.constant 0 : index
      %c0_71 = arith.constant 0 : index
      %94 = vector.load %arg13[%c0_69, %c0_70, %c0_71] : memref<2x8x128xf32, #tpu.memory_space<vmem>>, vector<1x8x128xf32>
      %95 = vector.shape_cast %94 : vector<1x8x128xf32> to vector<8x128xf32>
      %96 = vector.shape_cast %88 : vector<8x128xf32> to vector<1x8x128xf32>
      tpu.vector_store %arg13[%c0_69, %c0_70, %c0_71], %96 {strides = array<i32>} : memref<2x8x128xf32, #tpu.memory_space<vmem>>, vector<1x8x128xf32>,
      %97 = arith.index_cast %c3_i32 : i32 to index
      %c0_72 = arith.constant 0 : index
      %c0_73 = arith.constant 0 : index
      %98 = vector.load %arg14[%97, %c0_72, %c0_73] : memref<4x8x128xf32, #tpu.memory_space<vmem>>, vector<1x8x128xf32>
      %99 = vector.shape_cast %98 : vector<1x8x128xf32> to vector<8x128xf32>
      %100 = vector.shape_cast %90 : vector<8x128xf32> to vector<1x8x128xf32>
      tpu.vector_store %arg14[%97, %c0_72, %c0_73], %100 {strides = array<i32>} : memref<4x8x128xf32, #tpu.memory_space<vmem>>, vector<1x8x128xf32>,
    } else {
    }
    %c4_i32_23 = arith.constant 4 : i32
    %c0_24 = arith.constant 0 : index
    %c0_25 = arith.constant 0 : index
    %33 = vector.load %arg6[%c0_24, %c0_25] : memref<128x512xf32, #tpu.memory_space<vmem>>, vector<128x512xf32>
    %c0_26 = arith.constant 0 : index
    %c0_27 = arith.constant 0 : index
    %34 = vector.load %arg7[%c0_26, %c0_27] : memref<128x512xf32, #tpu.memory_space<vmem>>, vector<128x512xf32>
    %c0_28 = arith.constant 0 : index
    %c0_29 = arith.constant 0 : index
    %35 = vector.load %arg8[%c0_28, %c0_29] : memref<1x512xf32, #tpu.memory_space<vmem>>, vector<1x512xf32>
    %c0_30 = arith.constant 0 : index
    %c0_31 = arith.constant 0 : index
    %c0_32 = arith.constant 0 : index
    %36 = vector.load %arg14[%c0_30, %c0_31, %c0_32] : memref<4x8x128xf32, #tpu.memory_space<vmem>>, vector<4x8x128xf32>
    %37 = vector.shape_cast %36 : vector<4x8x128xf32> to vector<32x128xf32>
    %cst_33 = arith.constant dense<0.000000e+00> : vector<32x512xf32>
    %38 = tpu.matmul %37, %33, %cst_33 {dimension_numbers = #tpu.dot_dimension_numbers<[1], [0], [0], [1], [0, 0, 1, 1], [], []>} : vector<32x128xf32>, vector<128x512xf32>, vector<32x512xf32> -> vector<32x512xf32>
    %39 = vector.broadcast %35 : vector<1x512xf32> to vector<32x512xf32>
    %40 = arith.addf %38, %39 : vector<32x512xf32>
    %41 = vector.shape_cast %40 : vector<32x512xf32> to vector<4x8x512xf32>
    %c0_34 = arith.constant 0 : index
    %c0_35 = arith.constant 0 : index
    %c0_36 = arith.constant 0 : index
    %42 = vector.load %arg15[%c0_34, %c0_35, %c0_36] : memref<4x8x512xf32, #tpu.memory_space<vmem>>, vector<4x8x512xf32>
    tpu.vector_store %arg15[%c0_34, %c0_35, %c0_36], %41 {strides = array<i32>} : memref<4x8x512xf32, #tpu.memory_space<vmem>>, vector<4x8x512xf32>,
    %c0_i32_37 = arith.constant 0 : i32
    %c4_i32_38 = arith.constant 4 : i32
    %43 = arith.muli %arg1, %c4_i32_38 : i32
    %44 = arith.addi %43, %c0_i32_37 : i32
    %c8_i32_39 = arith.constant 8 : i32
    %45 = arith.cmpi slt, %44, %c8_i32_39 : i32
    %46 = arith.extui %45 : i1 to i32
    %c0_i32_40 = arith.constant 0 : i32
    %47 = arith.cmpi ne, %46, %c0_i32_40 : i32
    scf.if %47 {
      %c1 = arith.constant 1 : index
      %c0_56 = arith.constant 0 : index
      %c0_57 = arith.constant 0 : index
      %66 = vector.load %arg12[%c1, %c0_56, %c0_57] : memref<2x8x128xf32, #tpu.memory_space<vmem>>, vector<1x8x128xf32>
      %67 = vector.shape_cast %66 : vector<1x8x128xf32> to vector<8x128xf32>
      %c1_58 = arith.constant 1 : index
      %c0_59 = arith.constant 0 : index
      %c0_60 = arith.constant 0 : index
      %68 = vector.load %arg13[%c1_58, %c0_59, %c0_60] : memref<2x8x128xf32, #tpu.memory_space<vmem>>, vector<1x8x128xf32>
      %69 = vector.shape_cast %68 : vector<1x8x128xf32> to vector<8x128xf32>
      %70 = arith.index_cast %c0_i32_37 : i32 to index
      %c0_61 = arith.constant 0 : index
      %c0_62 = arith.constant 0 : index
      %71 = vector.load %arg15[%70, %c0_61, %c0_62] : memref<4x8x512xf32, #tpu.memory_space<vmem>>, vector<1x8x512xf32>
      %72 = vector.shape_cast %71 : vector<1x8x512xf32> to vector<8x512xf32>
      %cst_63 = arith.constant dense<0.000000e+00> : vector<8x512xf32>
      %73 = tpu.matmul %67, %34, %cst_63 {dimension_numbers = #tpu.dot_dimension_numbers<[1], [0], [0], [1], [0, 0, 1, 1], [], []>} : vector<8x128xf32>, vector<128x512xf32>, vector<8x512xf32> -> vector<8x512xf32>
      %74 = arith.addf %72, %73 : vector<8x512xf32>
      %75 = vector.extract_strided_slice %74 {offsets = [0, 0], sizes = [8, 384], strides = [1, 1]} : vector<8x512xf32> to vector<8x384xf32>
      %76 = arith.negf %75 : vector<8x384xf32>
      %77 = math.exp %76 : vector<8x384xf32>
      %cst_64 = arith.constant 1.000000e+00 : f32
      %78 = vector.broadcast %cst_64 : f32 to vector<8x384xf32>
      %79 = arith.addf %78, %77 : vector<8x384xf32>
      %80 = arith.divf %78, %79 : vector<8x384xf32>
      %81 = vector.extract_strided_slice %80 {offsets = [0, 0], sizes = [8, 128], strides = [1, 1]} : vector<8x384xf32> to vector<8x128xf32>
      %82 = vector.extract_strided_slice %80 {offsets = [0, 128], sizes = [8, 128], strides = [1, 1]} : vector<8x384xf32> to vector<8x128xf32>
      %83 = vector.extract_strided_slice %80 {offsets = [0, 256], sizes = [8, 128], strides = [1, 1]} : vector<8x384xf32> to vector<8x128xf32>
      %84 = vector.extract_strided_slice %74 {offsets = [0, 384], sizes = [8, 128], strides = [1, 1]} : vector<8x512xf32> to vector<8x128xf32>
      %85 = math.tanh %84 : vector<8x128xf32>
      %86 = arith.mulf %82, %69 : vector<8x128xf32>
      %87 = arith.mulf %81, %85 : vector<8x128xf32>
      %88 = arith.addf %86, %87 : vector<8x128xf32>
      %89 = math.tanh %88 : vector<8x128xf32>
      %90 = arith.mulf %83, %89 : vector<8x128xf32>
      %c1_65 = arith.constant 1 : index
      %c0_66 = arith.constant 0 : index
      %c0_67 = arith.constant 0 : index
      %91 = vector.load %arg12[%c1_65, %c0_66, %c0_67] : memref<2x8x128xf32, #tpu.memory_space<vmem>>, vector<1x8x128xf32>
      %92 = vector.shape_cast %91 : vector<1x8x128xf32> to vector<8x128xf32>
      %93 = vector.shape_cast %90 : vector<8x128xf32> to vector<1x8x128xf32>
      tpu.vector_store %arg12[%c1_65, %c0_66, %c0_67], %93 {strides = array<i32>} : memref<2x8x128xf32, #tpu.memory_space<vmem>>, vector<1x8x128xf32>,
      %c1_68 = arith.constant 1 : index
      %c0_69 = arith.constant 0 : index
      %c0_70 = arith.constant 0 : index
      %94 = vector.load %arg13[%c1_68, %c0_69, %c0_70] : memref<2x8x128xf32, #tpu.memory_space<vmem>>, vector<1x8x128xf32>
      %95 = vector.shape_cast %94 : vector<1x8x128xf32> to vector<8x128xf32>
      %96 = vector.shape_cast %88 : vector<8x128xf32> to vector<1x8x128xf32>
      tpu.vector_store %arg13[%c1_68, %c0_69, %c0_70], %96 {strides = array<i32>} : memref<2x8x128xf32, #tpu.memory_space<vmem>>, vector<1x8x128xf32>,
    } else {
    }
    %c1_i32_41 = arith.constant 1 : i32
    %c4_i32_42 = arith.constant 4 : i32
    %48 = arith.muli %arg1, %c4_i32_42 : i32
    %49 = arith.addi %48, %c1_i32_41 : i32
    %c8_i32_43 = arith.constant 8 : i32
    %50 = arith.cmpi slt, %49, %c8_i32_43 : i32
    %51 = arith.extui %50 : i1 to i32
    %c0_i32_44 = arith.constant 0 : i32
    %52 = arith.cmpi ne, %51, %c0_i32_44 : i32
    scf.if %52 {
      %c1 = arith.constant 1 : index
      %c0_56 = arith.constant 0 : index
      %c0_57 = arith.constant 0 : index
      %66 = vector.load %arg12[%c1, %c0_56, %c0_57] : memref<2x8x128xf32, #tpu.memory_space<vmem>>, vector<1x8x128xf32>
      %67 = vector.shape_cast %66 : vector<1x8x128xf32> to vector<8x128xf32>
      %c1_58 = arith.constant 1 : index
      %c0_59 = arith.constant 0 : index
      %c0_60 = arith.constant 0 : index
      %68 = vector.load %arg13[%c1_58, %c0_59, %c0_60] : memref<2x8x128xf32, #tpu.memory_space<vmem>>, vector<1x8x128xf32>
      %69 = vector.shape_cast %68 : vector<1x8x128xf32> to vector<8x128xf32>
      %70 = arith.index_cast %c1_i32_41 : i32 to index
      %c0_61 = arith.constant 0 : index
      %c0_62 = arith.constant 0 : index
      %71 = vector.load %arg15[%70, %c0_61, %c0_62] : memref<4x8x512xf32, #tpu.memory_space<vmem>>, vector<1x8x512xf32>
      %72 = vector.shape_cast %71 : vector<1x8x512xf32> to vector<8x512xf32>
      %cst_63 = arith.constant dense<0.000000e+00> : vector<8x512xf32>
      %73 = tpu.matmul %67, %34, %cst_63 {dimension_numbers = #tpu.dot_dimension_numbers<[1], [0], [0], [1], [0, 0, 1, 1], [], []>} : vector<8x128xf32>, vector<128x512xf32>, vector<8x512xf32> -> vector<8x512xf32>
      %74 = arith.addf %72, %73 : vector<8x512xf32>
      %75 = vector.extract_strided_slice %74 {offsets = [0, 0], sizes = [8, 384], strides = [1, 1]} : vector<8x512xf32> to vector<8x384xf32>
      %76 = arith.negf %75 : vector<8x384xf32>
      %77 = math.exp %76 : vector<8x384xf32>
      %cst_64 = arith.constant 1.000000e+00 : f32
      %78 = vector.broadcast %cst_64 : f32 to vector<8x384xf32>
      %79 = arith.addf %78, %77 : vector<8x384xf32>
      %80 = arith.divf %78, %79 : vector<8x384xf32>
      %81 = vector.extract_strided_slice %80 {offsets = [0, 0], sizes = [8, 128], strides = [1, 1]} : vector<8x384xf32> to vector<8x128xf32>
      %82 = vector.extract_strided_slice %80 {offsets = [0, 128], sizes = [8, 128], strides = [1, 1]} : vector<8x384xf32> to vector<8x128xf32>
      %83 = vector.extract_strided_slice %80 {offsets = [0, 256], sizes = [8, 128], strides = [1, 1]} : vector<8x384xf32> to vector<8x128xf32>
      %84 = vector.extract_strided_slice %74 {offsets = [0, 384], sizes = [8, 128], strides = [1, 1]} : vector<8x512xf32> to vector<8x128xf32>
      %85 = math.tanh %84 : vector<8x128xf32>
      %86 = arith.mulf %82, %69 : vector<8x128xf32>
      %87 = arith.mulf %81, %85 : vector<8x128xf32>
      %88 = arith.addf %86, %87 : vector<8x128xf32>
      %89 = math.tanh %88 : vector<8x128xf32>
      %90 = arith.mulf %83, %89 : vector<8x128xf32>
      %c1_65 = arith.constant 1 : index
      %c0_66 = arith.constant 0 : index
      %c0_67 = arith.constant 0 : index
      %91 = vector.load %arg12[%c1_65, %c0_66, %c0_67] : memref<2x8x128xf32, #tpu.memory_space<vmem>>, vector<1x8x128xf32>
      %92 = vector.shape_cast %91 : vector<1x8x128xf32> to vector<8x128xf32>
      %93 = vector.shape_cast %90 : vector<8x128xf32> to vector<1x8x128xf32>
      tpu.vector_store %arg12[%c1_65, %c0_66, %c0_67], %93 {strides = array<i32>} : memref<2x8x128xf32, #tpu.memory_space<vmem>>, vector<1x8x128xf32>,
      %c1_68 = arith.constant 1 : index
      %c0_69 = arith.constant 0 : index
      %c0_70 = arith.constant 0 : index
      %94 = vector.load %arg13[%c1_68, %c0_69, %c0_70] : memref<2x8x128xf32, #tpu.memory_space<vmem>>, vector<1x8x128xf32>
      %95 = vector.shape_cast %94 : vector<1x8x128xf32> to vector<8x128xf32>
      %96 = vector.shape_cast %88 : vector<8x128xf32> to vector<1x8x128xf32>
      tpu.vector_store %arg13[%c1_68, %c0_69, %c0_70], %96 {strides = array<i32>} : memref<2x8x128xf32, #tpu.memory_space<vmem>>, vector<1x8x128xf32>,
    } else {
    }
    %c2_i32_45 = arith.constant 2 : i32
    %c4_i32_46 = arith.constant 4 : i32
    %53 = arith.muli %arg1, %c4_i32_46 : i32
    %54 = arith.addi %53, %c2_i32_45 : i32
    %c8_i32_47 = arith.constant 8 : i32
    %55 = arith.cmpi slt, %54, %c8_i32_47 : i32
    %56 = arith.extui %55 : i1 to i32
    %c0_i32_48 = arith.constant 0 : i32
    %57 = arith.cmpi ne, %56, %c0_i32_48 : i32
    scf.if %57 {
      %c1 = arith.constant 1 : index
      %c0_56 = arith.constant 0 : index
      %c0_57 = arith.constant 0 : index
      %66 = vector.load %arg12[%c1, %c0_56, %c0_57] : memref<2x8x128xf32, #tpu.memory_space<vmem>>, vector<1x8x128xf32>
      %67 = vector.shape_cast %66 : vector<1x8x128xf32> to vector<8x128xf32>
      %c1_58 = arith.constant 1 : index
      %c0_59 = arith.constant 0 : index
      %c0_60 = arith.constant 0 : index
      %68 = vector.load %arg13[%c1_58, %c0_59, %c0_60] : memref<2x8x128xf32, #tpu.memory_space<vmem>>, vector<1x8x128xf32>
      %69 = vector.shape_cast %68 : vector<1x8x128xf32> to vector<8x128xf32>
      %70 = arith.index_cast %c2_i32_45 : i32 to index
      %c0_61 = arith.constant 0 : index
      %c0_62 = arith.constant 0 : index
      %71 = vector.load %arg15[%70, %c0_61, %c0_62] : memref<4x8x512xf32, #tpu.memory_space<vmem>>, vector<1x8x512xf32>
      %72 = vector.shape_cast %71 : vector<1x8x512xf32> to vector<8x512xf32>
      %cst_63 = arith.constant dense<0.000000e+00> : vector<8x512xf32>
      %73 = tpu.matmul %67, %34, %cst_63 {dimension_numbers = #tpu.dot_dimension_numbers<[1], [0], [0], [1], [0, 0, 1, 1], [], []>} : vector<8x128xf32>, vector<128x512xf32>, vector<8x512xf32> -> vector<8x512xf32>
      %74 = arith.addf %72, %73 : vector<8x512xf32>
      %75 = vector.extract_strided_slice %74 {offsets = [0, 0], sizes = [8, 384], strides = [1, 1]} : vector<8x512xf32> to vector<8x384xf32>
      %76 = arith.negf %75 : vector<8x384xf32>
      %77 = math.exp %76 : vector<8x384xf32>
      %cst_64 = arith.constant 1.000000e+00 : f32
      %78 = vector.broadcast %cst_64 : f32 to vector<8x384xf32>
      %79 = arith.addf %78, %77 : vector<8x384xf32>
      %80 = arith.divf %78, %79 : vector<8x384xf32>
      %81 = vector.extract_strided_slice %80 {offsets = [0, 0], sizes = [8, 128], strides = [1, 1]} : vector<8x384xf32> to vector<8x128xf32>
      %82 = vector.extract_strided_slice %80 {offsets = [0, 128], sizes = [8, 128], strides = [1, 1]} : vector<8x384xf32> to vector<8x128xf32>
      %83 = vector.extract_strided_slice %80 {offsets = [0, 256], sizes = [8, 128], strides = [1, 1]} : vector<8x384xf32> to vector<8x128xf32>
      %84 = vector.extract_strided_slice %74 {offsets = [0, 384], sizes = [8, 128], strides = [1, 1]} : vector<8x512xf32> to vector<8x128xf32>
      %85 = math.tanh %84 : vector<8x128xf32>
      %86 = arith.mulf %82, %69 : vector<8x128xf32>
      %87 = arith.mulf %81, %85 : vector<8x128xf32>
      %88 = arith.addf %86, %87 : vector<8x128xf32>
      %89 = math.tanh %88 : vector<8x128xf32>
      %90 = arith.mulf %83, %89 : vector<8x128xf32>
      %c1_65 = arith.constant 1 : index
      %c0_66 = arith.constant 0 : index
      %c0_67 = arith.constant 0 : index
      %91 = vector.load %arg12[%c1_65, %c0_66, %c0_67] : memref<2x8x128xf32, #tpu.memory_space<vmem>>, vector<1x8x128xf32>
      %92 = vector.shape_cast %91 : vector<1x8x128xf32> to vector<8x128xf32>
      %93 = vector.shape_cast %90 : vector<8x128xf32> to vector<1x8x128xf32>
      tpu.vector_store %arg12[%c1_65, %c0_66, %c0_67], %93 {strides = array<i32>} : memref<2x8x128xf32, #tpu.memory_space<vmem>>, vector<1x8x128xf32>,
      %c1_68 = arith.constant 1 : index
      %c0_69 = arith.constant 0 : index
      %c0_70 = arith.constant 0 : index
      %94 = vector.load %arg13[%c1_68, %c0_69, %c0_70] : memref<2x8x128xf32, #tpu.memory_space<vmem>>, vector<1x8x128xf32>
      %95 = vector.shape_cast %94 : vector<1x8x128xf32> to vector<8x128xf32>
      %96 = vector.shape_cast %88 : vector<8x128xf32> to vector<1x8x128xf32>
      tpu.vector_store %arg13[%c1_68, %c0_69, %c0_70], %96 {strides = array<i32>} : memref<2x8x128xf32, #tpu.memory_space<vmem>>, vector<1x8x128xf32>,
    } else {
    }
    %c3_i32_49 = arith.constant 3 : i32
    %c4_i32_50 = arith.constant 4 : i32
    %58 = arith.muli %arg1, %c4_i32_50 : i32
    %59 = arith.addi %58, %c3_i32_49 : i32
    %c8_i32_51 = arith.constant 8 : i32
    %60 = arith.cmpi slt, %59, %c8_i32_51 : i32
    %61 = arith.extui %60 : i1 to i32
    %c0_i32_52 = arith.constant 0 : i32
    %62 = arith.cmpi ne, %61, %c0_i32_52 : i32
    scf.if %62 {
      %c1 = arith.constant 1 : index
      %c0_56 = arith.constant 0 : index
      %c0_57 = arith.constant 0 : index
      %66 = vector.load %arg12[%c1, %c0_56, %c0_57] : memref<2x8x128xf32, #tpu.memory_space<vmem>>, vector<1x8x128xf32>
      %67 = vector.shape_cast %66 : vector<1x8x128xf32> to vector<8x128xf32>
      %c1_58 = arith.constant 1 : index
      %c0_59 = arith.constant 0 : index
      %c0_60 = arith.constant 0 : index
      %68 = vector.load %arg13[%c1_58, %c0_59, %c0_60] : memref<2x8x128xf32, #tpu.memory_space<vmem>>, vector<1x8x128xf32>
      %69 = vector.shape_cast %68 : vector<1x8x128xf32> to vector<8x128xf32>
      %70 = arith.index_cast %c3_i32_49 : i32 to index
      %c0_61 = arith.constant 0 : index
      %c0_62 = arith.constant 0 : index
      %71 = vector.load %arg15[%70, %c0_61, %c0_62] : memref<4x8x512xf32, #tpu.memory_space<vmem>>, vector<1x8x512xf32>
      %72 = vector.shape_cast %71 : vector<1x8x512xf32> to vector<8x512xf32>
      %cst_63 = arith.constant dense<0.000000e+00> : vector<8x512xf32>
      %73 = tpu.matmul %67, %34, %cst_63 {dimension_numbers = #tpu.dot_dimension_numbers<[1], [0], [0], [1], [0, 0, 1, 1], [], []>} : vector<8x128xf32>, vector<128x512xf32>, vector<8x512xf32> -> vector<8x512xf32>
      %74 = arith.addf %72, %73 : vector<8x512xf32>
      %75 = vector.extract_strided_slice %74 {offsets = [0, 0], sizes = [8, 384], strides = [1, 1]} : vector<8x512xf32> to vector<8x384xf32>
      %76 = arith.negf %75 : vector<8x384xf32>
      %77 = math.exp %76 : vector<8x384xf32>
      %cst_64 = arith.constant 1.000000e+00 : f32
      %78 = vector.broadcast %cst_64 : f32 to vector<8x384xf32>
      %79 = arith.addf %78, %77 : vector<8x384xf32>
      %80 = arith.divf %78, %79 : vector<8x384xf32>
      %81 = vector.extract_strided_slice %80 {offsets = [0, 0], sizes = [8, 128], strides = [1, 1]} : vector<8x384xf32> to vector<8x128xf32>
      %82 = vector.extract_strided_slice %80 {offsets = [0, 128], sizes = [8, 128], strides = [1, 1]} : vector<8x384xf32> to vector<8x128xf32>
      %83 = vector.extract_strided_slice %80 {offsets = [0, 256], sizes = [8, 128], strides = [1, 1]} : vector<8x384xf32> to vector<8x128xf32>
      %84 = vector.extract_strided_slice %74 {offsets = [0, 384], sizes = [8, 128], strides = [1, 1]} : vector<8x512xf32> to vector<8x128xf32>
      %85 = math.tanh %84 : vector<8x128xf32>
      %86 = arith.mulf %82, %69 : vector<8x128xf32>
      %87 = arith.mulf %81, %85 : vector<8x128xf32>
      %88 = arith.addf %86, %87 : vector<8x128xf32>
      %89 = math.tanh %88 : vector<8x128xf32>
      %90 = arith.mulf %83, %89 : vector<8x128xf32>
      %c1_65 = arith.constant 1 : index
      %c0_66 = arith.constant 0 : index
      %c0_67 = arith.constant 0 : index
      %91 = vector.load %arg12[%c1_65, %c0_66, %c0_67] : memref<2x8x128xf32, #tpu.memory_space<vmem>>, vector<1x8x128xf32>
      %92 = vector.shape_cast %91 : vector<1x8x128xf32> to vector<8x128xf32>
      %93 = vector.shape_cast %90 : vector<8x128xf32> to vector<1x8x128xf32>
      tpu.vector_store %arg12[%c1_65, %c0_66, %c0_67], %93 {strides = array<i32>} : memref<2x8x128xf32, #tpu.memory_space<vmem>>, vector<1x8x128xf32>,
      %c1_68 = arith.constant 1 : index
      %c0_69 = arith.constant 0 : index
      %c0_70 = arith.constant 0 : index
      %94 = vector.load %arg13[%c1_68, %c0_69, %c0_70] : memref<2x8x128xf32, #tpu.memory_space<vmem>>, vector<1x8x128xf32>
      %95 = vector.shape_cast %94 : vector<1x8x128xf32> to vector<8x128xf32>
      %96 = vector.shape_cast %88 : vector<8x128xf32> to vector<1x8x128xf32>
      tpu.vector_store %arg13[%c1_68, %c0_69, %c0_70], %96 {strides = array<i32>} : memref<2x8x128xf32, #tpu.memory_space<vmem>>, vector<1x8x128xf32>,
    } else {
    }
    %c4_i32_53 = arith.constant 4 : i32
    %c1_i32_54 = arith.constant 1 : i32
    %63 = arith.cmpi eq, %arg1, %c1_i32_54 : i32
    %64 = arith.extui %63 : i1 to i32
    %c0_i32_55 = arith.constant 0 : i32
    %65 = arith.cmpi ne, %64, %c0_i32_55 : i32
    scf.if %65 {
      %c1 = arith.constant 1 : index
      %c0_56 = arith.constant 0 : index
      %c0_57 = arith.constant 0 : index
      %66 = vector.load %arg12[%c1, %c0_56, %c0_57] : memref<2x8x128xf32, #tpu.memory_space<vmem>>, vector<1x8x128xf32>
      %67 = vector.shape_cast %66 : vector<1x8x128xf32> to vector<8x128xf32>
      %c0_58 = arith.constant 0 : index
      %c0_59 = arith.constant 0 : index
      %68 = vector.load %arg9[%c0_58, %c0_59] : memref<128x128xf32, #tpu.memory_space<vmem>>, vector<128x128xf32>
      %cst_60 = arith.constant dense<0.000000e+00> : vector<8x128xf32>
      %69 = tpu.matmul %67, %68, %cst_60 {dimension_numbers = #tpu.dot_dimension_numbers<[1], [0], [0], [1], [0, 0, 1, 1], [], []>} : vector<8x128xf32>, vector<128x128xf32>, vector<8x128xf32> -> vector<8x128xf32>
      %c0_61 = arith.constant 0 : index
      %c0_62 = arith.constant 0 : index
      %70 = vector.load %arg10[%c0_61, %c0_62] : memref<1x128xf32, #tpu.memory_space<vmem>>, vector<1x128xf32>
      %71 = vector.broadcast %70 : vector<1x128xf32> to vector<8x128xf32>
      %72 = arith.addf %69, %71 : vector<8x128xf32>
      %c0_63 = arith.constant 0 : index
      %c0_64 = arith.constant 0 : index
      %73 = vector.load %arg11[%c0_63, %c0_64] : memref<8x128xf32, #tpu.memory_space<vmem>>, vector<8x128xf32>
      tpu.vector_store %arg11[%c0_63, %c0_64], %72 {strides = array<i32>} : memref<8x128xf32, #tpu.memory_space<vmem>>, vector<8x128xf32>,
    } else {
    }
    return
  }
  func.func @transform_0(%arg0: i32, %arg1: i32) -> (i32, i32, i32) {
    %c0_i32 = arith.constant 0 : i32
    %c0_i32_0 = arith.constant 0 : i32
    return %arg1, %arg0, %c0_i32 : i32, i32, i32
  }
  func.func @transform_1(%arg0: i32, %arg1: i32) -> (i32, i32) {
    %c0_i32 = arith.constant 0 : i32
    %c0_i32_0 = arith.constant 0 : i32
    %c0_i32_1 = arith.constant 0 : i32
    return %c0_i32, %c0_i32_0 : i32, i32
  }
  func.func @transform_2(%arg0: i32, %arg1: i32) -> (i32, i32) {
    %c0_i32 = arith.constant 0 : i32
    %c0_i32_0 = arith.constant 0 : i32
    %c0_i32_1 = arith.constant 0 : i32
    return %c0_i32, %c0_i32_0 : i32, i32
  }
  func.func @transform_3(%arg0: i32, %arg1: i32) -> (i32, i32) {
    %c0_i32 = arith.constant 0 : i32
    %c0_i32_0 = arith.constant 0 : i32
    %c0_i32_1 = arith.constant 0 : i32
    return %c0_i32, %c0_i32_0 : i32, i32
  }
  func.func @transform_4(%arg0: i32, %arg1: i32) -> (i32, i32) {
    %c0_i32 = arith.constant 0 : i32
    %c0_i32_0 = arith.constant 0 : i32
    %c0_i32_1 = arith.constant 0 : i32
    return %c0_i32, %c0_i32_0 : i32, i32
  }
  func.func @transform_5(%arg0: i32, %arg1: i32) -> (i32, i32) {
    %c0_i32 = arith.constant 0 : i32
    %c0_i32_0 = arith.constant 0 : i32
    %c0_i32_1 = arith.constant 0 : i32
    return %c0_i32, %c0_i32_0 : i32, i32
  }
  func.func @transform_6(%arg0: i32, %arg1: i32) -> (i32, i32) {
    %c0_i32 = arith.constant 0 : i32
    %c0_i32_0 = arith.constant 0 : i32
    %c0_i32_1 = arith.constant 0 : i32
    return %c0_i32, %c0_i32_0 : i32, i32
  }
  func.func @transform_7(%arg0: i32, %arg1: i32) -> (i32, i32) {
    %c0_i32 = arith.constant 0 : i32
    %c0_i32_0 = arith.constant 0 : i32
    %c0_i32_1 = arith.constant 0 : i32
    return %c0_i32, %c0_i32_0 : i32, i32
  }
  func.func @transform_8(%arg0: i32, %arg1: i32) -> (i32, i32) {
    %c0_i32 = arith.constant 0 : i32
    %c0_i32_0 = arith.constant 0 : i32
    %c0_i32_1 = arith.constant 0 : i32
    return %c0_i32, %c0_i32_0 : i32, i32
  }
  func.func @transform_9(%arg0: i32, %arg1: i32) -> (i32, i32) {
    %c0_i32 = arith.constant 0 : i32
    %c0_i32_0 = arith.constant 0 : i32
    return %arg0, %c0_i32 : i32, i32
  }
}

</mosaic_0001>

<llo_original>
// kernel: tpu_custom_call.1
$region0: #{tpu_custom_call.1}
  #allocation0 [shape = 'u32[]', space=smem, size = 0x4, offset = 0x4, fixed_abs, tag = 'smem constant byte address 0x4 - core index']
  #allocation1 [shape = 'u32[72,128]{1,0:T(1,128)}', space=vmem, size = 0x9000, scoped, tag = 'internal scratch']
  #allocation2 [shape = 'f32[2,8,128]{2,1,0:T(8,128)}', space=vmem, size = 0x2000, scoped, tag = 'scratch operand']
  #allocation3 [shape = 'f32[2,8,128]{2,1,0:T(8,128)}', space=vmem, size = 0x2000, scoped, tag = 'scratch operand']
  #allocation4 [shape = 'f32[4,8,128]{2,1,0:T(8,128)}', space=vmem, size = 0x4000, scoped, tag = 'scratch operand']
  #allocation5 [shape = 'f32[4,8,512]{2,1,0:T(8,128)}', space=vmem, size = 0x10000, scoped, tag = 'scratch operand']
  %s0 = inlined_call_operand.hbm [shape: f32[8,8,128], index: 0, kind: input, shape index: {}]
  %s1 = inlined_call_operand.hbm [shape: f32[128,512], index: 1, kind: input, shape index: {}]
  %s2 = inlined_call_operand.hbm [shape: f32[128,512], index: 2, kind: input, shape index: {}]
  %s3 = inlined_call_operand.hbm [shape: f32[1,512], index: 3, kind: input, shape index: {}]
  %s4 = inlined_call_operand.hbm [shape: f32[128,512], index: 4, kind: input, shape index: {}]
  %s5 = inlined_call_operand.hbm [shape: f32[128,512], index: 5, kind: input, shape index: {}]
  %s6 = inlined_call_operand.vmem [shape: f32[1,512], index: 6, kind: input, shape index: {}]
  %s7 = inlined_call_operand.hbm [shape: f32[128,128], index: 7, kind: input, shape index: {}]
  %s8 = inlined_call_operand.vmem [shape: f32[1,128], index: 8, kind: input, shape index: {}]
  %s9 = inlined_call_operand.hbm [shape: f32[8,128], index: 9, kind: output, shape index: {}]
  %s10 = sld [smem:[#allocation0]]
  $region137: #{tpu_custom_call.1} parent=0
    _
  %s12 = ssub.s32 1, %s10
  %s13 = scalar_select 0, %s12, %s10
  $region1: #{tpu_custom_call.1} parent=0
    #allocation6 [shape = 'u8[32768]{0}', space=vmem, size = 0x8000, scoped, tag = 'input window, operand 0']
    #allocation7 [shape = 's32[2]{0}', space=sflag, size = 0x8, scoped, tag = 'scoped memory for tpu_custom_call.1']
    #allocation8 [shape = 's32[2]{0}', space=sflag, size = 0x8, scoped, tag = 'scoped memory for tpu_custom_call.1']
    #allocation9 [shape = 'u8[262144]{0}', space=vmem, size = 0x40000, scoped, tag = 'input window, operand 1, single buffered']
    #allocation10 [shape = 's32[1]{0}', space=sflag, size = 0x4, scoped, tag = 'scoped memory for tpu_custom_call.1']
    #allocation11 [shape = 'u8[262144]{0}', space=vmem, size = 0x40000, scoped, tag = 'input window, operand 2, single buffered']
    #allocation12 [shape = 'u8[2048]{0}', space=vmem, size = 0x800, scoped, tag = 'input window, operand 3, single buffered']
    #allocation13 [shape = 's32[1]{0}', space=sflag, size = 0x4, scoped, tag = 'scoped memory for tpu_custom_call.1']
    #allocation14 [shape = 'u8[262144]{0}', space=vmem, size = 0x40000, scoped, tag = 'input window, operand 4, single buffered']
    #allocation15 [shape = 'u8[262144]{0}', space=vmem, size = 0x40000, scoped, tag = 'input window, operand 5, single buffered']
    #allocation16 [shape = 's32[1]{0}', space=sflag, size = 0x4, scoped, tag = 'scoped memory for tpu_custom_call.1']
    #allocation17 [shape = 'u8[65536]{0}', space=vmem, size = 0x10000, scoped, tag = 'input window, operand 7, single buffered']
    #allocation18 [shape = 'u8[4096]{0}', space=vmem, size = 0x1000, scoped, tag = 'output window, operand 0, single buffered']
    %14 = vsyncpa [#allocation7], 0
    %s15 = scalar_lea.sflag [#allocation7], 1
    %16 = vsyncpa %s15, 0
    %17 = vsyncpa [#allocation10], 0
    %18 = vsyncpa [#allocation13], 0
    %19 = vsyncpa [#allocation16], 0
    %20 = vsyncpa [#allocation8], 0
    loop: start=0, step=1, limit=4
    $region2: #{tpu_custom_call.1} parent=1 // loop_pre_header
      _
    $region3: #{tpu_custom_call.1} parent=1 // loop_header
      %s22 = sphi 0, %s26
      %p23 = scmp.ge.s32.totalorder %s22, 4
      %s29 = sphi 0, %s41
      %s30 = sphi 0, %s37
      %s31 = sphi 0, %s29
      %s32 = sphi 0, %s30
      %s33 = sphi 0, %s31
      %s34 = sphi 0, %s32
      %s46 = sphi 0, %s48
      %s49 = sphi 0, %s46
      %s50 = sphi 0, %s49
      %s66 = sphi 0, %s50
      %s70 = sphi 0, %s70
      %s72 = sphi 0, %s70
      %s73 = sphi 0, %s72
      %s87 = sphi 0, %s73
      %s91 = sphi 0, %s91
      %s93 = sphi 0, %s91
      %s94 = sphi 0, %s93
      %s108 = sphi 0, %s94
      %s112 = sphi 0, %s112
      %s114 = sphi 0, %s112
      %s115 = sphi 0, %s114
      %s129 = sphi 0, %s115
      %s133 = sphi 0, %s133
      %s135 = sphi 0, %s133
      %s136 = sphi 0, %s135
      %s150 = sphi 0, %s136
      %s154 = sphi 0, %s154
      %s156 = sphi 0, %s154
      %s157 = sphi 0, %s156
      %s171 = sphi 0, %s157
      %s175 = sphi 0, %s175
      %s177 = sphi 0, %s175
      %s178 = sphi 0, %s177
      %s192 = sphi 0, %s178
      %s196 = sphi 0, %s196
      %s198 = sphi 0, %s196
      %s199 = sphi 0, %s198
      %s213 = sphi 0, %s199
      %s217 = sphi 0, %s217
      %s219 = sphi 0, %s217
      %s220 = sphi 0, %s219
      %s234 = sphi 0, %s220
      %s240 = sphi 0, %s242
      %s243 = sphi 0, %s240
      %s244 = sphi 0, %s243
      %s260 = sphi 0, %s244
    $region4: #{tpu_custom_call.1} parent=1 // loop_header_branch
      %25 = sbr.rel (%p23) target = $region8
    $region5: #{tpu_custom_call.1} parent=1 // loop_body
      %s27 = ssub.s32 %s22, 1
      %s28 = ssub.s32 %s22, 2
      %s35 = sadd.s32 1, %s30
      %p36 = scmp.ge.s32.totalorder %s35, 2
      %s37 = scalar_select %p36, 0, %s35
      %s38 = sadd.s32 1, %s29
      %s39 = scalar_select %p36, %s38, %s29
      %p40 = scmp.ge.s32.totalorder %s39, 1
      %s41 = scalar_select %p40, 0, %s39
      %s42 = ssub.s32 %s30, %s37
      %s43 = ssub.s32 %s29, %s41
      %s44 = sor.u32 %s42, %s43
      %p45 = scmp.eq.s32.totalorder %s44, 0
      %s47 = sadd.s32 %s46, 1
      %s48 = scalar_select %p45, %s46, %s47
      %p51 = pneg %p45
      %p52 = scmp.eq.s32.totalorder %s22, 1
      %p53 = por %p51, %p52
      %p54 = scmp.ne.s32.totalorder %s46, %s49
      %p55 = scmp.eq.s32.totalorder %s22, 0
      %p56 = por %p54, %p55
      %p57 = scmp.ne.s32.totalorder %s46, %s49
      %p58 = scmp.eq.s32.totalorder %s27, 1
      %p59 = por %p57, %p58
      %p60 = scmp.ne.s32.totalorder %s49, %s50
      %p61 = scmp.eq.s32.totalorder %s27, 0
      %p62 = por %p60, %p61
      %p63 = scmp.ne.s32.totalorder %s49, %s50
      %p64 = scmp.eq.s32.totalorder %s28, 1
      %p65 = por %p63, %p64
      %p67 = scmp.ne.s32.totalorder %s50, %s66
      %p68 = scmp.eq.s32.totalorder %s28, 0
      %p69 = por %p67, %p68
      %s71 = sadd.s32 %s70, 1
      %p74 = scmp.eq.s32.totalorder %s22, 1
      %p75 = scmp.ne.s32.totalorder %s70, %s72
      %p76 = scmp.eq.s32.totalorder %s22, 0
      %p77 = por %p75, %p76
      %p78 = scmp.ne.s32.totalorder %s70, %s72
      %p79 = scmp.eq.s32.totalorder %s27, 1
      %p80 = por %p78, %p79
      %p81 = scmp.ne.s32.totalorder %s72, %s73
      %p82 = scmp.eq.s32.totalorder %s27, 0
      %p83 = por %p81, %p82
      %p84 = scmp.ne.s32.totalorder %s72, %s73
      %p85 = scmp.eq.s32.totalorder %s28, 1
      %p86 = por %p84, %p85
      %p88 = scmp.ne.s32.totalorder %s73, %s87
      %p89 = scmp.eq.s32.totalorder %s28, 0
      %p90 = por %p88, %p89
      %s92 = sadd.s32 %s91, 1
      %p95 = scmp.eq.s32.totalorder %s22, 1
      %p96 = scmp.ne.s32.totalorder %s91, %s93
      %p97 = scmp.eq.s32.totalorder %s22, 0
      %p98 = por %p96, %p97
      %p99 = scmp.ne.s32.totalorder %s91, %s93
      %p100 = scmp.eq.s32.totalorder %s27, 1
      %p101 = por %p99, %p100
      %p102 = scmp.ne.s32.totalorder %s93, %s94
      %p103 = scmp.eq.s32.totalorder %s27, 0
      %p104 = por %p102, %p103
      %p105 = scmp.ne.s32.totalorder %s93, %s94
      %p106 = scmp.eq.s32.totalorder %s28, 1
      %p107 = por %p105, %p106
      %p109 = scmp.ne.s32.totalorder %s94, %s108
      %p110 = scmp.eq.s32.totalorder %s28, 0
      %p111 = por %p109, %p110
      %s113 = sadd.s32 %s112, 1
      %p116 = scmp.eq.s32.totalorder %s22, 1
      %p117 = scmp.ne.s32.totalorder %s112, %s114
      %p118 = scmp.eq.s32.totalorder %s22, 0
      %p119 = por %p117, %p118
      %p120 = scmp.ne.s32.totalorder %s112, %s114
      %p121 = scmp.eq.s32.totalorder %s27, 1
      %p122 = por %p120, %p121
      %p123 = scmp.ne.s32.totalorder %s114, %s115
      %p124 = scmp.eq.s32.totalorder %s27, 0
      %p125 = por %p123, %p124
      %p126 = scmp.ne.s32.totalorder %s114, %s115
      %p127 = scmp.eq.s32.totalorder %s28, 1
      %p128 = por %p126, %p127
      %p130 = scmp.ne.s32.totalorder %s115, %s129
      %p131 = scmp.eq.s32.totalorder %s28, 0
      %p132 = por %p130, %p131
      %s134 = sadd.s32 %s133, 1
      %p137 = scmp.eq.s32.totalorder %s22, 1
      %p138 = scmp.ne.s32.totalorder %s133, %s135
      %p139 = scmp.eq.s32.totalorder %s22, 0
      %p140 = por %p138, %p139
      %p141 = scmp.ne.s32.totalorder %s133, %s135
      %p142 = scmp.eq.s32.totalorder %s27, 1
      %p143 = por %p141, %p142
      %p144 = scmp.ne.s32.totalorder %s135, %s136
      %p145 = scmp.eq.s32.totalorder %s27, 0
      %p146 = por %p144, %p145
      %p147 = scmp.ne.s32.totalorder %s135, %s136
      %p148 = scmp.eq.s32.totalorder %s28, 1
      %p149 = por %p147, %p148
      %p151 = scmp.ne.s32.totalorder %s136, %s150
      %p152 = scmp.eq.s32.totalorder %s28, 0
      %p153 = por %p151, %p152
      %s155 = sadd.s32 %s154, 1
      %p158 = scmp.eq.s32.totalorder %s22, 1
      %p159 = scmp.ne.s32.totalorder %s154, %s156
      %p160 = scmp.eq.s32.totalorder %s22, 0
      %p161 = por %p159, %p160
      %p162 = scmp.ne.s32.totalorder %s154, %s156
      %p163 = scmp.eq.s32.totalorder %s27, 1
      %p164 = por %p162, %p163
      %p165 = scmp.ne.s32.totalorder %s156, %s157
      %p166 = scmp.eq.s32.totalorder %s27, 0
      %p167 = por %p165, %p166
      %p168 = scmp.ne.s32.totalorder %s156, %s157
      %p169 = scmp.eq.s32.totalorder %s28, 1
      %p170 = por %p168, %p169
      %p172 = scmp.ne.s32.totalorder %s157, %s171
      %p173 = scmp.eq.s32.totalorder %s28, 0
      %p174 = por %p172, %p173
      %s176 = sadd.s32 %s175, 1
      %p179 = scmp.eq.s32.totalorder %s22, 1
      %p180 = scmp.ne.s32.totalorder %s175, %s177
      %p181 = scmp.eq.s32.totalorder %s22, 0
      %p182 = por %p180, %p181
      %p183 = scmp.ne.s32.totalorder %s175, %s177
      %p184 = scmp.eq.s32.totalorder %s27, 1
      %p185 = por %p183, %p184
      %p186 = scmp.ne.s32.totalorder %s177, %s178
      %p187 = scmp.eq.s32.totalorder %s27, 0
      %p188 = por %p186, %p187
      %p189 = scmp.ne.s32.totalorder %s177, %s178
      %p190 = scmp.eq.s32.totalorder %s28, 1
      %p191 = por %p189, %p190
      %p193 = scmp.ne.s32.totalorder %s178, %s192
      %p194 = scmp.eq.s32.totalorder %s28, 0
      %p195 = por %p193, %p194
      %s197 = sadd.s32 %s196, 1
      %p200 = scmp.eq.s32.totalorder %s22, 1
      %p201 = scmp.ne.s32.totalorder %s196, %s198
      %p202 = scmp.eq.s32.totalorder %s22, 0
      %p203 = por %p201, %p202
      %p204 = scmp.ne.s32.totalorder %s196, %s198
      %p205 = scmp.eq.s32.totalorder %s27, 1
      %p206 = por %p204, %p205
      %p207 = scmp.ne.s32.totalorder %s198, %s199
      %p208 = scmp.eq.s32.totalorder %s27, 0
      %p209 = por %p207, %p208
      %p210 = scmp.ne.s32.totalorder %s198, %s199
      %p211 = scmp.eq.s32.totalorder %s28, 1
      %p212 = por %p210, %p211
      %p214 = scmp.ne.s32.totalorder %s199, %s213
      %p215 = scmp.eq.s32.totalorder %s28, 0
      %p216 = por %p214, %p215
      %s218 = sadd.s32 %s217, 1
      %p221 = scmp.eq.s32.totalorder %s22, 1
      %p222 = scmp.ne.s32.totalorder %s217, %s219
      %p223 = scmp.eq.s32.totalorder %s22, 0
      %p224 = por %p222, %p223
      %p225 = scmp.ne.s32.totalorder %s217, %s219
      %p226 = scmp.eq.s32.totalorder %s27, 1
      %p227 = por %p225, %p226
      %p228 = scmp.ne.s32.totalorder %s219, %s220
      %p229 = scmp.eq.s32.totalorder %s27, 0
      %p230 = por %p228, %p229
      %p231 = scmp.ne.s32.totalorder %s219, %s220
      %p232 = scmp.eq.s32.totalorder %s28, 1
      %p233 = por %p231, %p232
      %p235 = scmp.ne.s32.totalorder %s220, %s234
      %p236 = scmp.eq.s32.totalorder %s28, 0
      %p237 = por %p235, %p236
      %s238 = ssub.s32 %s29, %s41
      %p239 = scmp.eq.s32.totalorder %s238, 0
      %s241 = sadd.s32 %s240, 1
      %s242 = scalar_select %p239, %s240, %s241
      %p245 = pneg %p239
      %p246 = scmp.eq.s32.totalorder %s22, 1
      %p247 = por %p245, %p246
      %p248 = scmp.ne.s32.totalorder %s240, %s243
      %p249 = scmp.eq.s32.totalorder %s22, 0
      %p250 = por %p248, %p249
      %p251 = scmp.ne.s32.totalorder %s240, %s243
      %p252 = scmp.eq.s32.totalorder %s27, 1
      %p253 = por %p251, %p252
      %p254 = scmp.ne.s32.totalorder %s243, %s244
      %p255 = scmp.eq.s32.totalorder %s27, 0
      %p256 = por %p254, %p255
      %p257 = scmp.ne.s32.totalorder %s243, %s244
      %p258 = scmp.eq.s32.totalorder %s28, 1
      %p259 = por %p257, %p258
      %p261 = scmp.ne.s32.totalorder %s244, %s260
      %p262 = scmp.eq.s32.totalorder %s28, 0
      %p263 = por %p261, %p262
      %p264 = scmp.le.s32.totalorder 1, %s22
      %p265 = scmp.lt.s32.totalorder %s22, 3
      %p266 = pnand %p264, %p265
      %p267 = pneg %p266
      // Predicated region
      $region9: #{tpu_custom_call.1} parent=5 // pred_check
        _
      $region10: #{tpu_custom_call.1} parent=5 // pred_check_branch
        %269 = sbr.rel (%p266) target = $region12
      $region11: #{tpu_custom_call.1} parent=5 // pred_region
        %s270 = ssub.s32 %s22, 1
        // Predicated region
        $region13: #{tpu_custom_call.1} parent=11 // pred_check
          %p271 = pneg %p83
        $region14: #{tpu_custom_call.1} parent=11 // pred_check_branch
          %273 = sbr.rel (%p271) target = $region16
        $region15: #{tpu_custom_call.1} parent=11 // pred_region
          %275 = vsyncadd [#allocation10], 0
          %s276 = sshll.u32 %s1, 4
          %s277 = int_to_ptr.hbm [resolvable:$true] %s276
          %s278 = sshll.u32 [#allocation9], 4
          %s279 = int_to_ptr.vmem [resolvable:$true] %s278
          %284 = dma.hbm_to_vmem [thread:$0]  %s277, 8192, %s279, [#allocation10], 512, 512, 32
        $region16: #{tpu_custom_call.1} parent=11 // pred_fallthru
          _
        // Predicated region
        $region17: #{tpu_custom_call.1} parent=11 // pred_check
          %p285 = pneg %p104
        $region18: #{tpu_custom_call.1} parent=11 // pred_check_branch
          %287 = sbr.rel (%p285) target = $region20
        $region19: #{tpu_custom_call.1} parent=11 // pred_region
          %289 = vsyncadd [#allocation10], 0
          %s290 = sshll.u32 %s2, 4
          %s291 = int_to_ptr.hbm [resolvable:$true] %s290
          %s292 = sshll.u32 [#allocation11], 4
          %s293 = int_to_ptr.vmem [resolvable:$true] %s292
          %298 = dma.hbm_to_vmem [thread:$0]  %s291, 8192, %s293, [#allocation10], 512, 512, 32
        $region20: #{tpu_custom_call.1} parent=11 // pred_fallthru
          _
        // Predicated region
        $region21: #{tpu_custom_call.1} parent=11 // pred_check
          %p299 = pneg %p125
        $region22: #{tpu_custom_call.1} parent=11 // pred_check_branch
          %301 = sbr.rel (%p299) target = $region24
        $region23: #{tpu_custom_call.1} parent=11 // pred_region
          %303 = vsyncadd [#allocation13], 0
          %s305 = sshll.u32 %s3, 4
          %s306 = int_to_ptr.hbm [resolvable:$true] %s305
          %s307 = sshll.u32 [#allocation12], 4
          %s308 = int_to_ptr.vmem [resolvable:$true] %s307
          %310 = dma.hbm_to_vmem [thread:$0]  %s306, 64, %s308, [#allocation13]
        $region24: #{tpu_custom_call.1} parent=11 // pred_fallthru
          _
        // Predicated region
        $region25: #{tpu_custom_call.1} parent=11 // pred_check
          %p311 = pneg %p146
        $region26: #{tpu_custom_call.1} parent=11 // pred_check_branch
          %313 = sbr.rel (%p311) target = $region28
        $region27: #{tpu_custom_call.1} parent=11 // pred_region
          %315 = vsyncadd [#allocation13], 0
          %s316 = sshll.u32 %s4, 4
          %s317 = int_to_ptr.hbm [resolvable:$true] %s316
          %s318 = sshll.u32 [#allocation14], 4
          %s319 = int_to_ptr.vmem [resolvable:$true] %s318
          %324 = dma.hbm_to_vmem [thread:$0]  %s317, 8192, %s319, [#allocation13], 512, 512, 32
        $region28: #{tpu_custom_call.1} parent=11 // pred_fallthru
          _
        // Predicated region
        $region29: #{tpu_custom_call.1} parent=11 // pred_check
          %p325 = pneg %p167
        $region30: #{tpu_custom_call.1} parent=11 // pred_check_branch
          %327 = sbr.rel (%p325) target = $region32
        $region31: #{tpu_custom_call.1} parent=11 // pred_region
          %329 = vsyncadd [#allocation16], 0
          %s330 = sshll.u32 %s5, 4
          %s331 = int_to_ptr.hbm [resolvable:$true] %s330
          %s332 = sshll.u32 [#allocation15], 4
          %s333 = int_to_ptr.vmem [resolvable:$true] %s332
          %338 = dma.hbm_to_vmem [thread:$0]  %s331, 8192, %s333, [#allocation16], 512, 512, 32
        $region32: #{tpu_custom_call.1} parent=11 // pred_fallthru
          _
        // Predicated region
        $region33: #{tpu_custom_call.1} parent=11 // pred_check
          %p339 = pneg %p188
        $region34: #{tpu_custom_call.1} parent=11 // pred_check_branch
          %341 = sbr.rel (%p339) target = $region36
        $region35: #{tpu_custom_call.1} parent=11 // pred_region
          _
        $region36: #{tpu_custom_call.1} parent=11 // pred_fallthru
          _
        // Predicated region
        $region37: #{tpu_custom_call.1} parent=11 // pred_check
          %p342 = pneg %p209
        $region38: #{tpu_custom_call.1} parent=11 // pred_check_branch
          %344 = sbr.rel (%p342) target = $region40
        $region39: #{tpu_custom_call.1} parent=11 // pred_region
          %346 = vsyncadd [#allocation16], 0
          %s347 = sshll.u32 %s7, 4
          %s348 = int_to_ptr.hbm [resolvable:$true] %s347
          %s349 = sshll.u32 [#allocation17], 4
          %s350 = int_to_ptr.vmem [resolvable:$true] %s349
          %355 = dma.hbm_to_vmem [thread:$0]  %s348, 2048, %s350, [#allocation16], 128, 128, 8
        $region40: #{tpu_custom_call.1} parent=11 // pred_fallthru
          _
        // Predicated region
        $region41: #{tpu_custom_call.1} parent=11 // pred_check
          %p356 = pneg %p230
        $region42: #{tpu_custom_call.1} parent=11 // pred_check_branch
          %358 = sbr.rel (%p356) target = $region44
        $region43: #{tpu_custom_call.1} parent=11 // pred_region
          _
        $region44: #{tpu_custom_call.1} parent=11 // pred_fallthru
          _
      $region12: #{tpu_custom_call.1} parent=5 // pred_fallthru
        _
      %p359 = scmp.lt.s32.totalorder %s22, 2
      // Predicated region
      $region45: #{tpu_custom_call.1} parent=5 // pred_check
        %p360 = pneg %p359
      $region46: #{tpu_custom_call.1} parent=5 // pred_check_branch
        %362 = sbr.rel (%p360) target = $region48
      $region47: #{tpu_custom_call.1} parent=5 // pred_region
        // Predicated region
        $region49: #{tpu_custom_call.1} parent=47 // pred_check
          %p363 = pneg %p56
        $region50: #{tpu_custom_call.1} parent=47 // pred_check_branch
          %365 = sbr.rel (%p363) target = $region52
        $region51: #{tpu_custom_call.1} parent=47 // pred_region
          %s366 = sand.u32 %s46, 1
          %s367 = scalar_lea.sflag [#allocation7], %s366
          %s368 = sand.u32 %s46, 1
          %s369 = smul.addr %s368, 32
          %s370 = scalar_lea.vmem [#allocation6], %s369
          %s371 = smul.u32 4, %s30
          %373 = vsyncadd %s367, 0
          %s374 = sadd.s32 %s29, %s371
          %s375 = smul.addr %s374, 8
          %s376 = scalar_lea.hbm %s0, %s375
          %s377 = sshll.u32 %s376, 4
          %s378 = int_to_ptr.hbm [resolvable:$true] %s377
          %s379 = sshll.u32 %s370, 4
          %s380 = int_to_ptr.vmem [resolvable:$true] %s379
          %385 = dma.hbm_to_vmem [thread:$0]  %s378, 512, %s380, %s367, 128, 128, 8
        $region52: #{tpu_custom_call.1} parent=47 // pred_fallthru
          _
      $region48: #{tpu_custom_call.1} parent=5 // pred_fallthru
        _
      %p386 = scmp.le.s32.totalorder 1, %s22
      %p387 = scmp.lt.s32.totalorder %s22, 3
      %p388 = pnand %p386, %p387
      %p389 = pneg %p388
      // Predicated region
      $region53: #{tpu_custom_call.1} parent=5 // pred_check
        _
      $region54: #{tpu_custom_call.1} parent=5 // pred_check_branch
        %391 = sbr.rel (%p388) target = $region56
      $region55: #{tpu_custom_call.1} parent=5 // pred_region
        %s392 = ssub.s32 %s22, 1
        %s393 = sand.u32 %s49, 1
        %s394 = scalar_lea.sflag [#allocation7], %s393
        %s395 = sand.u32 %s49, 1
        %s396 = smul.addr %s395, 32
        %s397 = scalar_lea.vmem [#allocation6], %s396
        // Predicated region
        $region57: #{tpu_custom_call.1} parent=55 // pred_check
          %p398 = pneg %p62
        $region58: #{tpu_custom_call.1} parent=55 // pred_check_branch
          %400 = sbr.rel (%p398) target = $region60
        $region59: #{tpu_custom_call.1} parent=55 // pred_region
          %402 = dma.done %s394, 512
        $region60: #{tpu_custom_call.1} parent=55 // pred_fallthru
          _
        // Predicated region
        $region61: #{tpu_custom_call.1} parent=55 // pred_check
          %p403 = pneg %p83
        $region62: #{tpu_custom_call.1} parent=55 // pred_check_branch
          %405 = sbr.rel (%p403) target = $region64
        $region63: #{tpu_custom_call.1} parent=55 // pred_region
          %407 = dma.done [#allocation10], 8192
        $region64: #{tpu_custom_call.1} parent=55 // pred_fallthru
          _
        // Predicated region
        $region65: #{tpu_custom_call.1} parent=55 // pred_check
          %p408 = pneg %p104
        $region66: #{tpu_custom_call.1} parent=55 // pred_check_branch
          %410 = sbr.rel (%p408) target = $region68
        $region67: #{tpu_custom_call.1} parent=55 // pred_region
          %412 = dma.done [#allocation10], 8192
        $region68: #{tpu_custom_call.1} parent=55 // pred_fallthru
          _
        // Predicated region
        $region69: #{tpu_custom_call.1} parent=55 // pred_check
          %p413 = pneg %p125
        $region70: #{tpu_custom_call.1} parent=55 // pred_check_branch
          %415 = sbr.rel (%p413) target = $region72
        $region71: #{tpu_custom_call.1} parent=55 // pred_region
          %417 = dma.done [#allocation13], 64
        $region72: #{tpu_custom_call.1} parent=55 // pred_fallthru
          _
        // Predicated region
        $region73: #{tpu_custom_call.1} parent=55 // pred_check
          %p418 = pneg %p146
        $region74: #{tpu_custom_call.1} parent=55 // pred_check_branch
          %420 = sbr.rel (%p418) target = $region76
        $region75: #{tpu_custom_call.1} parent=55 // pred_region
          %422 = dma.done [#allocation13], 8192
        $region76: #{tpu_custom_call.1} parent=55 // pred_fallthru
          _
        // Predicated region
        $region77: #{tpu_custom_call.1} parent=55 // pred_check
          %p423 = pneg %p167
        $region78: #{tpu_custom_call.1} parent=55 // pred_check_branch
          %425 = sbr.rel (%p423) target = $region80
        $region79: #{tpu_custom_call.1} parent=55 // pred_region
          %427 = dma.done [#allocation16], 8192
        $region80: #{tpu_custom_call.1} parent=55 // pred_fallthru
          _
        // Predicated region
        $region81: #{tpu_custom_call.1} parent=55 // pred_check
          %p428 = pneg %p209
        $region82: #{tpu_custom_call.1} parent=55 // pred_check_branch
          %430 = sbr.rel (%p428) target = $region84
        $region83: #{tpu_custom_call.1} parent=55 // pred_region
          %432 = dma.done [#allocation16], 2048
        $region84: #{tpu_custom_call.1} parent=55 // pred_fallthru
          _
        %s433 = sand.u32 %s49, 1
        %s434 = scalar_lea.sflag [#allocation7], %s433
        %s435 = sand.u32 %s49, 1
        %s436 = smul.addr %s435, 32
        %s437 = scalar_lea.vmem [#allocation6], %s436
        %p438 = pneg %p62
        %p439 = pneg %p59
        %p440 = pneg %p83
        %p441 = pneg %p80
        %p442 = pneg %p104
        %p443 = pneg %p101
        %p444 = pneg %p125
        %p445 = pneg %p122
        %p446 = pneg %p146
        %p447 = pneg %p143
        %p448 = pneg %p167
        %p449 = pneg %p164
        %p450 = pneg %p188
        %p451 = pneg %p185
        %p452 = pneg %p209
        %p453 = pneg %p206
        %p454 = pneg %p230
        %p455 = pneg %p227
        %p456 = pneg %p256
        %p457 = pneg %p253
        %s458 = smul.u32 4, %s32
        %p459 = scmp.eq.s32.totalorder %s32, 0
        // Predicated region
        $region85: #{tpu_custom_call.1} parent=55 // pred_check
          %p460 = pneg %p459
        $region86: #{tpu_custom_call.1} parent=55 // pred_check_branch
          %462 = sbr.rel (%p460) target = $region88
        $region87: #{tpu_custom_call.1} parent=55 // pred_region
          %463 = vst [vmem:[#allocation2] sm:$0xff] 0.0
          %464 = vst [vmem:[#allocation2 + $0x8] sm:$0xff] 0.0
          %465 = vst [vmem:[#allocation3] sm:$0xff] 0.0
          %466 = vst [vmem:[#allocation3 + $0x8] sm:$0xff] 0.0
        $region88: #{tpu_custom_call.1} parent=55 // pred_fallthru
          _
        %v467 = vld [vmem:[#allocation9] sm:$0xff]
        %v468 = vld [vmem:[#allocation9 + $0x8] sm:$0xff]
        %v469 = vld [vmem:[#allocation9 + $0x10] sm:$0xff]
        %v470 = vld [vmem:[#allocation9 + $0x18] sm:$0xff]
        %v471 = vld [vmem:[#allocation9 + $0x20] sm:$0xff]
        %v472 = vld [vmem:[#allocation9 + $0x28] sm:$0xff]
        %v473 = vld [vmem:[#allocation9 + $0x30] sm:$0xff]
        %v474 = vld [vmem:[#allocation9 + $0x38] sm:$0xff]
        %v475 = vld [vmem:[#allocation9 + $0x40] sm:$0xff]
        %v476 = vld [vmem:[#allocation9 + $0x48] sm:$0xff]
        %v477 = vld [vmem:[#allocation9 + $0x50] sm:$0xff]
        %v478 = vld [vmem:[#allocation9 + $0x58] sm:$0xff]
        %v479 = vld [vmem:[#allocation9 + $0x60] sm:$0xff]
        %v480 = vld [vmem:[#allocation9 + $0x68] sm:$0xff]
        %v481 = vld [vmem:[#allocation9 + $0x70] sm:$0xff]
        %v482 = vld [vmem:[#allocation9 + $0x78] sm:$0xff]
        %v483 = vld [vmem:[#allocation9 + $0x80] sm:$0xff]
        %v484 = vld [vmem:[#allocation9 + $0x88] sm:$0xff]
        %v485 = vld [vmem:[#allocation9 + $0x90] sm:$0xff]
        %v486 = vld [vmem:[#allocation9 + $0x98] sm:$0xff]
        %v487 = vld [vmem:[#allocation9 + $0xa0] sm:$0xff]
        %v488 = vld [vmem:[#allocation9 + $0xa8] sm:$0xff]
        %v489 = vld [vmem:[#allocation9 + $0xb0] sm:$0xff]
        %v490 = vld [vmem:[#allocation9 + $0xb8] sm:$0xff]
        %v491 = vld [vmem:[#allocation9 + $0xc0] sm:$0xff]
        %v492 = vld [vmem:[#allocation9 + $0xc8] sm:$0xff]
        %v493 = vld [vmem:[#allocation9 + $0xd0] sm:$0xff]
        %v494 = vld [vmem:[#allocation9 + $0xd8] sm:$0xff]
        %v495 = vld [vmem:[#allocation9 + $0xe0] sm:$0xff]
        %v496 = vld [vmem:[#allocation9 + $0xe8] sm:$0xff]
        %v497 = vld [vmem:[#allocation9 + $0xf0] sm:$0xff]
        %v498 = vld [vmem:[#allocation9 + $0xf8] sm:$0xff]
        %v499 = vld [vmem:[#allocation9 + $0x100] sm:$0xff]
        %v500 = vld [vmem:[#allocation9 + $0x108] sm:$0xff]
        %v501 = vld [vmem:[#allocation9 + $0x110] sm:$0xff]
        %v502 = vld [vmem:[#allocation9 + $0x118] sm:$0xff]
        %v503 = vld [vmem:[#allocation9 + $0x120] sm:$0xff]
        %v504 = vld [vmem:[#allocation9 + $0x128] sm:$0xff]
        %v505 = vld [vmem:[#allocation9 + $0x130] sm:$0xff]
        %v506 = vld [vmem:[#allocation9 + $0x138] sm:$0xff]
        %v507 = vld [vmem:[#allocation9 + $0x140] sm:$0xff]
        %v508 = vld [vmem:[#allocation9 + $0x148] sm:$0xff]
        %v509 = vld [vmem:[#allocation9 + $0x150] sm:$0xff]
        %v510 = vld [vmem:[#allocation9 + $0x158] sm:$0xff]
        %v511 = vld [vmem:[#allocation9 + $0x160] sm:$0xff]
        %v512 = vld [vmem:[#allocation9 + $0x168] sm:$0xff]
        %v513 = vld [vmem:[#allocation9 + $0x170] sm:$0xff]
        %v514 = vld [vmem:[#allocation9 + $0x178] sm:$0xff]
        %v515 = vld [vmem:[#allocation9 + $0x180] sm:$0xff]
        %v516 = vld [vmem:[#allocation9 + $0x188] sm:$0xff]
        %v517 = vld [vmem:[#allocation9 + $0x190] sm:$0xff]
        %v518 = vld [vmem:[#allocation9 + $0x198] sm:$0xff]
        %v519 = vld [vmem:[#allocation9 + $0x1a0] sm:$0xff]
        %v520 = vld [vmem:[#allocation9 + $0x1a8] sm:$0xff]
        %v521 = vld [vmem:[#allocation9 + $0x1b0] sm:$0xff]
        %v522 = vld [vmem:[#allocation9 + $0x1b8] sm:$0xff]
        %v523 = vld [vmem:[#allocation9 + $0x1c0] sm:$0xff]
        %v524 = vld [vmem:[#allocation9 + $0x1c8] sm:$0xff]
        %v525 = vld [vmem:[#allocation9 + $0x1d0] sm:$0xff]
        %v526 = vld [vmem:[#allocation9 + $0x1d8] sm:$0xff]
        %v527 = vld [vmem:[#allocation9 + $0x1e0] sm:$0xff]
        %v528 = vld [vmem:[#allocation9 + $0x1e8] sm:$0xff]
        %v529 = vld [vmem:[#allocation9 + $0x1f0] sm:$0xff]
        %v530 = vld [vmem:[#allocation9 + $0x1f8] sm:$0xff]
        %v531 = vld [vmem:[#allocation11] sm:$0xff]
        %v532 = vld [vmem:[#allocation11 + $0x8] sm:$0xff]
        %v533 = vld [vmem:[#allocation11 + $0x10] sm:$0xff]
        %v534 = vld [vmem:[#allocation11 + $0x18] sm:$0xff]
        %v535 = vld [vmem:[#allocation11 + $0x20] sm:$0xff]
        %v536 = vld [vmem:[#allocation11 + $0x28] sm:$0xff]
        %v537 = vld [vmem:[#allocation11 + $0x30] sm:$0xff]
        %v538 = vld [vmem:[#allocation11 + $0x38] sm:$0xff]
        %v539 = vld [vmem:[#allocation11 + $0x40] sm:$0xff]
        %v540 = vld [vmem:[#allocation11 + $0x48] sm:$0xff]
        %v541 = vld [vmem:[#allocation11 + $0x50] sm:$0xff]
        %v542 = vld [vmem:[#allocation11 + $0x58] sm:$0xff]
        %v543 = vld [vmem:[#allocation11 + $0x60] sm:$0xff]
        %v544 = vld [vmem:[#allocation11 + $0x68] sm:$0xff]
        %v545 = vld [vmem:[#allocation11 + $0x70] sm:$0xff]
        %v546 = vld [vmem:[#allocation11 + $0x78] sm:$0xff]
        %v547 = vld [vmem:[#allocation11 + $0x80] sm:$0xff]
        %v548 = vld [vmem:[#allocation11 + $0x88] sm:$0xff]
        %v549 = vld [vmem:[#allocation11 + $0x90] sm:$0xff]
        %v550 = vld [vmem:[#allocation11 + $0x98] sm:$0xff]
        %v551 = vld [vmem:[#allocation11 + $0xa0] sm:$0xff]
        %v552 = vld [vmem:[#allocation11 + $0xa8] sm:$0xff]
        %v553 = vld [vmem:[#allocation11 + $0xb0] sm:$0xff]
        %v554 = vld [vmem:[#allocation11 + $0xb8] sm:$0xff]
        %v555 = vld [vmem:[#allocation11 + $0xc0] sm:$0xff]
        %v556 = vld [vmem:[#allocation11 + $0xc8] sm:$0xff]
        %v557 = vld [vmem:[#allocation11 + $0xd0] sm:$0xff]
        %v558 = vld [vmem:[#allocation11 + $0xd8] sm:$0xff]
        %v559 = vld [vmem:[#allocation11 + $0xe0] sm:$0xff]
        %v560 = vld [vmem:[#allocation11 + $0xe8] sm:$0xff]
        %v561 = vld [vmem:[#allocation11 + $0xf0] sm:$0xff]
        %v562 = vld [vmem:[#allocation11 + $0xf8] sm:$0xff]
        %v563 = vld [vmem:[#allocation11 + $0x100] sm:$0xff]
        %v564 = vld [vmem:[#allocation11 + $0x108] sm:$0xff]
        %v565 = vld [vmem:[#allocation11 + $0x110] sm:$0xff]
        %v566 = vld [vmem:[#allocation11 + $0x118] sm:$0xff]
        %v567 = vld [vmem:[#allocation11 + $0x120] sm:$0xff]
        %v568 = vld [vmem:[#allocation11 + $0x128] sm:$0xff]
        %v569 = vld [vmem:[#allocation11 + $0x130] sm:$0xff]
        %v570 = vld [vmem:[#allocation11 + $0x138] sm:$0xff]
        %v571 = vld [vmem:[#allocation11 + $0x140] sm:$0xff]
        %v572 = vld [vmem:[#allocation11 + $0x148] sm:$0xff]
        %v573 = vld [vmem:[#allocation11 + $0x150] sm:$0xff]
        %v574 = vld [vmem:[#allocation11 + $0x158] sm:$0xff]
        %v575 = vld [vmem:[#allocation11 + $0x160] sm:$0xff]
        %v576 = vld [vmem:[#allocation11 + $0x168] sm:$0xff]
        %v577 = vld [vmem:[#allocation11 + $0x170] sm:$0xff]
        %v578 = vld [vmem:[#allocation11 + $0x178] sm:$0xff]
        %v579 = vld [vmem:[#allocation11 + $0x180] sm:$0xff]
        %v580 = vld [vmem:[#allocation11 + $0x188] sm:$0xff]
        %v581 = vld [vmem:[#allocation11 + $0x190] sm:$0xff]
        %v582 = vld [vmem:[#allocation11 + $0x198] sm:$0xff]
        %v583 = vld [vmem:[#allocation11 + $0x1a0] sm:$0xff]
        %v584 = vld [vmem:[#allocation11 + $0x1a8] sm:$0xff]
        %v585 = vld [vmem:[#allocation11 + $0x1b0] sm:$0xff]
        %v586 = vld [vmem:[#allocation11 + $0x1b8] sm:$0xff]
        %v587 = vld [vmem:[#allocation11 + $0x1c0] sm:$0xff]
        %v588 = vld [vmem:[#allocation11 + $0x1c8] sm:$0xff]
        %v589 = vld [vmem:[#allocation11 + $0x1d0] sm:$0xff]
        %v590 = vld [vmem:[#allocation11 + $0x1d8] sm:$0xff]
        %v591 = vld [vmem:[#allocation11 + $0x1e0] sm:$0xff]
        %v592 = vld [vmem:[#allocation11 + $0x1e8] sm:$0xff]
        %v593 = vld [vmem:[#allocation11 + $0x1f0] sm:$0xff]
        %v594 = vld [vmem:[#allocation11 + $0x1f8] sm:$0xff]
        %v595 = vld [vmem:[#allocation12] sm:$0xf]
        %v596 = vld [vmem:[%s397] sm:$0xff]
        %v597 = vld [vmem:[%s397 + $0x8] sm:$0xff]
        %v598 = vld [vmem:[%s397 + $0x10] sm:$0xff]
        %v599 = vld [vmem:[%s397 + $0x18] sm:$0xff]
        %v601 = vperm.slane %v595, 0
        %v602 = vperm.slane %v595, 1
        %v603 = vperm.slane %v595, 2
        %v604 = vperm.slane %v595, 3
        %609 = vmatpush.msra.mxu0 %v527
        %610 = vmatpush.msra.mxu0 %v523
        %611 = vmatpush.msra.mxu0 %v519
        %612 = vmatpush.msra.mxu0 %v515
        %613 = vmatpush.msra.mxu0 %v511
        %614 = vmatpush.msra.mxu0 %v507
        %615 = vmatpush.msra.mxu0 %v503
        %616 = vmatpush.msra.mxu0 %v499
        %617 = vmatpush.msra.mxu0 %v495
        %618 = vmatpush.msra.mxu0 %v491
        %619 = vmatpush.msra.mxu0 %v487
        %620 = vmatpush.msra.mxu0 %v483
        %621 = vmatpush.msra.mxu0 %v479
        %622 = vmatpush.msra.mxu0 %v475
        %623 = vmatpush.msra.mxu0 %v471
        %624 = vmatpush.msra.mxu0 %v467
        %625 = vmatmul.f32.gmra.mxu0 %v596
        %v626 = vpop.f32.mrf.mxu0
        %v627 = vadd.f32 %v601, %v626
        %628 = vmatmul.f32.gmra.mxu0 %v597
        %v629 = vpop.f32.mrf.mxu0
        %v630 = vadd.f32 %v601, %v629
        %631 = vmatmul.f32.gmra.mxu0 %v598
        %v632 = vpop.f32.mrf.mxu0
        %v633 = vadd.f32 %v601, %v632
        %634 = vmatmul.f32.gmra.mxu0 %v599
        %v635 = vpop.f32.mrf.mxu0
        %v636 = vadd.f32 %v601, %v635
        %637 = vdwg.mxu0
        %638 = vmatpush.msra.mxu0 %v528
        %639 = vmatpush.msra.mxu0 %v524
        %640 = vmatpush.msra.mxu0 %v520
        %641 = vmatpush.msra.mxu0 %v516
        %642 = vmatpush.msra.mxu0 %v512
        %643 = vmatpush.msra.mxu0 %v508
        %644 = vmatpush.msra.mxu0 %v504
        %645 = vmatpush.msra.mxu0 %v500
        %646 = vmatpush.msra.mxu0 %v496
        %647 = vmatpush.msra.mxu0 %v492
        %648 = vmatpush.msra.mxu0 %v488
        %649 = vmatpush.msra.mxu0 %v484
        %650 = vmatpush.msra.mxu0 %v480
        %651 = vmatpush.msra.mxu0 %v476
        %652 = vmatpush.msra.mxu0 %v472
        %653 = vmatpush.msra.mxu0 %v468
        %654 = vmatmul.f32.gmra.mxu0 %v596
        %v655 = vpop.f32.mrf.mxu0
        %v656 = vadd.f32 %v602, %v655
        %657 = vmatmul.f32.gmra.mxu0 %v597
        %v658 = vpop.f32.mrf.mxu0
        %v659 = vadd.f32 %v602, %v658
        %660 = vmatmul.f32.gmra.mxu0 %v598
        %v661 = vpop.f32.mrf.mxu0
        %v662 = vadd.f32 %v602, %v661
        %663 = vmatmul.f32.gmra.mxu0 %v599
        %v664 = vpop.f32.mrf.mxu0
        %v665 = vadd.f32 %v602, %v664
        %666 = vdwg.mxu0
        %667 = vmatpush.msra.mxu0 %v529
        %668 = vmatpush.msra.mxu0 %v525
        %669 = vmatpush.msra.mxu0 %v521
        %670 = vmatpush.msra.mxu0 %v517
        %671 = vmatpush.msra.mxu0 %v513
        %672 = vmatpush.msra.mxu0 %v509
        %673 = vmatpush.msra.mxu0 %v505
        %674 = vmatpush.msra.mxu0 %v501
        %675 = vmatpush.msra.mxu0 %v497
        %676 = vmatpush.msra.mxu0 %v493
        %677 = vmatpush.msra.mxu0 %v489
        %678 = vmatpush.msra.mxu0 %v485
        %679 = vmatpush.msra.mxu0 %v481
        %680 = vmatpush.msra.mxu0 %v477
        %681 = vmatpush.msra.mxu0 %v473
        %682 = vmatpush.msra.mxu0 %v469
        %683 = vmatmul.f32.gmra.mxu0 %v596
        %v684 = vpop.f32.mrf.mxu0
        %v685 = vadd.f32 %v603, %v684
        %686 = vmatmul.f32.gmra.mxu0 %v597
        %v687 = vpop.f32.mrf.mxu0
        %v688 = vadd.f32 %v603, %v687
        %689 = vmatmul.f32.gmra.mxu0 %v598
        %v690 = vpop.f32.mrf.mxu0
        %v691 = vadd.f32 %v603, %v690
        %692 = vmatmul.f32.gmra.mxu0 %v599
        %v693 = vpop.f32.mrf.mxu0
        %v694 = vadd.f32 %v603, %v693
        %695 = vdwg.mxu0
        %696 = vmatpush.msra.mxu0 %v530
        %697 = vmatpush.msra.mxu0 %v526
        %698 = vmatpush.msra.mxu0 %v522
        %699 = vmatpush.msra.mxu0 %v518
        %700 = vmatpush.msra.mxu0 %v514
        %701 = vmatpush.msra.mxu0 %v510
        %702 = vmatpush.msra.mxu0 %v506
        %703 = vmatpush.msra.mxu0 %v502
        %704 = vmatpush.msra.mxu0 %v498
        %705 = vmatpush.msra.mxu0 %v494
        %706 = vmatpush.msra.mxu0 %v490
        %707 = vmatpush.msra.mxu0 %v486
        %708 = vmatpush.msra.mxu0 %v482
        %709 = vmatpush.msra.mxu0 %v478
        %710 = vmatpush.msra.mxu0 %v474
        %711 = vmatpush.msra.mxu0 %v470
        %712 = vmatmul.f32.gmra.mxu0 %v596
        %v713 = vpop.f32.mrf.mxu0
        %v714 = vadd.f32 %v604, %v713
        %715 = vmatmul.f32.gmra.mxu0 %v597
        %v716 = vpop.f32.mrf.mxu0
        %v717 = vadd.f32 %v604, %v716
        %718 = vmatmul.f32.gmra.mxu0 %v598
        %v719 = vpop.f32.mrf.mxu0
        %v720 = vadd.f32 %v604, %v719
        %721 = vmatmul.f32.gmra.mxu0 %v599
        %v722 = vpop.f32.mrf.mxu0
        %v723 = vadd.f32 %v604, %v722
        %724 = vdwg.mxu0
        %725 = vst [vmem:[#allocation5] sm:$0xff] %v627
        %726 = vst [vmem:[#allocation5 + $0x8] sm:$0xff] %v656
        %727 = vst [vmem:[#allocation5 + $0x10] sm:$0xff] %v685
        %728 = vst [vmem:[#allocation5 + $0x18] sm:$0xff] %v714
        %729 = vst [vmem:[#allocation5 + $0x20] sm:$0xff] %v630
        %730 = vst [vmem:[#allocation5 + $0x28] sm:$0xff] %v659
        %731 = vst [vmem:[#allocation5 + $0x30] sm:$0xff] %v688
        %732 = vst [vmem:[#allocation5 + $0x38] sm:$0xff] %v717
        %733 = vst [vmem:[#allocation5 + $0x40] sm:$0xff] %v633
        %734 = vst [vmem:[#allocation5 + $0x48] sm:$0xff] %v662
        %735 = vst [vmem:[#allocation5 + $0x50] sm:$0xff] %v691
        %736 = vst [vmem:[#allocation5 + $0x58] sm:$0xff] %v720
        %737 = vst [vmem:[#allocation5 + $0x60] sm:$0xff] %v636
        %738 = vst [vmem:[#allocation5 + $0x68] sm:$0xff] %v665
        %739 = vst [vmem:[#allocation5 + $0x70] sm:$0xff] %v694
        %740 = vst [vmem:[#allocation5 + $0x78] sm:$0xff] %v723
        %s741 = smul.u32 %s32, 4
        %p742 = scmp.lt.s32.totalorder %s741, 8
        // Predicated region
        $region89: #{tpu_custom_call.1} parent=55 // pred_check
          %p743 = pneg %p742
        $region90: #{tpu_custom_call.1} parent=55 // pred_check_branch
          %745 = sbr.rel (%p743) target = $region92
        $region91: #{tpu_custom_call.1} parent=55 // pred_region
          %v746 = vld [vmem:[#allocation2] sm:$0xff]
          %v747 = vld [vmem:[#allocation3] sm:$0xff]
          %v748 = vld [vmem:[#allocation5] sm:$0xff]
          %v749 = vld [vmem:[#allocation5 + $0x8] sm:$0xff]
          %v750 = vld [vmem:[#allocation5 + $0x10] sm:$0xff]
          %v751 = vld [vmem:[#allocation5 + $0x18] sm:$0xff]
          %752 = vmatpush.msra.mxu0 %v591
          %753 = vmatpush.msra.mxu0 %v587
          %754 = vmatpush.msra.mxu0 %v583
          %755 = vmatpush.msra.mxu0 %v579
          %756 = vmatpush.msra.mxu0 %v575
          %757 = vmatpush.msra.mxu0 %v571
          %758 = vmatpush.msra.mxu0 %v567
          %759 = vmatpush.msra.mxu0 %v563
          %760 = vmatpush.msra.mxu0 %v559
          %761 = vmatpush.msra.mxu0 %v555
          %762 = vmatpush.msra.mxu0 %v551
          %763 = vmatpush.msra.mxu0 %v547
          %764 = vmatpush.msra.mxu0 %v543
          %765 = vmatpush.msra.mxu0 %v539
          %766 = vmatpush.msra.mxu0 %v535
          %767 = vmatpush.msra.mxu0 %v531
          %768 = vmatmul.f32.gmra.mxu0 %v746
          %v769 = vpop.f32.mrf.mxu0
          %v770 = vadd.f32 0.0, %v769
          %771 = vdwg.mxu0
          %772 = vmatpush.msra.mxu0 %v592
          %773 = vmatpush.msra.mxu0 %v588
          %774 = vmatpush.msra.mxu0 %v584
          %775 = vmatpush.msra.mxu0 %v580
          %776 = vmatpush.msra.mxu0 %v576
          %777 = vmatpush.msra.mxu0 %v572
          %778 = vmatpush.msra.mxu0 %v568
          %779 = vmatpush.msra.mxu0 %v564
          %780 = vmatpush.msra.mxu0 %v560
          %781 = vmatpush.msra.mxu0 %v556
          %782 = vmatpush.msra.mxu0 %v552
          %783 = vmatpush.msra.mxu0 %v548
          %784 = vmatpush.msra.mxu0 %v544
          %785 = vmatpush.msra.mxu0 %v540
          %786 = vmatpush.msra.mxu0 %v536
          %787 = vmatpush.msra.mxu0 %v532
          %788 = vmatmul.f32.gmra.mxu0 %v746
          %v789 = vpop.f32.mrf.mxu0
          %v790 = vadd.f32 0.0, %v789
          %791 = vdwg.mxu0
          %792 = vmatpush.msra.mxu0 %v593
          %793 = vmatpush.msra.mxu0 %v589
          %794 = vmatpush.msra.mxu0 %v585
          %795 = vmatpush.msra.mxu0 %v581
          %796 = vmatpush.msra.mxu0 %v577
          %797 = vmatpush.msra.mxu0 %v573
          %798 = vmatpush.msra.mxu0 %v569
          %799 = vmatpush.msra.mxu0 %v565
          %800 = vmatpush.msra.mxu0 %v561
          %801 = vmatpush.msra.mxu0 %v557
          %802 = vmatpush.msra.mxu0 %v553
          %803 = vmatpush.msra.mxu0 %v549
          %804 = vmatpush.msra.mxu0 %v545
          %805 = vmatpush.msra.mxu0 %v541
          %806 = vmatpush.msra.mxu0 %v537
          %807 = vmatpush.msra.mxu0 %v533
          %808 = vmatmul.f32.gmra.mxu0 %v746
          %v809 = vpop.f32.mrf.mxu0
          %v810 = vadd.f32 0.0, %v809
          %811 = vdwg.mxu0
          %812 = vmatpush.msra.mxu0 %v594
          %813 = vmatpush.msra.mxu0 %v590
          %814 = vmatpush.msra.mxu0 %v586
          %815 = vmatpush.msra.mxu0 %v582
          %816 = vmatpush.msra.mxu0 %v578
          %817 = vmatpush.msra.mxu0 %v574
          %818 = vmatpush.msra.mxu0 %v570
          %819 = vmatpush.msra.mxu0 %v566
          %820 = vmatpush.msra.mxu0 %v562
          %821 = vmatpush.msra.mxu0 %v558
          %822 = vmatpush.msra.mxu0 %v554
          %823 = vmatpush.msra.mxu0 %v550
          %824 = vmatpush.msra.mxu0 %v546
          %825 = vmatpush.msra.mxu0 %v542
          %826 = vmatpush.msra.mxu0 %v538
          %827 = vmatpush.msra.mxu0 %v534
          %828 = vmatmul.f32.gmra.mxu0 %v746
          %v829 = vpop.f32.mrf.mxu0
          %v830 = vadd.f32 0.0, %v829
          %831 = vdwg.mxu0
          %v832 = vadd.f32 %v748, %v770
          %v833 = vadd.f32 %v749, %v790
          %v834 = vadd.f32 %v750, %v810
          %v835 = vadd.f32 %v751, %v830
          %v836 = vxor.u32 %v832, 2147483648
          %v837 = vxor.u32 %v833, 2147483648
          %v838 = vxor.u32 %v834, 2147483648
          %v839 = vmul.f32 %v836, 1.442695
          %v840 = vpow.pop %v839
          %v841 = vmul.f32 %v837, 1.442695
          %v842 = vpow.pop %v841
          %v843 = vmul.f32 %v838, 1.442695
          %v844 = vpow.pop %v843
          %v845 = vadd.f32 %v840, 1.0
          %v846 = vadd.f32 %v842, 1.0
          %v847 = vadd.f32 %v844, 1.0
          %v848 = vrcp.pop %v845
          %v849 = vmul.f32 %v845, %v848
          %v850 = vsub.f32 1.0, %v849
          %v851 = vmul.f32 %v848, %v850
          %v852 = vadd.f32 %v848, %v851
          %vm853 = vweird.f32 %v845
          %vm854 = vweird.f32 %v848
          %vm855 = vmor %vm853, %vm854
          %v856 = vsel %vm855, %v848, %v852
          %v857 = vand.u32 2147483647, %v845
          %vm858 = vcmp.eq.f32.partialorder %v857, 8.507059e+37
          %v859 = vand.u32 %v845, 2147483648
          %v860 = vor.u32 1.1754944e-38, %v859
          %v861 = vsel %vm858, %v860, %v856
          %v862 = vmul.f32 1.0, %v861
          %v863 = vrcp.pop %v846
          %v864 = vmul.f32 %v846, %v863
          %v865 = vsub.f32 1.0, %v864
          %v866 = vmul.f32 %v863, %v865
          %v867 = vadd.f32 %v863, %v866
          %vm868 = vweird.f32 %v846
          %vm869 = vweird.f32 %v863
          %vm870 = vmor %vm868, %vm869
          %v871 = vsel %vm870, %v863, %v867
          %v872 = vand.u32 2147483647, %v846
          %vm873 = vcmp.eq.f32.partialorder %v872, 8.507059e+37
          %v874 = vand.u32 %v846, 2147483648
          %v875 = vor.u32 1.1754944e-38, %v874
          %v876 = vsel %vm873, %v875, %v871
          %v877 = vmul.f32 1.0, %v876
          %v878 = vrcp.pop %v847
          %v879 = vmul.f32 %v847, %v878
          %v880 = vsub.f32 1.0, %v879
          %v881 = vmul.f32 %v878, %v880
          %v882 = vadd.f32 %v878, %v881
          %vm883 = vweird.f32 %v847
          %vm884 = vweird.f32 %v878
          %vm885 = vmor %vm883, %vm884
          %v886 = vsel %vm885, %v878, %v882
          %v887 = vand.u32 2147483647, %v847
          %vm888 = vcmp.eq.f32.partialorder %v887, 8.507059e+37
          %v889 = vand.u32 %v847, 2147483648
          %v890 = vor.u32 1.1754944e-38, %v889
          %v891 = vsel %vm888, %v890, %v886
          %v892 = vmul.f32 1.0, %v891
          %v893 = vtanh.pop %v835
          %v894 = vmul.f32 %v877, %v747
          %v895 = vmul.f32 %v862, %v893
          %v896 = vadd.f32 %v894, %v895
          %v897 = vtanh.pop %v896
          %v898 = vmul.f32 %v892, %v897
          %899 = vst [vmem:[#allocation2] sm:$0xff] %v898
          %900 = vst [vmem:[#allocation3] sm:$0xff] %v896
          %901 = vst [vmem:[#allocation4] sm:$0xff] %v898
        $region92: #{tpu_custom_call.1} parent=55 // pred_fallthru
          _
        %s902 = sadd.s32 %s741, 1
        %p903 = scmp.lt.s32.totalorder %s902, 8
        // Predicated region
        $region93: #{tpu_custom_call.1} parent=55 // pred_check
          %p904 = pneg %p903
        $region94: #{tpu_custom_call.1} parent=55 // pred_check_branch
          %906 = sbr.rel (%p904) target = $region96
        $region95: #{tpu_custom_call.1} parent=55 // pred_region
          %v907 = vld [vmem:[#allocation2] sm:$0xff]
          %v908 = vld [vmem:[#allocation3] sm:$0xff]
          %s909 = scalar_lea.vmem [#allocation5], 32
          %v910 = vld [vmem:[%s909] sm:$0xff]
          %v911 = vld [vmem:[%s909 + $0x8] sm:$0xff]
          %v912 = vld [vmem:[%s909 + $0x10] sm:$0xff]
          %v913 = vld [vmem:[%s909 + $0x18] sm:$0xff]
          %914 = vmatpush.msra.mxu0 %v591
          %915 = vmatpush.msra.mxu0 %v587
          %916 = vmatpush.msra.mxu0 %v583
          %917 = vmatpush.msra.mxu0 %v579
          %918 = vmatpush.msra.mxu0 %v575
          %919 = vmatpush.msra.mxu0 %v571
          %920 = vmatpush.msra.mxu0 %v567
          %921 = vmatpush.msra.mxu0 %v563
          %922 = vmatpush.msra.mxu0 %v559
          %923 = vmatpush.msra.mxu0 %v555
          %924 = vmatpush.msra.mxu0 %v551
          %925 = vmatpush.msra.mxu0 %v547
          %926 = vmatpush.msra.mxu0 %v543
          %927 = vmatpush.msra.mxu0 %v539
          %928 = vmatpush.msra.mxu0 %v535
          %929 = vmatpush.msra.mxu0 %v531
          %930 = vmatmul.f32.gmra.mxu0 %v907
          %v931 = vpop.f32.mrf.mxu0
          %v932 = vadd.f32 0.0, %v931
          %933 = vdwg.mxu0
          %934 = vmatpush.msra.mxu0 %v592
          %935 = vmatpush.msra.mxu0 %v588
          %936 = vmatpush.msra.mxu0 %v584
          %937 = vmatpush.msra.mxu0 %v580
          %938 = vmatpush.msra.mxu0 %v576
          %939 = vmatpush.msra.mxu0 %v572
          %940 = vmatpush.msra.mxu0 %v568
          %941 = vmatpush.msra.mxu0 %v564
          %942 = vmatpush.msra.mxu0 %v560
          %943 = vmatpush.msra.mxu0 %v556
          %944 = vmatpush.msra.mxu0 %v552
          %945 = vmatpush.msra.mxu0 %v548
          %946 = vmatpush.msra.mxu0 %v544
          %947 = vmatpush.msra.mxu0 %v540
          %948 = vmatpush.msra.mxu0 %v536
          %949 = vmatpush.msra.mxu0 %v532
          %950 = vmatmul.f32.gmra.mxu0 %v907
          %v951 = vpop.f32.mrf.mxu0
          %v952 = vadd.f32 0.0, %v951
          %953 = vdwg.mxu0
          %954 = vmatpush.msra.mxu0 %v593
          %955 = vmatpush.msra.mxu0 %v589
          %956 = vmatpush.msra.mxu0 %v585
          %957 = vmatpush.msra.mxu0 %v581
          %958 = vmatpush.msra.mxu0 %v577
          %959 = vmatpush.msra.mxu0 %v573
          %960 = vmatpush.msra.mxu0 %v569
          %961 = vmatpush.msra.mxu0 %v565
          %962 = vmatpush.msra.mxu0 %v561
          %963 = vmatpush.msra.mxu0 %v557
          %964 = vmatpush.msra.mxu0 %v553
          %965 = vmatpush.msra.mxu0 %v549
          %966 = vmatpush.msra.mxu0 %v545
          %967 = vmatpush.msra.mxu0 %v541
          %968 = vmatpush.msra.mxu0 %v537
          %969 = vmatpush.msra.mxu0 %v533
          %970 = vmatmul.f32.gmra.mxu0 %v907
          %v971 = vpop.f32.mrf.mxu0
          %v972 = vadd.f32 0.0, %v971
          %973 = vdwg.mxu0
          %974 = vmatpush.msra.mxu0 %v594
          %975 = vmatpush.msra.mxu0 %v590
          %976 = vmatpush.msra.mxu0 %v586
          %977 = vmatpush.msra.mxu0 %v582
          %978 = vmatpush.msra.mxu0 %v578
          %979 = vmatpush.msra.mxu0 %v574
          %980 = vmatpush.msra.mxu0 %v570
          %981 = vmatpush.msra.mxu0 %v566
          %982 = vmatpush.msra.mxu0 %v562
          %983 = vmatpush.msra.mxu0 %v558
          %984 = vmatpush.msra.mxu0 %v554
          %985 = vmatpush.msra.mxu0 %v550
          %986 = vmatpush.msra.mxu0 %v546
          %987 = vmatpush.msra.mxu0 %v542
          %988 = vmatpush.msra.mxu0 %v538
          %989 = vmatpush.msra.mxu0 %v534
          %990 = vmatmul.f32.gmra.mxu0 %v907
          %v991 = vpop.f32.mrf.mxu0
          %v992 = vadd.f32 0.0, %v991
          %993 = vdwg.mxu0
          %v994 = vadd.f32 %v910, %v932
          %v995 = vadd.f32 %v911, %v952
          %v996 = vadd.f32 %v912, %v972
          %v997 = vadd.f32 %v913, %v992
          %v998 = vxor.u32 %v994, 2147483648
          %v999 = vxor.u32 %v995, 2147483648
          %v1000 = vxor.u32 %v996, 2147483648
          %v1001 = vmul.f32 %v998, 1.442695
          %v1002 = vpow.pop %v1001
          %v1003 = vmul.f32 %v999, 1.442695
          %v1004 = vpow.pop %v1003
          %v1005 = vmul.f32 %v1000, 1.442695
          %v1006 = vpow.pop %v1005
          %v1007 = vadd.f32 %v1002, 1.0
          %v1008 = vadd.f32 %v1004, 1.0
          %v1009 = vadd.f32 %v1006, 1.0
          %v1010 = vrcp.pop %v1007
          %v1011 = vmul.f32 %v1007, %v1010
          %v1012 = vsub.f32 1.0, %v1011
          %v1013 = vmul.f32 %v1010, %v1012
          %v1014 = vadd.f32 %v1010, %v1013
          %vm1015 = vweird.f32 %v1007
          %vm1016 = vweird.f32 %v1010
          %vm1017 = vmor %vm1015, %vm1016
          %v1018 = vsel %vm1017, %v1010, %v1014
          %v1019 = vand.u32 2147483647, %v1007
          %vm1020 = vcmp.eq.f32.partialorder %v1019, 8.507059e+37
          %v1021 = vand.u32 %v1007, 2147483648
          %v1022 = vor.u32 1.1754944e-38, %v1021
          %v1023 = vsel %vm1020, %v1022, %v1018
          %v1024 = vmul.f32 1.0, %v1023
          %v1025 = vrcp.pop %v1008
          %v1026 = vmul.f32 %v1008, %v1025
          %v1027 = vsub.f32 1.0, %v1026
          %v1028 = vmul.f32 %v1025, %v1027
          %v1029 = vadd.f32 %v1025, %v1028
          %vm1030 = vweird.f32 %v1008
          %vm1031 = vweird.f32 %v1025
          %vm1032 = vmor %vm1030, %vm1031
          %v1033 = vsel %vm1032, %v1025, %v1029
          %v1034 = vand.u32 2147483647, %v1008
          %vm1035 = vcmp.eq.f32.partialorder %v1034, 8.507059e+37
          %v1036 = vand.u32 %v1008, 2147483648
          %v1037 = vor.u32 1.1754944e-38, %v1036
          %v1038 = vsel %vm1035, %v1037, %v1033
          %v1039 = vmul.f32 1.0, %v1038
          %v1040 = vrcp.pop %v1009
          %v1041 = vmul.f32 %v1009, %v1040
          %v1042 = vsub.f32 1.0, %v1041
          %v1043 = vmul.f32 %v1040, %v1042
          %v1044 = vadd.f32 %v1040, %v1043
          %vm1045 = vweird.f32 %v1009
          %vm1046 = vweird.f32 %v1040
          %vm1047 = vmor %vm1045, %vm1046
          %v1048 = vsel %vm1047, %v1040, %v1044
          %v1049 = vand.u32 2147483647, %v1009
          %vm1050 = vcmp.eq.f32.partialorder %v1049, 8.507059e+37
          %v1051 = vand.u32 %v1009, 2147483648
          %v1052 = vor.u32 1.1754944e-38, %v1051
          %v1053 = vsel %vm1050, %v1052, %v1048
          %v1054 = vmul.f32 1.0, %v1053
          %v1055 = vtanh.pop %v997
          %v1056 = vmul.f32 %v1039, %v908
          %v1057 = vmul.f32 %v1024, %v1055
          %v1058 = vadd.f32 %v1056, %v1057
          %v1059 = vtanh.pop %v1058
          %v1060 = vmul.f32 %v1054, %v1059
          %1061 = vst [vmem:[#allocation2] sm:$0xff] %v1060
          %1062 = vst [vmem:[#allocation3] sm:$0xff] %v1058
          %s1063 = scalar_lea.vmem [#allocation4], 8
          %1064 = vst [vmem:[%s1063] sm:$0xff] %v1060
        $region96: #{tpu_custom_call.1} parent=55 // pred_fallthru
          _
        %s1065 = sadd.s32 %s741, 2
        %p1066 = scmp.lt.s32.totalorder %s1065, 8
        // Predicated region
        $region97: #{tpu_custom_call.1} parent=55 // pred_check
          %p1067 = pneg %p1066
        $region98: #{tpu_custom_call.1} parent=55 // pred_check_branch
          %1069 = sbr.rel (%p1067) target = $region100
        $region99: #{tpu_custom_call.1} parent=55 // pred_region
          %v1070 = vld [vmem:[#allocation2] sm:$0xff]
          %v1071 = vld [vmem:[#allocation3] sm:$0xff]
          %s1072 = scalar_lea.vmem [#allocation5], 64
          %v1073 = vld [vmem:[%s1072] sm:$0xff]
          %v1074 = vld [vmem:[%s1072 + $0x8] sm:$0xff]
          %v1075 = vld [vmem:[%s1072 + $0x10] sm:$0xff]
          %v1076 = vld [vmem:[%s1072 + $0x18] sm:$0xff]
          %1077 = vmatpush.msra.mxu0 %v591
          %1078 = vmatpush.msra.mxu0 %v587
          %1079 = vmatpush.msra.mxu0 %v583
          %1080 = vmatpush.msra.mxu0 %v579
          %1081 = vmatpush.msra.mxu0 %v575
          %1082 = vmatpush.msra.mxu0 %v571
          %1083 = vmatpush.msra.mxu0 %v567
          %1084 = vmatpush.msra.mxu0 %v563
          %1085 = vmatpush.msra.mxu0 %v559
          %1086 = vmatpush.msra.mxu0 %v555
          %1087 = vmatpush.msra.mxu0 %v551
          %1088 = vmatpush.msra.mxu0 %v547
          %1089 = vmatpush.msra.mxu0 %v543
          %1090 = vmatpush.msra.mxu0 %v539
          %1091 = vmatpush.msra.mxu0 %v535
          %1092 = vmatpush.msra.mxu0 %v531
          %1093 = vmatmul.f32.gmra.mxu0 %v1070
          %v1094 = vpop.f32.mrf.mxu0
          %v1095 = vadd.f32 0.0, %v1094
          %1096 = vdwg.mxu0
          %1097 = vmatpush.msra.mxu0 %v592
          %1098 = vmatpush.msra.mxu0 %v588
          %1099 = vmatpush.msra.mxu0 %v584
          %1100 = vmatpush.msra.mxu0 %v580
          %1101 = vmatpush.msra.mxu0 %v576
          %1102 = vmatpush.msra.mxu0 %v572
          %1103 = vmatpush.msra.mxu0 %v568
          %1104 = vmatpush.msra.mxu0 %v564
          %1105 = vmatpush.msra.mxu0 %v560
          %1106 = vmatpush.msra.mxu0 %v556
          %1107 = vmatpush.msra.mxu0 %v552
          %1108 = vmatpush.msra.mxu0 %v548
          %1109 = vmatpush.msra.mxu0 %v544
          %1110 = vmatpush.msra.mxu0 %v540
          %1111 = vmatpush.msra.mxu0 %v536
          %1112 = vmatpush.msra.mxu0 %v532
          %1113 = vmatmul.f32.gmra.mxu0 %v1070
          %v1114 = vpop.f32.mrf.mxu0
          %v1115 = vadd.f32 0.0, %v1114
          %1116 = vdwg.mxu0
          %1117 = vmatpush.msra.mxu0 %v593
          %1118 = vmatpush.msra.mxu0 %v589
          %1119 = vmatpush.msra.mxu0 %v585
          %1120 = vmatpush.msra.mxu0 %v581
          %1121 = vmatpush.msra.mxu0 %v577
          %1122 = vmatpush.msra.mxu0 %v573
          %1123 = vmatpush.msra.mxu0 %v569
          %1124 = vmatpush.msra.mxu0 %v565
          %1125 = vmatpush.msra.mxu0 %v561
          %1126 = vmatpush.msra.mxu0 %v557
          %1127 = vmatpush.msra.mxu0 %v553
          %1128 = vmatpush.msra.mxu0 %v549
          %1129 = vmatpush.msra.mxu0 %v545
          %1130 = vmatpush.msra.mxu0 %v541
          %1131 = vmatpush.msra.mxu0 %v537
          %1132 = vmatpush.msra.mxu0 %v533
          %1133 = vmatmul.f32.gmra.mxu0 %v1070
          %v1134 = vpop.f32.mrf.mxu0
          %v1135 = vadd.f32 0.0, %v1134
          %1136 = vdwg.mxu0
          %1137 = vmatpush.msra.mxu0 %v594
          %1138 = vmatpush.msra.mxu0 %v590
          %1139 = vmatpush.msra.mxu0 %v586
          %1140 = vmatpush.msra.mxu0 %v582
          %1141 = vmatpush.msra.mxu0 %v578
          %1142 = vmatpush.msra.mxu0 %v574
          %1143 = vmatpush.msra.mxu0 %v570
          %1144 = vmatpush.msra.mxu0 %v566
          %1145 = vmatpush.msra.mxu0 %v562
          %1146 = vmatpush.msra.mxu0 %v558
          %1147 = vmatpush.msra.mxu0 %v554
          %1148 = vmatpush.msra.mxu0 %v550
          %1149 = vmatpush.msra.mxu0 %v546
          %1150 = vmatpush.msra.mxu0 %v542
          %1151 = vmatpush.msra.mxu0 %v538
          %1152 = vmatpush.msra.mxu0 %v534
          %1153 = vmatmul.f32.gmra.mxu0 %v1070
          %v1154 = vpop.f32.mrf.mxu0
          %v1155 = vadd.f32 0.0, %v1154
          %1156 = vdwg.mxu0
          %v1157 = vadd.f32 %v1073, %v1095
          %v1158 = vadd.f32 %v1074, %v1115
          %v1159 = vadd.f32 %v1075, %v1135
          %v1160 = vadd.f32 %v1076, %v1155
          %v1161 = vxor.u32 %v1157, 2147483648
          %v1162 = vxor.u32 %v1158, 2147483648
          %v1163 = vxor.u32 %v1159, 2147483648
          %v1164 = vmul.f32 %v1161, 1.442695
          %v1165 = vpow.pop %v1164
          %v1166 = vmul.f32 %v1162, 1.442695
          %v1167 = vpow.pop %v1166
          %v1168 = vmul.f32 %v1163, 1.442695
          %v1169 = vpow.pop %v1168
          %v1170 = vadd.f32 %v1165, 1.0
          %v1171 = vadd.f32 %v1167, 1.0
          %v1172 = vadd.f32 %v1169, 1.0
          %v1173 = vrcp.pop %v1170
          %v1174 = vmul.f32 %v1170, %v1173
          %v1175 = vsub.f32 1.0, %v1174
          %v1176 = vmul.f32 %v1173, %v1175
          %v1177 = vadd.f32 %v1173, %v1176
          %vm1178 = vweird.f32 %v1170
          %vm1179 = vweird.f32 %v1173
          %vm1180 = vmor %vm1178, %vm1179
          %v1181 = vsel %vm1180, %v1173, %v1177
          %v1182 = vand.u32 2147483647, %v1170
          %vm1183 = vcmp.eq.f32.partialorder %v1182, 8.507059e+37
          %v1184 = vand.u32 %v1170, 2147483648
          %v1185 = vor.u32 1.1754944e-38, %v1184
          %v1186 = vsel %vm1183, %v1185, %v1181
          %v1187 = vmul.f32 1.0, %v1186
          %v1188 = vrcp.pop %v1171
          %v1189 = vmul.f32 %v1171, %v1188
          %v1190 = vsub.f32 1.0, %v1189
          %v1191 = vmul.f32 %v1188, %v1190
          %v1192 = vadd.f32 %v1188, %v1191
          %vm1193 = vweird.f32 %v1171
          %vm1194 = vweird.f32 %v1188
          %vm1195 = vmor %vm1193, %vm1194
          %v1196 = vsel %vm1195, %v1188, %v1192
          %v1197 = vand.u32 2147483647, %v1171
          %vm1198 = vcmp.eq.f32.partialorder %v1197, 8.507059e+37
          %v1199 = vand.u32 %v1171, 2147483648
          %v1200 = vor.u32 1.1754944e-38, %v1199
          %v1201 = vsel %vm1198, %v1200, %v1196
          %v1202 = vmul.f32 1.0, %v1201
          %v1203 = vrcp.pop %v1172
          %v1204 = vmul.f32 %v1172, %v1203
          %v1205 = vsub.f32 1.0, %v1204
          %v1206 = vmul.f32 %v1203, %v1205
          %v1207 = vadd.f32 %v1203, %v1206
          %vm1208 = vweird.f32 %v1172
          %vm1209 = vweird.f32 %v1203
          %vm1210 = vmor %vm1208, %vm1209
          %v1211 = vsel %vm1210, %v1203, %v1207
          %v1212 = vand.u32 2147483647, %v1172
          %vm1213 = vcmp.eq.f32.partialorder %v1212, 8.507059e+37
          %v1214 = vand.u32 %v1172, 2147483648
          %v1215 = vor.u32 1.1754944e-38, %v1214
          %v1216 = vsel %vm1213, %v1215, %v1211
          %v1217 = vmul.f32 1.0, %v1216
          %v1218 = vtanh.pop %v1160
          %v1219 = vmul.f32 %v1202, %v1071
          %v1220 = vmul.f32 %v1187, %v1218
          %v1221 = vadd.f32 %v1219, %v1220
          %v1222 = vtanh.pop %v1221
          %v1223 = vmul.f32 %v1217, %v1222
          %1224 = vst [vmem:[#allocation2] sm:$0xff] %v1223
          %1225 = vst [vmem:[#allocation3] sm:$0xff] %v1221
          %s1226 = scalar_lea.vmem [#allocation4], 16
          %1227 = vst [vmem:[%s1226] sm:$0xff] %v1223
        $region100: #{tpu_custom_call.1} parent=55 // pred_fallthru
          _
        %s1228 = sadd.s32 %s741, 3
        %p1229 = scmp.lt.s32.totalorder %s1228, 8
        // Predicated region
        $region101: #{tpu_custom_call.1} parent=55 // pred_check
          %p1230 = pneg %p1229
        $region102: #{tpu_custom_call.1} parent=55 // pred_check_branch
          %1232 = sbr.rel (%p1230) target = $region104
        $region103: #{tpu_custom_call.1} parent=55 // pred_region
          %v1233 = vld [vmem:[#allocation2] sm:$0xff]
          %v1234 = vld [vmem:[#allocation3] sm:$0xff]
          %s1235 = scalar_lea.vmem [#allocation5], 96
          %v1236 = vld [vmem:[%s1235] sm:$0xff]
          %v1237 = vld [vmem:[%s1235 + $0x8] sm:$0xff]
          %v1238 = vld [vmem:[%s1235 + $0x10] sm:$0xff]
          %v1239 = vld [vmem:[%s1235 + $0x18] sm:$0xff]
          %1240 = vmatpush.msra.mxu0 %v591
          %1241 = vmatpush.msra.mxu0 %v587
          %1242 = vmatpush.msra.mxu0 %v583
          %1243 = vmatpush.msra.mxu0 %v579
          %1244 = vmatpush.msra.mxu0 %v575
          %1245 = vmatpush.msra.mxu0 %v571
          %1246 = vmatpush.msra.mxu0 %v567
          %1247 = vmatpush.msra.mxu0 %v563
          %1248 = vmatpush.msra.mxu0 %v559
          %1249 = vmatpush.msra.mxu0 %v555
          %1250 = vmatpush.msra.mxu0 %v551
          %1251 = vmatpush.msra.mxu0 %v547
          %1252 = vmatpush.msra.mxu0 %v543
          %1253 = vmatpush.msra.mxu0 %v539
          %1254 = vmatpush.msra.mxu0 %v535
          %1255 = vmatpush.msra.mxu0 %v531
          %1256 = vmatmul.f32.gmra.mxu0 %v1233
          %v1257 = vpop.f32.mrf.mxu0
          %v1258 = vadd.f32 0.0, %v1257
          %1259 = vdwg.mxu0
          %1260 = vmatpush.msra.mxu0 %v592
          %1261 = vmatpush.msra.mxu0 %v588
          %1262 = vmatpush.msra.mxu0 %v584
          %1263 = vmatpush.msra.mxu0 %v580
          %1264 = vmatpush.msra.mxu0 %v576
          %1265 = vmatpush.msra.mxu0 %v572
          %1266 = vmatpush.msra.mxu0 %v568
          %1267 = vmatpush.msra.mxu0 %v564
          %1268 = vmatpush.msra.mxu0 %v560
          %1269 = vmatpush.msra.mxu0 %v556
          %1270 = vmatpush.msra.mxu0 %v552
          %1271 = vmatpush.msra.mxu0 %v548
          %1272 = vmatpush.msra.mxu0 %v544
          %1273 = vmatpush.msra.mxu0 %v540
          %1274 = vmatpush.msra.mxu0 %v536
          %1275 = vmatpush.msra.mxu0 %v532
          %1276 = vmatmul.f32.gmra.mxu0 %v1233
          %v1277 = vpop.f32.mrf.mxu0
          %v1278 = vadd.f32 0.0, %v1277
          %1279 = vdwg.mxu0
          %1280 = vmatpush.msra.mxu0 %v593
          %1281 = vmatpush.msra.mxu0 %v589
          %1282 = vmatpush.msra.mxu0 %v585
          %1283 = vmatpush.msra.mxu0 %v581
          %1284 = vmatpush.msra.mxu0 %v577
          %1285 = vmatpush.msra.mxu0 %v573
          %1286 = vmatpush.msra.mxu0 %v569
          %1287 = vmatpush.msra.mxu0 %v565
          %1288 = vmatpush.msra.mxu0 %v561
          %1289 = vmatpush.msra.mxu0 %v557
          %1290 = vmatpush.msra.mxu0 %v553
          %1291 = vmatpush.msra.mxu0 %v549
          %1292 = vmatpush.msra.mxu0 %v545
          %1293 = vmatpush.msra.mxu0 %v541
          %1294 = vmatpush.msra.mxu0 %v537
          %1295 = vmatpush.msra.mxu0 %v533
          %1296 = vmatmul.f32.gmra.mxu0 %v1233
          %v1297 = vpop.f32.mrf.mxu0
          %v1298 = vadd.f32 0.0, %v1297
          %1299 = vdwg.mxu0
          %1300 = vmatpush.msra.mxu0 %v594
          %1301 = vmatpush.msra.mxu0 %v590
          %1302 = vmatpush.msra.mxu0 %v586
          %1303 = vmatpush.msra.mxu0 %v582
          %1304 = vmatpush.msra.mxu0 %v578
          %1305 = vmatpush.msra.mxu0 %v574
          %1306 = vmatpush.msra.mxu0 %v570
          %1307 = vmatpush.msra.mxu0 %v566
          %1308 = vmatpush.msra.mxu0 %v562
          %1309 = vmatpush.msra.mxu0 %v558
          %1310 = vmatpush.msra.mxu0 %v554
          %1311 = vmatpush.msra.mxu0 %v550
          %1312 = vmatpush.msra.mxu0 %v546
          %1313 = vmatpush.msra.mxu0 %v542
          %1314 = vmatpush.msra.mxu0 %v538
          %1315 = vmatpush.msra.mxu0 %v534
          %1316 = vmatmul.f32.gmra.mxu0 %v1233
          %v1317 = vpop.f32.mrf.mxu0
          %v1318 = vadd.f32 0.0, %v1317
          %1319 = vdwg.mxu0
          %v1320 = vadd.f32 %v1236, %v1258
          %v1321 = vadd.f32 %v1237, %v1278
          %v1322 = vadd.f32 %v1238, %v1298
          %v1323 = vadd.f32 %v1239, %v1318
          %v1324 = vxor.u32 %v1320, 2147483648
          %v1325 = vxor.u32 %v1321, 2147483648
          %v1326 = vxor.u32 %v1322, 2147483648
          %v1327 = vmul.f32 %v1324, 1.442695
          %v1328 = vpow.pop %v1327
          %v1329 = vmul.f32 %v1325, 1.442695
          %v1330 = vpow.pop %v1329
          %v1331 = vmul.f32 %v1326, 1.442695
          %v1332 = vpow.pop %v1331
          %v1333 = vadd.f32 %v1328, 1.0
          %v1334 = vadd.f32 %v1330, 1.0
          %v1335 = vadd.f32 %v1332, 1.0
          %v1336 = vrcp.pop %v1333
          %v1337 = vmul.f32 %v1333, %v1336
          %v1338 = vsub.f32 1.0, %v1337
          %v1339 = vmul.f32 %v1336, %v1338
          %v1340 = vadd.f32 %v1336, %v1339
          %vm1341 = vweird.f32 %v1333
          %vm1342 = vweird.f32 %v1336
          %vm1343 = vmor %vm1341, %vm1342
          %v1344 = vsel %vm1343, %v1336, %v1340
          %v1345 = vand.u32 2147483647, %v1333
          %vm1346 = vcmp.eq.f32.partialorder %v1345, 8.507059e+37
          %v1347 = vand.u32 %v1333, 2147483648
          %v1348 = vor.u32 1.1754944e-38, %v1347
          %v1349 = vsel %vm1346, %v1348, %v1344
          %v1350 = vmul.f32 1.0, %v1349
          %v1351 = vrcp.pop %v1334
          %v1352 = vmul.f32 %v1334, %v1351
          %v1353 = vsub.f32 1.0, %v1352
          %v1354 = vmul.f32 %v1351, %v1353
          %v1355 = vadd.f32 %v1351, %v1354
          %vm1356 = vweird.f32 %v1334
          %vm1357 = vweird.f32 %v1351
          %vm1358 = vmor %vm1356, %vm1357
          %v1359 = vsel %vm1358, %v1351, %v1355
          %v1360 = vand.u32 2147483647, %v1334
          %vm1361 = vcmp.eq.f32.partialorder %v1360, 8.507059e+37
          %v1362 = vand.u32 %v1334, 2147483648
          %v1363 = vor.u32 1.1754944e-38, %v1362
          %v1364 = vsel %vm1361, %v1363, %v1359
          %v1365 = vmul.f32 1.0, %v1364
          %v1366 = vrcp.pop %v1335
          %v1367 = vmul.f32 %v1335, %v1366
          %v1368 = vsub.f32 1.0, %v1367
          %v1369 = vmul.f32 %v1366, %v1368
          %v1370 = vadd.f32 %v1366, %v1369
          %vm1371 = vweird.f32 %v1335
          %vm1372 = vweird.f32 %v1366
          %vm1373 = vmor %vm1371, %vm1372
          %v1374 = vsel %vm1373, %v1366, %v1370
          %v1375 = vand.u32 2147483647, %v1335
          %vm1376 = vcmp.eq.f32.partialorder %v1375, 8.507059e+37
          %v1377 = vand.u32 %v1335, 2147483648
          %v1378 = vor.u32 1.1754944e-38, %v1377
          %v1379 = vsel %vm1376, %v1378, %v1374
          %v1380 = vmul.f32 1.0, %v1379
          %v1381 = vtanh.pop %v1323
          %v1382 = vmul.f32 %v1365, %v1234
          %v1383 = vmul.f32 %v1350, %v1381
          %v1384 = vadd.f32 %v1382, %v1383
          %v1385 = vtanh.pop %v1384
          %v1386 = vmul.f32 %v1380, %v1385
          %1387 = vst [vmem:[#allocation2] sm:$0xff] %v1386
          %1388 = vst [vmem:[#allocation3] sm:$0xff] %v1384
          %s1389 = scalar_lea.vmem [#allocation4], 24
          %1390 = vst [vmem:[%s1389] sm:$0xff] %v1386
        $region104: #{tpu_custom_call.1} parent=55 // pred_fallthru
          _
        %v1391 = vld [vmem:[#allocation14] sm:$0xff]
        %v1392 = vld [vmem:[#allocation14 + $0x8] sm:$0xff]
        %v1393 = vld [vmem:[#allocation14 + $0x10] sm:$0xff]
        %v1394 = vld [vmem:[#allocation14 + $0x18] sm:$0xff]
        %v1395 = vld [vmem:[#allocation14 + $0x20] sm:$0xff]
        %v1396 = vld [vmem:[#allocation14 + $0x28] sm:$0xff]
        %v1397 = vld [vmem:[#allocation14 + $0x30] sm:$0xff]
        %v1398 = vld [vmem:[#allocation14 + $0x38] sm:$0xff]
        %v1399 = vld [vmem:[#allocation14 + $0x40] sm:$0xff]
        %v1400 = vld [vmem:[#allocation14 + $0x48] sm:$0xff]
        %v1401 = vld [vmem:[#allocation14 + $0x50] sm:$0xff]
        %v1402 = vld [vmem:[#allocation14 + $0x58] sm:$0xff]
        %v1403 = vld [vmem:[#allocation14 + $0x60] sm:$0xff]
        %v1404 = vld [vmem:[#allocation14 + $0x68] sm:$0xff]
        %v1405 = vld [vmem:[#allocation14 + $0x70] sm:$0xff]
        %v1406 = vld [vmem:[#allocation14 + $0x78] sm:$0xff]
        %v1407 = vld [vmem:[#allocation14 + $0x80] sm:$0xff]
        %v1408 = vld [vmem:[#allocation14 + $0x88] sm:$0xff]
        %v1409 = vld [vmem:[#allocation14 + $0x90] sm:$0xff]
        %v1410 = vld [vmem:[#allocation14 + $0x98] sm:$0xff]
        %v1411 = vld [vmem:[#allocation14 + $0xa0] sm:$0xff]
        %v1412 = vld [vmem:[#allocation14 + $0xa8] sm:$0xff]
        %v1413 = vld [vmem:[#allocation14 + $0xb0] sm:$0xff]
        %v1414 = vld [vmem:[#allocation14 + $0xb8] sm:$0xff]
        %v1415 = vld [vmem:[#allocation14 + $0xc0] sm:$0xff]
        %v1416 = vld [vmem:[#allocation14 + $0xc8] sm:$0xff]
        %v1417 = vld [vmem:[#allocation14 + $0xd0] sm:$0xff]
        %v1418 = vld [vmem:[#allocation14 + $0xd8] sm:$0xff]
        %v1419 = vld [vmem:[#allocation14 + $0xe0] sm:$0xff]
        %v1420 = vld [vmem:[#allocation14 + $0xe8] sm:$0xff]
        %v1421 = vld [vmem:[#allocation14 + $0xf0] sm:$0xff]
        %v1422 = vld [vmem:[#allocation14 + $0xf8] sm:$0xff]
        %v1423 = vld [vmem:[#allocation14 + $0x100] sm:$0xff]
        %v1424 = vld [vmem:[#allocation14 + $0x108] sm:$0xff]
        %v1425 = vld [vmem:[#allocation14 + $0x110] sm:$0xff]
        %v1426 = vld [vmem:[#allocation14 + $0x118] sm:$0xff]
        %v1427 = vld [vmem:[#allocation14 + $0x120] sm:$0xff]
        %v1428 = vld [vmem:[#allocation14 + $0x128] sm:$0xff]
        %v1429 = vld [vmem:[#allocation14 + $0x130] sm:$0xff]
        %v1430 = vld [vmem:[#allocation14 + $0x138] sm:$0xff]
        %v1431 = vld [vmem:[#allocation14 + $0x140] sm:$0xff]
        %v1432 = vld [vmem:[#allocation14 + $0x148] sm:$0xff]
        %v1433 = vld [vmem:[#allocation14 + $0x150] sm:$0xff]
        %v1434 = vld [vmem:[#allocation14 + $0x158] sm:$0xff]
        %v1435 = vld [vmem:[#allocation14 + $0x160] sm:$0xff]
        %v1436 = vld [vmem:[#allocation14 + $0x168] sm:$0xff]
        %v1437 = vld [vmem:[#allocation14 + $0x170] sm:$0xff]
        %v1438 = vld [vmem:[#allocation14 + $0x178] sm:$0xff]
        %v1439 = vld [vmem:[#allocation14 + $0x180] sm:$0xff]
        %v1440 = vld [vmem:[#allocation14 + $0x188] sm:$0xff]
        %v1441 = vld [vmem:[#allocation14 + $0x190] sm:$0xff]
        %v1442 = vld [vmem:[#allocation14 + $0x198] sm:$0xff]
        %v1443 = vld [vmem:[#allocation14 + $0x1a0] sm:$0xff]
        %v1444 = vld [vmem:[#allocation14 + $0x1a8] sm:$0xff]
        %v1445 = vld [vmem:[#allocation14 + $0x1b0] sm:$0xff]
        %v1446 = vld [vmem:[#allocation14 + $0x1b8] sm:$0xff]
        %v1447 = vld [vmem:[#allocation14 + $0x1c0] sm:$0xff]
        %v1448 = vld [vmem:[#allocation14 + $0x1c8] sm:$0xff]
        %v1449 = vld [vmem:[#allocation14 + $0x1d0] sm:$0xff]
        %v1450 = vld [vmem:[#allocation14 + $0x1d8] sm:$0xff]
        %v1451 = vld [vmem:[#allocation14 + $0x1e0] sm:$0xff]
        %v1452 = vld [vmem:[#allocation14 + $0x1e8] sm:$0xff]
        %v1453 = vld [vmem:[#allocation14 + $0x1f0] sm:$0xff]
        %v1454 = vld [vmem:[#allocation14 + $0x1f8] sm:$0xff]
        %v1455 = vld [vmem:[#allocation15] sm:$0xff]
        %v1456 = vld [vmem:[#allocation15 + $0x8] sm:$0xff]
        %v1457 = vld [vmem:[#allocation15 + $0x10] sm:$0xff]
        %v1458 = vld [vmem:[#allocation15 + $0x18] sm:$0xff]
        %v1459 = vld [vmem:[#allocation15 + $0x20] sm:$0xff]
        %v1460 = vld [vmem:[#allocation15 + $0x28] sm:$0xff]
        %v1461 = vld [vmem:[#allocation15 + $0x30] sm:$0xff]
        %v1462 = vld [vmem:[#allocation15 + $0x38] sm:$0xff]
        %v1463 = vld [vmem:[#allocation15 + $0x40] sm:$0xff]
        %v1464 = vld [vmem:[#allocation15 + $0x48] sm:$0xff]
        %v1465 = vld [vmem:[#allocation15 + $0x50] sm:$0xff]
        %v1466 = vld [vmem:[#allocation15 + $0x58] sm:$0xff]
        %v1467 = vld [vmem:[#allocation15 + $0x60] sm:$0xff]
        %v1468 = vld [vmem:[#allocation15 + $0x68] sm:$0xff]
        %v1469 = vld [vmem:[#allocation15 + $0x70] sm:$0xff]
        %v1470 = vld [vmem:[#allocation15 + $0x78] sm:$0xff]
        %v1471 = vld [vmem:[#allocation15 + $0x80] sm:$0xff]
        %v1472 = vld [vmem:[#allocation15 + $0x88] sm:$0xff]
        %v1473 = vld [vmem:[#allocation15 + $0x90] sm:$0xff]
        %v1474 = vld [vmem:[#allocation15 + $0x98] sm:$0xff]
        %v1475 = vld [vmem:[#allocation15 + $0xa0] sm:$0xff]
        %v1476 = vld [vmem:[#allocation15 + $0xa8] sm:$0xff]
        %v1477 = vld [vmem:[#allocation15 + $0xb0] sm:$0xff]
        %v1478 = vld [vmem:[#allocation15 + $0xb8] sm:$0xff]
        %v1479 = vld [vmem:[#allocation15 + $0xc0] sm:$0xff]
        %v1480 = vld [vmem:[#allocation15 + $0xc8] sm:$0xff]
        %v1481 = vld [vmem:[#allocation15 + $0xd0] sm:$0xff]
        %v1482 = vld [vmem:[#allocation15 + $0xd8] sm:$0xff]
        %v1483 = vld [vmem:[#allocation15 + $0xe0] sm:$0xff]
        %v1484 = vld [vmem:[#allocation15 + $0xe8] sm:$0xff]
        %v1485 = vld [vmem:[#allocation15 + $0xf0] sm:$0xff]
        %v1486 = vld [vmem:[#allocation15 + $0xf8] sm:$0xff]
        %v1487 = vld [vmem:[#allocation15 + $0x100] sm:$0xff]
        %v1488 = vld [vmem:[#allocation15 + $0x108] sm:$0xff]
        %v1489 = vld [vmem:[#allocation15 + $0x110] sm:$0xff]
        %v1490 = vld [vmem:[#allocation15 + $0x118] sm:$0xff]
        %v1491 = vld [vmem:[#allocation15 + $0x120] sm:$0xff]
        %v1492 = vld [vmem:[#allocation15 + $0x128] sm:$0xff]
        %v1493 = vld [vmem:[#allocation15 + $0x130] sm:$0xff]
        %v1494 = vld [vmem:[#allocation15 + $0x138] sm:$0xff]
        %v1495 = vld [vmem:[#allocation15 + $0x140] sm:$0xff]
        %v1496 = vld [vmem:[#allocation15 + $0x148] sm:$0xff]
        %v1497 = vld [vmem:[#allocation15 + $0x150] sm:$0xff]
        %v1498 = vld [vmem:[#allocation15 + $0x158] sm:$0xff]
        %v1499 = vld [vmem:[#allocation15 + $0x160] sm:$0xff]
        %v1500 = vld [vmem:[#allocation15 + $0x168] sm:$0xff]
        %v1501 = vld [vmem:[#allocation15 + $0x170] sm:$0xff]
        %v1502 = vld [vmem:[#allocation15 + $0x178] sm:$0xff]
        %v1503 = vld [vmem:[#allocation15 + $0x180] sm:$0xff]
        %v1504 = vld [vmem:[#allocation15 + $0x188] sm:$0xff]
        %v1505 = vld [vmem:[#allocation15 + $0x190] sm:$0xff]
        %v1506 = vld [vmem:[#allocation15 + $0x198] sm:$0xff]
        %v1507 = vld [vmem:[#allocation15 + $0x1a0] sm:$0xff]
        %v1508 = vld [vmem:[#allocation15 + $0x1a8] sm:$0xff]
        %v1509 = vld [vmem:[#allocation15 + $0x1b0] sm:$0xff]
        %v1510 = vld [vmem:[#allocation15 + $0x1b8] sm:$0xff]
        %v1511 = vld [vmem:[#allocation15 + $0x1c0] sm:$0xff]
        %v1512 = vld [vmem:[#allocation15 + $0x1c8] sm:$0xff]
        %v1513 = vld [vmem:[#allocation15 + $0x1d0] sm:$0xff]
        %v1514 = vld [vmem:[#allocation15 + $0x1d8] sm:$0xff]
        %v1515 = vld [vmem:[#allocation15 + $0x1e0] sm:$0xff]
        %v1516 = vld [vmem:[#allocation15 + $0x1e8] sm:$0xff]
        %v1517 = vld [vmem:[#allocation15 + $0x1f0] sm:$0xff]
        %v1518 = vld [vmem:[#allocation15 + $0x1f8] sm:$0xff]
        %v1519 = vld [vmem:[%s6] sm:$0xf]
        %v1520 = vld [vmem:[#allocation4] sm:$0xff]
        %v1521 = vld [vmem:[#allocation4 + $0x8] sm:$0xff]
        %v1522 = vld [vmem:[#allocation4 + $0x10] sm:$0xff]
        %v1523 = vld [vmem:[#allocation4 + $0x18] sm:$0xff]
        %v1525 = vperm.slane %v1519, 0
        %v1526 = vperm.slane %v1519, 1
        %v1527 = vperm.slane %v1519, 2
        %v1528 = vperm.slane %v1519, 3
        %1533 = vmatpush.msra.mxu0 %v1451
        %1534 = vmatpush.msra.mxu0 %v1447
        %1535 = vmatpush.msra.mxu0 %v1443
        %1536 = vmatpush.msra.mxu0 %v1439
        %1537 = vmatpush.msra.mxu0 %v1435
        %1538 = vmatpush.msra.mxu0 %v1431
        %1539 = vmatpush.msra.mxu0 %v1427
        %1540 = vmatpush.msra.mxu0 %v1423
        %1541 = vmatpush.msra.mxu0 %v1419
        %1542 = vmatpush.msra.mxu0 %v1415
        %1543 = vmatpush.msra.mxu0 %v1411
        %1544 = vmatpush.msra.mxu0 %v1407
        %1545 = vmatpush.msra.mxu0 %v1403
        %1546 = vmatpush.msra.mxu0 %v1399
        %1547 = vmatpush.msra.mxu0 %v1395
        %1548 = vmatpush.msra.mxu0 %v1391
        %1549 = vmatmul.f32.gmra.mxu0 %v1520
        %v1550 = vpop.f32.mrf.mxu0
        %v1551 = vadd.f32 %v1525, %v1550
        %1552 = vmatmul.f32.gmra.mxu0 %v1521
        %v1553 = vpop.f32.mrf.mxu0
        %v1554 = vadd.f32 %v1525, %v1553
        %1555 = vmatmul.f32.gmra.mxu0 %v1522
        %v1556 = vpop.f32.mrf.mxu0
        %v1557 = vadd.f32 %v1525, %v1556
        %1558 = vmatmul.f32.gmra.mxu0 %v1523
        %v1559 = vpop.f32.mrf.mxu0
        %v1560 = vadd.f32 %v1525, %v1559
        %1561 = vdwg.mxu0
        %1562 = vmatpush.msra.mxu0 %v1452
        %1563 = vmatpush.msra.mxu0 %v1448
        %1564 = vmatpush.msra.mxu0 %v1444
        %1565 = vmatpush.msra.mxu0 %v1440
        %1566 = vmatpush.msra.mxu0 %v1436
        %1567 = vmatpush.msra.mxu0 %v1432
        %1568 = vmatpush.msra.mxu0 %v1428
        %1569 = vmatpush.msra.mxu0 %v1424
        %1570 = vmatpush.msra.mxu0 %v1420
        %1571 = vmatpush.msra.mxu0 %v1416
        %1572 = vmatpush.msra.mxu0 %v1412
        %1573 = vmatpush.msra.mxu0 %v1408
        %1574 = vmatpush.msra.mxu0 %v1404
        %1575 = vmatpush.msra.mxu0 %v1400
        %1576 = vmatpush.msra.mxu0 %v1396
        %1577 = vmatpush.msra.mxu0 %v1392
        %1578 = vmatmul.f32.gmra.mxu0 %v1520
        %v1579 = vpop.f32.mrf.mxu0
        %v1580 = vadd.f32 %v1526, %v1579
        %1581 = vmatmul.f32.gmra.mxu0 %v1521
        %v1582 = vpop.f32.mrf.mxu0
        %v1583 = vadd.f32 %v1526, %v1582
        %1584 = vmatmul.f32.gmra.mxu0 %v1522
        %v1585 = vpop.f32.mrf.mxu0
        %v1586 = vadd.f32 %v1526, %v1585
        %1587 = vmatmul.f32.gmra.mxu0 %v1523
        %v1588 = vpop.f32.mrf.mxu0
        %v1589 = vadd.f32 %v1526, %v1588
        %1590 = vdwg.mxu0
        %1591 = vmatpush.msra.mxu0 %v1453
        %1592 = vmatpush.msra.mxu0 %v1449
        %1593 = vmatpush.msra.mxu0 %v1445
        %1594 = vmatpush.msra.mxu0 %v1441
        %1595 = vmatpush.msra.mxu0 %v1437
        %1596 = vmatpush.msra.mxu0 %v1433
        %1597 = vmatpush.msra.mxu0 %v1429
        %1598 = vmatpush.msra.mxu0 %v1425
        %1599 = vmatpush.msra.mxu0 %v1421
        %1600 = vmatpush.msra.mxu0 %v1417
        %1601 = vmatpush.msra.mxu0 %v1413
        %1602 = vmatpush.msra.mxu0 %v1409
        %1603 = vmatpush.msra.mxu0 %v1405
        %1604 = vmatpush.msra.mxu0 %v1401
        %1605 = vmatpush.msra.mxu0 %v1397
        %1606 = vmatpush.msra.mxu0 %v1393
        %1607 = vmatmul.f32.gmra.mxu0 %v1520
        %v1608 = vpop.f32.mrf.mxu0
        %v1609 = vadd.f32 %v1527, %v1608
        %1610 = vmatmul.f32.gmra.mxu0 %v1521
        %v1611 = vpop.f32.mrf.mxu0
        %v1612 = vadd.f32 %v1527, %v1611
        %1613 = vmatmul.f32.gmra.mxu0 %v1522
        %v1614 = vpop.f32.mrf.mxu0
        %v1615 = vadd.f32 %v1527, %v1614
        %1616 = vmatmul.f32.gmra.mxu0 %v1523
        %v1617 = vpop.f32.mrf.mxu0
        %v1618 = vadd.f32 %v1527, %v1617
        %1619 = vdwg.mxu0
        %1620 = vmatpush.msra.mxu0 %v1454
        %1621 = vmatpush.msra.mxu0 %v1450
        %1622 = vmatpush.msra.mxu0 %v1446
        %1623 = vmatpush.msra.mxu0 %v1442
        %1624 = vmatpush.msra.mxu0 %v1438
        %1625 = vmatpush.msra.mxu0 %v1434
        %1626 = vmatpush.msra.mxu0 %v1430
        %1627 = vmatpush.msra.mxu0 %v1426
        %1628 = vmatpush.msra.mxu0 %v1422
        %1629 = vmatpush.msra.mxu0 %v1418
        %1630 = vmatpush.msra.mxu0 %v1414
        %1631 = vmatpush.msra.mxu0 %v1410
        %1632 = vmatpush.msra.mxu0 %v1406
        %1633 = vmatpush.msra.mxu0 %v1402
        %1634 = vmatpush.msra.mxu0 %v1398
        %1635 = vmatpush.msra.mxu0 %v1394
        %1636 = vmatmul.f32.gmra.mxu0 %v1520
        %v1637 = vpop.f32.mrf.mxu0
        %v1638 = vadd.f32 %v1528, %v1637
        %1639 = vmatmul.f32.gmra.mxu0 %v1521
        %v1640 = vpop.f32.mrf.mxu0
        %v1641 = vadd.f32 %v1528, %v1640
        %1642 = vmatmul.f32.gmra.mxu0 %v1522
        %v1643 = vpop.f32.mrf.mxu0
        %v1644 = vadd.f32 %v1528, %v1643
        %1645 = vmatmul.f32.gmra.mxu0 %v1523
        %v1646 = vpop.f32.mrf.mxu0
        %v1647 = vadd.f32 %v1528, %v1646
        %1648 = vdwg.mxu0
        %1649 = vst [vmem:[#allocation5] sm:$0xff] %v1551
        %1650 = vst [vmem:[#allocation5 + $0x8] sm:$0xff] %v1580
        %1651 = vst [vmem:[#allocation5 + $0x10] sm:$0xff] %v1609
        %1652 = vst [vmem:[#allocation5 + $0x18] sm:$0xff] %v1638
        %1653 = vst [vmem:[#allocation5 + $0x20] sm:$0xff] %v1554
        %1654 = vst [vmem:[#allocation5 + $0x28] sm:$0xff] %v1583
        %1655 = vst [vmem:[#allocation5 + $0x30] sm:$0xff] %v1612
        %1656 = vst [vmem:[#allocation5 + $0x38] sm:$0xff] %v1641
        %1657 = vst [vmem:[#allocation5 + $0x40] sm:$0xff] %v1557
        %1658 = vst [vmem:[#allocation5 + $0x48] sm:$0xff] %v1586
        %1659 = vst [vmem:[#allocation5 + $0x50] sm:$0xff] %v1615
        %1660 = vst [vmem:[#allocation5 + $0x58] sm:$0xff] %v1644
        %1661 = vst [vmem:[#allocation5 + $0x60] sm:$0xff] %v1560
        %1662 = vst [vmem:[#allocation5 + $0x68] sm:$0xff] %v1589
        %1663 = vst [vmem:[#allocation5 + $0x70] sm:$0xff] %v1618
        %1664 = vst [vmem:[#allocation5 + $0x78] sm:$0xff] %v1647
        // Predicated region
        $region105: #{tpu_custom_call.1} parent=55 // pred_check
          %p1665 = pneg %p742
        $region106: #{tpu_custom_call.1} parent=55 // pred_check_branch
          %1667 = sbr.rel (%p1665) target = $region108
        $region107: #{tpu_custom_call.1} parent=55 // pred_region
          %s1668 = scalar_lea.vmem [#allocation2], 8
          %v1669 = vld [vmem:[%s1668] sm:$0xff]
          %s1670 = scalar_lea.vmem [#allocation3], 8
          %v1671 = vld [vmem:[%s1670] sm:$0xff]
          %v1672 = vld [vmem:[#allocation5] sm:$0xff]
          %v1673 = vld [vmem:[#allocation5 + $0x8] sm:$0xff]
          %v1674 = vld [vmem:[#allocation5 + $0x10] sm:$0xff]
          %v1675 = vld [vmem:[#allocation5 + $0x18] sm:$0xff]
          %1676 = vmatpush.msra.mxu0 %v1515
          %1677 = vmatpush.msra.mxu0 %v1511
          %1678 = vmatpush.msra.mxu0 %v1507
          %1679 = vmatpush.msra.mxu0 %v1503
          %1680 = vmatpush.msra.mxu0 %v1499
          %1681 = vmatpush.msra.mxu0 %v1495
          %1682 = vmatpush.msra.mxu0 %v1491
          %1683 = vmatpush.msra.mxu0 %v1487
          %1684 = vmatpush.msra.mxu0 %v1483
          %1685 = vmatpush.msra.mxu0 %v1479
          %1686 = vmatpush.msra.mxu0 %v1475
          %1687 = vmatpush.msra.mxu0 %v1471
          %1688 = vmatpush.msra.mxu0 %v1467
          %1689 = vmatpush.msra.mxu0 %v1463
          %1690 = vmatpush.msra.mxu0 %v1459
          %1691 = vmatpush.msra.mxu0 %v1455
          %1692 = vmatmul.f32.gmra.mxu0 %v1669
          %v1693 = vpop.f32.mrf.mxu0
          %v1694 = vadd.f32 0.0, %v1693
          %1695 = vdwg.mxu0
          %1696 = vmatpush.msra.mxu0 %v1516
          %1697 = vmatpush.msra.mxu0 %v1512
          %1698 = vmatpush.msra.mxu0 %v1508
          %1699 = vmatpush.msra.mxu0 %v1504
          %1700 = vmatpush.msra.mxu0 %v1500
          %1701 = vmatpush.msra.mxu0 %v1496
          %1702 = vmatpush.msra.mxu0 %v1492
          %1703 = vmatpush.msra.mxu0 %v1488
          %1704 = vmatpush.msra.mxu0 %v1484
          %1705 = vmatpush.msra.mxu0 %v1480
          %1706 = vmatpush.msra.mxu0 %v1476
          %1707 = vmatpush.msra.mxu0 %v1472
          %1708 = vmatpush.msra.mxu0 %v1468
          %1709 = vmatpush.msra.mxu0 %v1464
          %1710 = vmatpush.msra.mxu0 %v1460
          %1711 = vmatpush.msra.mxu0 %v1456
          %1712 = vmatmul.f32.gmra.mxu0 %v1669
          %v1713 = vpop.f32.mrf.mxu0
          %v1714 = vadd.f32 0.0, %v1713
          %1715 = vdwg.mxu0
          %1716 = vmatpush.msra.mxu0 %v1517
          %1717 = vmatpush.msra.mxu0 %v1513
          %1718 = vmatpush.msra.mxu0 %v1509
          %1719 = vmatpush.msra.mxu0 %v1505
          %1720 = vmatpush.msra.mxu0 %v1501
          %1721 = vmatpush.msra.mxu0 %v1497
          %1722 = vmatpush.msra.mxu0 %v1493
          %1723 = vmatpush.msra.mxu0 %v1489
          %1724 = vmatpush.msra.mxu0 %v1485
          %1725 = vmatpush.msra.mxu0 %v1481
          %1726 = vmatpush.msra.mxu0 %v1477
          %1727 = vmatpush.msra.mxu0 %v1473
          %1728 = vmatpush.msra.mxu0 %v1469
          %1729 = vmatpush.msra.mxu0 %v1465
          %1730 = vmatpush.msra.mxu0 %v1461
          %1731 = vmatpush.msra.mxu0 %v1457
          %1732 = vmatmul.f32.gmra.mxu0 %v1669
          %v1733 = vpop.f32.mrf.mxu0
          %v1734 = vadd.f32 0.0, %v1733
          %1735 = vdwg.mxu0
          %1736 = vmatpush.msra.mxu0 %v1518
          %1737 = vmatpush.msra.mxu0 %v1514
          %1738 = vmatpush.msra.mxu0 %v1510
          %1739 = vmatpush.msra.mxu0 %v1506
          %1740 = vmatpush.msra.mxu0 %v1502
          %1741 = vmatpush.msra.mxu0 %v1498
          %1742 = vmatpush.msra.mxu0 %v1494
          %1743 = vmatpush.msra.mxu0 %v1490
          %1744 = vmatpush.msra.mxu0 %v1486
          %1745 = vmatpush.msra.mxu0 %v1482
          %1746 = vmatpush.msra.mxu0 %v1478
          %1747 = vmatpush.msra.mxu0 %v1474
          %1748 = vmatpush.msra.mxu0 %v1470
          %1749 = vmatpush.msra.mxu0 %v1466
          %1750 = vmatpush.msra.mxu0 %v1462
          %1751 = vmatpush.msra.mxu0 %v1458
          %1752 = vmatmul.f32.gmra.mxu0 %v1669
          %v1753 = vpop.f32.mrf.mxu0
          %v1754 = vadd.f32 0.0, %v1753
          %1755 = vdwg.mxu0
          %v1756 = vadd.f32 %v1672, %v1694
          %v1757 = vadd.f32 %v1673, %v1714
          %v1758 = vadd.f32 %v1674, %v1734
          %v1759 = vadd.f32 %v1675, %v1754
          %v1760 = vxor.u32 %v1756, 2147483648
          %v1761 = vxor.u32 %v1757, 2147483648
          %v1762 = vxor.u32 %v1758, 2147483648
          %v1763 = vmul.f32 %v1760, 1.442695
          %v1764 = vpow.pop %v1763
          %v1765 = vmul.f32 %v1761, 1.442695
          %v1766 = vpow.pop %v1765
          %v1767 = vmul.f32 %v1762, 1.442695
          %v1768 = vpow.pop %v1767
          %v1769 = vadd.f32 %v1764, 1.0
          %v1770 = vadd.f32 %v1766, 1.0
          %v1771 = vadd.f32 %v1768, 1.0
          %v1772 = vrcp.pop %v1769
          %v1773 = vmul.f32 %v1769, %v1772
          %v1774 = vsub.f32 1.0, %v1773
          %v1775 = vmul.f32 %v1772, %v1774
          %v1776 = vadd.f32 %v1772, %v1775
          %vm1777 = vweird.f32 %v1769
          %vm1778 = vweird.f32 %v1772
          %vm1779 = vmor %vm1777, %vm1778
          %v1780 = vsel %vm1779, %v1772, %v1776
          %v1781 = vand.u32 2147483647, %v1769
          %vm1782 = vcmp.eq.f32.partialorder %v1781, 8.507059e+37
          %v1783 = vand.u32 %v1769, 2147483648
          %v1784 = vor.u32 1.1754944e-38, %v1783
          %v1785 = vsel %vm1782, %v1784, %v1780
          %v1786 = vmul.f32 1.0, %v1785
          %v1787 = vrcp.pop %v1770
          %v1788 = vmul.f32 %v1770, %v1787
          %v1789 = vsub.f32 1.0, %v1788
          %v1790 = vmul.f32 %v1787, %v1789
          %v1791 = vadd.f32 %v1787, %v1790
          %vm1792 = vweird.f32 %v1770
          %vm1793 = vweird.f32 %v1787
          %vm1794 = vmor %vm1792, %vm1793
          %v1795 = vsel %vm1794, %v1787, %v1791
          %v1796 = vand.u32 2147483647, %v1770
          %vm1797 = vcmp.eq.f32.partialorder %v1796, 8.507059e+37
          %v1798 = vand.u32 %v1770, 2147483648
          %v1799 = vor.u32 1.1754944e-38, %v1798
          %v1800 = vsel %vm1797, %v1799, %v1795
          %v1801 = vmul.f32 1.0, %v1800
          %v1802 = vrcp.pop %v1771
          %v1803 = vmul.f32 %v1771, %v1802
          %v1804 = vsub.f32 1.0, %v1803
          %v1805 = vmul.f32 %v1802, %v1804
          %v1806 = vadd.f32 %v1802, %v1805
          %vm1807 = vweird.f32 %v1771
          %vm1808 = vweird.f32 %v1802
          %vm1809 = vmor %vm1807, %vm1808
          %v1810 = vsel %vm1809, %v1802, %v1806
          %v1811 = vand.u32 2147483647, %v1771
          %vm1812 = vcmp.eq.f32.partialorder %v1811, 8.507059e+37
          %v1813 = vand.u32 %v1771, 2147483648
          %v1814 = vor.u32 1.1754944e-38, %v1813
          %v1815 = vsel %vm1812, %v1814, %v1810
          %v1816 = vmul.f32 1.0, %v1815
          %v1817 = vtanh.pop %v1759
          %v1818 = vmul.f32 %v1801, %v1671
          %v1819 = vmul.f32 %v1786, %v1817
          %v1820 = vadd.f32 %v1818, %v1819
          %v1821 = vtanh.pop %v1820
          %v1822 = vmul.f32 %v1816, %v1821
          %1823 = vst [vmem:[%s1668] sm:$0xff] %v1822
          %1824 = vst [vmem:[%s1670] sm:$0xff] %v1820
        $region108: #{tpu_custom_call.1} parent=55 // pred_fallthru
          _
        // Predicated region
        $region109: #{tpu_custom_call.1} parent=55 // pred_check
          %p1825 = pneg %p903
        $region110: #{tpu_custom_call.1} parent=55 // pred_check_branch
          %1827 = sbr.rel (%p1825) target = $region112
        $region111: #{tpu_custom_call.1} parent=55 // pred_region
          %s1828 = scalar_lea.vmem [#allocation2], 8
          %v1829 = vld [vmem:[%s1828] sm:$0xff]
          %s1830 = scalar_lea.vmem [#allocation3], 8
          %v1831 = vld [vmem:[%s1830] sm:$0xff]
          %s1832 = scalar_lea.vmem [#allocation5], 32
          %v1833 = vld [vmem:[%s1832] sm:$0xff]
          %v1834 = vld [vmem:[%s1832 + $0x8] sm:$0xff]
          %v1835 = vld [vmem:[%s1832 + $0x10] sm:$0xff]
          %v1836 = vld [vmem:[%s1832 + $0x18] sm:$0xff]
          %1837 = vmatpush.msra.mxu0 %v1515
          %1838 = vmatpush.msra.mxu0 %v1511
          %1839 = vmatpush.msra.mxu0 %v1507
          %1840 = vmatpush.msra.mxu0 %v1503
          %1841 = vmatpush.msra.mxu0 %v1499
          %1842 = vmatpush.msra.mxu0 %v1495
          %1843 = vmatpush.msra.mxu0 %v1491
          %1844 = vmatpush.msra.mxu0 %v1487
          %1845 = vmatpush.msra.mxu0 %v1483
          %1846 = vmatpush.msra.mxu0 %v1479
          %1847 = vmatpush.msra.mxu0 %v1475
          %1848 = vmatpush.msra.mxu0 %v1471
          %1849 = vmatpush.msra.mxu0 %v1467
          %1850 = vmatpush.msra.mxu0 %v1463
          %1851 = vmatpush.msra.mxu0 %v1459
          %1852 = vmatpush.msra.mxu0 %v1455
          %1853 = vmatmul.f32.gmra.mxu0 %v1829
          %v1854 = vpop.f32.mrf.mxu0
          %v1855 = vadd.f32 0.0, %v1854
          %1856 = vdwg.mxu0
          %1857 = vmatpush.msra.mxu0 %v1516
          %1858 = vmatpush.msra.mxu0 %v1512
          %1859 = vmatpush.msra.mxu0 %v1508
          %1860 = vmatpush.msra.mxu0 %v1504
          %1861 = vmatpush.msra.mxu0 %v1500
          %1862 = vmatpush.msra.mxu0 %v1496
          %1863 = vmatpush.msra.mxu0 %v1492
          %1864 = vmatpush.msra.mxu0 %v1488
          %1865 = vmatpush.msra.mxu0 %v1484
          %1866 = vmatpush.msra.mxu0 %v1480
          %1867 = vmatpush.msra.mxu0 %v1476
          %1868 = vmatpush.msra.mxu0 %v1472
          %1869 = vmatpush.msra.mxu0 %v1468
          %1870 = vmatpush.msra.mxu0 %v1464
          %1871 = vmatpush.msra.mxu0 %v1460
          %1872 = vmatpush.msra.mxu0 %v1456
          %1873 = vmatmul.f32.gmra.mxu0 %v1829
          %v1874 = vpop.f32.mrf.mxu0
          %v1875 = vadd.f32 0.0, %v1874
          %1876 = vdwg.mxu0
          %1877 = vmatpush.msra.mxu0 %v1517
          %1878 = vmatpush.msra.mxu0 %v1513
          %1879 = vmatpush.msra.mxu0 %v1509
          %1880 = vmatpush.msra.mxu0 %v1505
          %1881 = vmatpush.msra.mxu0 %v1501
          %1882 = vmatpush.msra.mxu0 %v1497
          %1883 = vmatpush.msra.mxu0 %v1493
          %1884 = vmatpush.msra.mxu0 %v1489
          %1885 = vmatpush.msra.mxu0 %v1485
          %1886 = vmatpush.msra.mxu0 %v1481
          %1887 = vmatpush.msra.mxu0 %v1477
          %1888 = vmatpush.msra.mxu0 %v1473
          %1889 = vmatpush.msra.mxu0 %v1469
          %1890 = vmatpush.msra.mxu0 %v1465
          %1891 = vmatpush.msra.mxu0 %v1461
          %1892 = vmatpush.msra.mxu0 %v1457
          %1893 = vmatmul.f32.gmra.mxu0 %v1829
          %v1894 = vpop.f32.mrf.mxu0
          %v1895 = vadd.f32 0.0, %v1894
          %1896 = vdwg.mxu0
          %1897 = vmatpush.msra.mxu0 %v1518
          %1898 = vmatpush.msra.mxu0 %v1514
          %1899 = vmatpush.msra.mxu0 %v1510
          %1900 = vmatpush.msra.mxu0 %v1506
          %1901 = vmatpush.msra.mxu0 %v1502
          %1902 = vmatpush.msra.mxu0 %v1498
          %1903 = vmatpush.msra.mxu0 %v1494
          %1904 = vmatpush.msra.mxu0 %v1490
          %1905 = vmatpush.msra.mxu0 %v1486
          %1906 = vmatpush.msra.mxu0 %v1482
          %1907 = vmatpush.msra.mxu0 %v1478
          %1908 = vmatpush.msra.mxu0 %v1474
          %1909 = vmatpush.msra.mxu0 %v1470
          %1910 = vmatpush.msra.mxu0 %v1466
          %1911 = vmatpush.msra.mxu0 %v1462
          %1912 = vmatpush.msra.mxu0 %v1458
          %1913 = vmatmul.f32.gmra.mxu0 %v1829
          %v1914 = vpop.f32.mrf.mxu0
          %v1915 = vadd.f32 0.0, %v1914
          %1916 = vdwg.mxu0
          %v1917 = vadd.f32 %v1833, %v1855
          %v1918 = vadd.f32 %v1834, %v1875
          %v1919 = vadd.f32 %v1835, %v1895
          %v1920 = vadd.f32 %v1836, %v1915
          %v1921 = vxor.u32 %v1917, 2147483648
          %v1922 = vxor.u32 %v1918, 2147483648
          %v1923 = vxor.u32 %v1919, 2147483648
          %v1924 = vmul.f32 %v1921, 1.442695
          %v1925 = vpow.pop %v1924
          %v1926 = vmul.f32 %v1922, 1.442695
          %v1927 = vpow.pop %v1926
          %v1928 = vmul.f32 %v1923, 1.442695
          %v1929 = vpow.pop %v1928
          %v1930 = vadd.f32 %v1925, 1.0
          %v1931 = vadd.f32 %v1927, 1.0
          %v1932 = vadd.f32 %v1929, 1.0
          %v1933 = vrcp.pop %v1930
          %v1934 = vmul.f32 %v1930, %v1933
          %v1935 = vsub.f32 1.0, %v1934
          %v1936 = vmul.f32 %v1933, %v1935
          %v1937 = vadd.f32 %v1933, %v1936
          %vm1938 = vweird.f32 %v1930
          %vm1939 = vweird.f32 %v1933
          %vm1940 = vmor %vm1938, %vm1939
          %v1941 = vsel %vm1940, %v1933, %v1937
          %v1942 = vand.u32 2147483647, %v1930
          %vm1943 = vcmp.eq.f32.partialorder %v1942, 8.507059e+37
          %v1944 = vand.u32 %v1930, 2147483648
          %v1945 = vor.u32 1.1754944e-38, %v1944
          %v1946 = vsel %vm1943, %v1945, %v1941
          %v1947 = vmul.f32 1.0, %v1946
          %v1948 = vrcp.pop %v1931
          %v1949 = vmul.f32 %v1931, %v1948
          %v1950 = vsub.f32 1.0, %v1949
          %v1951 = vmul.f32 %v1948, %v1950
          %v1952 = vadd.f32 %v1948, %v1951
          %vm1953 = vweird.f32 %v1931
          %vm1954 = vweird.f32 %v1948
          %vm1955 = vmor %vm1953, %vm1954
          %v1956 = vsel %vm1955, %v1948, %v1952
          %v1957 = vand.u32 2147483647, %v1931
          %vm1958 = vcmp.eq.f32.partialorder %v1957, 8.507059e+37
          %v1959 = vand.u32 %v1931, 2147483648
          %v1960 = vor.u32 1.1754944e-38, %v1959
          %v1961 = vsel %vm1958, %v1960, %v1956
          %v1962 = vmul.f32 1.0, %v1961
          %v1963 = vrcp.pop %v1932
          %v1964 = vmul.f32 %v1932, %v1963
          %v1965 = vsub.f32 1.0, %v1964
          %v1966 = vmul.f32 %v1963, %v1965
          %v1967 = vadd.f32 %v1963, %v1966
          %vm1968 = vweird.f32 %v1932
          %vm1969 = vweird.f32 %v1963
          %vm1970 = vmor %vm1968, %vm1969
          %v1971 = vsel %vm1970, %v1963, %v1967
          %v1972 = vand.u32 2147483647, %v1932
          %vm1973 = vcmp.eq.f32.partialorder %v1972, 8.507059e+37
          %v1974 = vand.u32 %v1932, 2147483648
          %v1975 = vor.u32 1.1754944e-38, %v1974
          %v1976 = vsel %vm1973, %v1975, %v1971
          %v1977 = vmul.f32 1.0, %v1976
          %v1978 = vtanh.pop %v1920
          %v1979 = vmul.f32 %v1962, %v1831
          %v1980 = vmul.f32 %v1947, %v1978
          %v1981 = vadd.f32 %v1979, %v1980
          %v1982 = vtanh.pop %v1981
          %v1983 = vmul.f32 %v1977, %v1982
          %1984 = vst [vmem:[%s1828] sm:$0xff] %v1983
          %1985 = vst [vmem:[%s1830] sm:$0xff] %v1981
        $region112: #{tpu_custom_call.1} parent=55 // pred_fallthru
          _
        // Predicated region
        $region113: #{tpu_custom_call.1} parent=55 // pred_check
          %p1986 = pneg %p1066
        $region114: #{tpu_custom_call.1} parent=55 // pred_check_branch
          %1988 = sbr.rel (%p1986) target = $region116
        $region115: #{tpu_custom_call.1} parent=55 // pred_region
          %s1989 = scalar_lea.vmem [#allocation2], 8
          %v1990 = vld [vmem:[%s1989] sm:$0xff]
          %s1991 = scalar_lea.vmem [#allocation3], 8
          %v1992 = vld [vmem:[%s1991] sm:$0xff]
          %s1993 = scalar_lea.vmem [#allocation5], 64
          %v1994 = vld [vmem:[%s1993] sm:$0xff]
          %v1995 = vld [vmem:[%s1993 + $0x8] sm:$0xff]
          %v1996 = vld [vmem:[%s1993 + $0x10] sm:$0xff]
          %v1997 = vld [vmem:[%s1993 + $0x18] sm:$0xff]
          %1998 = vmatpush.msra.mxu0 %v1515
          %1999 = vmatpush.msra.mxu0 %v1511
          %2000 = vmatpush.msra.mxu0 %v1507
          %2001 = vmatpush.msra.mxu0 %v1503
          %2002 = vmatpush.msra.mxu0 %v1499
          %2003 = vmatpush.msra.mxu0 %v1495
          %2004 = vmatpush.msra.mxu0 %v1491
          %2005 = vmatpush.msra.mxu0 %v1487
          %2006 = vmatpush.msra.mxu0 %v1483
          %2007 = vmatpush.msra.mxu0 %v1479
          %2008 = vmatpush.msra.mxu0 %v1475
          %2009 = vmatpush.msra.mxu0 %v1471
          %2010 = vmatpush.msra.mxu0 %v1467
          %2011 = vmatpush.msra.mxu0 %v1463
          %2012 = vmatpush.msra.mxu0 %v1459
          %2013 = vmatpush.msra.mxu0 %v1455
          %2014 = vmatmul.f32.gmra.mxu0 %v1990
          %v2015 = vpop.f32.mrf.mxu0
          %v2016 = vadd.f32 0.0, %v2015
          %2017 = vdwg.mxu0
          %2018 = vmatpush.msra.mxu0 %v1516
          %2019 = vmatpush.msra.mxu0 %v1512
          %2020 = vmatpush.msra.mxu0 %v1508
          %2021 = vmatpush.msra.mxu0 %v1504
          %2022 = vmatpush.msra.mxu0 %v1500
          %2023 = vmatpush.msra.mxu0 %v1496
          %2024 = vmatpush.msra.mxu0 %v1492
          %2025 = vmatpush.msra.mxu0 %v1488
          %2026 = vmatpush.msra.mxu0 %v1484
          %2027 = vmatpush.msra.mxu0 %v1480
          %2028 = vmatpush.msra.mxu0 %v1476
          %2029 = vmatpush.msra.mxu0 %v1472
          %2030 = vmatpush.msra.mxu0 %v1468
          %2031 = vmatpush.msra.mxu0 %v1464
          %2032 = vmatpush.msra.mxu0 %v1460
          %2033 = vmatpush.msra.mxu0 %v1456
          %2034 = vmatmul.f32.gmra.mxu0 %v1990
          %v2035 = vpop.f32.mrf.mxu0
          %v2036 = vadd.f32 0.0, %v2035
          %2037 = vdwg.mxu0
          %2038 = vmatpush.msra.mxu0 %v1517
          %2039 = vmatpush.msra.mxu0 %v1513
          %2040 = vmatpush.msra.mxu0 %v1509
          %2041 = vmatpush.msra.mxu0 %v1505
          %2042 = vmatpush.msra.mxu0 %v1501
          %2043 = vmatpush.msra.mxu0 %v1497
          %2044 = vmatpush.msra.mxu0 %v1493
          %2045 = vmatpush.msra.mxu0 %v1489
          %2046 = vmatpush.msra.mxu0 %v1485
          %2047 = vmatpush.msra.mxu0 %v1481
          %2048 = vmatpush.msra.mxu0 %v1477
          %2049 = vmatpush.msra.mxu0 %v1473
          %2050 = vmatpush.msra.mxu0 %v1469
          %2051 = vmatpush.msra.mxu0 %v1465
          %2052 = vmatpush.msra.mxu0 %v1461
          %2053 = vmatpush.msra.mxu0 %v1457
          %2054 = vmatmul.f32.gmra.mxu0 %v1990
          %v2055 = vpop.f32.mrf.mxu0
          %v2056 = vadd.f32 0.0, %v2055
          %2057 = vdwg.mxu0
          %2058 = vmatpush.msra.mxu0 %v1518
          %2059 = vmatpush.msra.mxu0 %v1514
          %2060 = vmatpush.msra.mxu0 %v1510
          %2061 = vmatpush.msra.mxu0 %v1506
          %2062 = vmatpush.msra.mxu0 %v1502
          %2063 = vmatpush.msra.mxu0 %v1498
          %2064 = vmatpush.msra.mxu0 %v1494
          %2065 = vmatpush.msra.mxu0 %v1490
          %2066 = vmatpush.msra.mxu0 %v1486
          %2067 = vmatpush.msra.mxu0 %v1482
          %2068 = vmatpush.msra.mxu0 %v1478
          %2069 = vmatpush.msra.mxu0 %v1474
          %2070 = vmatpush.msra.mxu0 %v1470
          %2071 = vmatpush.msra.mxu0 %v1466
          %2072 = vmatpush.msra.mxu0 %v1462
          %2073 = vmatpush.msra.mxu0 %v1458
          %2074 = vmatmul.f32.gmra.mxu0 %v1990
          %v2075 = vpop.f32.mrf.mxu0
          %v2076 = vadd.f32 0.0, %v2075
          %2077 = vdwg.mxu0
          %v2078 = vadd.f32 %v1994, %v2016
          %v2079 = vadd.f32 %v1995, %v2036
          %v2080 = vadd.f32 %v1996, %v2056
          %v2081 = vadd.f32 %v1997, %v2076
          %v2082 = vxor.u32 %v2078, 2147483648
          %v2083 = vxor.u32 %v2079, 2147483648
          %v2084 = vxor.u32 %v2080, 2147483648
          %v2085 = vmul.f32 %v2082, 1.442695
          %v2086 = vpow.pop %v2085
          %v2087 = vmul.f32 %v2083, 1.442695
          %v2088 = vpow.pop %v2087
          %v2089 = vmul.f32 %v2084, 1.442695
          %v2090 = vpow.pop %v2089
          %v2091 = vadd.f32 %v2086, 1.0
          %v2092 = vadd.f32 %v2088, 1.0
          %v2093 = vadd.f32 %v2090, 1.0
          %v2094 = vrcp.pop %v2091
          %v2095 = vmul.f32 %v2091, %v2094
          %v2096 = vsub.f32 1.0, %v2095
          %v2097 = vmul.f32 %v2094, %v2096
          %v2098 = vadd.f32 %v2094, %v2097
          %vm2099 = vweird.f32 %v2091
          %vm2100 = vweird.f32 %v2094
          %vm2101 = vmor %vm2099, %vm2100
          %v2102 = vsel %vm2101, %v2094, %v2098
          %v2103 = vand.u32 2147483647, %v2091
          %vm2104 = vcmp.eq.f32.partialorder %v2103, 8.507059e+37
          %v2105 = vand.u32 %v2091, 2147483648
          %v2106 = vor.u32 1.1754944e-38, %v2105
          %v2107 = vsel %vm2104, %v2106, %v2102
          %v2108 = vmul.f32 1.0, %v2107
          %v2109 = vrcp.pop %v2092
          %v2110 = vmul.f32 %v2092, %v2109
          %v2111 = vsub.f32 1.0, %v2110
          %v2112 = vmul.f32 %v2109, %v2111
          %v2113 = vadd.f32 %v2109, %v2112
          %vm2114 = vweird.f32 %v2092
          %vm2115 = vweird.f32 %v2109
          %vm2116 = vmor %vm2114, %vm2115
          %v2117 = vsel %vm2116, %v2109, %v2113
          %v2118 = vand.u32 2147483647, %v2092
          %vm2119 = vcmp.eq.f32.partialorder %v2118, 8.507059e+37
          %v2120 = vand.u32 %v2092, 2147483648
          %v2121 = vor.u32 1.1754944e-38, %v2120
          %v2122 = vsel %vm2119, %v2121, %v2117
          %v2123 = vmul.f32 1.0, %v2122
          %v2124 = vrcp.pop %v2093
          %v2125 = vmul.f32 %v2093, %v2124
          %v2126 = vsub.f32 1.0, %v2125
          %v2127 = vmul.f32 %v2124, %v2126
          %v2128 = vadd.f32 %v2124, %v2127
          %vm2129 = vweird.f32 %v2093
          %vm2130 = vweird.f32 %v2124
          %vm2131 = vmor %vm2129, %vm2130
          %v2132 = vsel %vm2131, %v2124, %v2128
          %v2133 = vand.u32 2147483647, %v2093
          %vm2134 = vcmp.eq.f32.partialorder %v2133, 8.507059e+37
          %v2135 = vand.u32 %v2093, 2147483648
          %v2136 = vor.u32 1.1754944e-38, %v2135
          %v2137 = vsel %vm2134, %v2136, %v2132
          %v2138 = vmul.f32 1.0, %v2137
          %v2139 = vtanh.pop %v2081
          %v2140 = vmul.f32 %v2123, %v1992
          %v2141 = vmul.f32 %v2108, %v2139
          %v2142 = vadd.f32 %v2140, %v2141
          %v2143 = vtanh.pop %v2142
          %v2144 = vmul.f32 %v2138, %v2143
          %2145 = vst [vmem:[%s1989] sm:$0xff] %v2144
          %2146 = vst [vmem:[%s1991] sm:$0xff] %v2142
        $region116: #{tpu_custom_call.1} parent=55 // pred_fallthru
          _
        // Predicated region
        $region117: #{tpu_custom_call.1} parent=55 // pred_check
          %p2147 = pneg %p1229
        $region118: #{tpu_custom_call.1} parent=55 // pred_check_branch
          %2149 = sbr.rel (%p2147) target = $region120
        $region119: #{tpu_custom_call.1} parent=55 // pred_region
          %s2150 = scalar_lea.vmem [#allocation2], 8
          %v2151 = vld [vmem:[%s2150] sm:$0xff]
          %s2152 = scalar_lea.vmem [#allocation3], 8
          %v2153 = vld [vmem:[%s2152] sm:$0xff]
          %s2154 = scalar_lea.vmem [#allocation5], 96
          %v2155 = vld [vmem:[%s2154] sm:$0xff]
          %v2156 = vld [vmem:[%s2154 + $0x8] sm:$0xff]
          %v2157 = vld [vmem:[%s2154 + $0x10] sm:$0xff]
          %v2158 = vld [vmem:[%s2154 + $0x18] sm:$0xff]
          %2159 = vmatpush.msra.mxu0 %v1515
          %2160 = vmatpush.msra.mxu0 %v1511
          %2161 = vmatpush.msra.mxu0 %v1507
          %2162 = vmatpush.msra.mxu0 %v1503
          %2163 = vmatpush.msra.mxu0 %v1499
          %2164 = vmatpush.msra.mxu0 %v1495
          %2165 = vmatpush.msra.mxu0 %v1491
          %2166 = vmatpush.msra.mxu0 %v1487
          %2167 = vmatpush.msra.mxu0 %v1483
          %2168 = vmatpush.msra.mxu0 %v1479
          %2169 = vmatpush.msra.mxu0 %v1475
          %2170 = vmatpush.msra.mxu0 %v1471
          %2171 = vmatpush.msra.mxu0 %v1467
          %2172 = vmatpush.msra.mxu0 %v1463
          %2173 = vmatpush.msra.mxu0 %v1459
          %2174 = vmatpush.msra.mxu0 %v1455
          %2175 = vmatmul.f32.gmra.mxu0 %v2151
          %v2176 = vpop.f32.mrf.mxu0
          %v2177 = vadd.f32 0.0, %v2176
          %2178 = vdwg.mxu0
          %2179 = vmatpush.msra.mxu0 %v1516
          %2180 = vmatpush.msra.mxu0 %v1512
          %2181 = vmatpush.msra.mxu0 %v1508
          %2182 = vmatpush.msra.mxu0 %v1504
          %2183 = vmatpush.msra.mxu0 %v1500
          %2184 = vmatpush.msra.mxu0 %v1496
          %2185 = vmatpush.msra.mxu0 %v1492
          %2186 = vmatpush.msra.mxu0 %v1488
          %2187 = vmatpush.msra.mxu0 %v1484
          %2188 = vmatpush.msra.mxu0 %v1480
          %2189 = vmatpush.msra.mxu0 %v1476
          %2190 = vmatpush.msra.mxu0 %v1472
          %2191 = vmatpush.msra.mxu0 %v1468
          %2192 = vmatpush.msra.mxu0 %v1464
          %2193 = vmatpush.msra.mxu0 %v1460
          %2194 = vmatpush.msra.mxu0 %v1456
          %2195 = vmatmul.f32.gmra.mxu0 %v2151
          %v2196 = vpop.f32.mrf.mxu0
          %v2197 = vadd.f32 0.0, %v2196
          %2198 = vdwg.mxu0
          %2199 = vmatpush.msra.mxu0 %v1517
          %2200 = vmatpush.msra.mxu0 %v1513
          %2201 = vmatpush.msra.mxu0 %v1509
          %2202 = vmatpush.msra.mxu0 %v1505
          %2203 = vmatpush.msra.mxu0 %v1501
          %2204 = vmatpush.msra.mxu0 %v1497
          %2205 = vmatpush.msra.mxu0 %v1493
          %2206 = vmatpush.msra.mxu0 %v1489
          %2207 = vmatpush.msra.mxu0 %v1485
          %2208 = vmatpush.msra.mxu0 %v1481
          %2209 = vmatpush.msra.mxu0 %v1477
          %2210 = vmatpush.msra.mxu0 %v1473
          %2211 = vmatpush.msra.mxu0 %v1469
          %2212 = vmatpush.msra.mxu0 %v1465
          %2213 = vmatpush.msra.mxu0 %v1461
          %2214 = vmatpush.msra.mxu0 %v1457
          %2215 = vmatmul.f32.gmra.mxu0 %v2151
          %v2216 = vpop.f32.mrf.mxu0
          %v2217 = vadd.f32 0.0, %v2216
          %2218 = vdwg.mxu0
          %2219 = vmatpush.msra.mxu0 %v1518
          %2220 = vmatpush.msra.mxu0 %v1514
          %2221 = vmatpush.msra.mxu0 %v1510
          %2222 = vmatpush.msra.mxu0 %v1506
          %2223 = vmatpush.msra.mxu0 %v1502
          %2224 = vmatpush.msra.mxu0 %v1498
          %2225 = vmatpush.msra.mxu0 %v1494
          %2226 = vmatpush.msra.mxu0 %v1490
          %2227 = vmatpush.msra.mxu0 %v1486
          %2228 = vmatpush.msra.mxu0 %v1482
          %2229 = vmatpush.msra.mxu0 %v1478
          %2230 = vmatpush.msra.mxu0 %v1474
          %2231 = vmatpush.msra.mxu0 %v1470
          %2232 = vmatpush.msra.mxu0 %v1466
          %2233 = vmatpush.msra.mxu0 %v1462
          %2234 = vmatpush.msra.mxu0 %v1458
          %2235 = vmatmul.f32.gmra.mxu0 %v2151
          %v2236 = vpop.f32.mrf.mxu0
          %v2237 = vadd.f32 0.0, %v2236
          %2238 = vdwg.mxu0
          %v2239 = vadd.f32 %v2155, %v2177
          %v2240 = vadd.f32 %v2156, %v2197
          %v2241 = vadd.f32 %v2157, %v2217
          %v2242 = vadd.f32 %v2158, %v2237
          %v2243 = vxor.u32 %v2239, 2147483648
          %v2244 = vxor.u32 %v2240, 2147483648
          %v2245 = vxor.u32 %v2241, 2147483648
          %v2246 = vmul.f32 %v2243, 1.442695
          %v2247 = vpow.pop %v2246
          %v2248 = vmul.f32 %v2244, 1.442695
          %v2249 = vpow.pop %v2248
          %v2250 = vmul.f32 %v2245, 1.442695
          %v2251 = vpow.pop %v2250
          %v2252 = vadd.f32 %v2247, 1.0
          %v2253 = vadd.f32 %v2249, 1.0
          %v2254 = vadd.f32 %v2251, 1.0
          %v2255 = vrcp.pop %v2252
          %v2256 = vmul.f32 %v2252, %v2255
          %v2257 = vsub.f32 1.0, %v2256
          %v2258 = vmul.f32 %v2255, %v2257
          %v2259 = vadd.f32 %v2255, %v2258
          %vm2260 = vweird.f32 %v2252
          %vm2261 = vweird.f32 %v2255
          %vm2262 = vmor %vm2260, %vm2261
          %v2263 = vsel %vm2262, %v2255, %v2259
          %v2264 = vand.u32 2147483647, %v2252
          %vm2265 = vcmp.eq.f32.partialorder %v2264, 8.507059e+37
          %v2266 = vand.u32 %v2252, 2147483648
          %v2267 = vor.u32 1.1754944e-38, %v2266
          %v2268 = vsel %vm2265, %v2267, %v2263
          %v2269 = vmul.f32 1.0, %v2268
          %v2270 = vrcp.pop %v2253
          %v2271 = vmul.f32 %v2253, %v2270
          %v2272 = vsub.f32 1.0, %v2271
          %v2273 = vmul.f32 %v2270, %v2272
          %v2274 = vadd.f32 %v2270, %v2273
          %vm2275 = vweird.f32 %v2253
          %vm2276 = vweird.f32 %v2270
          %vm2277 = vmor %vm2275, %vm2276
          %v2278 = vsel %vm2277, %v2270, %v2274
          %v2279 = vand.u32 2147483647, %v2253
          %vm2280 = vcmp.eq.f32.partialorder %v2279, 8.507059e+37
          %v2281 = vand.u32 %v2253, 2147483648
          %v2282 = vor.u32 1.1754944e-38, %v2281
          %v2283 = vsel %vm2280, %v2282, %v2278
          %v2284 = vmul.f32 1.0, %v2283
          %v2285 = vrcp.pop %v2254
          %v2286 = vmul.f32 %v2254, %v2285
          %v2287 = vsub.f32 1.0, %v2286
          %v2288 = vmul.f32 %v2285, %v2287
          %v2289 = vadd.f32 %v2285, %v2288
          %vm2290 = vweird.f32 %v2254
          %vm2291 = vweird.f32 %v2285
          %vm2292 = vmor %vm2290, %vm2291
          %v2293 = vsel %vm2292, %v2285, %v2289
          %v2294 = vand.u32 2147483647, %v2254
          %vm2295 = vcmp.eq.f32.partialorder %v2294, 8.507059e+37
          %v2296 = vand.u32 %v2254, 2147483648
          %v2297 = vor.u32 1.1754944e-38, %v2296
          %v2298 = vsel %vm2295, %v2297, %v2293
          %v2299 = vmul.f32 1.0, %v2298
          %v2300 = vtanh.pop %v2242
          %v2301 = vmul.f32 %v2284, %v2153
          %v2302 = vmul.f32 %v2269, %v2300
          %v2303 = vadd.f32 %v2301, %v2302
          %v2304 = vtanh.pop %v2303
          %v2305 = vmul.f32 %v2299, %v2304
          %2306 = vst [vmem:[%s2150] sm:$0xff] %v2305
          %2307 = vst [vmem:[%s2152] sm:$0xff] %v2303
        $region120: #{tpu_custom_call.1} parent=55 // pred_fallthru
          _
        %p2308 = scmp.eq.s32.totalorder %s32, 1
        // Predicated region
        $region121: #{tpu_custom_call.1} parent=55 // pred_check
          %p2309 = pneg %p2308
        $region122: #{tpu_custom_call.1} parent=55 // pred_check_branch
          %2311 = sbr.rel (%p2309) target = $region124
        $region123: #{tpu_custom_call.1} parent=55 // pred_region
          %s2312 = scalar_lea.vmem [#allocation2], 8
          %v2313 = vld [vmem:[%s2312] sm:$0xff]
          %v2314 = vld [vmem:[#allocation17] sm:$0xff]
          %v2315 = vld [vmem:[#allocation17 + $0x8] sm:$0xff]
          %v2316 = vld [vmem:[#allocation17 + $0x10] sm:$0xff]
          %v2317 = vld [vmem:[#allocation17 + $0x18] sm:$0xff]
          %v2318 = vld [vmem:[#allocation17 + $0x20] sm:$0xff]
          %v2319 = vld [vmem:[#allocation17 + $0x28] sm:$0xff]
          %v2320 = vld [vmem:[#allocation17 + $0x30] sm:$0xff]
          %v2321 = vld [vmem:[#allocation17 + $0x38] sm:$0xff]
          %v2322 = vld [vmem:[#allocation17 + $0x40] sm:$0xff]
          %v2323 = vld [vmem:[#allocation17 + $0x48] sm:$0xff]
          %v2324 = vld [vmem:[#allocation17 + $0x50] sm:$0xff]
          %v2325 = vld [vmem:[#allocation17 + $0x58] sm:$0xff]
          %v2326 = vld [vmem:[#allocation17 + $0x60] sm:$0xff]
          %v2327 = vld [vmem:[#allocation17 + $0x68] sm:$0xff]
          %v2328 = vld [vmem:[#allocation17 + $0x70] sm:$0xff]
          %v2329 = vld [vmem:[#allocation17 + $0x78] sm:$0xff]
          %v2330 = vld [vmem:[%s8] sm:$0x1]
          %v2332 = vperm.slane %v2330, 0
          %2334 = vmatpush.msra.mxu0 %v2329
          %2335 = vmatpush.msra.mxu0 %v2328
          %2336 = vmatpush.msra.mxu0 %v2327
          %2337 = vmatpush.msra.mxu0 %v2326
          %2338 = vmatpush.msra.mxu0 %v2325
          %2339 = vmatpush.msra.mxu0 %v2324
          %2340 = vmatpush.msra.mxu0 %v2323
          %2341 = vmatpush.msra.mxu0 %v2322
          %2342 = vmatpush.msra.mxu0 %v2321
          %2343 = vmatpush.msra.mxu0 %v2320
          %2344 = vmatpush.msra.mxu0 %v2319
          %2345 = vmatpush.msra.mxu0 %v2318
          %2346 = vmatpush.msra.mxu0 %v2317
          %2347 = vmatpush.msra.mxu0 %v2316
          %2348 = vmatpush.msra.mxu0 %v2315
          %2349 = vmatpush.msra.mxu0 %v2314
          %2350 = vmatmul.f32.gmra.mxu0 %v2313
          %v2351 = vpop.f32.mrf.mxu0
          %v2352 = vadd.f32 %v2332, %v2351
          %2353 = vdwg.mxu0
          %2354 = vst [vmem:[#allocation18] sm:$0xff] %v2352
        $region124: #{tpu_custom_call.1} parent=55 // pred_fallthru
          _
        // Predicated region
        $region125: #{tpu_custom_call.1} parent=55 // pred_check
          %p2355 = pneg %p253
        $region126: #{tpu_custom_call.1} parent=55 // pred_check_branch
          %2357 = sbr.rel (%p2355) target = $region128
        $region127: #{tpu_custom_call.1} parent=55 // pred_region
          %2359 = vsyncadd [#allocation8], 0
          %s2360 = smul.addr %s31, 8
          %s2361 = scalar_lea.hbm %s9, %s2360
          %s2363 = sshll.u32 [#allocation18], 4
          %s2364 = int_to_ptr.vmem [resolvable:$true] %s2363
          %s2365 = sshll.u32 %s2361, 4
          %s2366 = int_to_ptr.hbm [resolvable:$true] %s2365
          %2368 = dma.vmem_to_hbm [thread:$0]  %s2364, 128, %s2366, [#allocation8]
        $region128: #{tpu_custom_call.1} parent=55 // pred_fallthru
          _
        // Predicated region
        $region129: #{tpu_custom_call.1} parent=55 // pred_check
          %p2369 = pneg %p253
        $region130: #{tpu_custom_call.1} parent=55 // pred_check_branch
          %2371 = sbr.rel (%p2369) target = $region132
        $region131: #{tpu_custom_call.1} parent=55 // pred_region
          %2373 = dma.done [#allocation8], 128
        $region132: #{tpu_custom_call.1} parent=55 // pred_fallthru
          _
      $region56: #{tpu_custom_call.1} parent=5 // pred_fallthru
        _
      %p2374 = scmp.le.s32.totalorder 2, %s22
      // Predicated region
      $region133: #{tpu_custom_call.1} parent=5 // pred_check
        %p2375 = pneg %p2374
      $region134: #{tpu_custom_call.1} parent=5 // pred_check_branch
        %2377 = sbr.rel (%p2375) target = $region136
      $region135: #{tpu_custom_call.1} parent=5 // pred_region
        %s2378 = ssub.s32 %s22, 2
      $region136: #{tpu_custom_call.1} parent=5 // pred_fallthru
        _
    $region6: #{tpu_custom_call.1} parent=1 // loop_footer
      %s26 = sadd.s32 1, %s22
    $region7: #{tpu_custom_call.1} parent=1 // loop_footer_branch
      %21 = sbr.rel target = $region3
    $region8: #{tpu_custom_call.1} parent=1 // loop_exit
      _
    %2379 = vsyncpa [#allocation7], 1
    %s2380 = scalar_lea.sflag [#allocation7], 1
    %2381 = vsyncpa %s2380, 1
    %2382 = vsyncpa [#allocation10], 1
    %2383 = vsyncpa [#allocation13], 1
    %2384 = vsyncpa [#allocation16], 1
    %2385 = vsyncpa [#allocation8], 1
    %s2386 = scalar_lea.sflag [#allocation8], 1
    %2387 = vsyncpa %s2386, 1

// kernel: tpu_custom_call.1
$region0: #{tpu_custom_call.1}
  #allocation0 [shape = 'u32[]', space=smem, size = 0x4, offset = 0x4, fixed_abs, tag = 'smem constant byte address 0x4 - core index']
  #allocation1 [shape = 'u32[72,128]{1,0:T(1,128)}', space=vmem, size = 0x9000, scoped, tag = 'internal scratch']
  #allocation2 [shape = 'f32[2,8,128]{2,1,0:T(8,128)}', space=vmem, size = 0x2000, scoped, tag = 'scratch operand']
  #allocation3 [shape = 'f32[2,8,128]{2,1,0:T(8,128)}', space=vmem, size = 0x2000, scoped, tag = 'scratch operand']
  #allocation4 [shape = 'f32[4,8,128]{2,1,0:T(8,128)}', space=vmem, size = 0x4000, scoped, tag = 'scratch operand']
  #allocation5 [shape = 'f32[4,8,512]{2,1,0:T(8,128)}', space=vmem, size = 0x10000, scoped, tag = 'scratch operand']
  %s0 = inlined_call_operand.hbm [shape: f32[8,8,128], index: 0, kind: input, shape index: {}]
  %s1 = inlined_call_operand.hbm [shape: f32[128,512], index: 1, kind: input, shape index: {}]
  %s2 = inlined_call_operand.hbm [shape: f32[128,512], index: 2, kind: input, shape index: {}]
  %s3 = inlined_call_operand.hbm [shape: f32[1,512], index: 3, kind: input, shape index: {}]
  %s4 = inlined_call_operand.hbm [shape: f32[128,512], index: 4, kind: input, shape index: {}]
  %s5 = inlined_call_operand.hbm [shape: f32[128,512], index: 5, kind: input, shape index: {}]
  %s6 = inlined_call_operand.vmem [shape: f32[1,512], index: 6, kind: input, shape index: {}]
  %s7 = inlined_call_operand.hbm [shape: f32[128,128], index: 7, kind: input, shape index: {}]
  %s8 = inlined_call_operand.vmem [shape: f32[1,128], index: 8, kind: input, shape index: {}]
  %s9 = inlined_call_operand.hbm [shape: f32[8,128], index: 9, kind: output, shape index: {}]
  %s10 = sld [smem:[#allocation0]]
  $region137: #{tpu_custom_call.1} parent=0
    _
  %s12 = ssub.s32 1, %s10
  %s13 = scalar_select 0, %s12, %s10
  $region1: #{tpu_custom_call.1} parent=0
    #allocation6 [shape = 'u8[32768]{0}', space=vmem, size = 0x8000, scoped, tag = 'input window, operand 0']
    #allocation7 [shape = 's32[2]{0}', space=sflag, size = 0x8, scoped, tag = 'scoped memory for tpu_custom_call.1']
    #allocation8 [shape = 's32[2]{0}', space=sflag, size = 0x8, scoped, tag = 'scoped memory for tpu_custom_call.1']
    #allocation9 [shape = 'u8[262144]{0}', space=vmem, size = 0x40000, scoped, tag = 'input window, operand 1, single buffered']
    #allocation10 [shape = 's32[1]{0}', space=sflag, size = 0x4, scoped, tag = 'scoped memory for tpu_custom_call.1']
    #allocation11 [shape = 'u8[262144]{0}', space=vmem, size = 0x40000, scoped, tag = 'input window, operand 2, single buffered']
    #allocation12 [shape = 'u8[2048]{0}', space=vmem, size = 0x800, scoped, tag = 'input window, operand 3, single buffered']
    #allocation13 [shape = 's32[1]{0}', space=sflag, size = 0x4, scoped, tag = 'scoped memory for tpu_custom_call.1']
    #allocation14 [shape = 'u8[262144]{0}', space=vmem, size = 0x40000, scoped, tag = 'input window, operand 4, single buffered']
    #allocation15 [shape = 'u8[262144]{0}', space=vmem, size = 0x40000, scoped, tag = 'input window, operand 5, single buffered']
    #allocation16 [shape = 's32[1]{0}', space=sflag, size = 0x4, scoped, tag = 'scoped memory for tpu_custom_call.1']
    #allocation17 [shape = 'u8[65536]{0}', space=vmem, size = 0x10000, scoped, tag = 'input window, operand 7, single buffered']
    #allocation18 [shape = 'u8[4096]{0}', space=vmem, size = 0x1000, scoped, tag = 'output window, operand 0, single buffered']
    %14 = vsyncpa [#allocation7], 0
    %s15 = scalar_lea.sflag [#allocation7], 1
    %16 = vsyncpa %s15, 0
    %17 = vsyncpa [#allocation10], 0
    %18 = vsyncpa [#allocation13], 0
    %19 = vsyncpa [#allocation16], 0
    %20 = vsyncpa [#allocation8], 0
    loop: start=0, step=1, limit=4
    $region2: #{tpu_custom_call.1} parent=1 // loop_pre_header
      _
    $region3: #{tpu_custom_call.1} parent=1 // loop_header
      %s22 = sphi 0, %s26
      %p23 = scmp.ge.s32.totalorder %s22, 4
      %s29 = sphi 0, %s41
      %s30 = sphi 0, %s37
      %s31 = sphi 0, %s29
      %s32 = sphi 0, %s30
      %s33 = sphi 0, %s31
      %s34 = sphi 0, %s32
      %s46 = sphi 0, %s48
      %s49 = sphi 0, %s46
      %s50 = sphi 0, %s49
      %s66 = sphi 0, %s50
      %s70 = sphi 0, %s70
      %s72 = sphi 0, %s70
      %s73 = sphi 0, %s72
      %s87 = sphi 0, %s73
      %s91 = sphi 0, %s91
      %s93 = sphi 0, %s91
      %s94 = sphi 0, %s93
      %s108 = sphi 0, %s94
      %s112 = sphi 0, %s112
      %s114 = sphi 0, %s112
      %s115 = sphi 0, %s114
      %s129 = sphi 0, %s115
      %s133 = sphi 0, %s133
      %s135 = sphi 0, %s133
      %s136 = sphi 0, %s135
      %s150 = sphi 0, %s136
      %s154 = sphi 0, %s154
      %s156 = sphi 0, %s154
      %s157 = sphi 0, %s156
      %s171 = sphi 0, %s157
      %s175 = sphi 0, %s175
      %s177 = sphi 0, %s175
      %s178 = sphi 0, %s177
      %s192 = sphi 0, %s178
      %s196 = sphi 0, %s196
      %s198 = sphi 0, %s196
      %s199 = sphi 0, %s198
      %s213 = sphi 0, %s199
      %s217 = sphi 0, %s217
      %s219 = sphi 0, %s217
      %s220 = sphi 0, %s219
      %s234 = sphi 0, %s220
      %s240 = sphi 0, %s242
      %s243 = sphi 0, %s240
      %s244 = sphi 0, %s243
      %s260 = sphi 0, %s244
    $region4: #{tpu_custom_call.1} parent=1 // loop_header_branch
      %25 = sbr.rel (%p23) target = $region8
    $region5: #{tpu_custom_call.1} parent=1 // loop_body
      %s27 = ssub.s32 %s22, 1
      %s28 = ssub.s32 %s22, 2
      %s35 = sadd.s32 1, %s30
      %p36 = scmp.ge.s32.totalorder %s35, 2
      %s37 = scalar_select %p36, 0, %s35
      %s38 = sadd.s32 1, %s29
      %s39 = scalar_select %p36, %s38, %s29
      %p40 = scmp.ge.s32.totalorder %s39, 1
      %s41 = scalar_select %p40, 0, %s39
      %s42 = ssub.s32 %s30, %s37
      %s43 = ssub.s32 %s29, %s41
      %s44 = sor.u32 %s42, %s43
      %p45 = scmp.eq.s32.totalorder %s44, 0
      %s47 = sadd.s32 %s46, 1
      %s48 = scalar_select %p45, %s46, %s47
      %p51 = pneg %p45
      %p52 = scmp.eq.s32.totalorder %s22, 1
      %p53 = por %p51, %p52
      %p54 = scmp.ne.s32.totalorder %s46, %s49
      %p55 = scmp.eq.s32.totalorder %s22, 0
      %p56 = por %p54, %p55
      %p57 = scmp.ne.s32.totalorder %s46, %s49
      %p58 = scmp.eq.s32.totalorder %s27, 1
      %p59 = por %p57, %p58
      %p60 = scmp.ne.s32.totalorder %s49, %s50
      %p61 = scmp.eq.s32.totalorder %s27, 0
      %p62 = por %p60, %p61
      %p63 = scmp.ne.s32.totalorder %s49, %s50
      %p64 = scmp.eq.s32.totalorder %s28, 1
      %p65 = por %p63, %p64
      %p67 = scmp.ne.s32.totalorder %s50, %s66
      %p68 = scmp.eq.s32.totalorder %s28, 0
      %p69 = por %p67, %p68
      %s71 = sadd.s32 %s70, 1
      %p74 = scmp.eq.s32.totalorder %s22, 1
      %p75 = scmp.ne.s32.totalorder %s70, %s72
      %p76 = scmp.eq.s32.totalorder %s22, 0
      %p77 = por %p75, %p76
      %p78 = scmp.ne.s32.totalorder %s70, %s72
      %p79 = scmp.eq.s32.totalorder %s27, 1
      %p80 = por %p78, %p79
      %p81 = scmp.ne.s32.totalorder %s72, %s73
      %p82 = scmp.eq.s32.totalorder %s27, 0
      %p83 = por %p81, %p82
      %p84 = scmp.ne.s32.totalorder %s72, %s73
      %p85 = scmp.eq.s32.totalorder %s28, 1
      %p86 = por %p84, %p85
      %p88 = scmp.ne.s32.totalorder %s73, %s87
      %p89 = scmp.eq.s32.totalorder %s28, 0
      %p90 = por %p88, %p89
      %s92 = sadd.s32 %s91, 1
      %p95 = scmp.eq.s32.totalorder %s22, 1
      %p96 = scmp.ne.s32.totalorder %s91, %s93
      %p97 = scmp.eq.s32.totalorder %s22, 0
      %p98 = por %p96, %p97
      %p99 = scmp.ne.s32.totalorder %s91, %s93
      %p100 = scmp.eq.s32.totalorder %s27, 1
      %p101 = por %p99, %p100
      %p102 = scmp.ne.s32.totalorder %s93, %s94
      %p103 = scmp.eq.s32.totalorder %s27, 0
      %p104 = por %p102, %p103
      %p105 = scmp.ne.s32.totalorder %s93, %s94
      %p106 = scmp.eq.s32.totalorder %s28, 1
      %p107 = por %p105, %p106
      %p109 = scmp.ne.s32.totalorder %s94, %s108
      %p110 = scmp.eq.s32.totalorder %s28, 0
      %p111 = por %p109, %p110
      %s113 = sadd.s32 %s112, 1
      %p116 = scmp.eq.s32.totalorder %s22, 1
      %p117 = scmp.ne.s32.totalorder %s112, %s114
      %p118 = scmp.eq.s32.totalorder %s22, 0
      %p119 = por %p117, %p118
      %p120 = scmp.ne.s32.totalorder %s112, %s114
      %p121 = scmp.eq.s32.totalorder %s27, 1
      %p122 = por %p120, %p121
      %p123 = scmp.ne.s32.totalorder %s114, %s115
      %p124 = scmp.eq.s32.totalorder %s27, 0
      %p125 = por %p123, %p124
      %p126 = scmp.ne.s32.totalorder %s114, %s115
      %p127 = scmp.eq.s32.totalorder %s28, 1
      %p128 = por %p126, %p127
      %p130 = scmp.ne.s32.totalorder %s115, %s129
      %p131 = scmp.eq.s32.totalorder %s28, 0
      %p132 = por %p130, %p131
      %s134 = sadd.s32 %s133, 1
      %p137 = scmp.eq.s32.totalorder %s22, 1
      %p138 = scmp.ne.s32.totalorder %s133, %s135
      %p139 = scmp.eq.s32.totalorder %s22, 0
      %p140 = por %p138, %p139
      %p141 = scmp.ne.s32.totalorder %s133, %s135
      %p142 = scmp.eq.s32.totalorder %s27, 1
      %p143 = por %p141, %p142
      %p144 = scmp.ne.s32.totalorder %s135, %s136
      %p145 = scmp.eq.s32.totalorder %s27, 0
      %p146 = por %p144, %p145
      %p147 = scmp.ne.s32.totalorder %s135, %s136
      %p148 = scmp.eq.s32.totalorder %s28, 1
      %p149 = por %p147, %p148
      %p151 = scmp.ne.s32.totalorder %s136, %s150
      %p152 = scmp.eq.s32.totalorder %s28, 0
      %p153 = por %p151, %p152
      %s155 = sadd.s32 %s154, 1
      %p158 = scmp.eq.s32.totalorder %s22, 1
      %p159 = scmp.ne.s32.totalorder %s154, %s156
      %p160 = scmp.eq.s32.totalorder %s22, 0
      %p161 = por %p159, %p160
      %p162 = scmp.ne.s32.totalorder %s154, %s156
      %p163 = scmp.eq.s32.totalorder %s27, 1
      %p164 = por %p162, %p163
      %p165 = scmp.ne.s32.totalorder %s156, %s157
      %p166 = scmp.eq.s32.totalorder %s27, 0
      %p167 = por %p165, %p166
      %p168 = scmp.ne.s32.totalorder %s156, %s157
      %p169 = scmp.eq.s32.totalorder %s28, 1
      %p170 = por %p168, %p169
      %p172 = scmp.ne.s32.totalorder %s157, %s171
      %p173 = scmp.eq.s32.totalorder %s28, 0
      %p174 = por %p172, %p173
      %s176 = sadd.s32 %s175, 1
      %p179 = scmp.eq.s32.totalorder %s22, 1
      %p180 = scmp.ne.s32.totalorder %s175, %s177
      %p181 = scmp.eq.s32.totalorder %s22, 0
      %p182 = por %p180, %p181
      %p183 = scmp.ne.s32.totalorder %s175, %s177
      %p184 = scmp.eq.s32.totalorder %s27, 1
      %p185 = por %p183, %p184
      %p186 = scmp.ne.s32.totalorder %s177, %s178
      %p187 = scmp.eq.s32.totalorder %s27, 0
      %p188 = por %p186, %p187
      %p189 = scmp.ne.s32.totalorder %s177, %s178
      %p190 = scmp.eq.s32.totalorder %s28, 1
      %p191 = por %p189, %p190
      %p193 = scmp.ne.s32.totalorder %s178, %s192
      %p194 = scmp.eq.s32.totalorder %s28, 0
      %p195 = por %p193, %p194
      %s197 = sadd.s32 %s196, 1
      %p200 = scmp.eq.s32.totalorder %s22, 1
      %p201 = scmp.ne.s32.totalorder %s196, %s198
      %p202 = scmp.eq.s32.totalorder %s22, 0
      %p203 = por %p201, %p202
      %p204 = scmp.ne.s32.totalorder %s196, %s198
      %p205 = scmp.eq.s32.totalorder %s27, 1
      %p206 = por %p204, %p205
      %p207 = scmp.ne.s32.totalorder %s198, %s199
      %p208 = scmp.eq.s32.totalorder %s27, 0
      %p209 = por %p207, %p208
      %p210 = scmp.ne.s32.totalorder %s198, %s199
      %p211 = scmp.eq.s32.totalorder %s28, 1
      %p212 = por %p210, %p211
      %p214 = scmp.ne.s32.totalorder %s199, %s213
      %p215 = scmp.eq.s32.totalorder %s28, 0
      %p216 = por %p214, %p215
      %s218 = sadd.s32 %s217, 1
      %p221 = scmp.eq.s32.totalorder %s22, 1
      %p222 = scmp.ne.s32.totalorder %s217, %s219
      %p223 = scmp.eq.s32.totalorder %s22, 0
      %p224 = por %p222, %p223
      %p225 = scmp.ne.s32.totalorder %s217, %s219
      %p226 = scmp.eq.s32.totalorder %s27, 1
      %p227 = por %p225, %p226
      %p228 = scmp.ne.s32.totalorder %s219, %s220
      %p229 = scmp.eq.s32.totalorder %s27, 0
      %p230 = por %p228, %p229
      %p231 = scmp.ne.s32.totalorder %s219, %s220
      %p232 = scmp.eq.s32.totalorder %s28, 1
      %p233 = por %p231, %p232
      %p235 = scmp.ne.s32.totalorder %s220, %s234
      %p236 = scmp.eq.s32.totalorder %s28, 0
      %p237 = por %p235, %p236
      %s238 = ssub.s32 %s29, %s41
      %p239 = scmp.eq.s32.totalorder %s238, 0
      %s241 = sadd.s32 %s240, 1
      %s242 = scalar_select %p239, %s240, %s241
      %p245 = pneg %p239
      %p246 = scmp.eq.s32.totalorder %s22, 1
      %p247 = por %p245, %p246
      %p248 = scmp.ne.s32.totalorder %s240, %s243
      %p249 = scmp.eq.s32.totalorder %s22, 0
      %p250 = por %p248, %p249
      %p251 = scmp.ne.s32.totalorder %s240, %s243
      %p252 = scmp.eq.s32.totalorder %s27, 1
      %p253 = por %p251, %p252
      %p254 = scmp.ne.s32.totalorder %s243, %s244
      %p255 = scmp.eq.s32.totalorder %s27, 0
      %p256 = por %p254, %p255
      %p257 = scmp.ne.s32.totalorder %s243, %s244
      %p258 = scmp.eq.s32.totalorder %s28, 1
      %p259 = por %p257, %p258
      %p261 = scmp.ne.s32.totalorder %s244, %s260
      %p262 = scmp.eq.s32.totalorder %s28, 0
      %p263 = por %p261, %p262
      %p264 = scmp.le.s32.totalorder 1, %s22
      %p265 = scmp.lt.s32.totalorder %s22, 3
      %p266 = pnand %p264, %p265
      %p267 = pneg %p266
      // Predicated region
      $region9: #{tpu_custom_call.1} parent=5 // pred_check
        _
      $region10: #{tpu_custom_call.1} parent=5 // pred_check_branch
        %269 = sbr.rel (%p266) target = $region12
      $region11: #{tpu_custom_call.1} parent=5 // pred_region
        %s270 = ssub.s32 %s22, 1
        // Predicated region
        $region13: #{tpu_custom_call.1} parent=11 // pred_check
          %p271 = pneg %p83
        $region14: #{tpu_custom_call.1} parent=11 // pred_check_branch
          %273 = sbr.rel (%p271) target = $region16
        $region15: #{tpu_custom_call.1} parent=11 // pred_region
          %275 = vsyncadd [#allocation10], 0
          %s276 = sshll.u32 %s1, 4
          %s277 = int_to_ptr.hbm [resolvable:$true] %s276
          %s278 = sshll.u32 [#allocation9], 4
          %s279 = int_to_ptr.vmem [resolvable:$true] %s278
          %284 = dma.hbm_to_vmem [thread:$0]  %s277, 8192, %s279, [#allocation10], 512, 512, 32
        $region16: #{tpu_custom_call.1} parent=11 // pred_fallthru
          _
        // Predicated region
        $region17: #{tpu_custom_call.1} parent=11 // pred_check
          %p285 = pneg %p104
        $region18: #{tpu_custom_call.1} parent=11 // pred_check_branch
          %287 = sbr.rel (%p285) target = $region20
        $region19: #{tpu_custom_call.1} parent=11 // pred_region
          %289 = vsyncadd [#allocation10], 0
          %s290 = sshll.u32 %s2, 4
          %s291 = int_to_ptr.hbm [resolvable:$true] %s290
          %s292 = sshll.u32 [#allocation11], 4
          %s293 = int_to_ptr.vmem [resolvable:$true] %s292
          %298 = dma.hbm_to_vmem [thread:$0]  %s291, 8192, %s293, [#allocation10], 512, 512, 32
        $region20: #{tpu_custom_call.1} parent=11 // pred_fallthru
          _
        // Predicated region
        $region21: #{tpu_custom_call.1} parent=11 // pred_check
          %p299 = pneg %p125
        $region22: #{tpu_custom_call.1} parent=11 // pred_check_branch
          %301 = sbr.rel (%p299) target = $region24
        $region23: #{tpu_custom_call.1} parent=11 // pred_region
          %303 = vsyncadd [#allocation13], 0
          %s305 = sshll.u32 %s3, 4
          %s306 = int_to_ptr.hbm [resolvable:$true] %s305
          %s307 = sshll.u32 [#allocation12], 4
          %s308 = int_to_ptr.vmem [resolvable:$true] %s307
          %310 = dma.hbm_to_vmem [thread:$0]  %s306, 64, %s308, [#allocation13]
        $region24: #{tpu_custom_call.1} parent=11 // pred_fallthru
          _
        // Predicated region
        $region25: #{tpu_custom_call.1} parent=11 // pred_check
          %p311 = pneg %p146
        $region26: #{tpu_custom_call.1} parent=11 // pred_check_branch
          %313 = sbr.rel (%p311) target = $region28
        $region27: #{tpu_custom_call.1} parent=11 // pred_region
          %315 = vsyncadd [#allocation13], 0
          %s316 = sshll.u32 %s4, 4
          %s317 = int_to_ptr.hbm [resolvable:$true] %s316
          %s318 = sshll.u32 [#allocation14], 4
          %s319 = int_to_ptr.vmem [resolvable:$true] %s318
          %324 = dma.hbm_to_vmem [thread:$0]  %s317, 8192, %s319, [#allocation13], 512, 512, 32
        $region28: #{tpu_custom_call.1} parent=11 // pred_fallthru
          _
        // Predicated region
        $region29: #{tpu_custom_call.1} parent=11 // pred_check
          %p325 = pneg %p167
        $region30: #{tpu_custom_call.1} parent=11 // pred_check_branch
          %327 = sbr.rel (%p325) target = $region32
        $region31: #{tpu_custom_call.1} parent=11 // pred_region
          %329 = vsyncadd [#allocation16], 0
          %s330 = sshll.u32 %s5, 4
          %s331 = int_to_ptr.hbm [resolvable:$true] %s330
          %s332 = sshll.u32 [#allocation15], 4
          %s333 = int_to_ptr.vmem [resolvable:$true] %s332
          %338 = dma.hbm_to_vmem [thread:$0]  %s331, 8192, %s333, [#allocation16], 512, 512, 32
        $region32: #{tpu_custom_call.1} parent=11 // pred_fallthru
          _
        // Predicated region
        $region33: #{tpu_custom_call.1} parent=11 // pred_check
          %p339 = pneg %p188
        $region34: #{tpu_custom_call.1} parent=11 // pred_check_branch
          %341 = sbr.rel (%p339) target = $region36
        $region35: #{tpu_custom_call.1} parent=11 // pred_region
          _
        $region36: #{tpu_custom_call.1} parent=11 // pred_fallthru
          _
        // Predicated region
        $region37: #{tpu_custom_call.1} parent=11 // pred_check
          %p342 = pneg %p209
        $region38: #{tpu_custom_call.1} parent=11 // pred_check_branch
          %344 = sbr.rel (%p342) target = $region40
        $region39: #{tpu_custom_call.1} parent=11 // pred_region
          %346 = vsyncadd [#allocation16], 0
          %s347 = sshll.u32 %s7, 4
          %s348 = int_to_ptr.hbm [resolvable:$true] %s347
          %s349 = sshll.u32 [#allocation17], 4
          %s350 = int_to_ptr.vmem [resolvable:$true] %s349
          %355 = dma.hbm_to_vmem [thread:$0]  %s348, 2048, %s350, [#allocation16], 128, 128, 8
        $region40: #{tpu_custom_call.1} parent=11 // pred_fallthru
          _
        // Predicated region
        $region41: #{tpu_custom_call.1} parent=11 // pred_check
          %p356 = pneg %p230
        $region42: #{tpu_custom_call.1} parent=11 // pred_check_branch
          %358 = sbr.rel (%p356) target = $region44
        $region43: #{tpu_custom_call.1} parent=11 // pred_region
          _
        $region44: #{tpu_custom_call.1} parent=11 // pred_fallthru
          _
      $region12: #{tpu_custom_call.1} parent=5 // pred_fallthru
        _
      %p359 = scmp.lt.s32.totalorder %s22, 2
      // Predicated region
      $region45: #{tpu_custom_call.1} parent=5 // pred_check
        %p360 = pneg %p359
      $region46: #{tpu_custom_call.1} parent=5 // pred_check_branch
        %362 = sbr.rel (%p360) target = $region48
      $region47: #{tpu_custom_call.1} parent=5 // pred_region
        // Predicated region
        $region49: #{tpu_custom_call.1} parent=47 // pred_check
          %p363 = pneg %p56
        $region50: #{tpu_custom_call.1} parent=47 // pred_check_branch
          %365 = sbr.rel (%p363) target = $region52
        $region51: #{tpu_custom_call.1} parent=47 // pred_region
          %s366 = sand.u32 %s46, 1
          %s367 = scalar_lea.sflag [#allocation7], %s366
          %s368 = sand.u32 %s46, 1
          %s369 = smul.addr %s368, 32
          %s370 = scalar_lea.vmem [#allocation6], %s369
          %s371 = smul.u32 4, %s30
          %373 = vsyncadd %s367, 0
          %s374 = sadd.s32 %s29, %s371
          %s375 = smul.addr %s374, 8
          %s376 = scalar_lea.hbm %s0, %s375
          %s377 = sshll.u32 %s376, 4
          %s378 = int_to_ptr.hbm [resolvable:$true] %s377
          %s379 = sshll.u32 %s370, 4
          %s380 = int_to_ptr.vmem [resolvable:$true] %s379
          %385 = dma.hbm_to_vmem [thread:$0]  %s378, 512, %s380, %s367, 128, 128, 8
        $region52: #{tpu_custom_call.1} parent=47 // pred_fallthru
          _
      $region48: #{tpu_custom_call.1} parent=5 // pred_fallthru
        _
      %p386 = scmp.le.s32.totalorder 1, %s22
      %p387 = scmp.lt.s32.totalorder %s22, 3
      %p388 = pnand %p386, %p387
      %p389 = pneg %p388
      // Predicated region
      $region53: #{tpu_custom_call.1} parent=5 // pred_check
        _
      $region54: #{tpu_custom_call.1} parent=5 // pred_check_branch
        %391 = sbr.rel (%p388) target = $region56
      $region55: #{tpu_custom_call.1} parent=5 // pred_region
        %s392 = ssub.s32 %s22, 1
        %s393 = sand.u32 %s49, 1
        %s394 = scalar_lea.sflag [#allocation7], %s393
        %s395 = sand.u32 %s49, 1
        %s396 = smul.addr %s395, 32
        %s397 = scalar_lea.vmem [#allocation6], %s396
        // Predicated region
        $region57: #{tpu_custom_call.1} parent=55 // pred_check
          %p398 = pneg %p62
        $region58: #{tpu_custom_call.1} parent=55 // pred_check_branch
          %400 = sbr.rel (%p398) target = $region60
        $region59: #{tpu_custom_call.1} parent=55 // pred_region
          %402 = dma.done %s394, 512
        $region60: #{tpu_custom_call.1} parent=55 // pred_fallthru
          _
        // Predicated region
        $region61: #{tpu_custom_call.1} parent=55 // pred_check
          %p403 = pneg %p83
        $region62: #{tpu_custom_call.1} parent=55 // pred_check_branch
          %405 = sbr.rel (%p403) target = $region64
        $region63: #{tpu_custom_call.1} parent=55 // pred_region
          %407 = dma.done [#allocation10], 8192
        $region64: #{tpu_custom_call.1} parent=55 // pred_fallthru
          _
        // Predicated region
        $region65: #{tpu_custom_call.1} parent=55 // pred_check
          %p408 = pneg %p104
        $region66: #{tpu_custom_call.1} parent=55 // pred_check_branch
          %410 = sbr.rel (%p408) target = $region68
        $region67: #{tpu_custom_call.1} parent=55 // pred_region
          %412 = dma.done [#allocation10], 8192
        $region68: #{tpu_custom_call.1} parent=55 // pred_fallthru
          _
        // Predicated region
        $region69: #{tpu_custom_call.1} parent=55 // pred_check
          %p413 = pneg %p125
        $region70: #{tpu_custom_call.1} parent=55 // pred_check_branch
          %415 = sbr.rel (%p413) target = $region72
        $region71: #{tpu_custom_call.1} parent=55 // pred_region
          %417 = dma.done [#allocation13], 64
        $region72: #{tpu_custom_call.1} parent=55 // pred_fallthru
          _
        // Predicated region
        $region73: #{tpu_custom_call.1} parent=55 // pred_check
          %p418 = pneg %p146
        $region74: #{tpu_custom_call.1} parent=55 // pred_check_branch
          %420 = sbr.rel (%p418) target = $region76
        $region75: #{tpu_custom_call.1} parent=55 // pred_region
          %422 = dma.done [#allocation13], 8192
        $region76: #{tpu_custom_call.1} parent=55 // pred_fallthru
          _
        // Predicated region
        $region77: #{tpu_custom_call.1} parent=55 // pred_check
          %p423 = pneg %p167
        $region78: #{tpu_custom_call.1} parent=55 // pred_check_branch
          %425 = sbr.rel (%p423) target = $region80
        $region79: #{tpu_custom_call.1} parent=55 // pred_region
          %427 = dma.done [#allocation16], 8192
        $region80: #{tpu_custom_call.1} parent=55 // pred_fallthru
          _
        // Predicated region
        $region81: #{tpu_custom_call.1} parent=55 // pred_check
          %p428 = pneg %p209
        $region82: #{tpu_custom_call.1} parent=55 // pred_check_branch
          %430 = sbr.rel (%p428) target = $region84
        $region83: #{tpu_custom_call.1} parent=55 // pred_region
          %432 = dma.done [#allocation16], 2048
        $region84: #{tpu_custom_call.1} parent=55 // pred_fallthru
          _
        %s433 = sand.u32 %s49, 1
        %s434 = scalar_lea.sflag [#allocation7], %s433
        %s435 = sand.u32 %s49, 1
        %s436 = smul.addr %s435, 32
        %s437 = scalar_lea.vmem [#allocation6], %s436
        %p438 = pneg %p62
        %p439 = pneg %p59
        %p440 = pneg %p83
        %p441 = pneg %p80
        %p442 = pneg %p104
        %p443 = pneg %p101
        %p444 = pneg %p125
        %p445 = pneg %p122
        %p446 = pneg %p146
        %p447 = pneg %p143
        %p448 = pneg %p167
        %p449 = pneg %p164
        %p450 = pneg %p188
        %p451 = pneg %p185
        %p452 = pneg %p209
        %p453 = pneg %p206
        %p454 = pneg %p230
        %p455 = pneg %p227
        %p456 = pneg %p256
        %p457 = pneg %p253
        %s458 = smul.u32 4, %s32
        %p459 = scmp.eq.s32.totalorder %s32, 0
        // Predicated region
        $region85: #{tpu_custom_call.1} parent=55 // pred_check
          %p460 = pneg %p459
        $region86: #{tpu_custom_call.1} parent=55 // pred_check_branch
          %462 = sbr.rel (%p460) target = $region88
        $region87: #{tpu_custom_call.1} parent=55 // pred_region
          %463 = vst [vmem:[#allocation2] sm:$0xff] 0.0
          %464 = vst [vmem:[#allocation2 + $0x8] sm:$0xff] 0.0
          %465 = vst [vmem:[#allocation3] sm:$0xff] 0.0
          %466 = vst [vmem:[#allocation3 + $0x8] sm:$0xff] 0.0
        $region88: #{tpu_custom_call.1} parent=55 // pred_fallthru
          _
        %v467 = vld [vmem:[#allocation9] sm:$0xff]
        %v468 = vld [vmem:[#allocation9 + $0x8] sm:$0xff]
        %v469 = vld [vmem:[#allocation9 + $0x10] sm:$0xff]
        %v470 = vld [vmem:[#allocation9 + $0x18] sm:$0xff]
        %v471 = vld [vmem:[#allocation9 + $0x20] sm:$0xff]
        %v472 = vld [vmem:[#allocation9 + $0x28] sm:$0xff]
        %v473 = vld [vmem:[#allocation9 + $0x30] sm:$0xff]
        %v474 = vld [vmem:[#allocation9 + $0x38] sm:$0xff]
        %v475 = vld [vmem:[#allocation9 + $0x40] sm:$0xff]
        %v476 = vld [vmem:[#allocation9 + $0x48] sm:$0xff]
        %v477 = vld [vmem:[#allocation9 + $0x50] sm:$0xff]
        %v478 = vld [vmem:[#allocation9 + $0x58] sm:$0xff]
        %v479 = vld [vmem:[#allocation9 + $0x60] sm:$0xff]
        %v480 = vld [vmem:[#allocation9 + $0x68] sm:$0xff]
        %v481 = vld [vmem:[#allocation9 + $0x70] sm:$0xff]
        %v482 = vld [vmem:[#allocation9 + $0x78] sm:$0xff]
        %v483 = vld [vmem:[#allocation9 + $0x80] sm:$0xff]
        %v484 = vld [vmem:[#allocation9 + $0x88] sm:$0xff]
        %v485 = vld [vmem:[#allocation9 + $0x90] sm:$0xff]
        %v486 = vld [vmem:[#allocation9 + $0x98] sm:$0xff]
        %v487 = vld [vmem:[#allocation9 + $0xa0] sm:$0xff]
        %v488 = vld [vmem:[#allocation9 + $0xa8] sm:$0xff]
        %v489 = vld [vmem:[#allocation9 + $0xb0] sm:$0xff]
        %v490 = vld [vmem:[#allocation9 + $0xb8] sm:$0xff]
        %v491 = vld [vmem:[#allocation9 + $0xc0] sm:$0xff]
        %v492 = vld [vmem:[#allocation9 + $0xc8] sm:$0xff]
        %v493 = vld [vmem:[#allocation9 + $0xd0] sm:$0xff]
        %v494 = vld [vmem:[#allocation9 + $0xd8] sm:$0xff]
        %v495 = vld [vmem:[#allocation9 + $0xe0] sm:$0xff]
        %v496 = vld [vmem:[#allocation9 + $0xe8] sm:$0xff]
        %v497 = vld [vmem:[#allocation9 + $0xf0] sm:$0xff]
        %v498 = vld [vmem:[#allocation9 + $0xf8] sm:$0xff]
        %v499 = vld [vmem:[#allocation9 + $0x100] sm:$0xff]
        %v500 = vld [vmem:[#allocation9 + $0x108] sm:$0xff]
        %v501 = vld [vmem:[#allocation9 + $0x110] sm:$0xff]
        %v502 = vld [vmem:[#allocation9 + $0x118] sm:$0xff]
        %v503 = vld [vmem:[#allocation9 + $0x120] sm:$0xff]
        %v504 = vld [vmem:[#allocation9 + $0x128] sm:$0xff]
        %v505 = vld [vmem:[#allocation9 + $0x130] sm:$0xff]
        %v506 = vld [vmem:[#allocation9 + $0x138] sm:$0xff]
        %v507 = vld [vmem:[#allocation9 + $0x140] sm:$0xff]
        %v508 = vld [vmem:[#allocation9 + $0x148] sm:$0xff]
        %v509 = vld [vmem:[#allocation9 + $0x150] sm:$0xff]
        %v510 = vld [vmem:[#allocation9 + $0x158] sm:$0xff]
        %v511 = vld [vmem:[#allocation9 + $0x160] sm:$0xff]
        %v512 = vld [vmem:[#allocation9 + $0x168] sm:$0xff]
        %v513 = vld [vmem:[#allocation9 + $0x170] sm:$0xff]
        %v514 = vld [vmem:[#allocation9 + $0x178] sm:$0xff]
        %v515 = vld [vmem:[#allocation9 + $0x180] sm:$0xff]
        %v516 = vld [vmem:[#allocation9 + $0x188] sm:$0xff]
        %v517 = vld [vmem:[#allocation9 + $0x190] sm:$0xff]
        %v518 = vld [vmem:[#allocation9 + $0x198] sm:$0xff]
        %v519 = vld [vmem:[#allocation9 + $0x1a0] sm:$0xff]
        %v520 = vld [vmem:[#allocation9 + $0x1a8] sm:$0xff]
        %v521 = vld [vmem:[#allocation9 + $0x1b0] sm:$0xff]
        %v522 = vld [vmem:[#allocation9 + $0x1b8] sm:$0xff]
        %v523 = vld [vmem:[#allocation9 + $0x1c0] sm:$0xff]
        %v524 = vld [vmem:[#allocation9 + $0x1c8] sm:$0xff]
        %v525 = vld [vmem:[#allocation9 + $0x1d0] sm:$0xff]
        %v526 = vld [vmem:[#allocation9 + $0x1d8] sm:$0xff]
        %v527 = vld [vmem:[#allocation9 + $0x1e0] sm:$0xff]
        %v528 = vld [vmem:[#allocation9 + $0x1e8] sm:$0xff]
        %v529 = vld [vmem:[#allocation9 + $0x1f0] sm:$0xff]
        %v530 = vld [vmem:[#allocation9 + $0x1f8] sm:$0xff]
        %v531 = vld [vmem:[#allocation11] sm:$0xff]
        %v532 = vld [vmem:[#allocation11 + $0x8] sm:$0xff]
        %v533 = vld [vmem:[#allocation11 + $0x10] sm:$0xff]
        %v534 = vld [vmem:[#allocation11 + $0x18] sm:$0xff]
        %v535 = vld [vmem:[#allocation11 + $0x20] sm:$0xff]
        %v536 = vld [vmem:[#allocation11 + $0x28] sm:$0xff]
        %v537 = vld [vmem:[#allocation11 + $0x30] sm:$0xff]
        %v538 = vld [vmem:[#allocation11 + $0x38] sm:$0xff]
        %v539 = vld [vmem:[#allocation11 + $0x40] sm:$0xff]
        %v540 = vld [vmem:[#allocation11 + $0x48] sm:$0xff]
        %v541 = vld [vmem:[#allocation11 + $0x50] sm:$0xff]
        %v542 = vld [vmem:[#allocation11 + $0x58] sm:$0xff]
        %v543 = vld [vmem:[#allocation11 + $0x60] sm:$0xff]
        %v544 = vld [vmem:[#allocation11 + $0x68] sm:$0xff]
        %v545 = vld [vmem:[#allocation11 + $0x70] sm:$0xff]
        %v546 = vld [vmem:[#allocation11 + $0x78] sm:$0xff]
        %v547 = vld [vmem:[#allocation11 + $0x80] sm:$0xff]
        %v548 = vld [vmem:[#allocation11 + $0x88] sm:$0xff]
        %v549 = vld [vmem:[#allocation11 + $0x90] sm:$0xff]
        %v550 = vld [vmem:[#allocation11 + $0x98] sm:$0xff]
        %v551 = vld [vmem:[#allocation11 + $0xa0] sm:$0xff]
        %v552 = vld [vmem:[#allocation11 + $0xa8] sm:$0xff]
        %v553 = vld [vmem:[#allocation11 + $0xb0] sm:$0xff]
        %v554 = vld [vmem:[#allocation11 + $0xb8] sm:$0xff]
        %v555 = vld [vmem:[#allocation11 + $0xc0] sm:$0xff]
        %v556 = vld [vmem:[#allocation11 + $0xc8] sm:$0xff]
        %v557 = vld [vmem:[#allocation11 + $0xd0] sm:$0xff]
        %v558 = vld [vmem:[#allocation11 + $0xd8] sm:$0xff]
        %v559 = vld [vmem:[#allocation11 + $0xe0] sm:$0xff]
        %v560 = vld [vmem:[#allocation11 + $0xe8] sm:$0xff]
        %v561 = vld [vmem:[#allocation11 + $0xf0] sm:$0xff]
        %v562 = vld [vmem:[#allocation11 + $0xf8] sm:$0xff]
        %v563 = vld [vmem:[#allocation11 + $0x100] sm:$0xff]
        %v564 = vld [vmem:[#allocation11 + $0x108] sm:$0xff]
        %v565 = vld [vmem:[#allocation11 + $0x110] sm:$0xff]
        %v566 = vld [vmem:[#allocation11 + $0x118] sm:$0xff]
        %v567 = vld [vmem:[#allocation11 + $0x120] sm:$0xff]
        %v568 = vld [vmem:[#allocation11 + $0x128] sm:$0xff]
        %v569 = vld [vmem:[#allocation11 + $0x130] sm:$0xff]
        %v570 = vld [vmem:[#allocation11 + $0x138] sm:$0xff]
        %v571 = vld [vmem:[#allocation11 + $0x140] sm:$0xff]
        %v572 = vld [vmem:[#allocation11 + $0x148] sm:$0xff]
        %v573 = vld [vmem:[#allocation11 + $0x150] sm:$0xff]
        %v574 = vld [vmem:[#allocation11 + $0x158] sm:$0xff]
        %v575 = vld [vmem:[#allocation11 + $0x160] sm:$0xff]
        %v576 = vld [vmem:[#allocation11 + $0x168] sm:$0xff]
        %v577 = vld [vmem:[#allocation11 + $0x170] sm:$0xff]
        %v578 = vld [vmem:[#allocation11 + $0x178] sm:$0xff]
        %v579 = vld [vmem:[#allocation11 + $0x180] sm:$0xff]
        %v580 = vld [vmem:[#allocation11 + $0x188] sm:$0xff]
        %v581 = vld [vmem:[#allocation11 + $0x190] sm:$0xff]
        %v582 = vld [vmem:[#allocation11 + $0x198] sm:$0xff]
        %v583 = vld [vmem:[#allocation11 + $0x1a0] sm:$0xff]
        %v584 = vld [vmem:[#allocation11 + $0x1a8] sm:$0xff]
        %v585 = vld [vmem:[#allocation11 + $0x1b0] sm:$0xff]
        %v586 = vld [vmem:[#allocation11 + $0x1b8] sm:$0xff]
        %v587 = vld [vmem:[#allocation11 + $0x1c0] sm:$0xff]
        %v588 = vld [vmem:[#allocation11 + $0x1c8] sm:$0xff]
        %v589 = vld [vmem:[#allocation11 + $0x1d0] sm:$0xff]
        %v590 = vld [vmem:[#allocation11 + $0x1d8] sm:$0xff]
        %v591 = vld [vmem:[#allocation11 + $0x1e0] sm:$0xff]
        %v592 = vld [vmem:[#allocation11 + $0x1e8] sm:$0xff]
        %v593 = vld [vmem:[#allocation11 + $0x1f0] sm:$0xff]
        %v594 = vld [vmem:[#allocation11 + $0x1f8] sm:$0xff]
        %v595 = vld [vmem:[#allocation12] sm:$0xf]
        %v596 = vld [vmem:[%s397] sm:$0xff]
        %v597 = vld [vmem:[%s397 + $0x8] sm:$0xff]
        %v598 = vld [vmem:[%s397 + $0x10] sm:$0xff]
        %v599 = vld [vmem:[%s397 + $0x18] sm:$0xff]
        %v601 = vperm.slane %v595, 0
        %v602 = vperm.slane %v595, 1
        %v603 = vperm.slane %v595, 2
        %v604 = vperm.slane %v595, 3
        %609 = vmatpush.msra.mxu0 %v527
        %610 = vmatpush.msra.mxu0 %v523
        %611 = vmatpush.msra.mxu0 %v519
        %612 = vmatpush.msra.mxu0 %v515
        %613 = vmatpush.msra.mxu0 %v511
        %614 = vmatpush.msra.mxu0 %v507
        %615 = vmatpush.msra.mxu0 %v503
        %616 = vmatpush.msra.mxu0 %v499
        %617 = vmatpush.msra.mxu0 %v495
        %618 = vmatpush.msra.mxu0 %v491
        %619 = vmatpush.msra.mxu0 %v487
        %620 = vmatpush.msra.mxu0 %v483
        %621 = vmatpush.msra.mxu0 %v479
        %622 = vmatpush.msra.mxu0 %v475
        %623 = vmatpush.msra.mxu0 %v471
        %624 = vmatpush.msra.mxu0 %v467
        %625 = vmatmul.f32.gmra.mxu0 %v596
        %v626 = vpop.f32.mrf.mxu0
        %v627 = vadd.f32 %v601, %v626
        %628 = vmatmul.f32.gmra.mxu0 %v597
        %v629 = vpop.f32.mrf.mxu0
        %v630 = vadd.f32 %v601, %v629
        %631 = vmatmul.f32.gmra.mxu0 %v598
        %v632 = vpop.f32.mrf.mxu0
        %v633 = vadd.f32 %v601, %v632
        %634 = vmatmul.f32.gmra.mxu0 %v599
        %v635 = vpop.f32.mrf.mxu0
        %v636 = vadd.f32 %v601, %v635
        %637 = vdwg.mxu0
        %638 = vmatpush.msra.mxu0 %v528
        %639 = vmatpush.msra.mxu0 %v524
        %640 = vmatpush.msra.mxu0 %v520
        %641 = vmatpush.msra.mxu0 %v516
        %642 = vmatpush.msra.mxu0 %v512
        %643 = vmatpush.msra.mxu0 %v508
        %644 = vmatpush.msra.mxu0 %v504
        %645 = vmatpush.msra.mxu0 %v500
        %646 = vmatpush.msra.mxu0 %v496
        %647 = vmatpush.msra.mxu0 %v492
        %648 = vmatpush.msra.mxu0 %v488
        %649 = vmatpush.msra.mxu0 %v484
        %650 = vmatpush.msra.mxu0 %v480
        %651 = vmatpush.msra.mxu0 %v476
        %652 = vmatpush.msra.mxu0 %v472
        %653 = vmatpush.msra.mxu0 %v468
        %654 = vmatmul.f32.gmra.mxu0 %v596
        %v655 = vpop.f32.mrf.mxu0
        %v656 = vadd.f32 %v602, %v655
        %657 = vmatmul.f32.gmra.mxu0 %v597
        %v658 = vpop.f32.mrf.mxu0
        %v659 = vadd.f32 %v602, %v658
        %660 = vmatmul.f32.gmra.mxu0 %v598
        %v661 = vpop.f32.mrf.mxu0
        %v662 = vadd.f32 %v602, %v661
        %663 = vmatmul.f32.gmra.mxu0 %v599
        %v664 = vpop.f32.mrf.mxu0
        %v665 = vadd.f32 %v602, %v664
        %666 = vdwg.mxu0
        %667 = vmatpush.msra.mxu0 %v529
        %668 = vmatpush.msra.mxu0 %v525
        %669 = vmatpush.msra.mxu0 %v521
        %670 = vmatpush.msra.mxu0 %v517
        %671 = vmatpush.msra.mxu0 %v513
        %672 = vmatpush.msra.mxu0 %v509
        %673 = vmatpush.msra.mxu0 %v505
        %674 = vmatpush.msra.mxu0 %v501
        %675 = vmatpush.msra.mxu0 %v497
        %676 = vmatpush.msra.mxu0 %v493
        %677 = vmatpush.msra.mxu0 %v489
        %678 = vmatpush.msra.mxu0 %v485
        %679 = vmatpush.msra.mxu0 %v481
        %680 = vmatpush.msra.mxu0 %v477
        %681 = vmatpush.msra.mxu0 %v473
        %682 = vmatpush.msra.mxu0 %v469
        %683 = vmatmul.f32.gmra.mxu0 %v596
        %v684 = vpop.f32.mrf.mxu0
        %v685 = vadd.f32 %v603, %v684
        %686 = vmatmul.f32.gmra.mxu0 %v597
        %v687 = vpop.f32.mrf.mxu0
        %v688 = vadd.f32 %v603, %v687
        %689 = vmatmul.f32.gmra.mxu0 %v598
        %v690 = vpop.f32.mrf.mxu0
        %v691 = vadd.f32 %v603, %v690
        %692 = vmatmul.f32.gmra.mxu0 %v599
        %v693 = vpop.f32.mrf.mxu0
        %v694 = vadd.f32 %v603, %v693
        %695 = vdwg.mxu0
        %696 = vmatpush.msra.mxu0 %v530
        %697 = vmatpush.msra.mxu0 %v526
        %698 = vmatpush.msra.mxu0 %v522
        %699 = vmatpush.msra.mxu0 %v518
        %700 = vmatpush.msra.mxu0 %v514
        %701 = vmatpush.msra.mxu0 %v510
        %702 = vmatpush.msra.mxu0 %v506
        %703 = vmatpush.msra.mxu0 %v502
        %704 = vmatpush.msra.mxu0 %v498
        %705 = vmatpush.msra.mxu0 %v494
        %706 = vmatpush.msra.mxu0 %v490
        %707 = vmatpush.msra.mxu0 %v486
        %708 = vmatpush.msra.mxu0 %v482
        %709 = vmatpush.msra.mxu0 %v478
        %710 = vmatpush.msra.mxu0 %v474
        %711 = vmatpush.msra.mxu0 %v470
        %712 = vmatmul.f32.gmra.mxu0 %v596
        %v713 = vpop.f32.mrf.mxu0
        %v714 = vadd.f32 %v604, %v713
        %715 = vmatmul.f32.gmra.mxu0 %v597
        %v716 = vpop.f32.mrf.mxu0
        %v717 = vadd.f32 %v604, %v716
        %718 = vmatmul.f32.gmra.mxu0 %v598
        %v719 = vpop.f32.mrf.mxu0
        %v720 = vadd.f32 %v604, %v719
        %721 = vmatmul.f32.gmra.mxu0 %v599
        %v722 = vpop.f32.mrf.mxu0
        %v723 = vadd.f32 %v604, %v722
        %724 = vdwg.mxu0
        %725 = vst [vmem:[#allocation5] sm:$0xff] %v627
        %726 = vst [vmem:[#allocation5 + $0x8] sm:$0xff] %v656
        %727 = vst [vmem:[#allocation5 + $0x10] sm:$0xff] %v685
        %728 = vst [vmem:[#allocation5 + $0x18] sm:$0xff] %v714
        %729 = vst [vmem:[#allocation5 + $0x20] sm:$0xff] %v630
        %730 = vst [vmem:[#allocation5 + $0x28] sm:$0xff] %v659
        %731 = vst [vmem:[#allocation5 + $0x30] sm:$0xff] %v688
        %732 = vst [vmem:[#allocation5 + $0x38] sm:$0xff] %v717
        %733 = vst [vmem:[#allocation5 + $0x40] sm:$0xff] %v633
        %734 = vst [vmem:[#allocation5 + $0x48] sm:$0xff] %v662
        %735 = vst [vmem:[#allocation5 + $0x50] sm:$0xff] %v691
        %736 = vst [vmem:[#allocation5 + $0x58] sm:$0xff] %v720
        %737 = vst [vmem:[#allocation5 + $0x60] sm:$0xff] %v636
        %738 = vst [vmem:[#allocation5 + $0x68] sm:$0xff] %v665
        %739 = vst [vmem:[#allocation5 + $0x70] sm:$0xff] %v694
        %740 = vst [vmem:[#allocation5 + $0x78] sm:$0xff] %v723
        %s741 = smul.u32 %s32, 4
        %p742 = scmp.lt.s32.totalorder %s741, 8
        // Predicated region
        $region89: #{tpu_custom_call.1} parent=55 // pred_check
          %p743 = pneg %p742
        $region90: #{tpu_custom_call.1} parent=55 // pred_check_branch
          %745 = sbr.rel (%p743) target = $region92
        $region91: #{tpu_custom_call.1} parent=55 // pred_region
          %v746 = vld [vmem:[#allocation2] sm:$0xff]
          %v747 = vld [vmem:[#allocation3] sm:$0xff]
          %v748 = vld [vmem:[#allocation5] sm:$0xff]
          %v749 = vld [vmem:[#allocation5 + $0x8] sm:$0xff]
          %v750 = vld [vmem:[#allocation5 + $0x10] sm:$0xff]
          %v751 = vld [vmem:[#allocation5 + $0x18] sm:$0xff]
          %752 = vmatpush.msra.mxu0 %v591
          %753 = vmatpush.msra.mxu0 %v587
          %754 = vmatpush.msra.mxu0 %v583
          %755 = vmatpush.msra.mxu0 %v579
          %756 = vmatpush.msra.mxu0 %v575
          %757 = vmatpush.msra.mxu0 %v571
          %758 = vmatpush.msra.mxu0 %v567
          %759 = vmatpush.msra.mxu0 %v563
          %760 = vmatpush.msra.mxu0 %v559
          %761 = vmatpush.msra.mxu0 %v555
          %762 = vmatpush.msra.mxu0 %v551
          %763 = vmatpush.msra.mxu0 %v547
          %764 = vmatpush.msra.mxu0 %v543
          %765 = vmatpush.msra.mxu0 %v539
          %766 = vmatpush.msra.mxu0 %v535
          %767 = vmatpush.msra.mxu0 %v531
          %768 = vmatmul.f32.gmra.mxu0 %v746
          %v769 = vpop.f32.mrf.mxu0
          %v770 = vadd.f32 0.0, %v769
          %771 = vdwg.mxu0
          %772 = vmatpush.msra.mxu0 %v592
          %773 = vmatpush.msra.mxu0 %v588
          %774 = vmatpush.msra.mxu0 %v584
          %775 = vmatpush.msra.mxu0 %v580
          %776 = vmatpush.msra.mxu0 %v576
          %777 = vmatpush.msra.mxu0 %v572
          %778 = vmatpush.msra.mxu0 %v568
          %779 = vmatpush.msra.mxu0 %v564
          %780 = vmatpush.msra.mxu0 %v560
          %781 = vmatpush.msra.mxu0 %v556
          %782 = vmatpush.msra.mxu0 %v552
          %783 = vmatpush.msra.mxu0 %v548
          %784 = vmatpush.msra.mxu0 %v544
          %785 = vmatpush.msra.mxu0 %v540
          %786 = vmatpush.msra.mxu0 %v536
          %787 = vmatpush.msra.mxu0 %v532
          %788 = vmatmul.f32.gmra.mxu0 %v746
          %v789 = vpop.f32.mrf.mxu0
          %v790 = vadd.f32 0.0, %v789
          %791 = vdwg.mxu0
          %792 = vmatpush.msra.mxu0 %v593
          %793 = vmatpush.msra.mxu0 %v589
          %794 = vmatpush.msra.mxu0 %v585
          %795 = vmatpush.msra.mxu0 %v581
          %796 = vmatpush.msra.mxu0 %v577
          %797 = vmatpush.msra.mxu0 %v573
          %798 = vmatpush.msra.mxu0 %v569
          %799 = vmatpush.msra.mxu0 %v565
          %800 = vmatpush.msra.mxu0 %v561
          %801 = vmatpush.msra.mxu0 %v557
          %802 = vmatpush.msra.mxu0 %v553
          %803 = vmatpush.msra.mxu0 %v549
          %804 = vmatpush.msra.mxu0 %v545
          %805 = vmatpush.msra.mxu0 %v541
          %806 = vmatpush.msra.mxu0 %v537
          %807 = vmatpush.msra.mxu0 %v533
          %808 = vmatmul.f32.gmra.mxu0 %v746
          %v809 = vpop.f32.mrf.mxu0
          %v810 = vadd.f32 0.0, %v809
          %811 = vdwg.mxu0
          %812 = vmatpush.msra.mxu0 %v594
          %813 = vmatpush.msra.mxu0 %v590
          %814 = vmatpush.msra.mxu0 %v586
          %815 = vmatpush.msra.mxu0 %v582
          %816 = vmatpush.msra.mxu0 %v578
          %817 = vmatpush.msra.mxu0 %v574
          %818 = vmatpush.msra.mxu0 %v570
          %819 = vmatpush.msra.mxu0 %v566
          %820 = vmatpush.msra.mxu0 %v562
          %821 = vmatpush.msra.mxu0 %v558
          %822 = vmatpush.msra.mxu0 %v554
          %823 = vmatpush.msra.mxu0 %v550
          %824 = vmatpush.msra.mxu0 %v546
          %825 = vmatpush.msra.mxu0 %v542
          %826 = vmatpush.msra.mxu0 %v538
          %827 = vmatpush.msra.mxu0 %v534
          %828 = vmatmul.f32.gmra.mxu0 %v746
          %v829 = vpop.f32.mrf.mxu0
          %v830 = vadd.f32 0.0, %v829
          %831 = vdwg.mxu0
          %v832 = vadd.f32 %v748, %v770
          %v833 = vadd.f32 %v749, %v790
          %v834 = vadd.f32 %v750, %v810
          %v835 = vadd.f32 %v751, %v830
          %v836 = vxor.u32 %v832, 2147483648
          %v837 = vxor.u32 %v833, 2147483648
          %v838 = vxor.u32 %v834, 2147483648
          %v839 = vmul.f32 %v836, 1.442695
          %v840 = vpow.pop %v839
          %v841 = vmul.f32 %v837, 1.442695
          %v842 = vpow.pop %v841
          %v843 = vmul.f32 %v838, 1.442695
          %v844 = vpow.pop %v843
          %v845 = vadd.f32 %v840, 1.0
          %v846 = vadd.f32 %v842, 1.0
          %v847 = vadd.f32 %v844, 1.0
          %v848 = vrcp.pop %v845
          %v849 = vmul.f32 %v845, %v848
          %v850 = vsub.f32 1.0, %v849
          %v851 = vmul.f32 %v848, %v850
          %v852 = vadd.f32 %v848, %v851
          %vm853 = vweird.f32 %v845
          %vm854 = vweird.f32 %v848
          %vm855 = vmor %vm853, %vm854
          %v856 = vsel %vm855, %v848, %v852
          %v857 = vand.u32 2147483647, %v845
          %vm858 = vcmp.eq.f32.partialorder %v857, 8.507059e+37
          %v859 = vand.u32 %v845, 2147483648
          %v860 = vor.u32 1.1754944e-38, %v859
          %v861 = vsel %vm858, %v860, %v856
          %v862 = vmul.f32 1.0, %v861
          %v863 = vrcp.pop %v846
          %v864 = vmul.f32 %v846, %v863
          %v865 = vsub.f32 1.0, %v864
          %v866 = vmul.f32 %v863, %v865
          %v867 = vadd.f32 %v863, %v866
          %vm868 = vweird.f32 %v846
          %vm869 = vweird.f32 %v863
          %vm870 = vmor %vm868, %vm869
          %v871 = vsel %vm870, %v863, %v867
          %v872 = vand.u32 2147483647, %v846
          %vm873 = vcmp.eq.f32.partialorder %v872, 8.507059e+37
          %v874 = vand.u32 %v846, 2147483648
          %v875 = vor.u32 1.1754944e-38, %v874
          %v876 = vsel %vm873, %v875, %v871
          %v877 = vmul.f32 1.0, %v876
          %v878 = vrcp.pop %v847
          %v879 = vmul.f32 %v847, %v878
          %v880 = vsub.f32 1.0, %v879
          %v881 = vmul.f32 %v878, %v880
          %v882 = vadd.f32 %v878, %v881
          %vm883 = vweird.f32 %v847
          %vm884 = vweird.f32 %v878
          %vm885 = vmor %vm883, %vm884
          %v886 = vsel %vm885, %v878, %v882
          %v887 = vand.u32 2147483647, %v847
          %vm888 = vcmp.eq.f32.partialorder %v887, 8.507059e+37
          %v889 = vand.u32 %v847, 2147483648
          %v890 = vor.u32 1.1754944e-38, %v889
          %v891 = vsel %vm888, %v890, %v886
          %v892 = vmul.f32 1.0, %v891
          %v893 = vtanh.pop %v835
          %v894 = vmul.f32 %v877, %v747
          %v895 = vmul.f32 %v862, %v893
          %v896 = vadd.f32 %v894, %v895
          %v897 = vtanh.pop %v896
          %v898 = vmul.f32 %v892, %v897
          %899 = vst [vmem:[#allocation2] sm:$0xff] %v898
          %900 = vst [vmem:[#allocation3] sm:$0xff] %v896
          %901 = vst [vmem:[#allocation4] sm:$0xff] %v898
        $region92: #{tpu_custom_call.1} parent=55 // pred_fallthru
          _
        %s902 = sadd.s32 %s741, 1
        %p903 = scmp.lt.s32.totalorder %s902, 8
        // Predicated region
        $region93: #{tpu_custom_call.1} parent=55 // pred_check
          %p904 = pneg %p903
        $region94: #{tpu_custom_call.1} parent=55 // pred_check_branch
          %906 = sbr.rel (%p904) target = $region96
        $region95: #{tpu_custom_call.1} parent=55 // pred_region
          %v907 = vld [vmem:[#allocation2] sm:$0xff]
          %v908 = vld [vmem:[#allocation3] sm:$0xff]
          %s909 = scalar_lea.vmem [#allocation5], 32
          %v910 = vld [vmem:[%s909] sm:$0xff]
          %v911 = vld [vmem:[%s909 + $0x8] sm:$0xff]
          %v912 = vld [vmem:[%s909 + $0x10] sm:$0xff]
          %v913 = vld [vmem:[%s909 + $0x18] sm:$0xff]
          %914 = vmatpush.msra.mxu0 %v591
          %915 = vmatpush.msra.mxu0 %v587
          %916 = vmatpush.msra.mxu0 %v583
          %917 = vmatpush.msra.mxu0 %v579
          %918 = vmatpush.msra.mxu0 %v575
          %919 = vmatpush.msra.mxu0 %v571
          %920 = vmatpush.msra.mxu0 %v567
          %921 = vmatpush.msra.mxu0 %v563
          %922 = vmatpush.msra.mxu0 %v559
          %923 = vmatpush.msra.mxu0 %v555
          %924 = vmatpush.msra.mxu0 %v551
          %925 = vmatpush.msra.mxu0 %v547
          %926 = vmatpush.msra.mxu0 %v543
          %927 = vmatpush.msra.mxu0 %v539
          %928 = vmatpush.msra.mxu0 %v535
          %929 = vmatpush.msra.mxu0 %v531
          %930 = vmatmul.f32.gmra.mxu0 %v907
          %v931 = vpop.f32.mrf.mxu0
          %v932 = vadd.f32 0.0, %v931
          %933 = vdwg.mxu0
          %934 = vmatpush.msra.mxu0 %v592
          %935 = vmatpush.msra.mxu0 %v588
          %936 = vmatpush.msra.mxu0 %v584
          %937 = vmatpush.msra.mxu0 %v580
          %938 = vmatpush.msra.mxu0 %v576
          %939 = vmatpush.msra.mxu0 %v572
          %940 = vmatpush.msra.mxu0 %v568
          %941 = vmatpush.msra.mxu0 %v564
          %942 = vmatpush.msra.mxu0 %v560
          %943 = vmatpush.msra.mxu0 %v556
          %944 = vmatpush.msra.mxu0 %v552
          %945 = vmatpush.msra.mxu0 %v548
          %946 = vmatpush.msra.mxu0 %v544
          %947 = vmatpush.msra.mxu0 %v540
          %948 = vmatpush.msra.mxu0 %v536
          %949 = vmatpush.msra.mxu0 %v532
          %950 = vmatmul.f32.gmra.mxu0 %v907
          %v951 = vpop.f32.mrf.mxu0
          %v952 = vadd.f32 0.0, %v951
          %953 = vdwg.mxu0
          %954 = vmatpush.msra.mxu0 %v593
          %955 = vmatpush.msra.mxu0 %v589
          %956 = vmatpush.msra.mxu0 %v585
          %957 = vmatpush.msra.mxu0 %v581
          %958 = vmatpush.msra.mxu0 %v577
          %959 = vmatpush.msra.mxu0 %v573
          %960 = vmatpush.msra.mxu0 %v569
          %961 = vmatpush.msra.mxu0 %v565
          %962 = vmatpush.msra.mxu0 %v561
          %963 = vmatpush.msra.mxu0 %v557
          %964 = vmatpush.msra.mxu0 %v553
          %965 = vmatpush.msra.mxu0 %v549
          %966 = vmatpush.msra.mxu0 %v545
          %967 = vmatpush.msra.mxu0 %v541
          %968 = vmatpush.msra.mxu0 %v537
          %969 = vmatpush.msra.mxu0 %v533
          %970 = vmatmul.f32.gmra.mxu0 %v907
          %v971 = vpop.f32.mrf.mxu0
          %v972 = vadd.f32 0.0, %v971
          %973 = vdwg.mxu0
          %974 = vmatpush.msra.mxu0 %v594
          %975 = vmatpush.msra.mxu0 %v590
          %976 = vmatpush.msra.mxu0 %v586
          %977 = vmatpush.msra.mxu0 %v582
          %978 = vmatpush.msra.mxu0 %v578
          %979 = vmatpush.msra.mxu0 %v574
          %980 = vmatpush.msra.mxu0 %v570
          %981 = vmatpush.msra.mxu0 %v566
          %982 = vmatpush.msra.mxu0 %v562
          %983 = vmatpush.msra.mxu0 %v558
          %984 = vmatpush.msra.mxu0 %v554
          %985 = vmatpush.msra.mxu0 %v550
          %986 = vmatpush.msra.mxu0 %v546
          %987 = vmatpush.msra.mxu0 %v542
          %988 = vmatpush.msra.mxu0 %v538
          %989 = vmatpush.msra.mxu0 %v534
          %990 = vmatmul.f32.gmra.mxu0 %v907
          %v991 = vpop.f32.mrf.mxu0
          %v992 = vadd.f32 0.0, %v991
          %993 = vdwg.mxu0
          %v994 = vadd.f32 %v910, %v932
          %v995 = vadd.f32 %v911, %v952
          %v996 = vadd.f32 %v912, %v972
          %v997 = vadd.f32 %v913, %v992
          %v998 = vxor.u32 %v994, 2147483648
          %v999 = vxor.u32 %v995, 2147483648
          %v1000 = vxor.u32 %v996, 2147483648
          %v1001 = vmul.f32 %v998, 1.442695
          %v1002 = vpow.pop %v1001
          %v1003 = vmul.f32 %v999, 1.442695
          %v1004 = vpow.pop %v1003
          %v1005 = vmul.f32 %v1000, 1.442695
          %v1006 = vpow.pop %v1005
          %v1007 = vadd.f32 %v1002, 1.0
          %v1008 = vadd.f32 %v1004, 1.0
          %v1009 = vadd.f32 %v1006, 1.0
          %v1010 = vrcp.pop %v1007
          %v1011 = vmul.f32 %v1007, %v1010
          %v1012 = vsub.f32 1.0, %v1011
          %v1013 = vmul.f32 %v1010, %v1012
          %v1014 = vadd.f32 %v1010, %v1013
          %vm1015 = vweird.f32 %v1007
          %vm1016 = vweird.f32 %v1010
          %vm1017 = vmor %vm1015, %vm1016
          %v1018 = vsel %vm1017, %v1010, %v1014
          %v1019 = vand.u32 2147483647, %v1007
          %vm1020 = vcmp.eq.f32.partialorder %v1019, 8.507059e+37
          %v1021 = vand.u32 %v1007, 2147483648
          %v1022 = vor.u32 1.1754944e-38, %v1021
          %v1023 = vsel %vm1020, %v1022, %v1018
          %v1024 = vmul.f32 1.0, %v1023
          %v1025 = vrcp.pop %v1008
          %v1026 = vmul.f32 %v1008, %v1025
          %v1027 = vsub.f32 1.0, %v1026
          %v1028 = vmul.f32 %v1025, %v1027
          %v1029 = vadd.f32 %v1025, %v1028
          %vm1030 = vweird.f32 %v1008
          %vm1031 = vweird.f32 %v1025
          %vm1032 = vmor %vm1030, %vm1031
          %v1033 = vsel %vm1032, %v1025, %v1029
          %v1034 = vand.u32 2147483647, %v1008
          %vm1035 = vcmp.eq.f32.partialorder %v1034, 8.507059e+37
          %v1036 = vand.u32 %v1008, 2147483648
          %v1037 = vor.u32 1.1754944e-38, %v1036
          %v1038 = vsel %vm1035, %v1037, %v1033
          %v1039 = vmul.f32 1.0, %v1038
          %v1040 = vrcp.pop %v1009
          %v1041 = vmul.f32 %v1009, %v1040
          %v1042 = vsub.f32 1.0, %v1041
          %v1043 = vmul.f32 %v1040, %v1042
          %v1044 = vadd.f32 %v1040, %v1043
          %vm1045 = vweird.f32 %v1009
          %vm1046 = vweird.f32 %v1040
          %vm1047 = vmor %vm1045, %vm1046
          %v1048 = vsel %vm1047, %v1040, %v1044
          %v1049 = vand.u32 2147483647, %v1009
          %vm1050 = vcmp.eq.f32.partialorder %v1049, 8.507059e+37
          %v1051 = vand.u32 %v1009, 2147483648
          %v1052 = vor.u32 1.1754944e-38, %v1051
          %v1053 = vsel %vm1050, %v1052, %v1048
          %v1054 = vmul.f32 1.0, %v1053
          %v1055 = vtanh.pop %v997
          %v1056 = vmul.f32 %v1039, %v908
          %v1057 = vmul.f32 %v1024, %v1055
          %v1058 = vadd.f32 %v1056, %v1057
          %v1059 = vtanh.pop %v1058
          %v1060 = vmul.f32 %v1054, %v1059
          %1061 = vst [vmem:[#allocation2] sm:$0xff] %v1060
          %1062 = vst [vmem:[#allocation3] sm:$0xff] %v1058
          %s1063 = scalar_lea.vmem [#allocation4], 8
          %1064 = vst [vmem:[%s1063] sm:$0xff] %v1060
        $region96: #{tpu_custom_call.1} parent=55 // pred_fallthru
          _
        %s1065 = sadd.s32 %s741, 2
        %p1066 = scmp.lt.s32.totalorder %s1065, 8
        // Predicated region
        $region97: #{tpu_custom_call.1} parent=55 // pred_check
          %p1067 = pneg %p1066
        $region98: #{tpu_custom_call.1} parent=55 // pred_check_branch
          %1069 = sbr.rel (%p1067) target = $region100
        $region99: #{tpu_custom_call.1} parent=55 // pred_region
          %v1070 = vld [vmem:[#allocation2] sm:$0xff]
          %v1071 = vld [vmem:[#allocation3] sm:$0xff]
          %s1072 = scalar_lea.vmem [#allocation5], 64
          %v1073 = vld [vmem:[%s1072] sm:$0xff]
          %v1074 = vld [vmem:[%s1072 + $0x8] sm:$0xff]
          %v1075 = vld [vmem:[%s1072 + $0x10] sm:$0xff]
          %v1076 = vld [vmem:[%s1072 + $0x18] sm:$0xff]
          %1077 = vmatpush.msra.mxu0 %v591
          %1078 = vmatpush.msra.mxu0 %v587
          %1079 = vmatpush.msra.mxu0 %v583
          %1080 = vmatpush.msra.mxu0 %v579
          %1081 = vmatpush.msra.mxu0 %v575
          %1082 = vmatpush.msra.mxu0 %v571
          %1083 = vmatpush.msra.mxu0 %v567
          %1084 = vmatpush.msra.mxu0 %v563
          %1085 = vmatpush.msra.mxu0 %v559
          %1086 = vmatpush.msra.mxu0 %v555
          %1087 = vmatpush.msra.mxu0 %v551
          %1088 = vmatpush.msra.mxu0 %v547
          %1089 = vmatpush.msra.mxu0 %v543
          %1090 = vmatpush.msra.mxu0 %v539
          %1091 = vmatpush.msra.mxu0 %v535
          %1092 = vmatpush.msra.mxu0 %v531
          %1093 = vmatmul.f32.gmra.mxu0 %v1070
          %v1094 = vpop.f32.mrf.mxu0
          %v1095 = vadd.f32 0.0, %v1094
          %1096 = vdwg.mxu0
          %1097 = vmatpush.msra.mxu0 %v592
          %1098 = vmatpush.msra.mxu0 %v588
          %1099 = vmatpush.msra.mxu0 %v584
          %1100 = vmatpush.msra.mxu0 %v580
          %1101 = vmatpush.msra.mxu0 %v576
          %1102 = vmatpush.msra.mxu0 %v572
          %1103 = vmatpush.msra.mxu0 %v568
          %1104 = vmatpush.msra.mxu0 %v564
          %1105 = vmatpush.msra.mxu0 %v560
          %1106 = vmatpush.msra.mxu0 %v556
          %1107 = vmatpush.msra.mxu0 %v552
          %1108 = vmatpush.msra.mxu0 %v548
          %1109 = vmatpush.msra.mxu0 %v544
          %1110 = vmatpush.msra.mxu0 %v540
          %1111 = vmatpush.msra.mxu0 %v536
          %1112 = vmatpush.msra.mxu0 %v532
          %1113 = vmatmul.f32.gmra.mxu0 %v1070
          %v1114 = vpop.f32.mrf.mxu0
          %v1115 = vadd.f32 0.0, %v1114
          %1116 = vdwg.mxu0
          %1117 = vmatpush.msra.mxu0 %v593
          %1118 = vmatpush.msra.mxu0 %v589
          %1119 = vmatpush.msra.mxu0 %v585
          %1120 = vmatpush.msra.mxu0 %v581
          %1121 = vmatpush.msra.mxu0 %v577
          %1122 = vmatpush.msra.mxu0 %v573
          %1123 = vmatpush.msra.mxu0 %v569
          %1124 = vmatpush.msra.mxu0 %v565
          %1125 = vmatpush.msra.mxu0 %v561
          %1126 = vmatpush.msra.mxu0 %v557
          %1127 = vmatpush.msra.mxu0 %v553
          %1128 = vmatpush.msra.mxu0 %v549
          %1129 = vmatpush.msra.mxu0 %v545
          %1130 = vmatpush.msra.mxu0 %v541
          %1131 = vmatpush.msra.mxu0 %v537
          %1132 = vmatpush.msra.mxu0 %v533
          %1133 = vmatmul.f32.gmra.mxu0 %v1070
          %v1134 = vpop.f32.mrf.mxu0
          %v1135 = vadd.f32 0.0, %v1134
          %1136 = vdwg.mxu0
          %1137 = vmatpush.msra.mxu0 %v594
          %1138 = vmatpush.msra.mxu0 %v590
          %1139 = vmatpush.msra.mxu0 %v586
          %1140 = vmatpush.msra.mxu0 %v582
          %1141 = vmatpush.msra.mxu0 %v578
          %1142 = vmatpush.msra.mxu0 %v574
          %1143 = vmatpush.msra.mxu0 %v570
          %1144 = vmatpush.msra.mxu0 %v566
          %1145 = vmatpush.msra.mxu0 %v562
          %1146 = vmatpush.msra.mxu0 %v558
          %1147 = vmatpush.msra.mxu0 %v554
          %1148 = vmatpush.msra.mxu0 %v550
          %1149 = vmatpush.msra.mxu0 %v546
          %1150 = vmatpush.msra.mxu0 %v542
          %1151 = vmatpush.msra.mxu0 %v538
          %1152 = vmatpush.msra.mxu0 %v534
          %1153 = vmatmul.f32.gmra.mxu0 %v1070
          %v1154 = vpop.f32.mrf.mxu0
          %v1155 = vadd.f32 0.0, %v1154
          %1156 = vdwg.mxu0
          %v1157 = vadd.f32 %v1073, %v1095
          %v1158 = vadd.f32 %v1074, %v1115
          %v1159 = vadd.f32 %v1075, %v1135
          %v1160 = vadd.f32 %v1076, %v1155
          %v1161 = vxor.u32 %v1157, 2147483648
          %v1162 = vxor.u32 %v1158, 2147483648
          %v1163 = vxor.u32 %v1159, 2147483648
          %v1164 = vmul.f32 %v1161, 1.442695
          %v1165 = vpow.pop %v1164
          %v1166 = vmul.f32 %v1162, 1.442695
          %v1167 = vpow.pop %v1166
          %v1168 = vmul.f32 %v1163, 1.442695
          %v1169 = vpow.pop %v1168
          %v1170 = vadd.f32 %v1165, 1.0
          %v1171 = vadd.f32 %v1167, 1.0
          %v1172 = vadd.f32 %v1169, 1.0
          %v1173 = vrcp.pop %v1170
          %v1174 = vmul.f32 %v1170, %v1173
          %v1175 = vsub.f32 1.0, %v1174
          %v1176 = vmul.f32 %v1173, %v1175
          %v1177 = vadd.f32 %v1173, %v1176
          %vm1178 = vweird.f32 %v1170
          %vm1179 = vweird.f32 %v1173
          %vm1180 = vmor %vm1178, %vm1179
          %v1181 = vsel %vm1180, %v1173, %v1177
          %v1182 = vand.u32 2147483647, %v1170
          %vm1183 = vcmp.eq.f32.partialorder %v1182, 8.507059e+37
          %v1184 = vand.u32 %v1170, 2147483648
          %v1185 = vor.u32 1.1754944e-38, %v1184
          %v1186 = vsel %vm1183, %v1185, %v1181
          %v1187 = vmul.f32 1.0, %v1186
          %v1188 = vrcp.pop %v1171
          %v1189 = vmul.f32 %v1171, %v1188
          %v1190 = vsub.f32 1.0, %v1189
          %v1191 = vmul.f32 %v1188, %v1190
          %v1192 = vadd.f32 %v1188, %v1191
          %vm1193 = vweird.f32 %v1171
          %vm1194 = vweird.f32 %v1188
          %vm1195 = vmor %vm1193, %vm1194
          %v1196 = vsel %vm1195, %v1188, %v1192
          %v1197 = vand.u32 2147483647, %v1171
          %vm1198 = vcmp.eq.f32.partialorder %v1197, 8.507059e+37
          %v1199 = vand.u32 %v1171, 2147483648
          %v1200 = vor.u32 1.1754944e-38, %v1199
          %v1201 = vsel %vm1198, %v1200, %v1196
          %v1202 = vmul.f32 1.0, %v1201
          %v1203 = vrcp.pop %v1172
          %v1204 = vmul.f32 %v1172, %v1203
          %v1205 = vsub.f32 1.0, %v1204
          %v1206 = vmul.f32 %v1203, %v1205
          %v1207 = vadd.f32 %v1203, %v1206
          %vm1208 = vweird.f32 %v1172
          %vm1209 = vweird.f32 %v1203
          %vm1210 = vmor %vm1208, %vm1209
          %v1211 = vsel %vm1210, %v1203, %v1207
          %v1212 = vand.u32 2147483647, %v1172
          %vm1213 = vcmp.eq.f32.partialorder %v1212, 8.507059e+37
          %v1214 = vand.u32 %v1172, 2147483648
          %v1215 = vor.u32 1.1754944e-38, %v1214
          %v1216 = vsel %vm1213, %v1215, %v1211
          %v1217 = vmul.f32 1.0, %v1216
          %v1218 = vtanh.pop %v1160
          %v1219 = vmul.f32 %v1202, %v1071
          %v1220 = vmul.f32 %v1187, %v1218
          %v1221 = vadd.f32 %v1219, %v1220
          %v1222 = vtanh.pop %v1221
          %v1223 = vmul.f32 %v1217, %v1222
          %1224 = vst [vmem:[#allocation2] sm:$0xff] %v1223
          %1225 = vst [vmem:[#allocation3] sm:$0xff] %v1221
          %s1226 = scalar_lea.vmem [#allocation4], 16
          %1227 = vst [vmem:[%s1226] sm:$0xff] %v1223
        $region100: #{tpu_custom_call.1} parent=55 // pred_fallthru
          _
        %s1228 = sadd.s32 %s741, 3
        %p1229 = scmp.lt.s32.totalorder %s1228, 8
        // Predicated region
        $region101: #{tpu_custom_call.1} parent=55 // pred_check
          %p1230 = pneg %p1229
        $region102: #{tpu_custom_call.1} parent=55 // pred_check_branch
          %1232 = sbr.rel (%p1230) target = $region104
        $region103: #{tpu_custom_call.1} parent=55 // pred_region
          %v1233 = vld [vmem:[#allocation2] sm:$0xff]
          %v1234 = vld [vmem:[#allocation3] sm:$0xff]
          %s1235 = scalar_lea.vmem [#allocation5], 96
          %v1236 = vld [vmem:[%s1235] sm:$0xff]
          %v1237 = vld [vmem:[%s1235 + $0x8] sm:$0xff]
          %v1238 = vld [vmem:[%s1235 + $0x10] sm:$0xff]
          %v1239 = vld [vmem:[%s1235 + $0x18] sm:$0xff]
          %1240 = vmatpush.msra.mxu0 %v591
          %1241 = vmatpush.msra.mxu0 %v587
          %1242 = vmatpush.msra.mxu0 %v583
          %1243 = vmatpush.msra.mxu0 %v579
          %1244 = vmatpush.msra.mxu0 %v575
          %1245 = vmatpush.msra.mxu0 %v571
          %1246 = vmatpush.msra.mxu0 %v567
          %1247 = vmatpush.msra.mxu0 %v563
          %1248 = vmatpush.msra.mxu0 %v559
          %1249 = vmatpush.msra.mxu0 %v555
          %1250 = vmatpush.msra.mxu0 %v551
          %1251 = vmatpush.msra.mxu0 %v547
          %1252 = vmatpush.msra.mxu0 %v543
          %1253 = vmatpush.msra.mxu0 %v539
          %1254 = vmatpush.msra.mxu0 %v535
          %1255 = vmatpush.msra.mxu0 %v531
          %1256 = vmatmul.f32.gmra.mxu0 %v1233
          %v1257 = vpop.f32.mrf.mxu0
          %v1258 = vadd.f32 0.0, %v1257
          %1259 = vdwg.mxu0
          %1260 = vmatpush.msra.mxu0 %v592
          %1261 = vmatpush.msra.mxu0 %v588
          %1262 = vmatpush.msra.mxu0 %v584
          %1263 = vmatpush.msra.mxu0 %v580
          %1264 = vmatpush.msra.mxu0 %v576
          %1265 = vmatpush.msra.mxu0 %v572
          %1266 = vmatpush.msra.mxu0 %v568
          %1267 = vmatpush.msra.mxu0 %v564
          %1268 = vmatpush.msra.mxu0 %v560
          %1269 = vmatpush.msra.mxu0 %v556
          %1270 = vmatpush.msra.mxu0 %v552
          %1271 = vmatpush.msra.mxu0 %v548
          %1272 = vmatpush.msra.mxu0 %v544
          %1273 = vmatpush.msra.mxu0 %v540
          %1274 = vmatpush.msra.mxu0 %v536
          %1275 = vmatpush.msra.mxu0 %v532
          %1276 = vmatmul.f32.gmra.mxu0 %v1233
          %v1277 = vpop.f32.mrf.mxu0
          %v1278 = vadd.f32 0.0, %v1277
          %1279 = vdwg.mxu0
          %1280 = vmatpush.msra.mxu0 %v593
          %1281 = vmatpush.msra.mxu0 %v589
          %1282 = vmatpush.msra.mxu0 %v585
          %1283 = vmatpush.msra.mxu0 %v581
          %1284 = vmatpush.msra.mxu0 %v577
          %1285 = vmatpush.msra.mxu0 %v573
          %1286 = vmatpush.msra.mxu0 %v569
          %1287 = vmatpush.msra.mxu0 %v565
          %1288 = vmatpush.msra.mxu0 %v561
          %1289 = vmatpush.msra.mxu0 %v557
          %1290 = vmatpush.msra.mxu0 %v553
          %1291 = vmatpush.msra.mxu0 %v549
          %1292 = vmatpush.msra.mxu0 %v545
          %1293 = vmatpush.msra.mxu0 %v541
          %1294 = vmatpush.msra.mxu0 %v537
          %1295 = vmatpush.msra.mxu0 %v533
          %1296 = vmatmul.f32.gmra.mxu0 %v1233
          %v1297 = vpop.f32.mrf.mxu0
          %v1298 = vadd.f32 0.0, %v1297
          %1299 = vdwg.mxu0
          %1300 = vmatpush.msra.mxu0 %v594
          %1301 = vmatpush.msra.mxu0 %v590
          %1302 = vmatpush.msra.mxu0 %v586
          %1303 = vmatpush.msra.mxu0 %v582
          %1304 = vmatpush.msra.mxu0 %v578
          %1305 = vmatpush.msra.mxu0 %v574
          %1306 = vmatpush.msra.mxu0 %v570
          %1307 = vmatpush.msra.mxu0 %v566
          %1308 = vmatpush.msra.mxu0 %v562
          %1309 = vmatpush.msra.mxu0 %v558
          %1310 = vmatpush.msra.mxu0 %v554
          %1311 = vmatpush.msra.mxu0 %v550
          %1312 = vmatpush.msra.mxu0 %v546
          %1313 = vmatpush.msra.mxu0 %v542
          %1314 = vmatpush.msra.mxu0 %v538
          %1315 = vmatpush.msra.mxu0 %v534
          %1316 = vmatmul.f32.gmra.mxu0 %v1233
          %v1317 = vpop.f32.mrf.mxu0
          %v1318 = vadd.f32 0.0, %v1317
          %1319 = vdwg.mxu0
          %v1320 = vadd.f32 %v1236, %v1258
          %v1321 = vadd.f32 %v1237, %v1278
          %v1322 = vadd.f32 %v1238, %v1298
          %v1323 = vadd.f32 %v1239, %v1318
          %v1324 = vxor.u32 %v1320, 2147483648
          %v1325 = vxor.u32 %v1321, 2147483648
          %v1326 = vxor.u32 %v1322, 2147483648
          %v1327 = vmul.f32 %v1324, 1.442695
          %v1328 = vpow.pop %v1327
          %v1329 = vmul.f32 %v1325, 1.442695
          %v1330 = vpow.pop %v1329
          %v1331 = vmul.f32 %v1326, 1.442695
          %v1332 = vpow.pop %v1331
          %v1333 = vadd.f32 %v1328, 1.0
          %v1334 = vadd.f32 %v1330, 1.0
          %v1335 = vadd.f32 %v1332, 1.0
          %v1336 = vrcp.pop %v1333
          %v1337 = vmul.f32 %v1333, %v1336
          %v1338 = vsub.f32 1.0, %v1337
          %v1339 = vmul.f32 %v1336, %v1338
          %v1340 = vadd.f32 %v1336, %v1339
          %vm1341 = vweird.f32 %v1333
          %vm1342 = vweird.f32 %v1336
          %vm1343 = vmor %vm1341, %vm1342
          %v1344 = vsel %vm1343, %v1336, %v1340
          %v1345 = vand.u32 2147483647, %v1333
          %vm1346 = vcmp.eq.f32.partialorder %v1345, 8.507059e+37
          %v1347 = vand.u32 %v1333, 2147483648
          %v1348 = vor.u32 1.1754944e-38, %v1347
          %v1349 = vsel %vm1346, %v1348, %v1344
          %v1350 = vmul.f32 1.0, %v1349
          %v1351 = vrcp.pop %v1334
          %v1352 = vmul.f32 %v1334, %v1351
          %v1353 = vsub.f32 1.0, %v1352
          %v1354 = vmul.f32 %v1351, %v1353
          %v1355 = vadd.f32 %v1351, %v1354
          %vm1356 = vweird.f32 %v1334
          %vm1357 = vweird.f32 %v1351
          %vm1358 = vmor %vm1356, %vm1357
          %v1359 = vsel %vm1358, %v1351, %v1355
          %v1360 = vand.u32 2147483647, %v1334
          %vm1361 = vcmp.eq.f32.partialorder %v1360, 8.507059e+37
          %v1362 = vand.u32 %v1334, 2147483648
          %v1363 = vor.u32 1.1754944e-38, %v1362
          %v1364 = vsel %vm1361, %v1363, %v1359
          %v1365 = vmul.f32 1.0, %v1364
          %v1366 = vrcp.pop %v1335
          %v1367 = vmul.f32 %v1335, %v1366
          %v1368 = vsub.f32 1.0, %v1367
          %v1369 = vmul.f32 %v1366, %v1368
          %v1370 = vadd.f32 %v1366, %v1369
          %vm1371 = vweird.f32 %v1335
          %vm1372 = vweird.f32 %v1366
          %vm1373 = vmor %vm1371, %vm1372
          %v1374 = vsel %vm1373, %v1366, %v1370
          %v1375 = vand.u32 2147483647, %v1335
          %vm1376 = vcmp.eq.f32.partialorder %v1375, 8.507059e+37
          %v1377 = vand.u32 %v1335, 2147483648
          %v1378 = vor.u32 1.1754944e-38, %v1377
          %v1379 = vsel %vm1376, %v1378, %v1374
          %v1380 = vmul.f32 1.0, %v1379
          %v1381 = vtanh.pop %v1323
          %v1382 = vmul.f32 %v1365, %v1234
          %v1383 = vmul.f32 %v1350, %v1381
          %v1384 = vadd.f32 %v1382, %v1383
          %v1385 = vtanh.pop %v1384
          %v1386 = vmul.f32 %v1380, %v1385
          %1387 = vst [vmem:[#allocation2] sm:$0xff] %v1386
          %1388 = vst [vmem:[#allocation3] sm:$0xff] %v1384
          %s1389 = scalar_lea.vmem [#allocation4], 24
          %1390 = vst [vmem:[%s1389] sm:$0xff] %v1386
        $region104: #{tpu_custom_call.1} parent=55 // pred_fallthru
          _
        %v1391 = vld [vmem:[#allocation14] sm:$0xff]
        %v1392 = vld [vmem:[#allocation14 + $0x8] sm:$0xff]
        %v1393 = vld [vmem:[#allocation14 + $0x10] sm:$0xff]
        %v1394 = vld [vmem:[#allocation14 + $0x18] sm:$0xff]
        %v1395 = vld [vmem:[#allocation14 + $0x20] sm:$0xff]
        %v1396 = vld [vmem:[#allocation14 + $0x28] sm:$0xff]
        %v1397 = vld [vmem:[#allocation14 + $0x30] sm:$0xff]
        %v1398 = vld [vmem:[#allocation14 + $0x38] sm:$0xff]
        %v1399 = vld [vmem:[#allocation14 + $0x40] sm:$0xff]
        %v1400 = vld [vmem:[#allocation14 + $0x48] sm:$0xff]
        %v1401 = vld [vmem:[#allocation14 + $0x50] sm:$0xff]
        %v1402 = vld [vmem:[#allocation14 + $0x58] sm:$0xff]
        %v1403 = vld [vmem:[#allocation14 + $0x60] sm:$0xff]
        %v1404 = vld [vmem:[#allocation14 + $0x68] sm:$0xff]
        %v1405 = vld [vmem:[#allocation14 + $0x70] sm:$0xff]
        %v1406 = vld [vmem:[#allocation14 + $0x78] sm:$0xff]
        %v1407 = vld [vmem:[#allocation14 + $0x80] sm:$0xff]
        %v1408 = vld [vmem:[#allocation14 + $0x88] sm:$0xff]
        %v1409 = vld [vmem:[#allocation14 + $0x90] sm:$0xff]
        %v1410 = vld [vmem:[#allocation14 + $0x98] sm:$0xff]
        %v1411 = vld [vmem:[#allocation14 + $0xa0] sm:$0xff]
        %v1412 = vld [vmem:[#allocation14 + $0xa8] sm:$0xff]
        %v1413 = vld [vmem:[#allocation14 + $0xb0] sm:$0xff]
        %v1414 = vld [vmem:[#allocation14 + $0xb8] sm:$0xff]
        %v1415 = vld [vmem:[#allocation14 + $0xc0] sm:$0xff]
        %v1416 = vld [vmem:[#allocation14 + $0xc8] sm:$0xff]
        %v1417 = vld [vmem:[#allocation14 + $0xd0] sm:$0xff]
        %v1418 = vld [vmem:[#allocation14 + $0xd8] sm:$0xff]
        %v1419 = vld [vmem:[#allocation14 + $0xe0] sm:$0xff]
        %v1420 = vld [vmem:[#allocation14 + $0xe8] sm:$0xff]
        %v1421 = vld [vmem:[#allocation14 + $0xf0] sm:$0xff]
        %v1422 = vld [vmem:[#allocation14 + $0xf8] sm:$0xff]
        %v1423 = vld [vmem:[#allocation14 + $0x100] sm:$0xff]
        %v1424 = vld [vmem:[#allocation14 + $0x108] sm:$0xff]
        %v1425 = vld [vmem:[#allocation14 + $0x110] sm:$0xff]
        %v1426 = vld [vmem:[#allocation14 + $0x118] sm:$0xff]
        %v1427 = vld [vmem:[#allocation14 + $0x120] sm:$0xff]
        %v1428 = vld [vmem:[#allocation14 + $0x128] sm:$0xff]
        %v1429 = vld [vmem:[#allocation14 + $0x130] sm:$0xff]
        %v1430 = vld [vmem:[#allocation14 + $0x138] sm:$0xff]
        %v1431 = vld [vmem:[#allocation14 + $0x140] sm:$0xff]
        %v1432 = vld [vmem:[#allocation14 + $0x148] sm:$0xff]
        %v1433 = vld [vmem:[#allocation14 + $0x150] sm:$0xff]
        %v1434 = vld [vmem:[#allocation14 + $0x158] sm:$0xff]
        %v1435 = vld [vmem:[#allocation14 + $0x160] sm:$0xff]
        %v1436 = vld [vmem:[#allocation14 + $0x168] sm:$0xff]
        %v1437 = vld [vmem:[#allocation14 + $0x170] sm:$0xff]
        %v1438 = vld [vmem:[#allocation14 + $0x178] sm:$0xff]
        %v1439 = vld [vmem:[#allocation14 + $0x180] sm:$0xff]
        %v1440 = vld [vmem:[#allocation14 + $0x188] sm:$0xff]
        %v1441 = vld [vmem:[#allocation14 + $0x190] sm:$0xff]
        %v1442 = vld [vmem:[#allocation14 + $0x198] sm:$0xff]
        %v1443 = vld [vmem:[#allocation14 + $0x1a0] sm:$0xff]
        %v1444 = vld [vmem:[#allocation14 + $0x1a8] sm:$0xff]
        %v1445 = vld [vmem:[#allocation14 + $0x1b0] sm:$0xff]
        %v1446 = vld [vmem:[#allocation14 + $0x1b8] sm:$0xff]
        %v1447 = vld [vmem:[#allocation14 + $0x1c0] sm:$0xff]
        %v1448 = vld [vmem:[#allocation14 + $0x1c8] sm:$0xff]
        %v1449 = vld [vmem:[#allocation14 + $0x1d0] sm:$0xff]
        %v1450 = vld [vmem:[#allocation14 + $0x1d8] sm:$0xff]
        %v1451 = vld [vmem:[#allocation14 + $0x1e0] sm:$0xff]
        %v1452 = vld [vmem:[#allocation14 + $0x1e8] sm:$0xff]
        %v1453 = vld [vmem:[#allocation14 + $0x1f0] sm:$0xff]
        %v1454 = vld [vmem:[#allocation14 + $0x1f8] sm:$0xff]
        %v1455 = vld [vmem:[#allocation15] sm:$0xff]
        %v1456 = vld [vmem:[#allocation15 + $0x8] sm:$0xff]
        %v1457 = vld [vmem:[#allocation15 + $0x10] sm:$0xff]
        %v1458 = vld [vmem:[#allocation15 + $0x18] sm:$0xff]
        %v1459 = vld [vmem:[#allocation15 + $0x20] sm:$0xff]
        %v1460 = vld [vmem:[#allocation15 + $0x28] sm:$0xff]
        %v1461 = vld [vmem:[#allocation15 + $0x30] sm:$0xff]
        %v1462 = vld [vmem:[#allocation15 + $0x38] sm:$0xff]
        %v1463 = vld [vmem:[#allocation15 + $0x40] sm:$0xff]
        %v1464 = vld [vmem:[#allocation15 + $0x48] sm:$0xff]
        %v1465 = vld [vmem:[#allocation15 + $0x50] sm:$0xff]
        %v1466 = vld [vmem:[#allocation15 + $0x58] sm:$0xff]
        %v1467 = vld [vmem:[#allocation15 + $0x60] sm:$0xff]
        %v1468 = vld [vmem:[#allocation15 + $0x68] sm:$0xff]
        %v1469 = vld [vmem:[#allocation15 + $0x70] sm:$0xff]
        %v1470 = vld [vmem:[#allocation15 + $0x78] sm:$0xff]
        %v1471 = vld [vmem:[#allocation15 + $0x80] sm:$0xff]
        %v1472 = vld [vmem:[#allocation15 + $0x88] sm:$0xff]
        %v1473 = vld [vmem:[#allocation15 + $0x90] sm:$0xff]
        %v1474 = vld [vmem:[#allocation15 + $0x98] sm:$0xff]
        %v1475 = vld [vmem:[#allocation15 + $0xa0] sm:$0xff]
        %v1476 = vld [vmem:[#allocation15 + $0xa8] sm:$0xff]
        %v1477 = vld [vmem:[#allocation15 + $0xb0] sm:$0xff]
        %v1478 = vld [vmem:[#allocation15 + $0xb8] sm:$0xff]
        %v1479 = vld [vmem:[#allocation15 + $0xc0] sm:$0xff]
        %v1480 = vld [vmem:[#allocation15 + $0xc8] sm:$0xff]
        %v1481 = vld [vmem:[#allocation15 + $0xd0] sm:$0xff]
        %v1482 = vld [vmem:[#allocation15 + $0xd8] sm:$0xff]
        %v1483 = vld [vmem:[#allocation15 + $0xe0] sm:$0xff]
        %v1484 = vld [vmem:[#allocation15 + $0xe8] sm:$0xff]
        %v1485 = vld [vmem:[#allocation15 + $0xf0] sm:$0xff]
        %v1486 = vld [vmem:[#allocation15 + $0xf8] sm:$0xff]
        %v1487 = vld [vmem:[#allocation15 + $0x100] sm:$0xff]
        %v1488 = vld [vmem:[#allocation15 + $0x108] sm:$0xff]
        %v1489 = vld [vmem:[#allocation15 + $0x110] sm:$0xff]
        %v1490 = vld [vmem:[#allocation15 + $0x118] sm:$0xff]
        %v1491 = vld [vmem:[#allocation15 + $0x120] sm:$0xff]
        %v1492 = vld [vmem:[#allocation15 + $0x128] sm:$0xff]
        %v1493 = vld [vmem:[#allocation15 + $0x130] sm:$0xff]
        %v1494 = vld [vmem:[#allocation15 + $0x138] sm:$0xff]
        %v1495 = vld [vmem:[#allocation15 + $0x140] sm:$0xff]
        %v1496 = vld [vmem:[#allocation15 + $0x148] sm:$0xff]
        %v1497 = vld [vmem:[#allocation15 + $0x150] sm:$0xff]
        %v1498 = vld [vmem:[#allocation15 + $0x158] sm:$0xff]
        %v1499 = vld [vmem:[#allocation15 + $0x160] sm:$0xff]
        %v1500 = vld [vmem:[#allocation15 + $0x168] sm:$0xff]
        %v1501 = vld [vmem:[#allocation15 + $0x170] sm:$0xff]
        %v1502 = vld [vmem:[#allocation15 + $0x178] sm:$0xff]
        %v1503 = vld [vmem:[#allocation15 + $0x180] sm:$0xff]
        %v1504 = vld [vmem:[#allocation15 + $0x188] sm:$0xff]
        %v1505 = vld [vmem:[#allocation15 + $0x190] sm:$0xff]
        %v1506 = vld [vmem:[#allocation15 + $0x198] sm:$0xff]
        %v1507 = vld [vmem:[#allocation15 + $0x1a0] sm:$0xff]
        %v1508 = vld [vmem:[#allocation15 + $0x1a8] sm:$0xff]
        %v1509 = vld [vmem:[#allocation15 + $0x1b0] sm:$0xff]
        %v1510 = vld [vmem:[#allocation15 + $0x1b8] sm:$0xff]
        %v1511 = vld [vmem:[#allocation15 + $0x1c0] sm:$0xff]
        %v1512 = vld [vmem:[#allocation15 + $0x1c8] sm:$0xff]
        %v1513 = vld [vmem:[#allocation15 + $0x1d0] sm:$0xff]
        %v1514 = vld [vmem:[#allocation15 + $0x1d8] sm:$0xff]
        %v1515 = vld [vmem:[#allocation15 + $0x1e0] sm:$0xff]
        %v1516 = vld [vmem:[#allocation15 + $0x1e8] sm:$0xff]
        %v1517 = vld [vmem:[#allocation15 + $0x1f0] sm:$0xff]
        %v1518 = vld [vmem:[#allocation15 + $0x1f8] sm:$0xff]
        %v1519 = vld [vmem:[%s6] sm:$0xf]
        %v1520 = vld [vmem:[#allocation4] sm:$0xff]
        %v1521 = vld [vmem:[#allocation4 + $0x8] sm:$0xff]
        %v1522 = vld [vmem:[#allocation4 + $0x10] sm:$0xff]
        %v1523 = vld [vmem:[#allocation4 + $0x18] sm:$0xff]
        %v1525 = vperm.slane %v1519, 0
        %v1526 = vperm.slane %v1519, 1
        %v1527 = vperm.slane %v1519, 2
        %v1528 = vperm.slane %v1519, 3
        %1533 = vmatpush.msra.mxu0 %v1451
        %1534 = vmatpush.msra.mxu0 %v1447
        %1535 = vmatpush.msra.mxu0 %v1443
        %1536 = vmatpush.msra.mxu0 %v1439
        %1537 = vmatpush.msra.mxu0 %v1435
        %1538 = vmatpush.msra.mxu0 %v1431
        %1539 = vmatpush.msra.mxu0 %v1427
        %1540 = vmatpush.msra.mxu0 %v1423
        %1541 = vmatpush.msra.mxu0 %v1419
        %1542 = vmatpush.msra.mxu0 %v1415
        %1543 = vmatpush.msra.mxu0 %v1411
        %1544 = vmatpush.msra.mxu0 %v1407
        %1545 = vmatpush.msra.mxu0 %v1403
        %1546 = vmatpush.msra.mxu0 %v1399
        %1547 = vmatpush.msra.mxu0 %v1395
        %1548 = vmatpush.msra.mxu0 %v1391
        %1549 = vmatmul.f32.gmra.mxu0 %v1520
        %v1550 = vpop.f32.mrf.mxu0
        %v1551 = vadd.f32 %v1525, %v1550
        %1552 = vmatmul.f32.gmra.mxu0 %v1521
        %v1553 = vpop.f32.mrf.mxu0
        %v1554 = vadd.f32 %v1525, %v1553
        %1555 = vmatmul.f32.gmra.mxu0 %v1522
        %v1556 = vpop.f32.mrf.mxu0
        %v1557 = vadd.f32 %v1525, %v1556
        %1558 = vmatmul.f32.gmra.mxu0 %v1523
        %v1559 = vpop.f32.mrf.mxu0
        %v1560 = vadd.f32 %v1525, %v1559
        %1561 = vdwg.mxu0
        %1562 = vmatpush.msra.mxu0 %v1452
        %1563 = vmatpush.msra.mxu0 %v1448
        %1564 = vmatpush.msra.mxu0 %v1444
        %1565 = vmatpush.msra.mxu0 %v1440
        %1566 = vmatpush.msra.mxu0 %v1436
        %1567 = vmatpush.msra.mxu0 %v1432
        %1568 = vmatpush.msra.mxu0 %v1428
        %1569 = vmatpush.msra.mxu0 %v1424
        %1570 = vmatpush.msra.mxu0 %v1420
        %1571 = vmatpush.msra.mxu0 %v1416
        %1572 = vmatpush.msra.mxu0 %v1412
        %1573 = vmatpush.msra.mxu0 %v1408
        %1574 = vmatpush.msra.mxu0 %v1404
        %1575 = vmatpush.msra.mxu0 %v1400
        %1576 = vmatpush.msra.mxu0 %v1396
        %1577 = vmatpush.msra.mxu0 %v1392
        %1578 = vmatmul.f32.gmra.mxu0 %v1520
        %v1579 = vpop.f32.mrf.mxu0
        %v1580 = vadd.f32 %v1526, %v1579
        %1581 = vmatmul.f32.gmra.mxu0 %v1521
        %v1582 = vpop.f32.mrf.mxu0
        %v1583 = vadd.f32 %v1526, %v1582
        %1584 = vmatmul.f32.gmra.mxu0 %v1522
        %v1585 = vpop.f32.mrf.mxu0
        %v1586 = vadd.f32 %v1526, %v1585
        %1587 = vmatmul.f32.gmra.mxu0 %v1523
        %v1588 = vpop.f32.mrf.mxu0
        %v1589 = vadd.f32 %v1526, %v1588
        %1590 = vdwg.mxu0
        %1591 = vmatpush.msra.mxu0 %v1453
        %1592 = vmatpush.msra.mxu0 %v1449
        %1593 = vmatpush.msra.mxu0 %v1445
        %1594 = vmatpush.msra.mxu0 %v1441
        %1595 = vmatpush.msra.mxu0 %v1437
        %1596 = vmatpush.msra.mxu0 %v1433
        %1597 = vmatpush.msra.mxu0 %v1429
        %1598 = vmatpush.msra.mxu0 %v1425
        %1599 = vmatpush.msra.mxu0 %v1421
        %1600 = vmatpush.msra.mxu0 %v1417
        %1601 = vmatpush.msra.mxu0 %v1413
        %1602 = vmatpush.msra.mxu0 %v1409
        %1603 = vmatpush.msra.mxu0 %v1405
        %1604 = vmatpush.msra.mxu0 %v1401
        %1605 = vmatpush.msra.mxu0 %v1397
        %1606 = vmatpush.msra.mxu0 %v1393
        %1607 = vmatmul.f32.gmra.mxu0 %v1520
        %v1608 = vpop.f32.mrf.mxu0
        %v1609 = vadd.f32 %v1527, %v1608
        %1610 = vmatmul.f32.gmra.mxu0 %v1521
        %v1611 = vpop.f32.mrf.mxu0
        %v1612 = vadd.f32 %v1527, %v1611
        %1613 = vmatmul.f32.gmra.mxu0 %v1522
        %v1614 = vpop.f32.mrf.mxu0
        %v1615 = vadd.f32 %v1527, %v1614
        %1616 = vmatmul.f32.gmra.mxu0 %v1523
        %v1617 = vpop.f32.mrf.mxu0
        %v1618 = vadd.f32 %v1527, %v1617
        %1619 = vdwg.mxu0
        %1620 = vmatpush.msra.mxu0 %v1454
        %1621 = vmatpush.msra.mxu0 %v1450
        %1622 = vmatpush.msra.mxu0 %v1446
        %1623 = vmatpush.msra.mxu0 %v1442
        %1624 = vmatpush.msra.mxu0 %v1438
        %1625 = vmatpush.msra.mxu0 %v1434
        %1626 = vmatpush.msra.mxu0 %v1430
        %1627 = vmatpush.msra.mxu0 %v1426
        %1628 = vmatpush.msra.mxu0 %v1422
        %1629 = vmatpush.msra.mxu0 %v1418
        %1630 = vmatpush.msra.mxu0 %v1414
        %1631 = vmatpush.msra.mxu0 %v1410
        %1632 = vmatpush.msra.mxu0 %v1406
        %1633 = vmatpush.msra.mxu0 %v1402
        %1634 = vmatpush.msra.mxu0 %v1398
        %1635 = vmatpush.msra.mxu0 %v1394
        %1636 = vmatmul.f32.gmra.mxu0 %v1520
        %v1637 = vpop.f32.mrf.mxu0
        %v1638 = vadd.f32 %v1528, %v1637
        %1639 = vmatmul.f32.gmra.mxu0 %v1521
        %v1640 = vpop.f32.mrf.mxu0
        %v1641 = vadd.f32 %v1528, %v1640
        %1642 = vmatmul.f32.gmra.mxu0 %v1522
        %v1643 = vpop.f32.mrf.mxu0
        %v1644 = vadd.f32 %v1528, %v1643
        %1645 = vmatmul.f32.gmra.mxu0 %v1523
        %v1646 = vpop.f32.mrf.mxu0
        %v1647 = vadd.f32 %v1528, %v1646
        %1648 = vdwg.mxu0
        %1649 = vst [vmem:[#allocation5] sm:$0xff] %v1551
        %1650 = vst [vmem:[#allocation5 + $0x8] sm:$0xff] %v1580
        %1651 = vst [vmem:[#allocation5 + $0x10] sm:$0xff] %v1609
        %1652 = vst [vmem:[#allocation5 + $0x18] sm:$0xff] %v1638
        %1653 = vst [vmem:[#allocation5 + $0x20] sm:$0xff] %v1554
        %1654 = vst [vmem:[#allocation5 + $0x28] sm:$0xff] %v1583
        %1655 = vst [vmem:[#allocation5 + $0x30] sm:$0xff] %v1612
        %1656 = vst [vmem:[#allocation5 + $0x38] sm:$0xff] %v1641
        %1657 = vst [vmem:[#allocation5 + $0x40] sm:$0xff] %v1557
        %1658 = vst [vmem:[#allocation5 + $0x48] sm:$0xff] %v1586
        %1659 = vst [vmem:[#allocation5 + $0x50] sm:$0xff] %v1615
        %1660 = vst [vmem:[#allocation5 + $0x58] sm:$0xff] %v1644
        %1661 = vst [vmem:[#allocation5 + $0x60] sm:$0xff] %v1560
        %1662 = vst [vmem:[#allocation5 + $0x68] sm:$0xff] %v1589
        %1663 = vst [vmem:[#allocation5 + $0x70] sm:$0xff] %v1618
        %1664 = vst [vmem:[#allocation5 + $0x78] sm:$0xff] %v1647
        // Predicated region
        $region105: #{tpu_custom_call.1} parent=55 // pred_check
          %p1665 = pneg %p742
        $region106: #{tpu_custom_call.1} parent=55 // pred_check_branch
          %1667 = sbr.rel (%p1665) target = $region108
        $region107: #{tpu_custom_call.1} parent=55 // pred_region
          %s1668 = scalar_lea.vmem [#allocation2], 8
          %v1669 = vld [vmem:[%s1668] sm:$0xff]
          %s1670 = scalar_lea.vmem [#allocation3], 8
          %v1671 = vld [vmem:[%s1670] sm:$0xff]
          %v1672 = vld [vmem:[#allocation5] sm:$0xff]
          %v1673 = vld [vmem:[#allocation5 + $0x8] sm:$0xff]
          %v1674 = vld [vmem:[#allocation5 + $0x10] sm:$0xff]
          %v1675 = vld [vmem:[#allocation5 + $0x18] sm:$0xff]
          %1676 = vmatpush.msra.mxu0 %v1515
          %1677 = vmatpush.msra.mxu0 %v1511
          %1678 = vmatpush.msra.mxu0 %v1507
          %1679 = vmatpush.msra.mxu0 %v1503
          %1680 = vmatpush.msra.mxu0 %v1499
          %1681 = vmatpush.msra.mxu0 %v1495
          %1682 = vmatpush.msra.mxu0 %v1491
          %1683 = vmatpush.msra.mxu0 %v1487
          %1684 = vmatpush.msra.mxu0 %v1483
          %1685 = vmatpush.msra.mxu0 %v1479
          %1686 = vmatpush.msra.mxu0 %v1475
          %1687 = vmatpush.msra.mxu0 %v1471
          %1688 = vmatpush.msra.mxu0 %v1467
          %1689 = vmatpush.msra.mxu0 %v1463
          %1690 = vmatpush.msra.mxu0 %v1459
          %1691 = vmatpush.msra.mxu0 %v1455
          %1692 = vmatmul.f32.gmra.mxu0 %v1669
          %v1693 = vpop.f32.mrf.mxu0
          %v1694 = vadd.f32 0.0, %v1693
          %1695 = vdwg.mxu0
          %1696 = vmatpush.msra.mxu0 %v1516
          %1697 = vmatpush.msra.mxu0 %v1512
          %1698 = vmatpush.msra.mxu0 %v1508
          %1699 = vmatpush.msra.mxu0 %v1504
          %1700 = vmatpush.msra.mxu0 %v1500
          %1701 = vmatpush.msra.mxu0 %v1496
          %1702 = vmatpush.msra.mxu0 %v1492
          %1703 = vmatpush.msra.mxu0 %v1488
          %1704 = vmatpush.msra.mxu0 %v1484
          %1705 = vmatpush.msra.mxu0 %v1480
          %1706 = vmatpush.msra.mxu0 %v1476
          %1707 = vmatpush.msra.mxu0 %v1472
          %1708 = vmatpush.msra.mxu0 %v1468
          %1709 = vmatpush.msra.mxu0 %v1464
          %1710 = vmatpush.msra.mxu0 %v1460
          %1711 = vmatpush.msra.mxu0 %v1456
          %1712 = vmatmul.f32.gmra.mxu0 %v1669
          %v1713 = vpop.f32.mrf.mxu0
          %v1714 = vadd.f32 0.0, %v1713
          %1715 = vdwg.mxu0
          %1716 = vmatpush.msra.mxu0 %v1517
          %1717 = vmatpush.msra.mxu0 %v1513
          %1718 = vmatpush.msra.mxu0 %v1509
          %1719 = vmatpush.msra.mxu0 %v1505
          %1720 = vmatpush.msra.mxu0 %v1501
          %1721 = vmatpush.msra.mxu0 %v1497
          %1722 = vmatpush.msra.mxu0 %v1493
          %1723 = vmatpush.msra.mxu0 %v1489
          %1724 = vmatpush.msra.mxu0 %v1485
          %1725 = vmatpush.msra.mxu0 %v1481
          %1726 = vmatpush.msra.mxu0 %v1477
          %1727 = vmatpush.msra.mxu0 %v1473
          %1728 = vmatpush.msra.mxu0 %v1469
          %1729 = vmatpush.msra.mxu0 %v1465
          %1730 = vmatpush.msra.mxu0 %v1461
          %1731 = vmatpush.msra.mxu0 %v1457
          %1732 = vmatmul.f32.gmra.mxu0 %v1669
          %v1733 = vpop.f32.mrf.mxu0
          %v1734 = vadd.f32 0.0, %v1733
          %1735 = vdwg.mxu0
          %1736 = vmatpush.msra.mxu0 %v1518
          %1737 = vmatpush.msra.mxu0 %v1514
          %1738 = vmatpush.msra.mxu0 %v1510
          %1739 = vmatpush.msra.mxu0 %v1506
          %1740 = vmatpush.msra.mxu0 %v1502
          %1741 = vmatpush.msra.mxu0 %v1498
          %1742 = vmatpush.msra.mxu0 %v1494
          %1743 = vmatpush.msra.mxu0 %v1490
          %1744 = vmatpush.msra.mxu0 %v1486
          %1745 = vmatpush.msra.mxu0 %v1482
          %1746 = vmatpush.msra.mxu0 %v1478
          %1747 = vmatpush.msra.mxu0 %v1474
          %1748 = vmatpush.msra.mxu0 %v1470
          %1749 = vmatpush.msra.mxu0 %v1466
          %1750 = vmatpush.msra.mxu0 %v1462
          %1751 = vmatpush.msra.mxu0 %v1458
          %1752 = vmatmul.f32.gmra.mxu0 %v1669
          %v1753 = vpop.f32.mrf.mxu0
          %v1754 = vadd.f32 0.0, %v1753
          %1755 = vdwg.mxu0
          %v1756 = vadd.f32 %v1672, %v1694
          %v1757 = vadd.f32 %v1673, %v1714
          %v1758 = vadd.f32 %v1674, %v1734
          %v1759 = vadd.f32 %v1675, %v1754
          %v1760 = vxor.u32 %v1756, 2147483648
          %v1761 = vxor.u32 %v1757, 2147483648
          %v1762 = vxor.u32 %v1758, 2147483648
          %v1763 = vmul.f32 %v1760, 1.442695
          %v1764 = vpow.pop %v1763
          %v1765 = vmul.f32 %v1761, 1.442695
          %v1766 = vpow.pop %v1765
          %v1767 = vmul.f32 %v1762, 1.442695
          %v1768 = vpow.pop %v1767
          %v1769 = vadd.f32 %v1764, 1.0
          %v1770 = vadd.f32 %v1766, 1.0
          %v1771 = vadd.f32 %v1768, 1.0
          %v1772 = vrcp.pop %v1769
          %v1773 = vmul.f32 %v1769, %v1772
          %v1774 = vsub.f32 1.0, %v1773
          %v1775 = vmul.f32 %v1772, %v1774
          %v1776 = vadd.f32 %v1772, %v1775
          %vm1777 = vweird.f32 %v1769
          %vm1778 = vweird.f32 %v1772
          %vm1779 = vmor %vm1777, %vm1778
          %v1780 = vsel %vm1779, %v1772, %v1776
          %v1781 = vand.u32 2147483647, %v1769
          %vm1782 = vcmp.eq.f32.partialorder %v1781, 8.507059e+37
          %v1783 = vand.u32 %v1769, 2147483648
          %v1784 = vor.u32 1.1754944e-38, %v1783
          %v1785 = vsel %vm1782, %v1784, %v1780
          %v1786 = vmul.f32 1.0, %v1785
          %v1787 = vrcp.pop %v1770
          %v1788 = vmul.f32 %v1770, %v1787
          %v1789 = vsub.f32 1.0, %v1788
          %v1790 = vmul.f32 %v1787, %v1789
          %v1791 = vadd.f32 %v1787, %v1790
          %vm1792 = vweird.f32 %v1770
          %vm1793 = vweird.f32 %v1787
          %vm1794 = vmor %vm1792, %vm1793
          %v1795 = vsel %vm1794, %v1787, %v1791
          %v1796 = vand.u32 2147483647, %v1770
          %vm1797 = vcmp.eq.f32.partialorder %v1796, 8.507059e+37
          %v1798 = vand.u32 %v1770, 2147483648
          %v1799 = vor.u32 1.1754944e-38, %v1798
          %v1800 = vsel %vm1797, %v1799, %v1795
          %v1801 = vmul.f32 1.0, %v1800
          %v1802 = vrcp.pop %v1771
          %v1803 = vmul.f32 %v1771, %v1802
          %v1804 = vsub.f32 1.0, %v1803
          %v1805 = vmul.f32 %v1802, %v1804
          %v1806 = vadd.f32 %v1802, %v1805
          %vm1807 = vweird.f32 %v1771
          %vm1808 = vweird.f32 %v1802
          %vm1809 = vmor %vm1807, %vm1808
          %v1810 = vsel %vm1809, %v1802, %v1806
          %v1811 = vand.u32 2147483647, %v1771
          %vm1812 = vcmp.eq.f32.partialorder %v1811, 8.507059e+37
          %v1813 = vand.u32 %v1771, 2147483648
          %v1814 = vor.u32 1.1754944e-38, %v1813
          %v1815 = vsel %vm1812, %v1814, %v1810
          %v1816 = vmul.f32 1.0, %v1815
          %v1817 = vtanh.pop %v1759
          %v1818 = vmul.f32 %v1801, %v1671
          %v1819 = vmul.f32 %v1786, %v1817
          %v1820 = vadd.f32 %v1818, %v1819
          %v1821 = vtanh.pop %v1820
          %v1822 = vmul.f32 %v1816, %v1821
          %1823 = vst [vmem:[%s1668] sm:$0xff] %v1822
          %1824 = vst [vmem:[%s1670] sm:$0xff] %v1820
        $region108: #{tpu_custom_call.1} parent=55 // pred_fallthru
          _
        // Predicated region
        $region109: #{tpu_custom_call.1} parent=55 // pred_check
          %p1825 = pneg %p903
        $region110: #{tpu_custom_call.1} parent=55 // pred_check_branch
          %1827 = sbr.rel (%p1825) target = $region112
        $region111: #{tpu_custom_call.1} parent=55 // pred_region
          %s1828 = scalar_lea.vmem [#allocation2], 8
          %v1829 = vld [vmem:[%s1828] sm:$0xff]
          %s1830 = scalar_lea.vmem [#allocation3], 8
          %v1831 = vld [vmem:[%s1830] sm:$0xff]
          %s1832 = scalar_lea.vmem [#allocation5], 32
          %v1833 = vld [vmem:[%s1832] sm:$0xff]
          %v1834 = vld [vmem:[%s1832 + $0x8] sm:$0xff]
          %v1835 = vld [vmem:[%s1832 + $0x10] sm:$0xff]
          %v1836 = vld [vmem:[%s1832 + $0x18] sm:$0xff]
          %1837 = vmatpush.msra.mxu0 %v1515
          %1838 = vmatpush.msra.mxu0 %v1511
          %1839 = vmatpush.msra.mxu0 %v1507
          %1840 = vmatpush.msra.mxu0 %v1503
          %1841 = vmatpush.msra.mxu0 %v1499
          %1842 = vmatpush.msra.mxu0 %v1495
          %1843 = vmatpush.msra.mxu0 %v1491
          %1844 = vmatpush.msra.mxu0 %v1487
          %1845 = vmatpush.msra.mxu0 %v1483
          %1846 = vmatpush.msra.mxu0 %v1479
          %1847 = vmatpush.msra.mxu0 %v1475
          %1848 = vmatpush.msra.mxu0 %v1471
          %1849 = vmatpush.msra.mxu0 %v1467
          %1850 = vmatpush.msra.mxu0 %v1463
          %1851 = vmatpush.msra.mxu0 %v1459
          %1852 = vmatpush.msra.mxu0 %v1455
          %1853 = vmatmul.f32.gmra.mxu0 %v1829
          %v1854 = vpop.f32.mrf.mxu0
          %v1855 = vadd.f32 0.0, %v1854
          %1856 = vdwg.mxu0
          %1857 = vmatpush.msra.mxu0 %v1516
          %1858 = vmatpush.msra.mxu0 %v1512
          %1859 = vmatpush.msra.mxu0 %v1508
          %1860 = vmatpush.msra.mxu0 %v1504
          %1861 = vmatpush.msra.mxu0 %v1500
          %1862 = vmatpush.msra.mxu0 %v1496
          %1863 = vmatpush.msra.mxu0 %v1492
          %1864 = vmatpush.msra.mxu0 %v1488
          %1865 = vmatpush.msra.mxu0 %v1484
          %1866 = vmatpush.msra.mxu0 %v1480
          %1867 = vmatpush.msra.mxu0 %v1476
          %1868 = vmatpush.msra.mxu0 %v1472
          %1869 = vmatpush.msra.mxu0 %v1468
          %1870 = vmatpush.msra.mxu0 %v1464
          %1871 = vmatpush.msra.mxu0 %v1460
          %1872 = vmatpush.msra.mxu0 %v1456
          %1873 = vmatmul.f32.gmra.mxu0 %v1829
          %v1874 = vpop.f32.mrf.mxu0
          %v1875 = vadd.f32 0.0, %v1874
          %1876 = vdwg.mxu0
          %1877 = vmatpush.msra.mxu0 %v1517
          %1878 = vmatpush.msra.mxu0 %v1513
          %1879 = vmatpush.msra.mxu0 %v1509
          %1880 = vmatpush.msra.mxu0 %v1505
          %1881 = vmatpush.msra.mxu0 %v1501
          %1882 = vmatpush.msra.mxu0 %v1497
          %1883 = vmatpush.msra.mxu0 %v1493
          %1884 = vmatpush.msra.mxu0 %v1489
          %1885 = vmatpush.msra.mxu0 %v1485
          %1886 = vmatpush.msra.mxu0 %v1481
          %1887 = vmatpush.msra.mxu0 %v1477
          %1888 = vmatpush.msra.mxu0 %v1473
          %1889 = vmatpush.msra.mxu0 %v1469
          %1890 = vmatpush.msra.mxu0 %v1465
          %1891 = vmatpush.msra.mxu0 %v1461
          %1892 = vmatpush.msra.mxu0 %v1457
          %1893 = vmatmul.f32.gmra.mxu0 %v1829
          %v1894 = vpop.f32.mrf.mxu0
          %v1895 = vadd.f32 0.0, %v1894
          %1896 = vdwg.mxu0
          %1897 = vmatpush.msra.mxu0 %v1518
          %1898 = vmatpush.msra.mxu0 %v1514
          %1899 = vmatpush.msra.mxu0 %v1510
          %1900 = vmatpush.msra.mxu0 %v1506
          %1901 = vmatpush.msra.mxu0 %v1502
          %1902 = vmatpush.msra.mxu0 %v1498
          %1903 = vmatpush.msra.mxu0 %v1494
          %1904 = vmatpush.msra.mxu0 %v1490
          %1905 = vmatpush.msra.mxu0 %v1486
          %1906 = vmatpush.msra.mxu0 %v1482
          %1907 = vmatpush.msra.mxu0 %v1478
          %1908 = vmatpush.msra.mxu0 %v1474
          %1909 = vmatpush.msra.mxu0 %v1470
          %1910 = vmatpush.msra.mxu0 %v1466
          %1911 = vmatpush.msra.mxu0 %v1462
          %1912 = vmatpush.msra.mxu0 %v1458
          %1913 = vmatmul.f32.gmra.mxu0 %v1829
          %v1914 = vpop.f32.mrf.mxu0
          %v1915 = vadd.f32 0.0, %v1914
          %1916 = vdwg.mxu0
          %v1917 = vadd.f32 %v1833, %v1855
          %v1918 = vadd.f32 %v1834, %v1875
          %v1919 = vadd.f32 %v1835, %v1895
          %v1920 = vadd.f32 %v1836, %v1915
          %v1921 = vxor.u32 %v1917, 2147483648
          %v1922 = vxor.u32 %v1918, 2147483648
          %v1923 = vxor.u32 %v1919, 2147483648
          %v1924 = vmul.f32 %v1921, 1.442695
          %v1925 = vpow.pop %v1924
          %v1926 = vmul.f32 %v1922, 1.442695
          %v1927 = vpow.pop %v1926
          %v1928 = vmul.f32 %v1923, 1.442695
          %v1929 = vpow.pop %v1928
          %v1930 = vadd.f32 %v1925, 1.0
          %v1931 = vadd.f32 %v1927, 1.0
          %v1932 = vadd.f32 %v1929, 1.0
          %v1933 = vrcp.pop %v1930
          %v1934 = vmul.f32 %v1930, %v1933
          %v1935 = vsub.f32 1.0, %v1934
          %v1936 = vmul.f32 %v1933, %v1935
          %v1937 = vadd.f32 %v1933, %v1936
          %vm1938 = vweird.f32 %v1930
          %vm1939 = vweird.f32 %v1933
          %vm1940 = vmor %vm1938, %vm1939
          %v1941 = vsel %vm1940, %v1933, %v1937
          %v1942 = vand.u32 2147483647, %v1930
          %vm1943 = vcmp.eq.f32.partialorder %v1942, 8.507059e+37
          %v1944 = vand.u32 %v1930, 2147483648
          %v1945 = vor.u32 1.1754944e-38, %v1944
          %v1946 = vsel %vm1943, %v1945, %v1941
          %v1947 = vmul.f32 1.0, %v1946
          %v1948 = vrcp.pop %v1931
          %v1949 = vmul.f32 %v1931, %v1948
          %v1950 = vsub.f32 1.0, %v1949
          %v1951 = vmul.f32 %v1948, %v1950
          %v1952 = vadd.f32 %v1948, %v1951
          %vm1953 = vweird.f32 %v1931
          %vm1954 = vweird.f32 %v1948
          %vm1955 = vmor %vm1953, %vm1954
          %v1956 = vsel %vm1955, %v1948, %v1952
          %v1957 = vand.u32 2147483647, %v1931
          %vm1958 = vcmp.eq.f32.partialorder %v1957, 8.507059e+37
          %v1959 = vand.u32 %v1931, 2147483648
          %v1960 = vor.u32 1.1754944e-38, %v1959
          %v1961 = vsel %vm1958, %v1960, %v1956
          %v1962 = vmul.f32 1.0, %v1961
          %v1963 = vrcp.pop %v1932
          %v1964 = vmul.f32 %v1932, %v1963
          %v1965 = vsub.f32 1.0, %v1964
          %v1966 = vmul.f32 %v1963, %v1965
          %v1967 = vadd.f32 %v1963, %v1966
          %vm1968 = vweird.f32 %v1932
          %vm1969 = vweird.f32 %v1963
          %vm1970 = vmor %vm1968, %vm1969
          %v1971 = vsel %vm1970, %v1963, %v1967
          %v1972 = vand.u32 2147483647, %v1932
          %vm1973 = vcmp.eq.f32.partialorder %v1972, 8.507059e+37
          %v1974 = vand.u32 %v1932, 2147483648
          %v1975 = vor.u32 1.1754944e-38, %v1974
          %v1976 = vsel %vm1973, %v1975, %v1971
          %v1977 = vmul.f32 1.0, %v1976
          %v1978 = vtanh.pop %v1920
          %v1979 = vmul.f32 %v1962, %v1831
          %v1980 = vmul.f32 %v1947, %v1978
          %v1981 = vadd.f32 %v1979, %v1980
          %v1982 = vtanh.pop %v1981
          %v1983 = vmul.f32 %v1977, %v1982
          %1984 = vst [vmem:[%s1828] sm:$0xff] %v1983
          %1985 = vst [vmem:[%s1830] sm:$0xff] %v1981
        $region112: #{tpu_custom_call.1} parent=55 // pred_fallthru
          _
        // Predicated region
        $region113: #{tpu_custom_call.1} parent=55 // pred_check
          %p1986 = pneg %p1066
        $region114: #{tpu_custom_call.1} parent=55 // pred_check_branch
          %1988 = sbr.rel (%p1986) target = $region116
        $region115: #{tpu_custom_call.1} parent=55 // pred_region
          %s1989 = scalar_lea.vmem [#allocation2], 8
          %v1990 = vld [vmem:[%s1989] sm:$0xff]
          %s1991 = scalar_lea.vmem [#allocation3], 8
          %v1992 = vld [vmem:[%s1991] sm:$0xff]
          %s1993 = scalar_lea.vmem [#allocation5], 64
          %v1994 = vld [vmem:[%s1993] sm:$0xff]
          %v1995 = vld [vmem:[%s1993 + $0x8] sm:$0xff]
          %v1996 = vld [vmem:[%s1993 + $0x10] sm:$0xff]
          %v1997 = vld [vmem:[%s1993 + $0x18] sm:$0xff]
          %1998 = vmatpush.msra.mxu0 %v1515
          %1999 = vmatpush.msra.mxu0 %v1511
          %2000 = vmatpush.msra.mxu0 %v1507
          %2001 = vmatpush.msra.mxu0 %v1503
          %2002 = vmatpush.msra.mxu0 %v1499
          %2003 = vmatpush.msra.mxu0 %v1495
          %2004 = vmatpush.msra.mxu0 %v1491
          %2005 = vmatpush.msra.mxu0 %v1487
          %2006 = vmatpush.msra.mxu0 %v1483
          %2007 = vmatpush.msra.mxu0 %v1479
          %2008 = vmatpush.msra.mxu0 %v1475
          %2009 = vmatpush.msra.mxu0 %v1471
          %2010 = vmatpush.msra.mxu0 %v1467
          %2011 = vmatpush.msra.mxu0 %v1463
          %2012 = vmatpush.msra.mxu0 %v1459
          %2013 = vmatpush.msra.mxu0 %v1455
          %2014 = vmatmul.f32.gmra.mxu0 %v1990
          %v2015 = vpop.f32.mrf.mxu0
          %v2016 = vadd.f32 0.0, %v2015
          %2017 = vdwg.mxu0
          %2018 = vmatpush.msra.mxu0 %v1516
          %2019 = vmatpush.msra.mxu0 %v1512
          %2020 = vmatpush.msra.mxu0 %v1508
          %2021 = vmatpush.msra.mxu0 %v1504
          %2022 = vmatpush.msra.mxu0 %v1500
          %2023 = vmatpush.msra.mxu0 %v1496
          %2024 = vmatpush.msra.mxu0 %v1492
          %2025 = vmatpush.msra.mxu0 %v1488
          %2026 = vmatpush.msra.mxu0 %v1484
          %2027 = vmatpush.msra.mxu0 %v1480
          %2028 = vmatpush.msra.mxu0 %v1476
          %2029 = vmatpush.msra.mxu0 %v1472
          %2030 = vmatpush.msra.mxu0 %v1468
          %2031 = vmatpush.msra.mxu0 %v1464
          %2032 = vmatpush.msra.mxu0 %v1460
          %2033 = vmatpush.msra.mxu0 %v1456
          %2034 = vmatmul.f32.gmra.mxu0 %v1990
          %v2035 = vpop.f32.mrf.mxu0
          %v2036 = vadd.f32 0.0, %v2035
          %2037 = vdwg.mxu0
          %2038 = vmatpush.msra.mxu0 %v1517
          %2039 = vmatpush.msra.mxu0 %v1513
          %2040 = vmatpush.msra.mxu0 %v1509
          %2041 = vmatpush.msra.mxu0 %v1505
          %2042 = vmatpush.msra.mxu0 %v1501
          %2043 = vmatpush.msra.mxu0 %v1497
          %2044 = vmatpush.msra.mxu0 %v1493
          %2045 = vmatpush.msra.mxu0 %v1489
          %2046 = vmatpush.msra.mxu0 %v1485
          %2047 = vmatpush.msra.mxu0 %v1481
          %2048 = vmatpush.msra.mxu0 %v1477
          %2049 = vmatpush.msra.mxu0 %v1473
          %2050 = vmatpush.msra.mxu0 %v1469
          %2051 = vmatpush.msra.mxu0 %v1465
          %2052 = vmatpush.msra.mxu0 %v1461
          %2053 = vmatpush.msra.mxu0 %v1457
          %2054 = vmatmul.f32.gmra.mxu0 %v1990
          %v2055 = vpop.f32.mrf.mxu0
          %v2056 = vadd.f32 0.0, %v2055
          %2057 = vdwg.mxu0
          %2058 = vmatpush.msra.mxu0 %v1518
          %2059 = vmatpush.msra.mxu0 %v1514
          %2060 = vmatpush.msra.mxu0 %v1510
          %2061 = vmatpush.msra.mxu0 %v1506
          %2062 = vmatpush.msra.mxu0 %v1502
          %2063 = vmatpush.msra.mxu0 %v1498
          %2064 = vmatpush.msra.mxu0 %v1494
          %2065 = vmatpush.msra.mxu0 %v1490
          %2066 = vmatpush.msra.mxu0 %v1486
          %2067 = vmatpush.msra.mxu0 %v1482
          %2068 = vmatpush.msra.mxu0 %v1478
          %2069 = vmatpush.msra.mxu0 %v1474
          %2070 = vmatpush.msra.mxu0 %v1470
          %2071 = vmatpush.msra.mxu0 %v1466
          %2072 = vmatpush.msra.mxu0 %v1462
          %2073 = vmatpush.msra.mxu0 %v1458
          %2074 = vmatmul.f32.gmra.mxu0 %v1990
          %v2075 = vpop.f32.mrf.mxu0
          %v2076 = vadd.f32 0.0, %v2075
          %2077 = vdwg.mxu0
          %v2078 = vadd.f32 %v1994, %v2016
          %v2079 = vadd.f32 %v1995, %v2036
          %v2080 = vadd.f32 %v1996, %v2056
          %v2081 = vadd.f32 %v1997, %v2076
          %v2082 = vxor.u32 %v2078, 2147483648
          %v2083 = vxor.u32 %v2079, 2147483648
          %v2084 = vxor.u32 %v2080, 2147483648
          %v2085 = vmul.f32 %v2082, 1.442695
          %v2086 = vpow.pop %v2085
          %v2087 = vmul.f32 %v2083, 1.442695
          %v2088 = vpow.pop %v2087
          %v2089 = vmul.f32 %v2084, 1.442695
          %v2090 = vpow.pop %v2089
          %v2091 = vadd.f32 %v2086, 1.0
          %v2092 = vadd.f32 %v2088, 1.0
          %v2093 = vadd.f32 %v2090, 1.0
          %v2094 = vrcp.pop %v2091
          %v2095 = vmul.f32 %v2091, %v2094
          %v2096 = vsub.f32 1.0, %v2095
          %v2097 = vmul.f32 %v2094, %v2096
          %v2098 = vadd.f32 %v2094, %v2097
          %vm2099 = vweird.f32 %v2091
          %vm2100 = vweird.f32 %v2094
          %vm2101 = vmor %vm2099, %vm2100
          %v2102 = vsel %vm2101, %v2094, %v2098
          %v2103 = vand.u32 2147483647, %v2091
          %vm2104 = vcmp.eq.f32.partialorder %v2103, 8.507059e+37
          %v2105 = vand.u32 %v2091, 2147483648
          %v2106 = vor.u32 1.1754944e-38, %v2105
          %v2107 = vsel %vm2104, %v2106, %v2102
          %v2108 = vmul.f32 1.0, %v2107
          %v2109 = vrcp.pop %v2092
          %v2110 = vmul.f32 %v2092, %v2109
          %v2111 = vsub.f32 1.0, %v2110
          %v2112 = vmul.f32 %v2109, %v2111
          %v2113 = vadd.f32 %v2109, %v2112
          %vm2114 = vweird.f32 %v2092
          %vm2115 = vweird.f32 %v2109
          %vm2116 = vmor %vm2114, %vm2115
          %v2117 = vsel %vm2116, %v2109, %v2113
          %v2118 = vand.u32 2147483647, %v2092
          %vm2119 = vcmp.eq.f32.partialorder %v2118, 8.507059e+37
          %v2120 = vand.u32 %v2092, 2147483648
          %v2121 = vor.u32 1.1754944e-38, %v2120
          %v2122 = vsel %vm2119, %v2121, %v2117
          %v2123 = vmul.f32 1.0, %v2122
          %v2124 = vrcp.pop %v2093
          %v2125 = vmul.f32 %v2093, %v2124
          %v2126 = vsub.f32 1.0, %v2125
          %v2127 = vmul.f32 %v2124, %v2126
          %v2128 = vadd.f32 %v2124, %v2127
          %vm2129 = vweird.f32 %v2093
          %vm2130 = vweird.f32 %v2124
          %vm2131 = vmor %vm2129, %vm2130
          %v2132 = vsel %vm2131, %v2124, %v2128
          %v2133 = vand.u32 2147483647, %v2093
          %vm2134 = vcmp.eq.f32.partialorder %v2133, 8.507059e+37
          %v2135 = vand.u32 %v2093, 2147483648
          %v2136 = vor.u32 1.1754944e-38, %v2135
          %v2137 = vsel %vm2134, %v2136, %v2132
          %v2138 = vmul.f32 1.0, %v2137
          %v2139 = vtanh.pop %v2081
          %v2140 = vmul.f32 %v2123, %v1992
          %v2141 = vmul.f32 %v2108, %v2139
          %v2142 = vadd.f32 %v2140, %v2141
          %v2143 = vtanh.pop %v2142
          %v2144 = vmul.f32 %v2138, %v2143
          %2145 = vst [vmem:[%s1989] sm:$0xff] %v2144
          %2146 = vst [vmem:[%s1991] sm:$0xff] %v2142
        $region116: #{tpu_custom_call.1} parent=55 // pred_fallthru
          _
        // Predicated region
        $region117: #{tpu_custom_call.1} parent=55 // pred_check
          %p2147 = pneg %p1229
        $region118: #{tpu_custom_call.1} parent=55 // pred_check_branch
          %2149 = sbr.rel (%p2147) target = $region120
        $region119: #{tpu_custom_call.1} parent=55 // pred_region
          %s2150 = scalar_lea.vmem [#allocation2], 8
          %v2151 = vld [vmem:[%s2150] sm:$0xff]
          %s2152 = scalar_lea.vmem [#allocation3], 8
          %v2153 = vld [vmem:[%s2152] sm:$0xff]
          %s2154 = scalar_lea.vmem [#allocation5], 96
          %v2155 = vld [vmem:[%s2154] sm:$0xff]
          %v2156 = vld [vmem:[%s2154 + $0x8] sm:$0xff]
          %v2157 = vld [vmem:[%s2154 + $0x10] sm:$0xff]
          %v2158 = vld [vmem:[%s2154 + $0x18] sm:$0xff]
          %2159 = vmatpush.msra.mxu0 %v1515
          %2160 = vmatpush.msra.mxu0 %v1511
          %2161 = vmatpush.msra.mxu0 %v1507
          %2162 = vmatpush.msra.mxu0 %v1503
          %2163 = vmatpush.msra.mxu0 %v1499
          %2164 = vmatpush.msra.mxu0 %v1495
          %2165 = vmatpush.msra.mxu0 %v1491
          %2166 = vmatpush.msra.mxu0 %v1487
          %2167 = vmatpush.msra.mxu0 %v1483
          %2168 = vmatpush.msra.mxu0 %v1479
          %2169 = vmatpush.msra.mxu0 %v1475
          %2170 = vmatpush.msra.mxu0 %v1471
          %2171 = vmatpush.msra.mxu0 %v1467
          %2172 = vmatpush.msra.mxu0 %v1463
          %2173 = vmatpush.msra.mxu0 %v1459
          %2174 = vmatpush.msra.mxu0 %v1455
          %2175 = vmatmul.f32.gmra.mxu0 %v2151
          %v2176 = vpop.f32.mrf.mxu0
          %v2177 = vadd.f32 0.0, %v2176
          %2178 = vdwg.mxu0
          %2179 = vmatpush.msra.mxu0 %v1516
          %2180 = vmatpush.msra.mxu0 %v1512
          %2181 = vmatpush.msra.mxu0 %v1508
          %2182 = vmatpush.msra.mxu0 %v1504
          %2183 = vmatpush.msra.mxu0 %v1500
          %2184 = vmatpush.msra.mxu0 %v1496
          %2185 = vmatpush.msra.mxu0 %v1492
          %2186 = vmatpush.msra.mxu0 %v1488
          %2187 = vmatpush.msra.mxu0 %v1484
          %2188 = vmatpush.msra.mxu0 %v1480
          %2189 = vmatpush.msra.mxu0 %v1476
          %2190 = vmatpush.msra.mxu0 %v1472
          %2191 = vmatpush.msra.mxu0 %v1468
          %2192 = vmatpush.msra.mxu0 %v1464
          %2193 = vmatpush.msra.mxu0 %v1460
          %2194 = vmatpush.msra.mxu0 %v1456
          %2195 = vmatmul.f32.gmra.mxu0 %v2151
          %v2196 = vpop.f32.mrf.mxu0
          %v2197 = vadd.f32 0.0, %v2196
          %2198 = vdwg.mxu0
          %2199 = vmatpush.msra.mxu0 %v1517
          %2200 = vmatpush.msra.mxu0 %v1513
          %2201 = vmatpush.msra.mxu0 %v1509
          %2202 = vmatpush.msra.mxu0 %v1505
          %2203 = vmatpush.msra.mxu0 %v1501
          %2204 = vmatpush.msra.mxu0 %v1497
          %2205 = vmatpush.msra.mxu0 %v1493
          %2206 = vmatpush.msra.mxu0 %v1489
          %2207 = vmatpush.msra.mxu0 %v1485
          %2208 = vmatpush.msra.mxu0 %v1481
          %2209 = vmatpush.msra.mxu0 %v1477
          %2210 = vmatpush.msra.mxu0 %v1473
          %2211 = vmatpush.msra.mxu0 %v1469
          %2212 = vmatpush.msra.mxu0 %v1465
          %2213 = vmatpush.msra.mxu0 %v1461
          %2214 = vmatpush.msra.mxu0 %v1457
          %2215 = vmatmul.f32.gmra.mxu0 %v2151
          %v2216 = vpop.f32.mrf.mxu0
          %v2217 = vadd.f32 0.0, %v2216
          %2218 = vdwg.mxu0
          %2219 = vmatpush.msra.mxu0 %v1518
          %2220 = vmatpush.msra.mxu0 %v1514
          %2221 = vmatpush.msra.mxu0 %v1510
          %2222 = vmatpush.msra.mxu0 %v1506
          %2223 = vmatpush.msra.mxu0 %v1502
          %2224 = vmatpush.msra.mxu0 %v1498
          %2225 = vmatpush.msra.mxu0 %v1494
          %2226 = vmatpush.msra.mxu0 %v1490
          %2227 = vmatpush.msra.mxu0 %v1486
          %2228 = vmatpush.msra.mxu0 %v1482
          %2229 = vmatpush.msra.mxu0 %v1478
          %2230 = vmatpush.msra.mxu0 %v1474
          %2231 = vmatpush.msra.mxu0 %v1470
          %2232 = vmatpush.msra.mxu0 %v1466
          %2233 = vmatpush.msra.mxu0 %v1462
          %2234 = vmatpush.msra.mxu0 %v1458
          %2235 = vmatmul.f32.gmra.mxu0 %v2151
          %v2236 = vpop.f32.mrf.mxu0
          %v2237 = vadd.f32 0.0, %v2236
          %2238 = vdwg.mxu0
          %v2239 = vadd.f32 %v2155, %v2177
          %v2240 = vadd.f32 %v2156, %v2197
          %v2241 = vadd.f32 %v2157, %v2217
          %v2242 = vadd.f32 %v2158, %v2237
          %v2243 = vxor.u32 %v2239, 2147483648
          %v2244 = vxor.u32 %v2240, 2147483648
          %v2245 = vxor.u32 %v2241, 2147483648
          %v2246 = vmul.f32 %v2243, 1.442695
          %v2247 = vpow.pop %v2246
          %v2248 = vmul.f32 %v2244, 1.442695
          %v2249 = vpow.pop %v2248
          %v2250 = vmul.f32 %v2245, 1.442695
          %v2251 = vpow.pop %v2250
          %v2252 = vadd.f32 %v2247, 1.0
          %v2253 = vadd.f32 %v2249, 1.0
          %v2254 = vadd.f32 %v2251, 1.0
          %v2255 = vrcp.pop %v2252
          %v2256 = vmul.f32 %v2252, %v2255
          %v2257 = vsub.f32 1.0, %v2256
          %v2258 = vmul.f32 %v2255, %v2257
          %v2259 = vadd.f32 %v2255, %v2258
          %vm2260 = vweird.f32 %v2252
          %vm2261 = vweird.f32 %v2255
          %vm2262 = vmor %vm2260, %vm2261
          %v2263 = vsel %vm2262, %v2255, %v2259
          %v2264 = vand.u32 2147483647, %v2252
          %vm2265 = vcmp.eq.f32.partialorder %v2264, 8.507059e+37
          %v2266 = vand.u32 %v2252, 2147483648
          %v2267 = vor.u32 1.1754944e-38, %v2266
          %v2268 = vsel %vm2265, %v2267, %v2263
          %v2269 = vmul.f32 1.0, %v2268
          %v2270 = vrcp.pop %v2253
          %v2271 = vmul.f32 %v2253, %v2270
          %v2272 = vsub.f32 1.0, %v2271
          %v2273 = vmul.f32 %v2270, %v2272
          %v2274 = vadd.f32 %v2270, %v2273
          %vm2275 = vweird.f32 %v2253
          %vm2276 = vweird.f32 %v2270
          %vm2277 = vmor %vm2275, %vm2276
          %v2278 = vsel %vm2277, %v2270, %v2274
          %v2279 = vand.u32 2147483647, %v2253
          %vm2280 = vcmp.eq.f32.partialorder %v2279, 8.507059e+37
          %v2281 = vand.u32 %v2253, 2147483648
          %v2282 = vor.u32 1.1754944e-38, %v2281
          %v2283 = vsel %vm2280, %v2282, %v2278
          %v2284 = vmul.f32 1.0, %v2283
          %v2285 = vrcp.pop %v2254
          %v2286 = vmul.f32 %v2254, %v2285
          %v2287 = vsub.f32 1.0, %v2286
          %v2288 = vmul.f32 %v2285, %v2287
          %v2289 = vadd.f32 %v2285, %v2288
          %vm2290 = vweird.f32 %v2254
          %vm2291 = vweird.f32 %v2285
          %vm2292 = vmor %vm2290, %vm2291
          %v2293 = vsel %vm2292, %v2285, %v2289
          %v2294 = vand.u32 2147483647, %v2254
          %vm2295 = vcmp.eq.f32.partialorder %v2294, 8.507059e+37
          %v2296 = vand.u32 %v2254, 2147483648
          %v2297 = vor.u32 1.1754944e-38, %v2296
          %v2298 = vsel %vm2295, %v2297, %v2293
          %v2299 = vmul.f32 1.0, %v2298
          %v2300 = vtanh.pop %v2242
          %v2301 = vmul.f32 %v2284, %v2153
          %v2302 = vmul.f32 %v2269, %v2300
          %v2303 = vadd.f32 %v2301, %v2302
          %v2304 = vtanh.pop %v2303
          %v2305 = vmul.f32 %v2299, %v2304
          %2306 = vst [vmem:[%s2150] sm:$0xff] %v2305
          %2307 = vst [vmem:[%s2152] sm:$0xff] %v2303
        $region120: #{tpu_custom_call.1} parent=55 // pred_fallthru
          _
        %p2308 = scmp.eq.s32.totalorder %s32, 1
        // Predicated region
        $region121: #{tpu_custom_call.1} parent=55 // pred_check
          %p2309 = pneg %p2308
        $region122: #{tpu_custom_call.1} parent=55 // pred_check_branch
          %2311 = sbr.rel (%p2309) target = $region124
        $region123: #{tpu_custom_call.1} parent=55 // pred_region
          %s2312 = scalar_lea.vmem [#allocation2], 8
          %v2313 = vld [vmem:[%s2312] sm:$0xff]
          %v2314 = vld [vmem:[#allocation17] sm:$0xff]
          %v2315 = vld [vmem:[#allocation17 + $0x8] sm:$0xff]
          %v2316 = vld [vmem:[#allocation17 + $0x10] sm:$0xff]
          %v2317 = vld [vmem:[#allocation17 + $0x18] sm:$0xff]
          %v2318 = vld [vmem:[#allocation17 + $0x20] sm:$0xff]
          %v2319 = vld [vmem:[#allocation17 + $0x28] sm:$0xff]
          %v2320 = vld [vmem:[#allocation17 + $0x30] sm:$0xff]
          %v2321 = vld [vmem:[#allocation17 + $0x38] sm:$0xff]
          %v2322 = vld [vmem:[#allocation17 + $0x40] sm:$0xff]
          %v2323 = vld [vmem:[#allocation17 + $0x48] sm:$0xff]
          %v2324 = vld [vmem:[#allocation17 + $0x50] sm:$0xff]
          %v2325 = vld [vmem:[#allocation17 + $0x58] sm:$0xff]
          %v2326 = vld [vmem:[#allocation17 + $0x60] sm:$0xff]
          %v2327 = vld [vmem:[#allocation17 + $0x68] sm:$0xff]
          %v2328 = vld [vmem:[#allocation17 + $0x70] sm:$0xff]
          %v2329 = vld [vmem:[#allocation17 + $0x78] sm:$0xff]
          %v2330 = vld [vmem:[%s8] sm:$0x1]
          %v2332 = vperm.slane %v2330, 0
          %2334 = vmatpush.msra.mxu0 %v2329
          %2335 = vmatpush.msra.mxu0 %v2328
          %2336 = vmatpush.msra.mxu0 %v2327
          %2337 = vmatpush.msra.mxu0 %v2326
          %2338 = vmatpush.msra.mxu0 %v2325
          %2339 = vmatpush.msra.mxu0 %v2324
          %2340 = vmatpush.msra.mxu0 %v2323
          %2341 = vmatpush.msra.mxu0 %v2322
          %2342 = vmatpush.msra.mxu0 %v2321
          %2343 = vmatpush.msra.mxu0 %v2320
          %2344 = vmatpush.msra.mxu0 %v2319
          %2345 = vmatpush.msra.mxu0 %v2318
          %2346 = vmatpush.msra.mxu0 %v2317
          %2347 = vmatpush.msra.mxu0 %v2316
          %2348 = vmatpush.msra.mxu0 %v2315
          %2349 = vmatpush.msra.mxu0 %v2314
          %2350 = vmatmul.f32.gmra.mxu0 %v2313
          %v2351 = vpop.f32.mrf.mxu0
          %v2352 = vadd.f32 %v2332, %v2351
          %2353 = vdwg.mxu0
          %2354 = vst [vmem:[#allocation18] sm:$0xff] %v2352
        $region124: #{tpu_custom_call.1} parent=55 // pred_fallthru
          _
        // Predicated region
        $region125: #{tpu_custom_call.1} parent=55 // pred_check
          %p2355 = pneg %p253
        $region126: #{tpu_custom_call.1} parent=55 // pred_check_branch
          %2357 = sbr.rel (%p2355) target = $region128
        $region127: #{tpu_custom_call.1} parent=55 // pred_region
          %2359 = vsyncadd [#allocation8], 0
          %s2360 = smul.addr %s31, 8
          %s2361 = scalar_lea.hbm %s9, %s2360
          %s2363 = sshll.u32 [#allocation18], 4
          %s2364 = int_to_ptr.vmem [resolvable:$true] %s2363
          %s2365 = sshll.u32 %s2361, 4
          %s2366 = int_to_ptr.hbm [resolvable:$true] %s2365
          %2368 = dma.vmem_to_hbm [thread:$0]  %s2364, 128, %s2366, [#allocation8]
        $region128: #{tpu_custom_call.1} parent=55 // pred_fallthru
          _
        // Predicated region
        $region129: #{tpu_custom_call.1} parent=55 // pred_check
          %p2369 = pneg %p253
        $region130: #{tpu_custom_call.1} parent=55 // pred_check_branch
          %2371 = sbr.rel (%p2369) target = $region132
        $region131: #{tpu_custom_call.1} parent=55 // pred_region
          %2373 = dma.done [#allocation8], 128
        $region132: #{tpu_custom_call.1} parent=55 // pred_fallthru
          _
      $region56: #{tpu_custom_call.1} parent=5 // pred_fallthru
        _
      %p2374 = scmp.le.s32.totalorder 2, %s22
      // Predicated region
      $region133: #{tpu_custom_call.1} parent=5 // pred_check
        %p2375 = pneg %p2374
      $region134: #{tpu_custom_call.1} parent=5 // pred_check_branch
        %2377 = sbr.rel (%p2375) target = $region136
      $region135: #{tpu_custom_call.1} parent=5 // pred_region
        %s2378 = ssub.s32 %s22, 2
      $region136: #{tpu_custom_call.1} parent=5 // pred_fallthru
        _
    $region6: #{tpu_custom_call.1} parent=1 // loop_footer
      %s26 = sadd.s32 1, %s22
    $region7: #{tpu_custom_call.1} parent=1 // loop_footer_branch
      %21 = sbr.rel target = $region3
    $region8: #{tpu_custom_call.1} parent=1 // loop_exit
      _
    %2379 = vsyncpa [#allocation7], 1
    %s2380 = scalar_lea.sflag [#allocation7], 1
    %2381 = vsyncpa %s2380, 1
    %2382 = vsyncpa [#allocation10], 1
    %2383 = vsyncpa [#allocation13], 1
    %2384 = vsyncpa [#allocation16], 1
    %2385 = vsyncpa [#allocation8], 1
    %s2386 = scalar_lea.sflag [#allocation8], 1
    %2387 = vsyncpa %s2386, 1

</llo_original>
